<compile_context>
chip_gen: v7x
topology: tpu7x:2x2x1
jax: 0.10.0
libtpu: 0.0.40
codegen_flags: <defaults>
</compile_context>

<pallas_src>
import jax
import jax.numpy as jnp
import numpy as np
from jax.experimental import pallas as pl
from jax.experimental.pallas import tpu as pltpu

EPS = 1e-5


# --------------------- Kernel A: conv (as im2col matmul) + BatchNorm -------------
def conv_bn_kernel(patch_ref, w_ref, gamma_ref, beta_ref, o_ref):
    # patch_ref: (P, 9)  rows = (n,h,w) output positions, cols = (ci,kw) taps
    # w_ref:     (9, 64) conv weight reshaped
    # gamma/beta: (1, 64)
    conv = jnp.dot(patch_ref[...], w_ref[...], preferred_element_type=jnp.float32)
    # train-mode BatchNorm over all (n,h,w) rows, biased variance.
    # (conv bias omitted: mean subtraction cancels it exactly)
    mean = jnp.mean(conv, axis=0, keepdims=True)
    var = jnp.mean((conv - mean) ** 2, axis=0, keepdims=True)
    inv = jax.lax.rsqrt(var + EPS)
    o_ref[...] = (conv - mean) * inv * gamma_ref[...] + beta_ref[...]


# --------------------- Kernel B: Linear + ReLU (K-tiled reduction) ----------------
def linear_relu_kernel(x_ref, w_ref, b_ref, o_ref):
    # x_ref: (N, TK)   activation tile
    # w_ref: (Nout, TK) native-layout weight tile (lane-dense)
    # b_ref: (1, Nout)
    # o_ref: (N, Nout)  grid-resident accumulator (index_map constant over k)
    k = pl.program_id(0)

    @pl.when(k == 0)
    def _():
        o_ref[...] = jnp.broadcast_to(b_ref[...], o_ref.shape).astype(jnp.float32)

    o_ref[...] += jax.lax.dot_general(
        x_ref[...], w_ref[...],
        dimension_numbers=(((1,), (1,)), ((), ())),
        preferred_element_type=jnp.float32)

    @pl.when(k == pl.num_programs(0) - 1)
    def _():
        o_ref[...] = jnp.maximum(o_ref[...], 0.0)


# --------------------- Param prep (outside jit, done once) ------------------------
def prepare_linear_weight(lin_w, Cout, H, Wout):
    # Fold Flatten's (n, c, h, w) ordering into the weight columns so the kernel
    # can consume the activation in its natural (n, h, w, c) order with a free
    # reshape.  Run once at param-prep time; do NOT put this inside the jit.
    Nout, K = lin_w.shape
    assert K == Cout * H * Wout
    return jnp.asarray(lin_w).reshape(Nout, Cout, H, Wout) \
                             .transpose(0, 2, 3, 1).reshape(Nout, K)


# --------------------- Forward wrapper ---------------------------------------------
def model_forward(x, conv_w, gamma, beta, lin_w_perm, lin_b, *, tk=16384):
    # x: (N, 3, H, Win) NCHW;  conv_w: (64, 3, 1, 3);  lin_w_perm: (13, 65536)
    N, Cin, H, Win = x.shape
    Cout = conv_w.shape[0]
    KW = conv_w.shape[3]
    Wout = Win - KW + 1
    P = N * H * Wout

    # im2col glue (kernel height is 1, so only KW taps along W).  ~26 KB of data.
    cols = jnp.stack([x[:, :, :, kw:kw + Wout] for kw in range(KW)], axis=-1)  # (N,Cin,H,Wout,KW)
    patches = cols.transpose(0, 2, 3, 1, 4).reshape(P, Cin * KW)               # (P, 9)
    w_mat = conv_w.reshape(Cout, Cin * KW).T                                   # (9, 64), tiny

    conv_bn = pl.pallas_call(
        conv_bn_kernel,
        out_shape=jax.ShapeDtypeStruct((P, Cout), jnp.float32),
        grid=(1,),
        in_specs=[
            pl.BlockSpec((P, Cin * KW), lambda i: (0, 0)),
            pl.BlockSpec((Cin * KW, Cout), lambda i: (0, 0)),
            pl.BlockSpec((1, Cout), lambda i: (0, 0)),
            pl.BlockSpec((1, Cout), lambda i: (0, 0)),
        ],
        out_specs=pl.BlockSpec((P, Cout), lambda i: (0, 0)),
        compiler_params=pltpu.CompilerParams(dimension_semantics=("arbitrary",)),
    )(patches, w_mat, gamma.reshape(1, Cout), beta.reshape(1, Cout))

    # conv_bn rows are (n, h, w), cols are c.  The Linear weight columns were
    # pre-permuted to the same (h, w, c) order, so this reshape is contiguous
    # (a free bitcast) -- no relayout between the two kernels.
    feat = conv_bn.reshape(N, H * Wout * Cout)                                 # (N, 65536)
    K = feat.shape[1]
    Nout = lin_w_perm.shape[0]

    assert K % tk == 0
    out = pl.pallas_call(
        linear_relu_kernel,
        out_shape=jax.ShapeDtypeStruct((N, Nout), jnp.float32),
        grid=(K // tk,),
        in_specs=[
            pl.BlockSpec((N, tk), lambda k: (0, k)),        # activation tile
            pl.BlockSpec((Nout, tk), lambda k: (0, k)),     # native-layout weight tile
            pl.BlockSpec((1, Nout), lambda k: (0, 0)),      # bias (DMA'd once)
        ],
        out_specs=pl.BlockSpec((N, Nout), lambda k: (0, 0)),
        compiler_params=pltpu.CompilerParams(dimension_semantics=("arbitrary",)),
    )(feat, lin_w_perm, lin_b.reshape(1, Nout))
    return out


# --------------------- Pure-JAX reference ------------------------------------------
def reference_forward(x, conv_w, conv_b, gamma, beta, lin_w, lin_b):
    conv = jax.lax.conv_general_dilated(
        x, conv_w, window_strides=(1, 1), padding="VALID",
        dimension_numbers=("NCHW", "OIHW", "NCHW"),
        precision=jax.lax.Precision.HIGHEST,
        preferred_element_type=jnp.float32) + conv_b[None, :, None, None]
    mean = conv.mean(axis=(0, 2, 3), keepdims=True)
    var = conv.var(axis=(0, 2, 3), keepdims=True)   # biased (train-mode BN)
    bn = (conv - mean) / jnp.sqrt(var + EPS) * gamma[None, :, None, None] \
         + beta[None, :, None, None]
    flat = bn.reshape(x.shape[0], -1)
    y = jnp.dot(flat, lin_w.T, precision=jax.lax.Precision.HIGHEST,
                preferred_element_type=jnp.float32) + lin_b[None, :]
    return jnp.maximum(y, 0.0)


if __name__ == "__main__":
    key = jax.random.PRNGKey(0)
    k_x, k_cw, k_cb, k_lw, k_lb = jax.random.split(key, 5)

    N, Cin, H, Win = 2, 3, 32, 34          # conv out (N, 64, 32, 32); flatten = 65536
    Cout, Nout = 64, 13
    Wout = Win - 2

    x = jax.random.normal(k_x, (N, Cin, H, Win), dtype=jnp.float32)
    conv_w = jax.random.normal(k_cw, (Cout, Cin, 1, 3), dtype=jnp.float32) * 0.2
    conv_b = jax.random.normal(k_cb, (Cout,), dtype=jnp.float32) * 0.1
    gamma = jnp.ones((Cout,), dtype=jnp.float32)    # BatchNorm2d default init
    beta = jnp.zeros((Cout,), dtype=jnp.float32)
    lin_w = jax.random.normal(k_lw, (Nout, Cout * H * Wout), dtype=jnp.float32) * 0.01
    lin_b = jax.random.normal(k_lb, (Nout,), dtype=jnp.float32) * 0.1

    # One-time param prep (outside the jitted forward).
    lin_w_perm = jax.block_until_ready(prepare_linear_weight(lin_w, Cout, H, Wout))

    fwd = jax.jit(model_forward)
    out = fwd(x, conv_w, gamma, beta, lin_w_perm, lin_b)
    out = jax.block_until_ready(out)

    ref = jax.block_until_ready(
        reference_forward(x, conv_w, conv_b, gamma, beta, lin_w, lin_b))
    np.testing.assert_allclose(np.asarray(out), np.asarray(ref), rtol=2e-3, atol=2e-3)

    print("KERNEL_OK")
</pallas_src>

<mosaic_0001>
module attributes {stable_mosaic.version = 11 : i64} {
  func.func @conv_bn_kernel(%arg0: i32, %arg1: memref<2048x9xf32, #tpu.memory_space<vmem>>, %arg2: memref<9x64xf32, #tpu.memory_space<vmem>>, %arg3: memref<1x64xf32, #tpu.memory_space<vmem>>, %arg4: memref<1x64xf32, #tpu.memory_space<vmem>>, %arg5: memref<2048x64xf32, #tpu.memory_space<vmem>>) attributes {dimension_semantics = [#tpu.dimension_semantics<arbitrary>], iteration_bounds = array<i64: 1>, scalar_prefetch = 0 : i64, scratch_operands = 0 : i64, tpu.core_type = #tpu.core_type<tc>, window_params = [{pipeline_mode = #tpu.pipeline_mode<synchronous>, transform_indices = @transform_0, window_bounds = array<i64: 2048, 9>}, {pipeline_mode = #tpu.pipeline_mode<synchronous>, transform_indices = @transform_1, window_bounds = array<i64: 9, 64>}, {pipeline_mode = #tpu.pipeline_mode<synchronous>, transform_indices = @transform_2, window_bounds = array<i64: 1, 64>}, {pipeline_mode = #tpu.pipeline_mode<synchronous>, transform_indices = @transform_3, window_bounds = array<i64: 1, 64>}, {pipeline_mode = #tpu.pipeline_mode<synchronous>, transform_indices = @transform_4, window_bounds = array<i64: 2048, 64>}]} {
    %c0 = arith.constant 0 : index
    %c0_0 = arith.constant 0 : index
    %0 = vector.load %arg1[%c0, %c0_0] : memref<2048x9xf32, #tpu.memory_space<vmem>>, vector<2048x9xf32>
    %c0_1 = arith.constant 0 : index
    %c0_2 = arith.constant 0 : index
    %1 = vector.load %arg2[%c0_1, %c0_2] : memref<9x64xf32, #tpu.memory_space<vmem>>, vector<9x64xf32>
    %cst = arith.constant dense<0.000000e+00> : vector<2048x64xf32>
    %2 = tpu.matmul %0, %1, %cst {dimension_numbers = #tpu.dot_dimension_numbers<[1], [0], [0], [1], [0, 0, 1, 1], [], []>} : vector<2048x9xf32>, vector<9x64xf32>, vector<2048x64xf32> -> vector<2048x64xf32>
    %cst_3 = arith.constant dense<0.000000e+00> : vector<64xf32>
    %3 = vector.multi_reduction <add>, %2, %cst_3 [0] : vector<2048x64xf32> to vector<64xf32>
    %4 = vector.shape_cast %3 : vector<64xf32> to vector<1x64xf32>
    %cst_4 = arith.constant 2.048000e+03 : f32
    %5 = vector.broadcast %cst_4 : f32 to vector<1x64xf32>
    %6 = arith.divf %4, %5 : vector<1x64xf32>
    %7 = vector.broadcast %6 : vector<1x64xf32> to vector<2048x64xf32>
    %8 = arith.subf %2, %7 : vector<2048x64xf32>
    %9 = arith.mulf %8, %8 : vector<2048x64xf32>
    %cst_5 = arith.constant dense<0.000000e+00> : vector<64xf32>
    %10 = vector.multi_reduction <add>, %9, %cst_5 [0] : vector<2048x64xf32> to vector<64xf32>
    %11 = vector.shape_cast %10 : vector<64xf32> to vector<1x64xf32>
    %cst_6 = arith.constant 2.048000e+03 : f32
    %12 = vector.broadcast %cst_6 : f32 to vector<1x64xf32>
    %13 = arith.divf %11, %12 : vector<1x64xf32>
    %cst_7 = arith.constant 9.99999974E-6 : f32
    %14 = vector.broadcast %cst_7 : f32 to vector<1x64xf32>
    %15 = arith.addf %13, %14 : vector<1x64xf32>
    %16 = math.rsqrt %15 : vector<1x64xf32>
    %17 = vector.broadcast %6 : vector<1x64xf32> to vector<2048x64xf32>
    %18 = arith.subf %2, %17 : vector<2048x64xf32>
    %19 = vector.broadcast %16 : vector<1x64xf32> to vector<2048x64xf32>
    %20 = arith.mulf %18, %19 : vector<2048x64xf32>
    %c0_8 = arith.constant 0 : index
    %c0_9 = arith.constant 0 : index
    %21 = vector.load %arg3[%c0_8, %c0_9] : memref<1x64xf32, #tpu.memory_space<vmem>>, vector<1x64xf32>
    %22 = vector.broadcast %21 : vector<1x64xf32> to vector<2048x64xf32>
    %23 = arith.mulf %20, %22 : vector<2048x64xf32>
    %c0_10 = arith.constant 0 : index
    %c0_11 = arith.constant 0 : index
    %24 = vector.load %arg4[%c0_10, %c0_11] : memref<1x64xf32, #tpu.memory_space<vmem>>, vector<1x64xf32>
    %25 = vector.broadcast %24 : vector<1x64xf32> to vector<2048x64xf32>
    %26 = arith.addf %23, %25 : vector<2048x64xf32>
    %c0_12 = arith.constant 0 : index
    %c0_13 = arith.constant 0 : index
    %27 = vector.load %arg5[%c0_12, %c0_13] : memref<2048x64xf32, #tpu.memory_space<vmem>>, vector<2048x64xf32>
    tpu.vector_store %arg5[%c0_12, %c0_13], %26 {strides = array<i32>} : memref<2048x64xf32, #tpu.memory_space<vmem>>, vector<2048x64xf32>,
    return
  }
  func.func @transform_0(%arg0: i32) -> (i32, i32) {
    %c0_i32 = arith.constant 0 : i32
    %c0_i32_0 = arith.constant 0 : i32
    %c0_i32_1 = arith.constant 0 : i32
    return %c0_i32, %c0_i32_0 : i32, i32
  }
  func.func @transform_1(%arg0: i32) -> (i32, i32) {
    %c0_i32 = arith.constant 0 : i32
    %c0_i32_0 = arith.constant 0 : i32
    %c0_i32_1 = arith.constant 0 : i32
    return %c0_i32, %c0_i32_0 : i32, i32
  }
  func.func @transform_2(%arg0: i32) -> (i32, i32) {
    %c0_i32 = arith.constant 0 : i32
    %c0_i32_0 = arith.constant 0 : i32
    %c0_i32_1 = arith.constant 0 : i32
    return %c0_i32, %c0_i32_0 : i32, i32
  }
  func.func @transform_3(%arg0: i32) -> (i32, i32) {
    %c0_i32 = arith.constant 0 : i32
    %c0_i32_0 = arith.constant 0 : i32
    %c0_i32_1 = arith.constant 0 : i32
    return %c0_i32, %c0_i32_0 : i32, i32
  }
  func.func @transform_4(%arg0: i32) -> (i32, i32) {
    %c0_i32 = arith.constant 0 : i32
    %c0_i32_0 = arith.constant 0 : i32
    %c0_i32_1 = arith.constant 0 : i32
    return %c0_i32, %c0_i32_0 : i32, i32
  }
}

module attributes {stable_mosaic.version = 11 : i64} {
  func.func @linear_relu_kernel(%arg0: i32, %arg1: memref<2x16384xf32, #tpu.memory_space<vmem>>, %arg2: memref<13x16384xf32, #tpu.memory_space<vmem>>, %arg3: memref<1x13xf32, #tpu.memory_space<vmem>>, %arg4: memref<2x13xf32, #tpu.memory_space<vmem>>) attributes {dimension_semantics = [#tpu.dimension_semantics<arbitrary>], iteration_bounds = array<i64: 4>, scalar_prefetch = 0 : i64, scratch_operands = 0 : i64, tpu.core_type = #tpu.core_type<tc>, window_params = [{transform_indices = @transform_0, window_bounds = array<i64: 2, 16384>}, {transform_indices = @transform_1, window_bounds = array<i64: 13, 16384>}, {pipeline_mode = #tpu.pipeline_mode<synchronous>, transform_indices = @transform_2, window_bounds = array<i64: 1, 13>}, {pipeline_mode = #tpu.pipeline_mode<synchronous>, transform_indices = @transform_3, window_bounds = array<i64: 2, 13>}]} {
    %c0_i32 = arith.constant 0 : i32
    %0 = arith.cmpi eq, %arg0, %c0_i32 : i32
    %1 = arith.extui %0 : i1 to i32
    %c0_i32_0 = arith.constant 0 : i32
    %2 = arith.cmpi ne, %1, %c0_i32_0 : i32
    scf.if %2 {
      %c0_9 = arith.constant 0 : index
      %c0_10 = arith.constant 0 : index
      %12 = vector.load %arg3[%c0_9, %c0_10] : memref<1x13xf32, #tpu.memory_space<vmem>>, vector<1x13xf32>
      %13 = vector.shape_cast %12 : vector<1x13xf32> to vector<1x13xf32>
      %14 = vector.broadcast %13 : vector<1x13xf32> to vector<2x13xf32>
      %c0_11 = arith.constant 0 : index
      %c0_12 = arith.constant 0 : index
      %15 = vector.load %arg4[%c0_11, %c0_12] : memref<2x13xf32, #tpu.memory_space<vmem>>, vector<2x13xf32>
      tpu.vector_store %arg4[%c0_11, %c0_12], %14 {strides = array<i32>} : memref<2x13xf32, #tpu.memory_space<vmem>>, vector<2x13xf32>,
    } else {
    }
    %c0 = arith.constant 0 : index
    %c0_1 = arith.constant 0 : index
    %3 = vector.load %arg4[%c0, %c0_1] : memref<2x13xf32, #tpu.memory_space<vmem>>, vector<2x13xf32>
    %c0_2 = arith.constant 0 : index
    %c0_3 = arith.constant 0 : index
    %4 = vector.load %arg1[%c0_2, %c0_3] : memref<2x16384xf32, #tpu.memory_space<vmem>>, vector<2x16384xf32>
    %c0_4 = arith.constant 0 : index
    %c0_5 = arith.constant 0 : index
    %5 = vector.load %arg2[%c0_4, %c0_5] : memref<13x16384xf32, #tpu.memory_space<vmem>>, vector<13x16384xf32>
    %cst = arith.constant dense<0.000000e+00> : vector<2x13xf32>
    %6 = tpu.matmul %4, %5, %cst {dimension_numbers = #tpu.dot_dimension_numbers<[1], [1], [0], [0], [0, 0, 1, 0], [], []>} : vector<2x16384xf32>, vector<13x16384xf32>, vector<2x13xf32> -> vector<2x13xf32>
    %7 = arith.addf %3, %6 : vector<2x13xf32>
    %c0_6 = arith.constant 0 : index
    %c0_7 = arith.constant 0 : index
    %8 = vector.load %arg4[%c0_6, %c0_7] : memref<2x13xf32, #tpu.memory_space<vmem>>, vector<2x13xf32>
    tpu.vector_store %arg4[%c0_6, %c0_7], %7 {strides = array<i32>} : memref<2x13xf32, #tpu.memory_space<vmem>>, vector<2x13xf32>,
    %c3_i32 = arith.constant 3 : i32
    %9 = arith.cmpi eq, %arg0, %c3_i32 : i32
    %10 = arith.extui %9 : i1 to i32
    %c0_i32_8 = arith.constant 0 : i32
    %11 = arith.cmpi ne, %10, %c0_i32_8 : i32
    scf.if %11 {
      %c0_9 = arith.constant 0 : index
      %c0_10 = arith.constant 0 : index
      %12 = vector.load %arg4[%c0_9, %c0_10] : memref<2x13xf32, #tpu.memory_space<vmem>>, vector<2x13xf32>
      %cst_11 = arith.constant 0.000000e+00 : f32
      %13 = vector.broadcast %cst_11 : f32 to vector<2x13xf32>
      %14 = arith.maximumf %12, %13 : vector<2x13xf32>
      %c0_12 = arith.constant 0 : index
      %c0_13 = arith.constant 0 : index
      %15 = vector.load %arg4[%c0_12, %c0_13] : memref<2x13xf32, #tpu.memory_space<vmem>>, vector<2x13xf32>
      tpu.vector_store %arg4[%c0_12, %c0_13], %14 {strides = array<i32>} : memref<2x13xf32, #tpu.memory_space<vmem>>, vector<2x13xf32>,
    } else {
    }
    return
  }
  func.func @transform_0(%arg0: i32) -> (i32, i32) {
    %c0_i32 = arith.constant 0 : i32
    %c0_i32_0 = arith.constant 0 : i32
    return %c0_i32, %arg0 : i32, i32
  }
  func.func @transform_1(%arg0: i32) -> (i32, i32) {
    %c0_i32 = arith.constant 0 : i32
    %c0_i32_0 = arith.constant 0 : i32
    return %c0_i32, %arg0 : i32, i32
  }
  func.func @transform_2(%arg0: i32) -> (i32, i32) {
    %c0_i32 = arith.constant 0 : i32
    %c0_i32_0 = arith.constant 0 : i32
    %c0_i32_1 = arith.constant 0 : i32
    return %c0_i32, %c0_i32_0 : i32, i32
  }
  func.func @transform_3(%arg0: i32) -> (i32, i32) {
    %c0_i32 = arith.constant 0 : i32
    %c0_i32_0 = arith.constant 0 : i32
    %c0_i32_1 = arith.constant 0 : i32
    return %c0_i32, %c0_i32_0 : i32, i32
  }
}

</mosaic_0001>

<llo_original>
// kernel: model_forward.2
$region0: #{model_forward.2}
  #allocation0 [shape = 'u32[]', space=smem, size = 0x4, offset = 0x4, fixed_abs, tag = 'smem constant byte address 0x4 - core index']
  #allocation1 [shape = 'u32[144,128]{1,0:T(1,128)}', space=vmem, size = 0x12000, scoped, tag = 'internal scratch']
  %s0 = inlined_call_operand.vmem [shape: f32[2048,9], index: 0, kind: input, shape index: {}]
  %s1 = inlined_call_operand.vmem [shape: f32[9,64], index: 1, kind: input, shape index: {}]
  %s2 = inlined_call_operand.hbm [shape: f32[1,64], index: 2, kind: input, shape index: {}]
  %s3 = inlined_call_operand.hbm [shape: f32[1,64], index: 3, kind: input, shape index: {}]
  %s4 = inlined_call_operand.vmem [shape: f32[2048,64], index: 4, kind: output, shape index: {}]
  %s5 = sld [smem:[#allocation0]]
  $region34: #{model_forward.2} parent=0
    _
  %s7 = ssub.s32 1, %s5
  %s8 = scalar_select 0, %s7, %s5
  $region1: #{model_forward.2} parent=0
    #allocation2 [shape = 'u8[512]{0}', space=vmem, size = 0x400, scoped, tag = 'input window, operand 2, single buffered']
    #allocation3 [shape = 's32[1]{0}', space=sflag, size = 0x4, scoped, tag = 'scoped memory for model_forward.2']
    #allocation4 [shape = 'u8[512]{0}', space=vmem, size = 0x400, scoped, tag = 'input window, operand 3, single buffered']
    #allocation5 [shape = 's32[1]{0}', space=sflag, size = 0x4, scoped, tag = 'scoped memory for model_forward.2']
    %9 = vsyncpa [#allocation3], 0
    %10 = vsyncpa [#allocation5], 0
    // Predicated region
    $region2: #{model_forward.2} parent=1 // pred_check
      _
    $region3: #{model_forward.2} parent=1 // pred_check_branch
      %12 = sbr.rel (0) target = $region5
    $region4: #{model_forward.2} parent=1 // pred_region
      _
    $region5: #{model_forward.2} parent=1 // pred_fallthru
      _
    // Predicated region
    $region6: #{model_forward.2} parent=1 // pred_check
      _
    $region7: #{model_forward.2} parent=1 // pred_check_branch
      %14 = sbr.rel (0) target = $region9
    $region8: #{model_forward.2} parent=1 // pred_region
      _
    $region9: #{model_forward.2} parent=1 // pred_fallthru
      _
    // Predicated region
    $region10: #{model_forward.2} parent=1 // pred_check
      _
    $region11: #{model_forward.2} parent=1 // pred_check_branch
      %16 = sbr.rel (0) target = $region13
    $region12: #{model_forward.2} parent=1 // pred_region
      %s18 = ssub.s32 16, 16
      %19 = vsyncadd [#allocation3], %s18
      %s21 = sshll.u32 [#allocation2], 4
      %s22 = int_to_ptr.vmem [resolvable:$true] %s21
      %24 = dma.hbm_to_vmem [thread:$0]  %s2, 16, %s22, [#allocation3]
    $region13: #{model_forward.2} parent=1 // pred_fallthru
      _
    // Predicated region
    $region14: #{model_forward.2} parent=1 // pred_check
      _
    $region15: #{model_forward.2} parent=1 // pred_check_branch
      %26 = sbr.rel (0) target = $region17
    $region16: #{model_forward.2} parent=1 // pred_region
      %s28 = ssub.s32 16, 16
      %29 = vsyncadd [#allocation5], %s28
      %s31 = sshll.u32 [#allocation4], 4
      %s32 = int_to_ptr.vmem [resolvable:$true] %s31
      %34 = dma.hbm_to_vmem [thread:$0]  %s3, 16, %s32, [#allocation5]
    $region17: #{model_forward.2} parent=1 // pred_fallthru
      _
    // Predicated region
    $region18: #{model_forward.2} parent=1 // pred_check
      _
    $region19: #{model_forward.2} parent=1 // pred_check_branch
      %36 = sbr.rel (0) target = $region21
    $region20: #{model_forward.2} parent=1 // pred_region
      %37 = dma.done [#allocation3], 16
    $region21: #{model_forward.2} parent=1 // pred_fallthru
      _
    // Predicated region
    $region22: #{model_forward.2} parent=1 // pred_check
      _
    $region23: #{model_forward.2} parent=1 // pred_check_branch
      %39 = sbr.rel (0) target = $region25
    $region24: #{model_forward.2} parent=1 // pred_region
      %40 = dma.done [#allocation5], 16
    $region25: #{model_forward.2} parent=1 // pred_fallthru
      _
    %v41 = vld [vmem:[%s0] sm:$0xff]
    %v42 = vld [vmem:[%s0 + $0x8] sm:$0xff]
    %v43 = vld [vmem:[%s0 + $0x10] sm:$0xff]
    %v44 = vld [vmem:[%s0 + $0x18] sm:$0xff]
    %v45 = vld [vmem:[%s0 + $0x20] sm:$0xff]
    %v46 = vld [vmem:[%s0 + $0x28] sm:$0xff]
    %v47 = vld [vmem:[%s0 + $0x30] sm:$0xff]
    %v48 = vld [vmem:[%s0 + $0x38] sm:$0xff]
    %v49 = vld [vmem:[%s0 + $0x40] sm:$0xff]
    %v50 = vld [vmem:[%s0 + $0x48] sm:$0xff]
    %v51 = vld [vmem:[%s0 + $0x50] sm:$0xff]
    %v52 = vld [vmem:[%s0 + $0x58] sm:$0xff]
    %v53 = vld [vmem:[%s0 + $0x60] sm:$0xff]
    %v54 = vld [vmem:[%s0 + $0x68] sm:$0xff]
    %v55 = vld [vmem:[%s0 + $0x70] sm:$0xff]
    %v56 = vld [vmem:[%s0 + $0x78] sm:$0xff]
    %v57 = vld [vmem:[%s0 + $0x80] sm:$0xff]
    %v58 = vld [vmem:[%s0 + $0x88] sm:$0xff]
    %v59 = vld [vmem:[%s0 + $0x90] sm:$0xff]
    %v60 = vld [vmem:[%s0 + $0x98] sm:$0xff]
    %v61 = vld [vmem:[%s0 + $0xa0] sm:$0xff]
    %v62 = vld [vmem:[%s0 + $0xa8] sm:$0xff]
    %v63 = vld [vmem:[%s0 + $0xb0] sm:$0xff]
    %v64 = vld [vmem:[%s0 + $0xb8] sm:$0xff]
    %v65 = vld [vmem:[%s0 + $0xc0] sm:$0xff]
    %v66 = vld [vmem:[%s0 + $0xc8] sm:$0xff]
    %v67 = vld [vmem:[%s0 + $0xd0] sm:$0xff]
    %v68 = vld [vmem:[%s0 + $0xd8] sm:$0xff]
    %v69 = vld [vmem:[%s0 + $0xe0] sm:$0xff]
    %v70 = vld [vmem:[%s0 + $0xe8] sm:$0xff]
    %v71 = vld [vmem:[%s0 + $0xf0] sm:$0xff]
    %v72 = vld [vmem:[%s0 + $0xf8] sm:$0xff]
    %v73 = vld [vmem:[%s0 + $0x100] sm:$0xff]
    %v74 = vld [vmem:[%s0 + $0x108] sm:$0xff]
    %v75 = vld [vmem:[%s0 + $0x110] sm:$0xff]
    %v76 = vld [vmem:[%s0 + $0x118] sm:$0xff]
    %v77 = vld [vmem:[%s0 + $0x120] sm:$0xff]
    %v78 = vld [vmem:[%s0 + $0x128] sm:$0xff]
    %v79 = vld [vmem:[%s0 + $0x130] sm:$0xff]
    %v80 = vld [vmem:[%s0 + $0x138] sm:$0xff]
    %v81 = vld [vmem:[%s0 + $0x140] sm:$0xff]
    %v82 = vld [vmem:[%s0 + $0x148] sm:$0xff]
    %v83 = vld [vmem:[%s0 + $0x150] sm:$0xff]
    %v84 = vld [vmem:[%s0 + $0x158] sm:$0xff]
    %v85 = vld [vmem:[%s0 + $0x160] sm:$0xff]
    %v86 = vld [vmem:[%s0 + $0x168] sm:$0xff]
    %v87 = vld [vmem:[%s0 + $0x170] sm:$0xff]
    %v88 = vld [vmem:[%s0 + $0x178] sm:$0xff]
    %v89 = vld [vmem:[%s0 + $0x180] sm:$0xff]
    %v90 = vld [vmem:[%s0 + $0x188] sm:$0xff]
    %v91 = vld [vmem:[%s0 + $0x190] sm:$0xff]
    %v92 = vld [vmem:[%s0 + $0x198] sm:$0xff]
    %v93 = vld [vmem:[%s0 + $0x1a0] sm:$0xff]
    %v94 = vld [vmem:[%s0 + $0x1a8] sm:$0xff]
    %v95 = vld [vmem:[%s0 + $0x1b0] sm:$0xff]
    %v96 = vld [vmem:[%s0 + $0x1b8] sm:$0xff]
    %v97 = vld [vmem:[%s0 + $0x1c0] sm:$0xff]
    %v98 = vld [vmem:[%s0 + $0x1c8] sm:$0xff]
    %v99 = vld [vmem:[%s0 + $0x1d0] sm:$0xff]
    %v100 = vld [vmem:[%s0 + $0x1d8] sm:$0xff]
    %v101 = vld [vmem:[%s0 + $0x1e0] sm:$0xff]
    %v102 = vld [vmem:[%s0 + $0x1e8] sm:$0xff]
    %v103 = vld [vmem:[%s0 + $0x1f0] sm:$0xff]
    %v104 = vld [vmem:[%s0 + $0x1f8] sm:$0xff]
    %v105 = vld [vmem:[%s0 + $0x200] sm:$0xff]
    %v106 = vld [vmem:[%s0 + $0x208] sm:$0xff]
    %v107 = vld [vmem:[%s0 + $0x210] sm:$0xff]
    %v108 = vld [vmem:[%s0 + $0x218] sm:$0xff]
    %v109 = vld [vmem:[%s0 + $0x220] sm:$0xff]
    %v110 = vld [vmem:[%s0 + $0x228] sm:$0xff]
    %v111 = vld [vmem:[%s0 + $0x230] sm:$0xff]
    %v112 = vld [vmem:[%s0 + $0x238] sm:$0xff]
    %v113 = vld [vmem:[%s0 + $0x240] sm:$0xff]
    %v114 = vld [vmem:[%s0 + $0x248] sm:$0xff]
    %v115 = vld [vmem:[%s0 + $0x250] sm:$0xff]
    %v116 = vld [vmem:[%s0 + $0x258] sm:$0xff]
    %v117 = vld [vmem:[%s0 + $0x260] sm:$0xff]
    %v118 = vld [vmem:[%s0 + $0x268] sm:$0xff]
    %v119 = vld [vmem:[%s0 + $0x270] sm:$0xff]
    %v120 = vld [vmem:[%s0 + $0x278] sm:$0xff]
    %v121 = vld [vmem:[%s0 + $0x280] sm:$0xff]
    %v122 = vld [vmem:[%s0 + $0x288] sm:$0xff]
    %v123 = vld [vmem:[%s0 + $0x290] sm:$0xff]
    %v124 = vld [vmem:[%s0 + $0x298] sm:$0xff]
    %v125 = vld [vmem:[%s0 + $0x2a0] sm:$0xff]
    %v126 = vld [vmem:[%s0 + $0x2a8] sm:$0xff]
    %v127 = vld [vmem:[%s0 + $0x2b0] sm:$0xff]
    %v128 = vld [vmem:[%s0 + $0x2b8] sm:$0xff]
    %v129 = vld [vmem:[%s0 + $0x2c0] sm:$0xff]
    %v130 = vld [vmem:[%s0 + $0x2c8] sm:$0xff]
    %v131 = vld [vmem:[%s0 + $0x2d0] sm:$0xff]
    %v132 = vld [vmem:[%s0 + $0x2d8] sm:$0xff]
    %v133 = vld [vmem:[%s0 + $0x2e0] sm:$0xff]
    %v134 = vld [vmem:[%s0 + $0x2e8] sm:$0xff]
    %v135 = vld [vmem:[%s0 + $0x2f0] sm:$0xff]
    %v136 = vld [vmem:[%s0 + $0x2f8] sm:$0xff]
    %v137 = vld [vmem:[%s0 + $0x300] sm:$0xff]
    %v138 = vld [vmem:[%s0 + $0x308] sm:$0xff]
    %v139 = vld [vmem:[%s0 + $0x310] sm:$0xff]
    %v140 = vld [vmem:[%s0 + $0x318] sm:$0xff]
    %v141 = vld [vmem:[%s0 + $0x320] sm:$0xff]
    %v142 = vld [vmem:[%s0 + $0x328] sm:$0xff]
    %v143 = vld [vmem:[%s0 + $0x330] sm:$0xff]
    %v144 = vld [vmem:[%s0 + $0x338] sm:$0xff]
    %v145 = vld [vmem:[%s0 + $0x340] sm:$0xff]
    %v146 = vld [vmem:[%s0 + $0x348] sm:$0xff]
    %v147 = vld [vmem:[%s0 + $0x350] sm:$0xff]
    %v148 = vld [vmem:[%s0 + $0x358] sm:$0xff]
    %v149 = vld [vmem:[%s0 + $0x360] sm:$0xff]
    %v150 = vld [vmem:[%s0 + $0x368] sm:$0xff]
    %v151 = vld [vmem:[%s0 + $0x370] sm:$0xff]
    %v152 = vld [vmem:[%s0 + $0x378] sm:$0xff]
    %v153 = vld [vmem:[%s0 + $0x380] sm:$0xff]
    %v154 = vld [vmem:[%s0 + $0x388] sm:$0xff]
    %v155 = vld [vmem:[%s0 + $0x390] sm:$0xff]
    %v156 = vld [vmem:[%s0 + $0x398] sm:$0xff]
    %v157 = vld [vmem:[%s0 + $0x3a0] sm:$0xff]
    %v158 = vld [vmem:[%s0 + $0x3a8] sm:$0xff]
    %v159 = vld [vmem:[%s0 + $0x3b0] sm:$0xff]
    %v160 = vld [vmem:[%s0 + $0x3b8] sm:$0xff]
    %v161 = vld [vmem:[%s0 + $0x3c0] sm:$0xff]
    %v162 = vld [vmem:[%s0 + $0x3c8] sm:$0xff]
    %v163 = vld [vmem:[%s0 + $0x3d0] sm:$0xff]
    %v164 = vld [vmem:[%s0 + $0x3d8] sm:$0xff]
    %v165 = vld [vmem:[%s0 + $0x3e0] sm:$0xff]
    %v166 = vld [vmem:[%s0 + $0x3e8] sm:$0xff]
    %v167 = vld [vmem:[%s0 + $0x3f0] sm:$0xff]
    %v168 = vld [vmem:[%s0 + $0x3f8] sm:$0xff]
    %v169 = vld [vmem:[%s0 + $0x400] sm:$0xff]
    %v170 = vld [vmem:[%s0 + $0x408] sm:$0xff]
    %v171 = vld [vmem:[%s0 + $0x410] sm:$0xff]
    %v172 = vld [vmem:[%s0 + $0x418] sm:$0xff]
    %v173 = vld [vmem:[%s0 + $0x420] sm:$0xff]
    %v174 = vld [vmem:[%s0 + $0x428] sm:$0xff]
    %v175 = vld [vmem:[%s0 + $0x430] sm:$0xff]
    %v176 = vld [vmem:[%s0 + $0x438] sm:$0xff]
    %v177 = vld [vmem:[%s0 + $0x440] sm:$0xff]
    %v178 = vld [vmem:[%s0 + $0x448] sm:$0xff]
    %v179 = vld [vmem:[%s0 + $0x450] sm:$0xff]
    %v180 = vld [vmem:[%s0 + $0x458] sm:$0xff]
    %v181 = vld [vmem:[%s0 + $0x460] sm:$0xff]
    %v182 = vld [vmem:[%s0 + $0x468] sm:$0xff]
    %v183 = vld [vmem:[%s0 + $0x470] sm:$0xff]
    %v184 = vld [vmem:[%s0 + $0x478] sm:$0xff]
    %v185 = vld [vmem:[%s0 + $0x480] sm:$0xff]
    %v186 = vld [vmem:[%s0 + $0x488] sm:$0xff]
    %v187 = vld [vmem:[%s0 + $0x490] sm:$0xff]
    %v188 = vld [vmem:[%s0 + $0x498] sm:$0xff]
    %v189 = vld [vmem:[%s0 + $0x4a0] sm:$0xff]
    %v190 = vld [vmem:[%s0 + $0x4a8] sm:$0xff]
    %v191 = vld [vmem:[%s0 + $0x4b0] sm:$0xff]
    %v192 = vld [vmem:[%s0 + $0x4b8] sm:$0xff]
    %v193 = vld [vmem:[%s0 + $0x4c0] sm:$0xff]
    %v194 = vld [vmem:[%s0 + $0x4c8] sm:$0xff]
    %v195 = vld [vmem:[%s0 + $0x4d0] sm:$0xff]
    %v196 = vld [vmem:[%s0 + $0x4d8] sm:$0xff]
    %v197 = vld [vmem:[%s0 + $0x4e0] sm:$0xff]
    %v198 = vld [vmem:[%s0 + $0x4e8] sm:$0xff]
    %v199 = vld [vmem:[%s0 + $0x4f0] sm:$0xff]
    %v200 = vld [vmem:[%s0 + $0x4f8] sm:$0xff]
    %v201 = vld [vmem:[%s0 + $0x500] sm:$0xff]
    %v202 = vld [vmem:[%s0 + $0x508] sm:$0xff]
    %v203 = vld [vmem:[%s0 + $0x510] sm:$0xff]
    %v204 = vld [vmem:[%s0 + $0x518] sm:$0xff]
    %v205 = vld [vmem:[%s0 + $0x520] sm:$0xff]
    %v206 = vld [vmem:[%s0 + $0x528] sm:$0xff]
    %v207 = vld [vmem:[%s0 + $0x530] sm:$0xff]
    %v208 = vld [vmem:[%s0 + $0x538] sm:$0xff]
    %v209 = vld [vmem:[%s0 + $0x540] sm:$0xff]
    %v210 = vld [vmem:[%s0 + $0x548] sm:$0xff]
    %v211 = vld [vmem:[%s0 + $0x550] sm:$0xff]
    %v212 = vld [vmem:[%s0 + $0x558] sm:$0xff]
    %v213 = vld [vmem:[%s0 + $0x560] sm:$0xff]
    %v214 = vld [vmem:[%s0 + $0x568] sm:$0xff]
    %v215 = vld [vmem:[%s0 + $0x570] sm:$0xff]
    %v216 = vld [vmem:[%s0 + $0x578] sm:$0xff]
    %v217 = vld [vmem:[%s0 + $0x580] sm:$0xff]
    %v218 = vld [vmem:[%s0 + $0x588] sm:$0xff]
    %v219 = vld [vmem:[%s0 + $0x590] sm:$0xff]
    %v220 = vld [vmem:[%s0 + $0x598] sm:$0xff]
    %v221 = vld [vmem:[%s0 + $0x5a0] sm:$0xff]
    %v222 = vld [vmem:[%s0 + $0x5a8] sm:$0xff]
    %v223 = vld [vmem:[%s0 + $0x5b0] sm:$0xff]
    %v224 = vld [vmem:[%s0 + $0x5b8] sm:$0xff]
    %v225 = vld [vmem:[%s0 + $0x5c0] sm:$0xff]
    %v226 = vld [vmem:[%s0 + $0x5c8] sm:$0xff]
    %v227 = vld [vmem:[%s0 + $0x5d0] sm:$0xff]
    %v228 = vld [vmem:[%s0 + $0x5d8] sm:$0xff]
    %v229 = vld [vmem:[%s0 + $0x5e0] sm:$0xff]
    %v230 = vld [vmem:[%s0 + $0x5e8] sm:$0xff]
    %v231 = vld [vmem:[%s0 + $0x5f0] sm:$0xff]
    %v232 = vld [vmem:[%s0 + $0x5f8] sm:$0xff]
    %v233 = vld [vmem:[%s0 + $0x600] sm:$0xff]
    %v234 = vld [vmem:[%s0 + $0x608] sm:$0xff]
    %v235 = vld [vmem:[%s0 + $0x610] sm:$0xff]
    %v236 = vld [vmem:[%s0 + $0x618] sm:$0xff]
    %v237 = vld [vmem:[%s0 + $0x620] sm:$0xff]
    %v238 = vld [vmem:[%s0 + $0x628] sm:$0xff]
    %v239 = vld [vmem:[%s0 + $0x630] sm:$0xff]
    %v240 = vld [vmem:[%s0 + $0x638] sm:$0xff]
    %v241 = vld [vmem:[%s0 + $0x640] sm:$0xff]
    %v242 = vld [vmem:[%s0 + $0x648] sm:$0xff]
    %v243 = vld [vmem:[%s0 + $0x650] sm:$0xff]
    %v244 = vld [vmem:[%s0 + $0x658] sm:$0xff]
    %v245 = vld [vmem:[%s0 + $0x660] sm:$0xff]
    %v246 = vld [vmem:[%s0 + $0x668] sm:$0xff]
    %v247 = vld [vmem:[%s0 + $0x670] sm:$0xff]
    %v248 = vld [vmem:[%s0 + $0x678] sm:$0xff]
    %v249 = vld [vmem:[%s0 + $0x680] sm:$0xff]
    %v250 = vld [vmem:[%s0 + $0x688] sm:$0xff]
    %v251 = vld [vmem:[%s0 + $0x690] sm:$0xff]
    %v252 = vld [vmem:[%s0 + $0x698] sm:$0xff]
    %v253 = vld [vmem:[%s0 + $0x6a0] sm:$0xff]
    %v254 = vld [vmem:[%s0 + $0x6a8] sm:$0xff]
    %v255 = vld [vmem:[%s0 + $0x6b0] sm:$0xff]
    %v256 = vld [vmem:[%s0 + $0x6b8] sm:$0xff]
    %v257 = vld [vmem:[%s0 + $0x6c0] sm:$0xff]
    %v258 = vld [vmem:[%s0 + $0x6c8] sm:$0xff]
    %v259 = vld [vmem:[%s0 + $0x6d0] sm:$0xff]
    %v260 = vld [vmem:[%s0 + $0x6d8] sm:$0xff]
    %v261 = vld [vmem:[%s0 + $0x6e0] sm:$0xff]
    %v262 = vld [vmem:[%s0 + $0x6e8] sm:$0xff]
    %v263 = vld [vmem:[%s0 + $0x6f0] sm:$0xff]
    %v264 = vld [vmem:[%s0 + $0x6f8] sm:$0xff]
    %v265 = vld [vmem:[%s0 + $0x700] sm:$0xff]
    %v266 = vld [vmem:[%s0 + $0x708] sm:$0xff]
    %v267 = vld [vmem:[%s0 + $0x710] sm:$0xff]
    %v268 = vld [vmem:[%s0 + $0x718] sm:$0xff]
    %v269 = vld [vmem:[%s0 + $0x720] sm:$0xff]
    %v270 = vld [vmem:[%s0 + $0x728] sm:$0xff]
    %v271 = vld [vmem:[%s0 + $0x730] sm:$0xff]
    %v272 = vld [vmem:[%s0 + $0x738] sm:$0xff]
    %v273 = vld [vmem:[%s0 + $0x740] sm:$0xff]
    %v274 = vld [vmem:[%s0 + $0x748] sm:$0xff]
    %v275 = vld [vmem:[%s0 + $0x750] sm:$0xff]
    %v276 = vld [vmem:[%s0 + $0x758] sm:$0xff]
    %v277 = vld [vmem:[%s0 + $0x760] sm:$0xff]
    %v278 = vld [vmem:[%s0 + $0x768] sm:$0xff]
    %v279 = vld [vmem:[%s0 + $0x770] sm:$0xff]
    %v280 = vld [vmem:[%s0 + $0x778] sm:$0xff]
    %v281 = vld [vmem:[%s0 + $0x780] sm:$0xff]
    %v282 = vld [vmem:[%s0 + $0x788] sm:$0xff]
    %v283 = vld [vmem:[%s0 + $0x790] sm:$0xff]
    %v284 = vld [vmem:[%s0 + $0x798] sm:$0xff]
    %v285 = vld [vmem:[%s0 + $0x7a0] sm:$0xff]
    %v286 = vld [vmem:[%s0 + $0x7a8] sm:$0xff]
    %v287 = vld [vmem:[%s0 + $0x7b0] sm:$0xff]
    %v288 = vld [vmem:[%s0 + $0x7b8] sm:$0xff]
    %v289 = vld [vmem:[%s0 + $0x7c0] sm:$0xff]
    %v290 = vld [vmem:[%s0 + $0x7c8] sm:$0xff]
    %v291 = vld [vmem:[%s0 + $0x7d0] sm:$0xff]
    %v292 = vld [vmem:[%s0 + $0x7d8] sm:$0xff]
    %v293 = vld [vmem:[%s0 + $0x7e0] sm:$0xff]
    %v294 = vld [vmem:[%s0 + $0x7e8] sm:$0xff]
    %v295 = vld [vmem:[%s0 + $0x7f0] sm:$0xff]
    %v296 = vld [vmem:[%s0 + $0x7f8] sm:$0xff]
    %v297 = vld [vmem:[%s1] sm:$0xff]
    %v298 = vld [vmem:[%s1 + $0x8] sm:$0x1]
    %vm299 = vcmask 72704
    %v301 = vsel %vm299, %v41, 0
    %v304 = vsel %vm299, %v42, 0
    %v307 = vsel %vm299, %v43, 0
    %v310 = vsel %vm299, %v44, 0
    %v313 = vsel %vm299, %v45, 0
    %v316 = vsel %vm299, %v46, 0
    %v319 = vsel %vm299, %v47, 0
    %v322 = vsel %vm299, %v48, 0
    %v325 = vsel %vm299, %v49, 0
    %v328 = vsel %vm299, %v50, 0
    %v331 = vsel %vm299, %v51, 0
    %v334 = vsel %vm299, %v52, 0
    %v337 = vsel %vm299, %v53, 0
    %v340 = vsel %vm299, %v54, 0
    %v343 = vsel %vm299, %v55, 0
    %v346 = vsel %vm299, %v56, 0
    %v349 = vsel %vm299, %v57, 0
    %v352 = vsel %vm299, %v58, 0
    %v355 = vsel %vm299, %v59, 0
    %v358 = vsel %vm299, %v60, 0
    %v361 = vsel %vm299, %v61, 0
    %v364 = vsel %vm299, %v62, 0
    %v367 = vsel %vm299, %v63, 0
    %v370 = vsel %vm299, %v64, 0
    %v373 = vsel %vm299, %v65, 0
    %v376 = vsel %vm299, %v66, 0
    %v379 = vsel %vm299, %v67, 0
    %v382 = vsel %vm299, %v68, 0
    %v385 = vsel %vm299, %v69, 0
    %v388 = vsel %vm299, %v70, 0
    %v391 = vsel %vm299, %v71, 0
    %v394 = vsel %vm299, %v72, 0
    %v397 = vsel %vm299, %v73, 0
    %v400 = vsel %vm299, %v74, 0
    %v403 = vsel %vm299, %v75, 0
    %v406 = vsel %vm299, %v76, 0
    %v409 = vsel %vm299, %v77, 0
    %v412 = vsel %vm299, %v78, 0
    %v415 = vsel %vm299, %v79, 0
    %v418 = vsel %vm299, %v80, 0
    %v421 = vsel %vm299, %v81, 0
    %v424 = vsel %vm299, %v82, 0
    %v427 = vsel %vm299, %v83, 0
    %v430 = vsel %vm299, %v84, 0
    %v433 = vsel %vm299, %v85, 0
    %v436 = vsel %vm299, %v86, 0
    %v439 = vsel %vm299, %v87, 0
    %v442 = vsel %vm299, %v88, 0
    %v445 = vsel %vm299, %v89, 0
    %v448 = vsel %vm299, %v90, 0
    %v451 = vsel %vm299, %v91, 0
    %v454 = vsel %vm299, %v92, 0
    %v457 = vsel %vm299, %v93, 0
    %v460 = vsel %vm299, %v94, 0
    %v463 = vsel %vm299, %v95, 0
    %v466 = vsel %vm299, %v96, 0
    %v469 = vsel %vm299, %v97, 0
    %v472 = vsel %vm299, %v98, 0
    %v475 = vsel %vm299, %v99, 0
    %v478 = vsel %vm299, %v100, 0
    %v481 = vsel %vm299, %v101, 0
    %v484 = vsel %vm299, %v102, 0
    %v487 = vsel %vm299, %v103, 0
    %v490 = vsel %vm299, %v104, 0
    %v493 = vsel %vm299, %v105, 0
    %v496 = vsel %vm299, %v106, 0
    %v499 = vsel %vm299, %v107, 0
    %v502 = vsel %vm299, %v108, 0
    %v505 = vsel %vm299, %v109, 0
    %v508 = vsel %vm299, %v110, 0
    %v511 = vsel %vm299, %v111, 0
    %v514 = vsel %vm299, %v112, 0
    %v517 = vsel %vm299, %v113, 0
    %v520 = vsel %vm299, %v114, 0
    %v523 = vsel %vm299, %v115, 0
    %v526 = vsel %vm299, %v116, 0
    %v529 = vsel %vm299, %v117, 0
    %v532 = vsel %vm299, %v118, 0
    %v535 = vsel %vm299, %v119, 0
    %v538 = vsel %vm299, %v120, 0
    %v541 = vsel %vm299, %v121, 0
    %v544 = vsel %vm299, %v122, 0
    %v547 = vsel %vm299, %v123, 0
    %v550 = vsel %vm299, %v124, 0
    %v553 = vsel %vm299, %v125, 0
    %v556 = vsel %vm299, %v126, 0
    %v559 = vsel %vm299, %v127, 0
    %v562 = vsel %vm299, %v128, 0
    %v565 = vsel %vm299, %v129, 0
    %v568 = vsel %vm299, %v130, 0
    %v571 = vsel %vm299, %v131, 0
    %v574 = vsel %vm299, %v132, 0
    %v577 = vsel %vm299, %v133, 0
    %v580 = vsel %vm299, %v134, 0
    %v583 = vsel %vm299, %v135, 0
    %v586 = vsel %vm299, %v136, 0
    %v589 = vsel %vm299, %v137, 0
    %v592 = vsel %vm299, %v138, 0
    %v595 = vsel %vm299, %v139, 0
    %v598 = vsel %vm299, %v140, 0
    %v601 = vsel %vm299, %v141, 0
    %v604 = vsel %vm299, %v142, 0
    %v607 = vsel %vm299, %v143, 0
    %v610 = vsel %vm299, %v144, 0
    %v613 = vsel %vm299, %v145, 0
    %v616 = vsel %vm299, %v146, 0
    %v619 = vsel %vm299, %v147, 0
    %v622 = vsel %vm299, %v148, 0
    %v625 = vsel %vm299, %v149, 0
    %v628 = vsel %vm299, %v150, 0
    %v631 = vsel %vm299, %v151, 0
    %v634 = vsel %vm299, %v152, 0
    %v637 = vsel %vm299, %v153, 0
    %v640 = vsel %vm299, %v154, 0
    %v643 = vsel %vm299, %v155, 0
    %v646 = vsel %vm299, %v156, 0
    %v649 = vsel %vm299, %v157, 0
    %v652 = vsel %vm299, %v158, 0
    %v655 = vsel %vm299, %v159, 0
    %v658 = vsel %vm299, %v160, 0
    %v661 = vsel %vm299, %v161, 0
    %v664 = vsel %vm299, %v162, 0
    %v667 = vsel %vm299, %v163, 0
    %v670 = vsel %vm299, %v164, 0
    %v673 = vsel %vm299, %v165, 0
    %v676 = vsel %vm299, %v166, 0
    %v679 = vsel %vm299, %v167, 0
    %v682 = vsel %vm299, %v168, 0
    %v685 = vsel %vm299, %v169, 0
    %v688 = vsel %vm299, %v170, 0
    %v691 = vsel %vm299, %v171, 0
    %v694 = vsel %vm299, %v172, 0
    %v697 = vsel %vm299, %v173, 0
    %v700 = vsel %vm299, %v174, 0
    %v703 = vsel %vm299, %v175, 0
    %v706 = vsel %vm299, %v176, 0
    %v709 = vsel %vm299, %v177, 0
    %v712 = vsel %vm299, %v178, 0
    %v715 = vsel %vm299, %v179, 0
    %v718 = vsel %vm299, %v180, 0
    %v721 = vsel %vm299, %v181, 0
    %v724 = vsel %vm299, %v182, 0
    %v727 = vsel %vm299, %v183, 0
    %v730 = vsel %vm299, %v184, 0
    %v733 = vsel %vm299, %v185, 0
    %v736 = vsel %vm299, %v186, 0
    %v739 = vsel %vm299, %v187, 0
    %v742 = vsel %vm299, %v188, 0
    %v745 = vsel %vm299, %v189, 0
    %v748 = vsel %vm299, %v190, 0
    %v751 = vsel %vm299, %v191, 0
    %v754 = vsel %vm299, %v192, 0
    %v757 = vsel %vm299, %v193, 0
    %v760 = vsel %vm299, %v194, 0
    %v763 = vsel %vm299, %v195, 0
    %v766 = vsel %vm299, %v196, 0
    %v769 = vsel %vm299, %v197, 0
    %v772 = vsel %vm299, %v198, 0
    %v775 = vsel %vm299, %v199, 0
    %v778 = vsel %vm299, %v200, 0
    %v781 = vsel %vm299, %v201, 0
    %v784 = vsel %vm299, %v202, 0
    %v787 = vsel %vm299, %v203, 0
    %v790 = vsel %vm299, %v204, 0
    %v793 = vsel %vm299, %v205, 0
    %v796 = vsel %vm299, %v206, 0
    %v799 = vsel %vm299, %v207, 0
    %v802 = vsel %vm299, %v208, 0
    %v805 = vsel %vm299, %v209, 0
    %v808 = vsel %vm299, %v210, 0
    %v811 = vsel %vm299, %v211, 0
    %v814 = vsel %vm299, %v212, 0
    %v817 = vsel %vm299, %v213, 0
    %v820 = vsel %vm299, %v214, 0
    %v823 = vsel %vm299, %v215, 0
    %v826 = vsel %vm299, %v216, 0
    %v829 = vsel %vm299, %v217, 0
    %v832 = vsel %vm299, %v218, 0
    %v835 = vsel %vm299, %v219, 0
    %v838 = vsel %vm299, %v220, 0
    %v841 = vsel %vm299, %v221, 0
    %v844 = vsel %vm299, %v222, 0
    %v847 = vsel %vm299, %v223, 0
    %v850 = vsel %vm299, %v224, 0
    %v853 = vsel %vm299, %v225, 0
    %v856 = vsel %vm299, %v226, 0
    %v859 = vsel %vm299, %v227, 0
    %v862 = vsel %vm299, %v228, 0
    %v865 = vsel %vm299, %v229, 0
    %v868 = vsel %vm299, %v230, 0
    %v871 = vsel %vm299, %v231, 0
    %v874 = vsel %vm299, %v232, 0
    %v877 = vsel %vm299, %v233, 0
    %v880 = vsel %vm299, %v234, 0
    %v883 = vsel %vm299, %v235, 0
    %v886 = vsel %vm299, %v236, 0
    %v889 = vsel %vm299, %v237, 0
    %v892 = vsel %vm299, %v238, 0
    %v895 = vsel %vm299, %v239, 0
    %v898 = vsel %vm299, %v240, 0
    %v901 = vsel %vm299, %v241, 0
    %v904 = vsel %vm299, %v242, 0
    %v907 = vsel %vm299, %v243, 0
    %v910 = vsel %vm299, %v244, 0
    %v913 = vsel %vm299, %v245, 0
    %v916 = vsel %vm299, %v246, 0
    %v919 = vsel %vm299, %v247, 0
    %v922 = vsel %vm299, %v248, 0
    %v925 = vsel %vm299, %v249, 0
    %v928 = vsel %vm299, %v250, 0
    %v931 = vsel %vm299, %v251, 0
    %v934 = vsel %vm299, %v252, 0
    %v937 = vsel %vm299, %v253, 0
    %v940 = vsel %vm299, %v254, 0
    %v943 = vsel %vm299, %v255, 0
    %v946 = vsel %vm299, %v256, 0
    %v949 = vsel %vm299, %v257, 0
    %v952 = vsel %vm299, %v258, 0
    %v955 = vsel %vm299, %v259, 0
    %v958 = vsel %vm299, %v260, 0
    %v961 = vsel %vm299, %v261, 0
    %v964 = vsel %vm299, %v262, 0
    %v967 = vsel %vm299, %v263, 0
    %v970 = vsel %vm299, %v264, 0
    %v973 = vsel %vm299, %v265, 0
    %v976 = vsel %vm299, %v266, 0
    %v979 = vsel %vm299, %v267, 0
    %v982 = vsel %vm299, %v268, 0
    %v985 = vsel %vm299, %v269, 0
    %v988 = vsel %vm299, %v270, 0
    %v991 = vsel %vm299, %v271, 0
    %v994 = vsel %vm299, %v272, 0
    %v997 = vsel %vm299, %v273, 0
    %v1000 = vsel %vm299, %v274, 0
    %v1003 = vsel %vm299, %v275, 0
    %v1006 = vsel %vm299, %v276, 0
    %v1009 = vsel %vm299, %v277, 0
    %v1012 = vsel %vm299, %v278, 0
    %v1015 = vsel %vm299, %v279, 0
    %v1018 = vsel %vm299, %v280, 0
    %v1021 = vsel %vm299, %v281, 0
    %v1024 = vsel %vm299, %v282, 0
    %v1027 = vsel %vm299, %v283, 0
    %v1030 = vsel %vm299, %v284, 0
    %v1033 = vsel %vm299, %v285, 0
    %v1036 = vsel %vm299, %v286, 0
    %v1039 = vsel %vm299, %v287, 0
    %v1042 = vsel %vm299, %v288, 0
    %v1045 = vsel %vm299, %v289, 0
    %v1048 = vsel %vm299, %v290, 0
    %v1051 = vsel %vm299, %v291, 0
    %v1054 = vsel %vm299, %v292, 0
    %v1057 = vsel %vm299, %v293, 0
    %v1060 = vsel %vm299, %v294, 0
    %v1063 = vsel %vm299, %v295, 0
    %v1066 = vsel %vm299, %v296, 0
    %vm1068 = vcmask 1040384
    %v1070 = vsel %vm1068, %v298, 0
    %1072 = vmatprep.subr.mxu0 0.0
    %1073 = vmatpush1.msra.mxu0 %v297
    %1074 = vmatprep.subr.mxu0 0.0
    %1075 = vmatpush1.msra.mxu0 %v1070
    %1076 = vmatprep.subr.mxu0 0.0
    %1077 = vmatpush1.msra.mxu0 0.0
    %1078 = vmatprep.subr.mxu0 0.0
    %1079 = vmatpush1.msra.mxu0 0.0
    %1080 = vmatprep.subr.mxu0 0.0
    %1081 = vmatpush1.msra.mxu0 0.0
    %1082 = vmatprep.subr.mxu0 0.0
    %1083 = vmatpush1.msra.mxu0 0.0
    %1084 = vmatprep.subr.mxu0 0.0
    %1085 = vmatpush1.msra.mxu0 0.0
    %1086 = vmatprep.subr.mxu0 0.0
    %1087 = vmatpush1.msra.mxu0 0.0
    %1088 = vmatprep.subr.mxu0 0.0
    %1089 = vmatpush1.msra.mxu0 0.0
    %1090 = vmatprep.subr.mxu0 0.0
    %1091 = vmatpush1.msra.mxu0 0.0
    %1092 = vmatprep.subr.mxu0 0.0
    %1093 = vmatpush1.msra.mxu0 0.0
    %1094 = vmatprep.subr.mxu0 0.0
    %1095 = vmatpush1.msra.mxu0 0.0
    %1096 = vmatprep.subr.mxu0 0.0
    %1097 = vmatpush1.msra.mxu0 0.0
    %1098 = vmatprep.subr.mxu0 0.0
    %1099 = vmatpush1.msra.mxu0 0.0
    %1100 = vmatprep.subr.mxu0 0.0
    %1101 = vmatpush1.msra.mxu0 0.0
    %1102 = vmatprep.subr.mxu0 0.0
    %1103 = vmatpush1.msra.mxu0 0.0
    %1104 = vmatprep.subr.mxu0 0.0
    %1105 = vmatpush1.msra.mxu0 0.0
    %1106 = vmatprep.subr.mxu0 0.0
    %1107 = vmatpush1.msra.mxu0 0.0
    %1108 = vmatprep.subr.mxu0 0.0
    %1109 = vmatpush1.msra.mxu0 0.0
    %1110 = vmatprep.subr.mxu0 0.0
    %1111 = vmatpush1.msra.mxu0 0.0
    %1112 = vmatprep.subr.mxu0 0.0
    %1113 = vmatpush1.msra.mxu0 0.0
    %1114 = vmatprep.subr.mxu0 0.0
    %1115 = vmatpush1.msra.mxu0 0.0
    %1116 = vmatprep.subr.mxu0 0.0
    %1117 = vmatpush1.msra.mxu0 0.0
    %1118 = vmatprep.subr.mxu0 0.0
    %1119 = vmatpush1.msra.mxu0 0.0
    %1120 = vmatprep.subr.mxu0 0.0
    %1121 = vmatpush1.msra.mxu0 0.0
    %1122 = vmatprep.subr.mxu0 0.0
    %1123 = vmatpush1.msra.mxu0 0.0
    %1124 = vmatprep.subr.mxu0 0.0
    %1125 = vmatpush1.msra.mxu0 0.0
    %1126 = vmatprep.subr.mxu0 0.0
    %1127 = vmatpush1.msra.mxu0 0.0
    %1128 = vmatprep.subr.mxu0 0.0
    %1129 = vmatpush1.msra.mxu0 0.0
    %1130 = vmatprep.subr.mxu0 0.0
    %1131 = vmatpush1.msra.mxu0 0.0
    %1132 = vmatprep.subr.mxu0 0.0
    %1133 = vmatpush1.msra.mxu0 0.0
    %1134 = vmatprep.subr.mxu0 0.0
    %1135 = vmatpush1.msra.mxu0 0.0
    %1136 = vmatprep.mubr.f32.mxu0 0.0
    %1137 = vmatmul.mubr.f32.gmra.mrb[0].mxu0 %v301
    %v1138 = vpop.f32.mrb[0].mxu0
    %v1139 = vadd.f32 0.0, %v1138
    %v1140 = vpop.f32.mrb[0].mxu0
    %1141 = vmatprep.mubr.f32.mxu0 0.0
    %1142 = vmatmul.mubr.f32.gmra.mrb[0].mxu0 %v304
    %v1143 = vpop.f32.mrb[0].mxu0
    %v1144 = vadd.f32 0.0, %v1143
    %v1145 = vpop.f32.mrb[0].mxu0
    %1146 = vmatprep.mubr.f32.mxu0 0.0
    %1147 = vmatmul.mubr.f32.gmra.mrb[0].mxu0 %v307
    %v1148 = vpop.f32.mrb[0].mxu0
    %v1149 = vadd.f32 0.0, %v1148
    %v1150 = vpop.f32.mrb[0].mxu0
    %1151 = vmatprep.mubr.f32.mxu0 0.0
    %1152 = vmatmul.mubr.f32.gmra.mrb[0].mxu0 %v310
    %v1153 = vpop.f32.mrb[0].mxu0
    %v1154 = vadd.f32 0.0, %v1153
    %v1155 = vpop.f32.mrb[0].mxu0
    %1156 = vmatprep.mubr.f32.mxu0 0.0
    %1157 = vmatmul.mubr.f32.gmra.mrb[0].mxu0 %v313
    %v1158 = vpop.f32.mrb[0].mxu0
    %v1159 = vadd.f32 0.0, %v1158
    %v1160 = vpop.f32.mrb[0].mxu0
    %1161 = vmatprep.mubr.f32.mxu0 0.0
    %1162 = vmatmul.mubr.f32.gmra.mrb[0].mxu0 %v316
    %v1163 = vpop.f32.mrb[0].mxu0
    %v1164 = vadd.f32 0.0, %v1163
    %v1165 = vpop.f32.mrb[0].mxu0
    %1166 = vmatprep.mubr.f32.mxu0 0.0
    %1167 = vmatmul.mubr.f32.gmra.mrb[0].mxu0 %v319
    %v1168 = vpop.f32.mrb[0].mxu0
    %v1169 = vadd.f32 0.0, %v1168
    %v1170 = vpop.f32.mrb[0].mxu0
    %1171 = vmatprep.mubr.f32.mxu0 0.0
    %1172 = vmatmul.mubr.f32.gmra.mrb[0].mxu0 %v322
    %v1173 = vpop.f32.mrb[0].mxu0
    %v1174 = vadd.f32 0.0, %v1173
    %v1175 = vpop.f32.mrb[0].mxu0
    %1176 = vmatprep.mubr.f32.mxu0 0.0
    %1177 = vmatmul.mubr.f32.gmra.mrb[0].mxu0 %v325
    %v1178 = vpop.f32.mrb[0].mxu0
    %v1179 = vadd.f32 0.0, %v1178
    %v1180 = vpop.f32.mrb[0].mxu0
    %1181 = vmatprep.mubr.f32.mxu0 0.0
    %1182 = vmatmul.mubr.f32.gmra.mrb[0].mxu0 %v328
    %v1183 = vpop.f32.mrb[0].mxu0
    %v1184 = vadd.f32 0.0, %v1183
    %v1185 = vpop.f32.mrb[0].mxu0
    %1186 = vmatprep.mubr.f32.mxu0 0.0
    %1187 = vmatmul.mubr.f32.gmra.mrb[0].mxu0 %v331
    %v1188 = vpop.f32.mrb[0].mxu0
    %v1189 = vadd.f32 0.0, %v1188
    %v1190 = vpop.f32.mrb[0].mxu0
    %1191 = vmatprep.mubr.f32.mxu0 0.0
    %1192 = vmatmul.mubr.f32.gmra.mrb[0].mxu0 %v334
    %v1193 = vpop.f32.mrb[0].mxu0
    %v1194 = vadd.f32 0.0, %v1193
    %v1195 = vpop.f32.mrb[0].mxu0
    %1196 = vmatprep.mubr.f32.mxu0 0.0
    %1197 = vmatmul.mubr.f32.gmra.mrb[0].mxu0 %v337
    %v1198 = vpop.f32.mrb[0].mxu0
    %v1199 = vadd.f32 0.0, %v1198
    %v1200 = vpop.f32.mrb[0].mxu0
    %1201 = vmatprep.mubr.f32.mxu0 0.0
    %1202 = vmatmul.mubr.f32.gmra.mrb[0].mxu0 %v340
    %v1203 = vpop.f32.mrb[0].mxu0
    %v1204 = vadd.f32 0.0, %v1203
    %v1205 = vpop.f32.mrb[0].mxu0
    %1206 = vmatprep.mubr.f32.mxu0 0.0
    %1207 = vmatmul.mubr.f32.gmra.mrb[0].mxu0 %v343
    %v1208 = vpop.f32.mrb[0].mxu0
    %v1209 = vadd.f32 0.0, %v1208
    %v1210 = vpop.f32.mrb[0].mxu0
    %1211 = vmatprep.mubr.f32.mxu0 0.0
    %1212 = vmatmul.mubr.f32.gmra.mrb[0].mxu0 %v346
    %v1213 = vpop.f32.mrb[0].mxu0
    %v1214 = vadd.f32 0.0, %v1213
    %v1215 = vpop.f32.mrb[0].mxu0
    %1216 = vmatprep.mubr.f32.mxu0 0.0
    %1217 = vmatmul.mubr.f32.gmra.mrb[0].mxu0 %v349
    %v1218 = vpop.f32.mrb[0].mxu0
    %v1219 = vadd.f32 0.0, %v1218
    %v1220 = vpop.f32.mrb[0].mxu0
    %1221 = vmatprep.mubr.f32.mxu0 0.0
    %1222 = vmatmul.mubr.f32.gmra.mrb[0].mxu0 %v352
    %v1223 = vpop.f32.mrb[0].mxu0
    %v1224 = vadd.f32 0.0, %v1223
    %v1225 = vpop.f32.mrb[0].mxu0
    %1226 = vmatprep.mubr.f32.mxu0 0.0
    %1227 = vmatmul.mubr.f32.gmra.mrb[0].mxu0 %v355
    %v1228 = vpop.f32.mrb[0].mxu0
    %v1229 = vadd.f32 0.0, %v1228
    %v1230 = vpop.f32.mrb[0].mxu0
    %1231 = vmatprep.mubr.f32.mxu0 0.0
    %1232 = vmatmul.mubr.f32.gmra.mrb[0].mxu0 %v358
    %v1233 = vpop.f32.mrb[0].mxu0
    %v1234 = vadd.f32 0.0, %v1233
    %v1235 = vpop.f32.mrb[0].mxu0
    %1236 = vmatprep.mubr.f32.mxu0 0.0
    %1237 = vmatmul.mubr.f32.gmra.mrb[0].mxu0 %v361
    %v1238 = vpop.f32.mrb[0].mxu0
    %v1239 = vadd.f32 0.0, %v1238
    %v1240 = vpop.f32.mrb[0].mxu0
    %1241 = vmatprep.mubr.f32.mxu0 0.0
    %1242 = vmatmul.mubr.f32.gmra.mrb[0].mxu0 %v364
    %v1243 = vpop.f32.mrb[0].mxu0
    %v1244 = vadd.f32 0.0, %v1243
    %v1245 = vpop.f32.mrb[0].mxu0
    %1246 = vmatprep.mubr.f32.mxu0 0.0
    %1247 = vmatmul.mubr.f32.gmra.mrb[0].mxu0 %v367
    %v1248 = vpop.f32.mrb[0].mxu0
    %v1249 = vadd.f32 0.0, %v1248
    %v1250 = vpop.f32.mrb[0].mxu0
    %1251 = vmatprep.mubr.f32.mxu0 0.0
    %1252 = vmatmul.mubr.f32.gmra.mrb[0].mxu0 %v370
    %v1253 = vpop.f32.mrb[0].mxu0
    %v1254 = vadd.f32 0.0, %v1253
    %v1255 = vpop.f32.mrb[0].mxu0
    %1256 = vmatprep.mubr.f32.mxu0 0.0
    %1257 = vmatmul.mubr.f32.gmra.mrb[0].mxu0 %v373
    %v1258 = vpop.f32.mrb[0].mxu0
    %v1259 = vadd.f32 0.0, %v1258
    %v1260 = vpop.f32.mrb[0].mxu0
    %1261 = vmatprep.mubr.f32.mxu0 0.0
    %1262 = vmatmul.mubr.f32.gmra.mrb[0].mxu0 %v376
    %v1263 = vpop.f32.mrb[0].mxu0
    %v1264 = vadd.f32 0.0, %v1263
    %v1265 = vpop.f32.mrb[0].mxu0
    %1266 = vmatprep.mubr.f32.mxu0 0.0
    %1267 = vmatmul.mubr.f32.gmra.mrb[0].mxu0 %v379
    %v1268 = vpop.f32.mrb[0].mxu0
    %v1269 = vadd.f32 0.0, %v1268
    %v1270 = vpop.f32.mrb[0].mxu0
    %1271 = vmatprep.mubr.f32.mxu0 0.0
    %1272 = vmatmul.mubr.f32.gmra.mrb[0].mxu0 %v382
    %v1273 = vpop.f32.mrb[0].mxu0
    %v1274 = vadd.f32 0.0, %v1273
    %v1275 = vpop.f32.mrb[0].mxu0
    %1276 = vmatprep.mubr.f32.mxu0 0.0
    %1277 = vmatmul.mubr.f32.gmra.mrb[0].mxu0 %v385
    %v1278 = vpop.f32.mrb[0].mxu0
    %v1279 = vadd.f32 0.0, %v1278
    %v1280 = vpop.f32.mrb[0].mxu0
    %1281 = vmatprep.mubr.f32.mxu0 0.0
    %1282 = vmatmul.mubr.f32.gmra.mrb[0].mxu0 %v388
    %v1283 = vpop.f32.mrb[0].mxu0
    %v1284 = vadd.f32 0.0, %v1283
    %v1285 = vpop.f32.mrb[0].mxu0
    %1286 = vmatprep.mubr.f32.mxu0 0.0
    %1287 = vmatmul.mubr.f32.gmra.mrb[0].mxu0 %v391
    %v1288 = vpop.f32.mrb[0].mxu0
    %v1289 = vadd.f32 0.0, %v1288
    %v1290 = vpop.f32.mrb[0].mxu0
    %1291 = vmatprep.mubr.f32.mxu0 0.0
    %1292 = vmatmul.mubr.f32.gmra.mrb[0].mxu0 %v394
    %v1293 = vpop.f32.mrb[0].mxu0
    %v1294 = vadd.f32 0.0, %v1293
    %v1295 = vpop.f32.mrb[0].mxu0
    %1296 = vmatprep.mubr.f32.mxu0 0.0
    %1297 = vmatmul.mubr.f32.gmra.mrb[0].mxu0 %v397
    %v1298 = vpop.f32.mrb[0].mxu0
    %v1299 = vadd.f32 0.0, %v1298
    %v1300 = vpop.f32.mrb[0].mxu0
    %1301 = vmatprep.mubr.f32.mxu0 0.0
    %1302 = vmatmul.mubr.f32.gmra.mrb[0].mxu0 %v400
    %v1303 = vpop.f32.mrb[0].mxu0
    %v1304 = vadd.f32 0.0, %v1303
    %v1305 = vpop.f32.mrb[0].mxu0
    %1306 = vmatprep.mubr.f32.mxu0 0.0
    %1307 = vmatmul.mubr.f32.gmra.mrb[0].mxu0 %v403
    %v1308 = vpop.f32.mrb[0].mxu0
    %v1309 = vadd.f32 0.0, %v1308
    %v1310 = vpop.f32.mrb[0].mxu0
    %1311 = vmatprep.mubr.f32.mxu0 0.0
    %1312 = vmatmul.mubr.f32.gmra.mrb[0].mxu0 %v406
    %v1313 = vpop.f32.mrb[0].mxu0
    %v1314 = vadd.f32 0.0, %v1313
    %v1315 = vpop.f32.mrb[0].mxu0
    %1316 = vmatprep.mubr.f32.mxu0 0.0
    %1317 = vmatmul.mubr.f32.gmra.mrb[0].mxu0 %v409
    %v1318 = vpop.f32.mrb[0].mxu0
    %v1319 = vadd.f32 0.0, %v1318
    %v1320 = vpop.f32.mrb[0].mxu0
    %1321 = vmatprep.mubr.f32.mxu0 0.0
    %1322 = vmatmul.mubr.f32.gmra.mrb[0].mxu0 %v412
    %v1323 = vpop.f32.mrb[0].mxu0
    %v1324 = vadd.f32 0.0, %v1323
    %v1325 = vpop.f32.mrb[0].mxu0
    %1326 = vmatprep.mubr.f32.mxu0 0.0
    %1327 = vmatmul.mubr.f32.gmra.mrb[0].mxu0 %v415
    %v1328 = vpop.f32.mrb[0].mxu0
    %v1329 = vadd.f32 0.0, %v1328
    %v1330 = vpop.f32.mrb[0].mxu0
    %1331 = vmatprep.mubr.f32.mxu0 0.0
    %1332 = vmatmul.mubr.f32.gmra.mrb[0].mxu0 %v418
    %v1333 = vpop.f32.mrb[0].mxu0
    %v1334 = vadd.f32 0.0, %v1333
    %v1335 = vpop.f32.mrb[0].mxu0
    %1336 = vmatprep.mubr.f32.mxu0 0.0
    %1337 = vmatmul.mubr.f32.gmra.mrb[0].mxu0 %v421
    %v1338 = vpop.f32.mrb[0].mxu0
    %v1339 = vadd.f32 0.0, %v1338
    %v1340 = vpop.f32.mrb[0].mxu0
    %1341 = vmatprep.mubr.f32.mxu0 0.0
    %1342 = vmatmul.mubr.f32.gmra.mrb[0].mxu0 %v424
    %v1343 = vpop.f32.mrb[0].mxu0
    %v1344 = vadd.f32 0.0, %v1343
    %v1345 = vpop.f32.mrb[0].mxu0
    %1346 = vmatprep.mubr.f32.mxu0 0.0
    %1347 = vmatmul.mubr.f32.gmra.mrb[0].mxu0 %v427
    %v1348 = vpop.f32.mrb[0].mxu0
    %v1349 = vadd.f32 0.0, %v1348
    %v1350 = vpop.f32.mrb[0].mxu0
    %1351 = vmatprep.mubr.f32.mxu0 0.0
    %1352 = vmatmul.mubr.f32.gmra.mrb[0].mxu0 %v430
    %v1353 = vpop.f32.mrb[0].mxu0
    %v1354 = vadd.f32 0.0, %v1353
    %v1355 = vpop.f32.mrb[0].mxu0
    %1356 = vmatprep.mubr.f32.mxu0 0.0
    %1357 = vmatmul.mubr.f32.gmra.mrb[0].mxu0 %v433
    %v1358 = vpop.f32.mrb[0].mxu0
    %v1359 = vadd.f32 0.0, %v1358
    %v1360 = vpop.f32.mrb[0].mxu0
    %1361 = vmatprep.mubr.f32.mxu0 0.0
    %1362 = vmatmul.mubr.f32.gmra.mrb[0].mxu0 %v436
    %v1363 = vpop.f32.mrb[0].mxu0
    %v1364 = vadd.f32 0.0, %v1363
    %v1365 = vpop.f32.mrb[0].mxu0
    %1366 = vmatprep.mubr.f32.mxu0 0.0
    %1367 = vmatmul.mubr.f32.gmra.mrb[0].mxu0 %v439
    %v1368 = vpop.f32.mrb[0].mxu0
    %v1369 = vadd.f32 0.0, %v1368
    %v1370 = vpop.f32.mrb[0].mxu0
    %1371 = vmatprep.mubr.f32.mxu0 0.0
    %1372 = vmatmul.mubr.f32.gmra.mrb[0].mxu0 %v442
    %v1373 = vpop.f32.mrb[0].mxu0
    %v1374 = vadd.f32 0.0, %v1373
    %v1375 = vpop.f32.mrb[0].mxu0
    %1376 = vmatprep.mubr.f32.mxu0 0.0
    %1377 = vmatmul.mubr.f32.gmra.mrb[0].mxu0 %v445
    %v1378 = vpop.f32.mrb[0].mxu0
    %v1379 = vadd.f32 0.0, %v1378
    %v1380 = vpop.f32.mrb[0].mxu0
    %1381 = vmatprep.mubr.f32.mxu0 0.0
    %1382 = vmatmul.mubr.f32.gmra.mrb[0].mxu0 %v448
    %v1383 = vpop.f32.mrb[0].mxu0
    %v1384 = vadd.f32 0.0, %v1383
    %v1385 = vpop.f32.mrb[0].mxu0
    %1386 = vmatprep.mubr.f32.mxu0 0.0
    %1387 = vmatmul.mubr.f32.gmra.mrb[0].mxu0 %v451
    %v1388 = vpop.f32.mrb[0].mxu0
    %v1389 = vadd.f32 0.0, %v1388
    %v1390 = vpop.f32.mrb[0].mxu0
    %1391 = vmatprep.mubr.f32.mxu0 0.0
    %1392 = vmatmul.mubr.f32.gmra.mrb[0].mxu0 %v454
    %v1393 = vpop.f32.mrb[0].mxu0
    %v1394 = vadd.f32 0.0, %v1393
    %v1395 = vpop.f32.mrb[0].mxu0
    %1396 = vmatprep.mubr.f32.mxu0 0.0
    %1397 = vmatmul.mubr.f32.gmra.mrb[0].mxu0 %v457
    %v1398 = vpop.f32.mrb[0].mxu0
    %v1399 = vadd.f32 0.0, %v1398
    %v1400 = vpop.f32.mrb[0].mxu0
    %1401 = vmatprep.mubr.f32.mxu0 0.0
    %1402 = vmatmul.mubr.f32.gmra.mrb[0].mxu0 %v460
    %v1403 = vpop.f32.mrb[0].mxu0
    %v1404 = vadd.f32 0.0, %v1403
    %v1405 = vpop.f32.mrb[0].mxu0
    %1406 = vmatprep.mubr.f32.mxu0 0.0
    %1407 = vmatmul.mubr.f32.gmra.mrb[0].mxu0 %v463
    %v1408 = vpop.f32.mrb[0].mxu0
    %v1409 = vadd.f32 0.0, %v1408
    %v1410 = vpop.f32.mrb[0].mxu0
    %1411 = vmatprep.mubr.f32.mxu0 0.0
    %1412 = vmatmul.mubr.f32.gmra.mrb[0].mxu0 %v466
    %v1413 = vpop.f32.mrb[0].mxu0
    %v1414 = vadd.f32 0.0, %v1413
    %v1415 = vpop.f32.mrb[0].mxu0
    %1416 = vmatprep.mubr.f32.mxu0 0.0
    %1417 = vmatmul.mubr.f32.gmra.mrb[0].mxu0 %v469
    %v1418 = vpop.f32.mrb[0].mxu0
    %v1419 = vadd.f32 0.0, %v1418
    %v1420 = vpop.f32.mrb[0].mxu0
    %1421 = vmatprep.mubr.f32.mxu0 0.0
    %1422 = vmatmul.mubr.f32.gmra.mrb[0].mxu0 %v472
    %v1423 = vpop.f32.mrb[0].mxu0
    %v1424 = vadd.f32 0.0, %v1423
    %v1425 = vpop.f32.mrb[0].mxu0
    %1426 = vmatprep.mubr.f32.mxu0 0.0
    %1427 = vmatmul.mubr.f32.gmra.mrb[0].mxu0 %v475
    %v1428 = vpop.f32.mrb[0].mxu0
    %v1429 = vadd.f32 0.0, %v1428
    %v1430 = vpop.f32.mrb[0].mxu0
    %1431 = vmatprep.mubr.f32.mxu0 0.0
    %1432 = vmatmul.mubr.f32.gmra.mrb[0].mxu0 %v478
    %v1433 = vpop.f32.mrb[0].mxu0
    %v1434 = vadd.f32 0.0, %v1433
    %v1435 = vpop.f32.mrb[0].mxu0
    %1436 = vmatprep.mubr.f32.mxu0 0.0
    %1437 = vmatmul.mubr.f32.gmra.mrb[0].mxu0 %v481
    %v1438 = vpop.f32.mrb[0].mxu0
    %v1439 = vadd.f32 0.0, %v1438
    %v1440 = vpop.f32.mrb[0].mxu0
    %1441 = vmatprep.mubr.f32.mxu0 0.0
    %1442 = vmatmul.mubr.f32.gmra.mrb[0].mxu0 %v484
    %v1443 = vpop.f32.mrb[0].mxu0
    %v1444 = vadd.f32 0.0, %v1443
    %v1445 = vpop.f32.mrb[0].mxu0
    %1446 = vmatprep.mubr.f32.mxu0 0.0
    %1447 = vmatmul.mubr.f32.gmra.mrb[0].mxu0 %v487
    %v1448 = vpop.f32.mrb[0].mxu0
    %v1449 = vadd.f32 0.0, %v1448
    %v1450 = vpop.f32.mrb[0].mxu0
    %1451 = vmatprep.mubr.f32.mxu0 0.0
    %1452 = vmatmul.mubr.f32.gmra.mrb[0].mxu0 %v490
    %v1453 = vpop.f32.mrb[0].mxu0
    %v1454 = vadd.f32 0.0, %v1453
    %v1455 = vpop.f32.mrb[0].mxu0
    %1456 = vmatprep.mubr.f32.mxu0 0.0
    %1457 = vmatmul.mubr.f32.gmra.mrb[0].mxu0 %v493
    %v1458 = vpop.f32.mrb[0].mxu0
    %v1459 = vadd.f32 0.0, %v1458
    %v1460 = vpop.f32.mrb[0].mxu0
    %1461 = vmatprep.mubr.f32.mxu0 0.0
    %1462 = vmatmul.mubr.f32.gmra.mrb[0].mxu0 %v496
    %v1463 = vpop.f32.mrb[0].mxu0
    %v1464 = vadd.f32 0.0, %v1463
    %v1465 = vpop.f32.mrb[0].mxu0
    %1466 = vmatprep.mubr.f32.mxu0 0.0
    %1467 = vmatmul.mubr.f32.gmra.mrb[0].mxu0 %v499
    %v1468 = vpop.f32.mrb[0].mxu0
    %v1469 = vadd.f32 0.0, %v1468
    %v1470 = vpop.f32.mrb[0].mxu0
    %1471 = vmatprep.mubr.f32.mxu0 0.0
    %1472 = vmatmul.mubr.f32.gmra.mrb[0].mxu0 %v502
    %v1473 = vpop.f32.mrb[0].mxu0
    %v1474 = vadd.f32 0.0, %v1473
    %v1475 = vpop.f32.mrb[0].mxu0
    %1476 = vmatprep.mubr.f32.mxu0 0.0
    %1477 = vmatmul.mubr.f32.gmra.mrb[0].mxu0 %v505
    %v1478 = vpop.f32.mrb[0].mxu0
    %v1479 = vadd.f32 0.0, %v1478
    %v1480 = vpop.f32.mrb[0].mxu0
    %1481 = vmatprep.mubr.f32.mxu0 0.0
    %1482 = vmatmul.mubr.f32.gmra.mrb[0].mxu0 %v508
    %v1483 = vpop.f32.mrb[0].mxu0
    %v1484 = vadd.f32 0.0, %v1483
    %v1485 = vpop.f32.mrb[0].mxu0
    %1486 = vmatprep.mubr.f32.mxu0 0.0
    %1487 = vmatmul.mubr.f32.gmra.mrb[0].mxu0 %v511
    %v1488 = vpop.f32.mrb[0].mxu0
    %v1489 = vadd.f32 0.0, %v1488
    %v1490 = vpop.f32.mrb[0].mxu0
    %1491 = vmatprep.mubr.f32.mxu0 0.0
    %1492 = vmatmul.mubr.f32.gmra.mrb[0].mxu0 %v514
    %v1493 = vpop.f32.mrb[0].mxu0
    %v1494 = vadd.f32 0.0, %v1493
    %v1495 = vpop.f32.mrb[0].mxu0
    %1496 = vmatprep.mubr.f32.mxu0 0.0
    %1497 = vmatmul.mubr.f32.gmra.mrb[0].mxu0 %v517
    %v1498 = vpop.f32.mrb[0].mxu0
    %v1499 = vadd.f32 0.0, %v1498
    %v1500 = vpop.f32.mrb[0].mxu0
    %1501 = vmatprep.mubr.f32.mxu0 0.0
    %1502 = vmatmul.mubr.f32.gmra.mrb[0].mxu0 %v520
    %v1503 = vpop.f32.mrb[0].mxu0
    %v1504 = vadd.f32 0.0, %v1503
    %v1505 = vpop.f32.mrb[0].mxu0
    %1506 = vmatprep.mubr.f32.mxu0 0.0
    %1507 = vmatmul.mubr.f32.gmra.mrb[0].mxu0 %v523
    %v1508 = vpop.f32.mrb[0].mxu0
    %v1509 = vadd.f32 0.0, %v1508
    %v1510 = vpop.f32.mrb[0].mxu0
    %1511 = vmatprep.mubr.f32.mxu0 0.0
    %1512 = vmatmul.mubr.f32.gmra.mrb[0].mxu0 %v526
    %v1513 = vpop.f32.mrb[0].mxu0
    %v1514 = vadd.f32 0.0, %v1513
    %v1515 = vpop.f32.mrb[0].mxu0
    %1516 = vmatprep.mubr.f32.mxu0 0.0
    %1517 = vmatmul.mubr.f32.gmra.mrb[0].mxu0 %v529
    %v1518 = vpop.f32.mrb[0].mxu0
    %v1519 = vadd.f32 0.0, %v1518
    %v1520 = vpop.f32.mrb[0].mxu0
    %1521 = vmatprep.mubr.f32.mxu0 0.0
    %1522 = vmatmul.mubr.f32.gmra.mrb[0].mxu0 %v532
    %v1523 = vpop.f32.mrb[0].mxu0
    %v1524 = vadd.f32 0.0, %v1523
    %v1525 = vpop.f32.mrb[0].mxu0
    %1526 = vmatprep.mubr.f32.mxu0 0.0
    %1527 = vmatmul.mubr.f32.gmra.mrb[0].mxu0 %v535
    %v1528 = vpop.f32.mrb[0].mxu0
    %v1529 = vadd.f32 0.0, %v1528
    %v1530 = vpop.f32.mrb[0].mxu0
    %1531 = vmatprep.mubr.f32.mxu0 0.0
    %1532 = vmatmul.mubr.f32.gmra.mrb[0].mxu0 %v538
    %v1533 = vpop.f32.mrb[0].mxu0
    %v1534 = vadd.f32 0.0, %v1533
    %v1535 = vpop.f32.mrb[0].mxu0
    %1536 = vmatprep.mubr.f32.mxu0 0.0
    %1537 = vmatmul.mubr.f32.gmra.mrb[0].mxu0 %v541
    %v1538 = vpop.f32.mrb[0].mxu0
    %v1539 = vadd.f32 0.0, %v1538
    %v1540 = vpop.f32.mrb[0].mxu0
    %1541 = vmatprep.mubr.f32.mxu0 0.0
    %1542 = vmatmul.mubr.f32.gmra.mrb[0].mxu0 %v544
    %v1543 = vpop.f32.mrb[0].mxu0
    %v1544 = vadd.f32 0.0, %v1543
    %v1545 = vpop.f32.mrb[0].mxu0
    %1546 = vmatprep.mubr.f32.mxu0 0.0
    %1547 = vmatmul.mubr.f32.gmra.mrb[0].mxu0 %v547
    %v1548 = vpop.f32.mrb[0].mxu0
    %v1549 = vadd.f32 0.0, %v1548
    %v1550 = vpop.f32.mrb[0].mxu0
    %1551 = vmatprep.mubr.f32.mxu0 0.0
    %1552 = vmatmul.mubr.f32.gmra.mrb[0].mxu0 %v550
    %v1553 = vpop.f32.mrb[0].mxu0
    %v1554 = vadd.f32 0.0, %v1553
    %v1555 = vpop.f32.mrb[0].mxu0
    %1556 = vmatprep.mubr.f32.mxu0 0.0
    %1557 = vmatmul.mubr.f32.gmra.mrb[0].mxu0 %v553
    %v1558 = vpop.f32.mrb[0].mxu0
    %v1559 = vadd.f32 0.0, %v1558
    %v1560 = vpop.f32.mrb[0].mxu0
    %1561 = vmatprep.mubr.f32.mxu0 0.0
    %1562 = vmatmul.mubr.f32.gmra.mrb[0].mxu0 %v556
    %v1563 = vpop.f32.mrb[0].mxu0
    %v1564 = vadd.f32 0.0, %v1563
    %v1565 = vpop.f32.mrb[0].mxu0
    %1566 = vmatprep.mubr.f32.mxu0 0.0
    %1567 = vmatmul.mubr.f32.gmra.mrb[0].mxu0 %v559
    %v1568 = vpop.f32.mrb[0].mxu0
    %v1569 = vadd.f32 0.0, %v1568
    %v1570 = vpop.f32.mrb[0].mxu0
    %1571 = vmatprep.mubr.f32.mxu0 0.0
    %1572 = vmatmul.mubr.f32.gmra.mrb[0].mxu0 %v562
    %v1573 = vpop.f32.mrb[0].mxu0
    %v1574 = vadd.f32 0.0, %v1573
    %v1575 = vpop.f32.mrb[0].mxu0
    %1576 = vmatprep.mubr.f32.mxu0 0.0
    %1577 = vmatmul.mubr.f32.gmra.mrb[0].mxu0 %v565
    %v1578 = vpop.f32.mrb[0].mxu0
    %v1579 = vadd.f32 0.0, %v1578
    %v1580 = vpop.f32.mrb[0].mxu0
    %1581 = vmatprep.mubr.f32.mxu0 0.0
    %1582 = vmatmul.mubr.f32.gmra.mrb[0].mxu0 %v568
    %v1583 = vpop.f32.mrb[0].mxu0
    %v1584 = vadd.f32 0.0, %v1583
    %v1585 = vpop.f32.mrb[0].mxu0
    %1586 = vmatprep.mubr.f32.mxu0 0.0
    %1587 = vmatmul.mubr.f32.gmra.mrb[0].mxu0 %v571
    %v1588 = vpop.f32.mrb[0].mxu0
    %v1589 = vadd.f32 0.0, %v1588
    %v1590 = vpop.f32.mrb[0].mxu0
    %1591 = vmatprep.mubr.f32.mxu0 0.0
    %1592 = vmatmul.mubr.f32.gmra.mrb[0].mxu0 %v574
    %v1593 = vpop.f32.mrb[0].mxu0
    %v1594 = vadd.f32 0.0, %v1593
    %v1595 = vpop.f32.mrb[0].mxu0
    %1596 = vmatprep.mubr.f32.mxu0 0.0
    %1597 = vmatmul.mubr.f32.gmra.mrb[0].mxu0 %v577
    %v1598 = vpop.f32.mrb[0].mxu0
    %v1599 = vadd.f32 0.0, %v1598
    %v1600 = vpop.f32.mrb[0].mxu0
    %1601 = vmatprep.mubr.f32.mxu0 0.0
    %1602 = vmatmul.mubr.f32.gmra.mrb[0].mxu0 %v580
    %v1603 = vpop.f32.mrb[0].mxu0
    %v1604 = vadd.f32 0.0, %v1603
    %v1605 = vpop.f32.mrb[0].mxu0
    %1606 = vmatprep.mubr.f32.mxu0 0.0
    %1607 = vmatmul.mubr.f32.gmra.mrb[0].mxu0 %v583
    %v1608 = vpop.f32.mrb[0].mxu0
    %v1609 = vadd.f32 0.0, %v1608
    %v1610 = vpop.f32.mrb[0].mxu0
    %1611 = vmatprep.mubr.f32.mxu0 0.0
    %1612 = vmatmul.mubr.f32.gmra.mrb[0].mxu0 %v586
    %v1613 = vpop.f32.mrb[0].mxu0
    %v1614 = vadd.f32 0.0, %v1613
    %v1615 = vpop.f32.mrb[0].mxu0
    %1616 = vmatprep.mubr.f32.mxu0 0.0
    %1617 = vmatmul.mubr.f32.gmra.mrb[0].mxu0 %v589
    %v1618 = vpop.f32.mrb[0].mxu0
    %v1619 = vadd.f32 0.0, %v1618
    %v1620 = vpop.f32.mrb[0].mxu0
    %1621 = vmatprep.mubr.f32.mxu0 0.0
    %1622 = vmatmul.mubr.f32.gmra.mrb[0].mxu0 %v592
    %v1623 = vpop.f32.mrb[0].mxu0
    %v1624 = vadd.f32 0.0, %v1623
    %v1625 = vpop.f32.mrb[0].mxu0
    %1626 = vmatprep.mubr.f32.mxu0 0.0
    %1627 = vmatmul.mubr.f32.gmra.mrb[0].mxu0 %v595
    %v1628 = vpop.f32.mrb[0].mxu0
    %v1629 = vadd.f32 0.0, %v1628
    %v1630 = vpop.f32.mrb[0].mxu0
    %1631 = vmatprep.mubr.f32.mxu0 0.0
    %1632 = vmatmul.mubr.f32.gmra.mrb[0].mxu0 %v598
    %v1633 = vpop.f32.mrb[0].mxu0
    %v1634 = vadd.f32 0.0, %v1633
    %v1635 = vpop.f32.mrb[0].mxu0
    %1636 = vmatprep.mubr.f32.mxu0 0.0
    %1637 = vmatmul.mubr.f32.gmra.mrb[0].mxu0 %v601
    %v1638 = vpop.f32.mrb[0].mxu0
    %v1639 = vadd.f32 0.0, %v1638
    %v1640 = vpop.f32.mrb[0].mxu0
    %1641 = vmatprep.mubr.f32.mxu0 0.0
    %1642 = vmatmul.mubr.f32.gmra.mrb[0].mxu0 %v604
    %v1643 = vpop.f32.mrb[0].mxu0
    %v1644 = vadd.f32 0.0, %v1643
    %v1645 = vpop.f32.mrb[0].mxu0
    %1646 = vmatprep.mubr.f32.mxu0 0.0
    %1647 = vmatmul.mubr.f32.gmra.mrb[0].mxu0 %v607
    %v1648 = vpop.f32.mrb[0].mxu0
    %v1649 = vadd.f32 0.0, %v1648
    %v1650 = vpop.f32.mrb[0].mxu0
    %1651 = vmatprep.mubr.f32.mxu0 0.0
    %1652 = vmatmul.mubr.f32.gmra.mrb[0].mxu0 %v610
    %v1653 = vpop.f32.mrb[0].mxu0
    %v1654 = vadd.f32 0.0, %v1653
    %v1655 = vpop.f32.mrb[0].mxu0
    %1656 = vmatprep.mubr.f32.mxu0 0.0
    %1657 = vmatmul.mubr.f32.gmra.mrb[0].mxu0 %v613
    %v1658 = vpop.f32.mrb[0].mxu0
    %v1659 = vadd.f32 0.0, %v1658
    %v1660 = vpop.f32.mrb[0].mxu0
    %1661 = vmatprep.mubr.f32.mxu0 0.0
    %1662 = vmatmul.mubr.f32.gmra.mrb[0].mxu0 %v616
    %v1663 = vpop.f32.mrb[0].mxu0
    %v1664 = vadd.f32 0.0, %v1663
    %v1665 = vpop.f32.mrb[0].mxu0
    %1666 = vmatprep.mubr.f32.mxu0 0.0
    %1667 = vmatmul.mubr.f32.gmra.mrb[0].mxu0 %v619
    %v1668 = vpop.f32.mrb[0].mxu0
    %v1669 = vadd.f32 0.0, %v1668
    %v1670 = vpop.f32.mrb[0].mxu0
    %1671 = vmatprep.mubr.f32.mxu0 0.0
    %1672 = vmatmul.mubr.f32.gmra.mrb[0].mxu0 %v622
    %v1673 = vpop.f32.mrb[0].mxu0
    %v1674 = vadd.f32 0.0, %v1673
    %v1675 = vpop.f32.mrb[0].mxu0
    %1676 = vmatprep.mubr.f32.mxu0 0.0
    %1677 = vmatmul.mubr.f32.gmra.mrb[0].mxu0 %v625
    %v1678 = vpop.f32.mrb[0].mxu0
    %v1679 = vadd.f32 0.0, %v1678
    %v1680 = vpop.f32.mrb[0].mxu0
    %1681 = vmatprep.mubr.f32.mxu0 0.0
    %1682 = vmatmul.mubr.f32.gmra.mrb[0].mxu0 %v628
    %v1683 = vpop.f32.mrb[0].mxu0
    %v1684 = vadd.f32 0.0, %v1683
    %v1685 = vpop.f32.mrb[0].mxu0
    %1686 = vmatprep.mubr.f32.mxu0 0.0
    %1687 = vmatmul.mubr.f32.gmra.mrb[0].mxu0 %v631
    %v1688 = vpop.f32.mrb[0].mxu0
    %v1689 = vadd.f32 0.0, %v1688
    %v1690 = vpop.f32.mrb[0].mxu0
    %1691 = vmatprep.mubr.f32.mxu0 0.0
    %1692 = vmatmul.mubr.f32.gmra.mrb[0].mxu0 %v634
    %v1693 = vpop.f32.mrb[0].mxu0
    %v1694 = vadd.f32 0.0, %v1693
    %v1695 = vpop.f32.mrb[0].mxu0
    %1696 = vmatprep.mubr.f32.mxu0 0.0
    %1697 = vmatmul.mubr.f32.gmra.mrb[0].mxu0 %v637
    %v1698 = vpop.f32.mrb[0].mxu0
    %v1699 = vadd.f32 0.0, %v1698
    %v1700 = vpop.f32.mrb[0].mxu0
    %1701 = vmatprep.mubr.f32.mxu0 0.0
    %1702 = vmatmul.mubr.f32.gmra.mrb[0].mxu0 %v640
    %v1703 = vpop.f32.mrb[0].mxu0
    %v1704 = vadd.f32 0.0, %v1703
    %v1705 = vpop.f32.mrb[0].mxu0
    %1706 = vmatprep.mubr.f32.mxu0 0.0
    %1707 = vmatmul.mubr.f32.gmra.mrb[0].mxu0 %v643
    %v1708 = vpop.f32.mrb[0].mxu0
    %v1709 = vadd.f32 0.0, %v1708
    %v1710 = vpop.f32.mrb[0].mxu0
    %1711 = vmatprep.mubr.f32.mxu0 0.0
    %1712 = vmatmul.mubr.f32.gmra.mrb[0].mxu0 %v646
    %v1713 = vpop.f32.mrb[0].mxu0
    %v1714 = vadd.f32 0.0, %v1713
    %v1715 = vpop.f32.mrb[0].mxu0
    %1716 = vmatprep.mubr.f32.mxu0 0.0
    %1717 = vmatmul.mubr.f32.gmra.mrb[0].mxu0 %v649
    %v1718 = vpop.f32.mrb[0].mxu0
    %v1719 = vadd.f32 0.0, %v1718
    %v1720 = vpop.f32.mrb[0].mxu0
    %1721 = vmatprep.mubr.f32.mxu0 0.0
    %1722 = vmatmul.mubr.f32.gmra.mrb[0].mxu0 %v652
    %v1723 = vpop.f32.mrb[0].mxu0
    %v1724 = vadd.f32 0.0, %v1723
    %v1725 = vpop.f32.mrb[0].mxu0
    %1726 = vmatprep.mubr.f32.mxu0 0.0
    %1727 = vmatmul.mubr.f32.gmra.mrb[0].mxu0 %v655
    %v1728 = vpop.f32.mrb[0].mxu0
    %v1729 = vadd.f32 0.0, %v1728
    %v1730 = vpop.f32.mrb[0].mxu0
    %1731 = vmatprep.mubr.f32.mxu0 0.0
    %1732 = vmatmul.mubr.f32.gmra.mrb[0].mxu0 %v658
    %v1733 = vpop.f32.mrb[0].mxu0
    %v1734 = vadd.f32 0.0, %v1733
    %v1735 = vpop.f32.mrb[0].mxu0
    %1736 = vmatprep.mubr.f32.mxu0 0.0
    %1737 = vmatmul.mubr.f32.gmra.mrb[0].mxu0 %v661
    %v1738 = vpop.f32.mrb[0].mxu0
    %v1739 = vadd.f32 0.0, %v1738
    %v1740 = vpop.f32.mrb[0].mxu0
    %1741 = vmatprep.mubr.f32.mxu0 0.0
    %1742 = vmatmul.mubr.f32.gmra.mrb[0].mxu0 %v664
    %v1743 = vpop.f32.mrb[0].mxu0
    %v1744 = vadd.f32 0.0, %v1743
    %v1745 = vpop.f32.mrb[0].mxu0
    %1746 = vmatprep.mubr.f32.mxu0 0.0
    %1747 = vmatmul.mubr.f32.gmra.mrb[0].mxu0 %v667
    %v1748 = vpop.f32.mrb[0].mxu0
    %v1749 = vadd.f32 0.0, %v1748
    %v1750 = vpop.f32.mrb[0].mxu0
    %1751 = vmatprep.mubr.f32.mxu0 0.0
    %1752 = vmatmul.mubr.f32.gmra.mrb[0].mxu0 %v670
    %v1753 = vpop.f32.mrb[0].mxu0
    %v1754 = vadd.f32 0.0, %v1753
    %v1755 = vpop.f32.mrb[0].mxu0
    %1756 = vmatprep.mubr.f32.mxu0 0.0
    %1757 = vmatmul.mubr.f32.gmra.mrb[0].mxu0 %v673
    %v1758 = vpop.f32.mrb[0].mxu0
    %v1759 = vadd.f32 0.0, %v1758
    %v1760 = vpop.f32.mrb[0].mxu0
    %1761 = vmatprep.mubr.f32.mxu0 0.0
    %1762 = vmatmul.mubr.f32.gmra.mrb[0].mxu0 %v676
    %v1763 = vpop.f32.mrb[0].mxu0
    %v1764 = vadd.f32 0.0, %v1763
    %v1765 = vpop.f32.mrb[0].mxu0
    %1766 = vmatprep.mubr.f32.mxu0 0.0
    %1767 = vmatmul.mubr.f32.gmra.mrb[0].mxu0 %v679
    %v1768 = vpop.f32.mrb[0].mxu0
    %v1769 = vadd.f32 0.0, %v1768
    %v1770 = vpop.f32.mrb[0].mxu0
    %1771 = vmatprep.mubr.f32.mxu0 0.0
    %1772 = vmatmul.mubr.f32.gmra.mrb[0].mxu0 %v682
    %v1773 = vpop.f32.mrb[0].mxu0
    %v1774 = vadd.f32 0.0, %v1773
    %v1775 = vpop.f32.mrb[0].mxu0
    %1776 = vmatprep.mubr.f32.mxu0 0.0
    %1777 = vmatmul.mubr.f32.gmra.mrb[0].mxu0 %v685
    %v1778 = vpop.f32.mrb[0].mxu0
    %v1779 = vadd.f32 0.0, %v1778
    %v1780 = vpop.f32.mrb[0].mxu0
    %1781 = vmatprep.mubr.f32.mxu0 0.0
    %1782 = vmatmul.mubr.f32.gmra.mrb[0].mxu0 %v688
    %v1783 = vpop.f32.mrb[0].mxu0
    %v1784 = vadd.f32 0.0, %v1783
    %v1785 = vpop.f32.mrb[0].mxu0
    %1786 = vmatprep.mubr.f32.mxu0 0.0
    %1787 = vmatmul.mubr.f32.gmra.mrb[0].mxu0 %v691
    %v1788 = vpop.f32.mrb[0].mxu0
    %v1789 = vadd.f32 0.0, %v1788
    %v1790 = vpop.f32.mrb[0].mxu0
    %1791 = vmatprep.mubr.f32.mxu0 0.0
    %1792 = vmatmul.mubr.f32.gmra.mrb[0].mxu0 %v694
    %v1793 = vpop.f32.mrb[0].mxu0
    %v1794 = vadd.f32 0.0, %v1793
    %v1795 = vpop.f32.mrb[0].mxu0
    %1796 = vmatprep.mubr.f32.mxu0 0.0
    %1797 = vmatmul.mubr.f32.gmra.mrb[0].mxu0 %v697
    %v1798 = vpop.f32.mrb[0].mxu0
    %v1799 = vadd.f32 0.0, %v1798
    %v1800 = vpop.f32.mrb[0].mxu0
    %1801 = vmatprep.mubr.f32.mxu0 0.0
    %1802 = vmatmul.mubr.f32.gmra.mrb[0].mxu0 %v700
    %v1803 = vpop.f32.mrb[0].mxu0
    %v1804 = vadd.f32 0.0, %v1803
    %v1805 = vpop.f32.mrb[0].mxu0
    %1806 = vmatprep.mubr.f32.mxu0 0.0
    %1807 = vmatmul.mubr.f32.gmra.mrb[0].mxu0 %v703
    %v1808 = vpop.f32.mrb[0].mxu0
    %v1809 = vadd.f32 0.0, %v1808
    %v1810 = vpop.f32.mrb[0].mxu0
    %1811 = vmatprep.mubr.f32.mxu0 0.0
    %1812 = vmatmul.mubr.f32.gmra.mrb[0].mxu0 %v706
    %v1813 = vpop.f32.mrb[0].mxu0
    %v1814 = vadd.f32 0.0, %v1813
    %v1815 = vpop.f32.mrb[0].mxu0
    %1816 = vmatprep.mubr.f32.mxu0 0.0
    %1817 = vmatmul.mubr.f32.gmra.mrb[0].mxu0 %v709
    %v1818 = vpop.f32.mrb[0].mxu0
    %v1819 = vadd.f32 0.0, %v1818
    %v1820 = vpop.f32.mrb[0].mxu0
    %1821 = vmatprep.mubr.f32.mxu0 0.0
    %1822 = vmatmul.mubr.f32.gmra.mrb[0].mxu0 %v712
    %v1823 = vpop.f32.mrb[0].mxu0
    %v1824 = vadd.f32 0.0, %v1823
    %v1825 = vpop.f32.mrb[0].mxu0
    %1826 = vmatprep.mubr.f32.mxu0 0.0
    %1827 = vmatmul.mubr.f32.gmra.mrb[0].mxu0 %v715
    %v1828 = vpop.f32.mrb[0].mxu0
    %v1829 = vadd.f32 0.0, %v1828
    %v1830 = vpop.f32.mrb[0].mxu0
    %1831 = vmatprep.mubr.f32.mxu0 0.0
    %1832 = vmatmul.mubr.f32.gmra.mrb[0].mxu0 %v718
    %v1833 = vpop.f32.mrb[0].mxu0
    %v1834 = vadd.f32 0.0, %v1833
    %v1835 = vpop.f32.mrb[0].mxu0
    %1836 = vmatprep.mubr.f32.mxu0 0.0
    %1837 = vmatmul.mubr.f32.gmra.mrb[0].mxu0 %v721
    %v1838 = vpop.f32.mrb[0].mxu0
    %v1839 = vadd.f32 0.0, %v1838
    %v1840 = vpop.f32.mrb[0].mxu0
    %1841 = vmatprep.mubr.f32.mxu0 0.0
    %1842 = vmatmul.mubr.f32.gmra.mrb[0].mxu0 %v724
    %v1843 = vpop.f32.mrb[0].mxu0
    %v1844 = vadd.f32 0.0, %v1843
    %v1845 = vpop.f32.mrb[0].mxu0
    %1846 = vmatprep.mubr.f32.mxu0 0.0
    %1847 = vmatmul.mubr.f32.gmra.mrb[0].mxu0 %v727
    %v1848 = vpop.f32.mrb[0].mxu0
    %v1849 = vadd.f32 0.0, %v1848
    %v1850 = vpop.f32.mrb[0].mxu0
    %1851 = vmatprep.mubr.f32.mxu0 0.0
    %1852 = vmatmul.mubr.f32.gmra.mrb[0].mxu0 %v730
    %v1853 = vpop.f32.mrb[0].mxu0
    %v1854 = vadd.f32 0.0, %v1853
    %v1855 = vpop.f32.mrb[0].mxu0
    %1856 = vmatprep.mubr.f32.mxu0 0.0
    %1857 = vmatmul.mubr.f32.gmra.mrb[0].mxu0 %v733
    %v1858 = vpop.f32.mrb[0].mxu0
    %v1859 = vadd.f32 0.0, %v1858
    %v1860 = vpop.f32.mrb[0].mxu0
    %1861 = vmatprep.mubr.f32.mxu0 0.0
    %1862 = vmatmul.mubr.f32.gmra.mrb[0].mxu0 %v736
    %v1863 = vpop.f32.mrb[0].mxu0
    %v1864 = vadd.f32 0.0, %v1863
    %v1865 = vpop.f32.mrb[0].mxu0
    %1866 = vmatprep.mubr.f32.mxu0 0.0
    %1867 = vmatmul.mubr.f32.gmra.mrb[0].mxu0 %v739
    %v1868 = vpop.f32.mrb[0].mxu0
    %v1869 = vadd.f32 0.0, %v1868
    %v1870 = vpop.f32.mrb[0].mxu0
    %1871 = vmatprep.mubr.f32.mxu0 0.0
    %1872 = vmatmul.mubr.f32.gmra.mrb[0].mxu0 %v742
    %v1873 = vpop.f32.mrb[0].mxu0
    %v1874 = vadd.f32 0.0, %v1873
    %v1875 = vpop.f32.mrb[0].mxu0
    %1876 = vmatprep.mubr.f32.mxu0 0.0
    %1877 = vmatmul.mubr.f32.gmra.mrb[0].mxu0 %v745
    %v1878 = vpop.f32.mrb[0].mxu0
    %v1879 = vadd.f32 0.0, %v1878
    %v1880 = vpop.f32.mrb[0].mxu0
    %1881 = vmatprep.mubr.f32.mxu0 0.0
    %1882 = vmatmul.mubr.f32.gmra.mrb[0].mxu0 %v748
    %v1883 = vpop.f32.mrb[0].mxu0
    %v1884 = vadd.f32 0.0, %v1883
    %v1885 = vpop.f32.mrb[0].mxu0
    %1886 = vmatprep.mubr.f32.mxu0 0.0
    %1887 = vmatmul.mubr.f32.gmra.mrb[0].mxu0 %v751
    %v1888 = vpop.f32.mrb[0].mxu0
    %v1889 = vadd.f32 0.0, %v1888
    %v1890 = vpop.f32.mrb[0].mxu0
    %1891 = vmatprep.mubr.f32.mxu0 0.0
    %1892 = vmatmul.mubr.f32.gmra.mrb[0].mxu0 %v754
    %v1893 = vpop.f32.mrb[0].mxu0
    %v1894 = vadd.f32 0.0, %v1893
    %v1895 = vpop.f32.mrb[0].mxu0
    %1896 = vmatprep.mubr.f32.mxu0 0.0
    %1897 = vmatmul.mubr.f32.gmra.mrb[0].mxu0 %v757
    %v1898 = vpop.f32.mrb[0].mxu0
    %v1899 = vadd.f32 0.0, %v1898
    %v1900 = vpop.f32.mrb[0].mxu0
    %1901 = vmatprep.mubr.f32.mxu0 0.0
    %1902 = vmatmul.mubr.f32.gmra.mrb[0].mxu0 %v760
    %v1903 = vpop.f32.mrb[0].mxu0
    %v1904 = vadd.f32 0.0, %v1903
    %v1905 = vpop.f32.mrb[0].mxu0
    %1906 = vmatprep.mubr.f32.mxu0 0.0
    %1907 = vmatmul.mubr.f32.gmra.mrb[0].mxu0 %v763
    %v1908 = vpop.f32.mrb[0].mxu0
    %v1909 = vadd.f32 0.0, %v1908
    %v1910 = vpop.f32.mrb[0].mxu0
    %1911 = vmatprep.mubr.f32.mxu0 0.0
    %1912 = vmatmul.mubr.f32.gmra.mrb[0].mxu0 %v766
    %v1913 = vpop.f32.mrb[0].mxu0
    %v1914 = vadd.f32 0.0, %v1913
    %v1915 = vpop.f32.mrb[0].mxu0
    %1916 = vmatprep.mubr.f32.mxu0 0.0
    %1917 = vmatmul.mubr.f32.gmra.mrb[0].mxu0 %v769
    %v1918 = vpop.f32.mrb[0].mxu0
    %v1919 = vadd.f32 0.0, %v1918
    %v1920 = vpop.f32.mrb[0].mxu0
    %1921 = vmatprep.mubr.f32.mxu0 0.0
    %1922 = vmatmul.mubr.f32.gmra.mrb[0].mxu0 %v772
    %v1923 = vpop.f32.mrb[0].mxu0
    %v1924 = vadd.f32 0.0, %v1923
    %v1925 = vpop.f32.mrb[0].mxu0
    %1926 = vmatprep.mubr.f32.mxu0 0.0
    %1927 = vmatmul.mubr.f32.gmra.mrb[0].mxu0 %v775
    %v1928 = vpop.f32.mrb[0].mxu0
    %v1929 = vadd.f32 0.0, %v1928
    %v1930 = vpop.f32.mrb[0].mxu0
    %1931 = vmatprep.mubr.f32.mxu0 0.0
    %1932 = vmatmul.mubr.f32.gmra.mrb[0].mxu0 %v778
    %v1933 = vpop.f32.mrb[0].mxu0
    %v1934 = vadd.f32 0.0, %v1933
    %v1935 = vpop.f32.mrb[0].mxu0
    %1936 = vmatprep.mubr.f32.mxu0 0.0
    %1937 = vmatmul.mubr.f32.gmra.mrb[0].mxu0 %v781
    %v1938 = vpop.f32.mrb[0].mxu0
    %v1939 = vadd.f32 0.0, %v1938
    %v1940 = vpop.f32.mrb[0].mxu0
    %1941 = vmatprep.mubr.f32.mxu0 0.0
    %1942 = vmatmul.mubr.f32.gmra.mrb[0].mxu0 %v784
    %v1943 = vpop.f32.mrb[0].mxu0
    %v1944 = vadd.f32 0.0, %v1943
    %v1945 = vpop.f32.mrb[0].mxu0
    %1946 = vmatprep.mubr.f32.mxu0 0.0
    %1947 = vmatmul.mubr.f32.gmra.mrb[0].mxu0 %v787
    %v1948 = vpop.f32.mrb[0].mxu0
    %v1949 = vadd.f32 0.0, %v1948
    %v1950 = vpop.f32.mrb[0].mxu0
    %1951 = vmatprep.mubr.f32.mxu0 0.0
    %1952 = vmatmul.mubr.f32.gmra.mrb[0].mxu0 %v790
    %v1953 = vpop.f32.mrb[0].mxu0
    %v1954 = vadd.f32 0.0, %v1953
    %v1955 = vpop.f32.mrb[0].mxu0
    %1956 = vmatprep.mubr.f32.mxu0 0.0
    %1957 = vmatmul.mubr.f32.gmra.mrb[0].mxu0 %v793
    %v1958 = vpop.f32.mrb[0].mxu0
    %v1959 = vadd.f32 0.0, %v1958
    %v1960 = vpop.f32.mrb[0].mxu0
    %1961 = vmatprep.mubr.f32.mxu0 0.0
    %1962 = vmatmul.mubr.f32.gmra.mrb[0].mxu0 %v796
    %v1963 = vpop.f32.mrb[0].mxu0
    %v1964 = vadd.f32 0.0, %v1963
    %v1965 = vpop.f32.mrb[0].mxu0
    %1966 = vmatprep.mubr.f32.mxu0 0.0
    %1967 = vmatmul.mubr.f32.gmra.mrb[0].mxu0 %v799
    %v1968 = vpop.f32.mrb[0].mxu0
    %v1969 = vadd.f32 0.0, %v1968
    %v1970 = vpop.f32.mrb[0].mxu0
    %1971 = vmatprep.mubr.f32.mxu0 0.0
    %1972 = vmatmul.mubr.f32.gmra.mrb[0].mxu0 %v802
    %v1973 = vpop.f32.mrb[0].mxu0
    %v1974 = vadd.f32 0.0, %v1973
    %v1975 = vpop.f32.mrb[0].mxu0
    %1976 = vmatprep.mubr.f32.mxu0 0.0
    %1977 = vmatmul.mubr.f32.gmra.mrb[0].mxu0 %v805
    %v1978 = vpop.f32.mrb[0].mxu0
    %v1979 = vadd.f32 0.0, %v1978
    %v1980 = vpop.f32.mrb[0].mxu0
    %1981 = vmatprep.mubr.f32.mxu0 0.0
    %1982 = vmatmul.mubr.f32.gmra.mrb[0].mxu0 %v808
    %v1983 = vpop.f32.mrb[0].mxu0
    %v1984 = vadd.f32 0.0, %v1983
    %v1985 = vpop.f32.mrb[0].mxu0
    %1986 = vmatprep.mubr.f32.mxu0 0.0
    %1987 = vmatmul.mubr.f32.gmra.mrb[0].mxu0 %v811
    %v1988 = vpop.f32.mrb[0].mxu0
    %v1989 = vadd.f32 0.0, %v1988
    %v1990 = vpop.f32.mrb[0].mxu0
    %1991 = vmatprep.mubr.f32.mxu0 0.0
    %1992 = vmatmul.mubr.f32.gmra.mrb[0].mxu0 %v814
    %v1993 = vpop.f32.mrb[0].mxu0
    %v1994 = vadd.f32 0.0, %v1993
    %v1995 = vpop.f32.mrb[0].mxu0
    %1996 = vmatprep.mubr.f32.mxu0 0.0
    %1997 = vmatmul.mubr.f32.gmra.mrb[0].mxu0 %v817
    %v1998 = vpop.f32.mrb[0].mxu0
    %v1999 = vadd.f32 0.0, %v1998
    %v2000 = vpop.f32.mrb[0].mxu0
    %2001 = vmatprep.mubr.f32.mxu0 0.0
    %2002 = vmatmul.mubr.f32.gmra.mrb[0].mxu0 %v820
    %v2003 = vpop.f32.mrb[0].mxu0
    %v2004 = vadd.f32 0.0, %v2003
    %v2005 = vpop.f32.mrb[0].mxu0
    %2006 = vmatprep.mubr.f32.mxu0 0.0
    %2007 = vmatmul.mubr.f32.gmra.mrb[0].mxu0 %v823
    %v2008 = vpop.f32.mrb[0].mxu0
    %v2009 = vadd.f32 0.0, %v2008
    %v2010 = vpop.f32.mrb[0].mxu0
    %2011 = vmatprep.mubr.f32.mxu0 0.0
    %2012 = vmatmul.mubr.f32.gmra.mrb[0].mxu0 %v826
    %v2013 = vpop.f32.mrb[0].mxu0
    %v2014 = vadd.f32 0.0, %v2013
    %v2015 = vpop.f32.mrb[0].mxu0
    %2016 = vmatprep.mubr.f32.mxu0 0.0
    %2017 = vmatmul.mubr.f32.gmra.mrb[0].mxu0 %v829
    %v2018 = vpop.f32.mrb[0].mxu0
    %v2019 = vadd.f32 0.0, %v2018
    %v2020 = vpop.f32.mrb[0].mxu0
    %2021 = vmatprep.mubr.f32.mxu0 0.0
    %2022 = vmatmul.mubr.f32.gmra.mrb[0].mxu0 %v832
    %v2023 = vpop.f32.mrb[0].mxu0
    %v2024 = vadd.f32 0.0, %v2023
    %v2025 = vpop.f32.mrb[0].mxu0
    %2026 = vmatprep.mubr.f32.mxu0 0.0
    %2027 = vmatmul.mubr.f32.gmra.mrb[0].mxu0 %v835
    %v2028 = vpop.f32.mrb[0].mxu0
    %v2029 = vadd.f32 0.0, %v2028
    %v2030 = vpop.f32.mrb[0].mxu0
    %2031 = vmatprep.mubr.f32.mxu0 0.0
    %2032 = vmatmul.mubr.f32.gmra.mrb[0].mxu0 %v838
    %v2033 = vpop.f32.mrb[0].mxu0
    %v2034 = vadd.f32 0.0, %v2033
    %v2035 = vpop.f32.mrb[0].mxu0
    %2036 = vmatprep.mubr.f32.mxu0 0.0
    %2037 = vmatmul.mubr.f32.gmra.mrb[0].mxu0 %v841
    %v2038 = vpop.f32.mrb[0].mxu0
    %v2039 = vadd.f32 0.0, %v2038
    %v2040 = vpop.f32.mrb[0].mxu0
    %2041 = vmatprep.mubr.f32.mxu0 0.0
    %2042 = vmatmul.mubr.f32.gmra.mrb[0].mxu0 %v844
    %v2043 = vpop.f32.mrb[0].mxu0
    %v2044 = vadd.f32 0.0, %v2043
    %v2045 = vpop.f32.mrb[0].mxu0
    %2046 = vmatprep.mubr.f32.mxu0 0.0
    %2047 = vmatmul.mubr.f32.gmra.mrb[0].mxu0 %v847
    %v2048 = vpop.f32.mrb[0].mxu0
    %v2049 = vadd.f32 0.0, %v2048
    %v2050 = vpop.f32.mrb[0].mxu0
    %2051 = vmatprep.mubr.f32.mxu0 0.0
    %2052 = vmatmul.mubr.f32.gmra.mrb[0].mxu0 %v850
    %v2053 = vpop.f32.mrb[0].mxu0
    %v2054 = vadd.f32 0.0, %v2053
    %v2055 = vpop.f32.mrb[0].mxu0
    %2056 = vmatprep.mubr.f32.mxu0 0.0
    %2057 = vmatmul.mubr.f32.gmra.mrb[0].mxu0 %v853
    %v2058 = vpop.f32.mrb[0].mxu0
    %v2059 = vadd.f32 0.0, %v2058
    %v2060 = vpop.f32.mrb[0].mxu0
    %2061 = vmatprep.mubr.f32.mxu0 0.0
    %2062 = vmatmul.mubr.f32.gmra.mrb[0].mxu0 %v856
    %v2063 = vpop.f32.mrb[0].mxu0
    %v2064 = vadd.f32 0.0, %v2063
    %v2065 = vpop.f32.mrb[0].mxu0
    %2066 = vmatprep.mubr.f32.mxu0 0.0
    %2067 = vmatmul.mubr.f32.gmra.mrb[0].mxu0 %v859
    %v2068 = vpop.f32.mrb[0].mxu0
    %v2069 = vadd.f32 0.0, %v2068
    %v2070 = vpop.f32.mrb[0].mxu0
    %2071 = vmatprep.mubr.f32.mxu0 0.0
    %2072 = vmatmul.mubr.f32.gmra.mrb[0].mxu0 %v862
    %v2073 = vpop.f32.mrb[0].mxu0
    %v2074 = vadd.f32 0.0, %v2073
    %v2075 = vpop.f32.mrb[0].mxu0
    %2076 = vmatprep.mubr.f32.mxu0 0.0
    %2077 = vmatmul.mubr.f32.gmra.mrb[0].mxu0 %v865
    %v2078 = vpop.f32.mrb[0].mxu0
    %v2079 = vadd.f32 0.0, %v2078
    %v2080 = vpop.f32.mrb[0].mxu0
    %2081 = vmatprep.mubr.f32.mxu0 0.0
    %2082 = vmatmul.mubr.f32.gmra.mrb[0].mxu0 %v868
    %v2083 = vpop.f32.mrb[0].mxu0
    %v2084 = vadd.f32 0.0, %v2083
    %v2085 = vpop.f32.mrb[0].mxu0
    %2086 = vmatprep.mubr.f32.mxu0 0.0
    %2087 = vmatmul.mubr.f32.gmra.mrb[0].mxu0 %v871
    %v2088 = vpop.f32.mrb[0].mxu0
    %v2089 = vadd.f32 0.0, %v2088
    %v2090 = vpop.f32.mrb[0].mxu0
    %2091 = vmatprep.mubr.f32.mxu0 0.0
    %2092 = vmatmul.mubr.f32.gmra.mrb[0].mxu0 %v874
    %v2093 = vpop.f32.mrb[0].mxu0
    %v2094 = vadd.f32 0.0, %v2093
    %v2095 = vpop.f32.mrb[0].mxu0
    %2096 = vmatprep.mubr.f32.mxu0 0.0
    %2097 = vmatmul.mubr.f32.gmra.mrb[0].mxu0 %v877
    %v2098 = vpop.f32.mrb[0].mxu0
    %v2099 = vadd.f32 0.0, %v2098
    %v2100 = vpop.f32.mrb[0].mxu0
    %2101 = vmatprep.mubr.f32.mxu0 0.0
    %2102 = vmatmul.mubr.f32.gmra.mrb[0].mxu0 %v880
    %v2103 = vpop.f32.mrb[0].mxu0
    %v2104 = vadd.f32 0.0, %v2103
    %v2105 = vpop.f32.mrb[0].mxu0
    %2106 = vmatprep.mubr.f32.mxu0 0.0
    %2107 = vmatmul.mubr.f32.gmra.mrb[0].mxu0 %v883
    %v2108 = vpop.f32.mrb[0].mxu0
    %v2109 = vadd.f32 0.0, %v2108
    %v2110 = vpop.f32.mrb[0].mxu0
    %2111 = vmatprep.mubr.f32.mxu0 0.0
    %2112 = vmatmul.mubr.f32.gmra.mrb[0].mxu0 %v886
    %v2113 = vpop.f32.mrb[0].mxu0
    %v2114 = vadd.f32 0.0, %v2113
    %v2115 = vpop.f32.mrb[0].mxu0
    %2116 = vmatprep.mubr.f32.mxu0 0.0
    %2117 = vmatmul.mubr.f32.gmra.mrb[0].mxu0 %v889
    %v2118 = vpop.f32.mrb[0].mxu0
    %v2119 = vadd.f32 0.0, %v2118
    %v2120 = vpop.f32.mrb[0].mxu0
    %2121 = vmatprep.mubr.f32.mxu0 0.0
    %2122 = vmatmul.mubr.f32.gmra.mrb[0].mxu0 %v892
    %v2123 = vpop.f32.mrb[0].mxu0
    %v2124 = vadd.f32 0.0, %v2123
    %v2125 = vpop.f32.mrb[0].mxu0
    %2126 = vmatprep.mubr.f32.mxu0 0.0
    %2127 = vmatmul.mubr.f32.gmra.mrb[0].mxu0 %v895
    %v2128 = vpop.f32.mrb[0].mxu0
    %v2129 = vadd.f32 0.0, %v2128
    %v2130 = vpop.f32.mrb[0].mxu0
    %2131 = vmatprep.mubr.f32.mxu0 0.0
    %2132 = vmatmul.mubr.f32.gmra.mrb[0].mxu0 %v898
    %v2133 = vpop.f32.mrb[0].mxu0
    %v2134 = vadd.f32 0.0, %v2133
    %v2135 = vpop.f32.mrb[0].mxu0
    %2136 = vmatprep.mubr.f32.mxu0 0.0
    %2137 = vmatmul.mubr.f32.gmra.mrb[0].mxu0 %v901
    %v2138 = vpop.f32.mrb[0].mxu0
    %v2139 = vadd.f32 0.0, %v2138
    %v2140 = vpop.f32.mrb[0].mxu0
    %2141 = vmatprep.mubr.f32.mxu0 0.0
    %2142 = vmatmul.mubr.f32.gmra.mrb[0].mxu0 %v904
    %v2143 = vpop.f32.mrb[0].mxu0
    %v2144 = vadd.f32 0.0, %v2143
    %v2145 = vpop.f32.mrb[0].mxu0
    %2146 = vmatprep.mubr.f32.mxu0 0.0
    %2147 = vmatmul.mubr.f32.gmra.mrb[0].mxu0 %v907
    %v2148 = vpop.f32.mrb[0].mxu0
    %v2149 = vadd.f32 0.0, %v2148
    %v2150 = vpop.f32.mrb[0].mxu0
    %2151 = vmatprep.mubr.f32.mxu0 0.0
    %2152 = vmatmul.mubr.f32.gmra.mrb[0].mxu0 %v910
    %v2153 = vpop.f32.mrb[0].mxu0
    %v2154 = vadd.f32 0.0, %v2153
    %v2155 = vpop.f32.mrb[0].mxu0
    %2156 = vmatprep.mubr.f32.mxu0 0.0
    %2157 = vmatmul.mubr.f32.gmra.mrb[0].mxu0 %v913
    %v2158 = vpop.f32.mrb[0].mxu0
    %v2159 = vadd.f32 0.0, %v2158
    %v2160 = vpop.f32.mrb[0].mxu0
    %2161 = vmatprep.mubr.f32.mxu0 0.0
    %2162 = vmatmul.mubr.f32.gmra.mrb[0].mxu0 %v916
    %v2163 = vpop.f32.mrb[0].mxu0
    %v2164 = vadd.f32 0.0, %v2163
    %v2165 = vpop.f32.mrb[0].mxu0
    %2166 = vmatprep.mubr.f32.mxu0 0.0
    %2167 = vmatmul.mubr.f32.gmra.mrb[0].mxu0 %v919
    %v2168 = vpop.f32.mrb[0].mxu0
    %v2169 = vadd.f32 0.0, %v2168
    %v2170 = vpop.f32.mrb[0].mxu0
    %2171 = vmatprep.mubr.f32.mxu0 0.0
    %2172 = vmatmul.mubr.f32.gmra.mrb[0].mxu0 %v922
    %v2173 = vpop.f32.mrb[0].mxu0
    %v2174 = vadd.f32 0.0, %v2173
    %v2175 = vpop.f32.mrb[0].mxu0
    %2176 = vmatprep.mubr.f32.mxu0 0.0
    %2177 = vmatmul.mubr.f32.gmra.mrb[0].mxu0 %v925
    %v2178 = vpop.f32.mrb[0].mxu0
    %v2179 = vadd.f32 0.0, %v2178
    %v2180 = vpop.f32.mrb[0].mxu0
    %2181 = vmatprep.mubr.f32.mxu0 0.0
    %2182 = vmatmul.mubr.f32.gmra.mrb[0].mxu0 %v928
    %v2183 = vpop.f32.mrb[0].mxu0
    %v2184 = vadd.f32 0.0, %v2183
    %v2185 = vpop.f32.mrb[0].mxu0
    %2186 = vmatprep.mubr.f32.mxu0 0.0
    %2187 = vmatmul.mubr.f32.gmra.mrb[0].mxu0 %v931
    %v2188 = vpop.f32.mrb[0].mxu0
    %v2189 = vadd.f32 0.0, %v2188
    %v2190 = vpop.f32.mrb[0].mxu0
    %2191 = vmatprep.mubr.f32.mxu0 0.0
    %2192 = vmatmul.mubr.f32.gmra.mrb[0].mxu0 %v934
    %v2193 = vpop.f32.mrb[0].mxu0
    %v2194 = vadd.f32 0.0, %v2193
    %v2195 = vpop.f32.mrb[0].mxu0
    %2196 = vmatprep.mubr.f32.mxu0 0.0
    %2197 = vmatmul.mubr.f32.gmra.mrb[0].mxu0 %v937
    %v2198 = vpop.f32.mrb[0].mxu0
    %v2199 = vadd.f32 0.0, %v2198
    %v2200 = vpop.f32.mrb[0].mxu0
    %2201 = vmatprep.mubr.f32.mxu0 0.0
    %2202 = vmatmul.mubr.f32.gmra.mrb[0].mxu0 %v940
    %v2203 = vpop.f32.mrb[0].mxu0
    %v2204 = vadd.f32 0.0, %v2203
    %v2205 = vpop.f32.mrb[0].mxu0
    %2206 = vmatprep.mubr.f32.mxu0 0.0
    %2207 = vmatmul.mubr.f32.gmra.mrb[0].mxu0 %v943
    %v2208 = vpop.f32.mrb[0].mxu0
    %v2209 = vadd.f32 0.0, %v2208
    %v2210 = vpop.f32.mrb[0].mxu0
    %2211 = vmatprep.mubr.f32.mxu0 0.0
    %2212 = vmatmul.mubr.f32.gmra.mrb[0].mxu0 %v946
    %v2213 = vpop.f32.mrb[0].mxu0
    %v2214 = vadd.f32 0.0, %v2213
    %v2215 = vpop.f32.mrb[0].mxu0
    %2216 = vmatprep.mubr.f32.mxu0 0.0
    %2217 = vmatmul.mubr.f32.gmra.mrb[0].mxu0 %v949
    %v2218 = vpop.f32.mrb[0].mxu0
    %v2219 = vadd.f32 0.0, %v2218
    %v2220 = vpop.f32.mrb[0].mxu0
    %2221 = vmatprep.mubr.f32.mxu0 0.0
    %2222 = vmatmul.mubr.f32.gmra.mrb[0].mxu0 %v952
    %v2223 = vpop.f32.mrb[0].mxu0
    %v2224 = vadd.f32 0.0, %v2223
    %v2225 = vpop.f32.mrb[0].mxu0
    %2226 = vmatprep.mubr.f32.mxu0 0.0
    %2227 = vmatmul.mubr.f32.gmra.mrb[0].mxu0 %v955
    %v2228 = vpop.f32.mrb[0].mxu0
    %v2229 = vadd.f32 0.0, %v2228
    %v2230 = vpop.f32.mrb[0].mxu0
    %2231 = vmatprep.mubr.f32.mxu0 0.0
    %2232 = vmatmul.mubr.f32.gmra.mrb[0].mxu0 %v958
    %v2233 = vpop.f32.mrb[0].mxu0
    %v2234 = vadd.f32 0.0, %v2233
    %v2235 = vpop.f32.mrb[0].mxu0
    %2236 = vmatprep.mubr.f32.mxu0 0.0
    %2237 = vmatmul.mubr.f32.gmra.mrb[0].mxu0 %v961
    %v2238 = vpop.f32.mrb[0].mxu0
    %v2239 = vadd.f32 0.0, %v2238
    %v2240 = vpop.f32.mrb[0].mxu0
    %2241 = vmatprep.mubr.f32.mxu0 0.0
    %2242 = vmatmul.mubr.f32.gmra.mrb[0].mxu0 %v964
    %v2243 = vpop.f32.mrb[0].mxu0
    %v2244 = vadd.f32 0.0, %v2243
    %v2245 = vpop.f32.mrb[0].mxu0
    %2246 = vmatprep.mubr.f32.mxu0 0.0
    %2247 = vmatmul.mubr.f32.gmra.mrb[0].mxu0 %v967
    %v2248 = vpop.f32.mrb[0].mxu0
    %v2249 = vadd.f32 0.0, %v2248
    %v2250 = vpop.f32.mrb[0].mxu0
    %2251 = vmatprep.mubr.f32.mxu0 0.0
    %2252 = vmatmul.mubr.f32.gmra.mrb[0].mxu0 %v970
    %v2253 = vpop.f32.mrb[0].mxu0
    %v2254 = vadd.f32 0.0, %v2253
    %v2255 = vpop.f32.mrb[0].mxu0
    %2256 = vmatprep.mubr.f32.mxu0 0.0
    %2257 = vmatmul.mubr.f32.gmra.mrb[0].mxu0 %v973
    %v2258 = vpop.f32.mrb[0].mxu0
    %v2259 = vadd.f32 0.0, %v2258
    %v2260 = vpop.f32.mrb[0].mxu0
    %2261 = vmatprep.mubr.f32.mxu0 0.0
    %2262 = vmatmul.mubr.f32.gmra.mrb[0].mxu0 %v976
    %v2263 = vpop.f32.mrb[0].mxu0
    %v2264 = vadd.f32 0.0, %v2263
    %v2265 = vpop.f32.mrb[0].mxu0
    %2266 = vmatprep.mubr.f32.mxu0 0.0
    %2267 = vmatmul.mubr.f32.gmra.mrb[0].mxu0 %v979
    %v2268 = vpop.f32.mrb[0].mxu0
    %v2269 = vadd.f32 0.0, %v2268
    %v2270 = vpop.f32.mrb[0].mxu0
    %2271 = vmatprep.mubr.f32.mxu0 0.0
    %2272 = vmatmul.mubr.f32.gmra.mrb[0].mxu0 %v982
    %v2273 = vpop.f32.mrb[0].mxu0
    %v2274 = vadd.f32 0.0, %v2273
    %v2275 = vpop.f32.mrb[0].mxu0
    %2276 = vmatprep.mubr.f32.mxu0 0.0
    %2277 = vmatmul.mubr.f32.gmra.mrb[0].mxu0 %v985
    %v2278 = vpop.f32.mrb[0].mxu0
    %v2279 = vadd.f32 0.0, %v2278
    %v2280 = vpop.f32.mrb[0].mxu0
    %2281 = vmatprep.mubr.f32.mxu0 0.0
    %2282 = vmatmul.mubr.f32.gmra.mrb[0].mxu0 %v988
    %v2283 = vpop.f32.mrb[0].mxu0
    %v2284 = vadd.f32 0.0, %v2283
    %v2285 = vpop.f32.mrb[0].mxu0
    %2286 = vmatprep.mubr.f32.mxu0 0.0
    %2287 = vmatmul.mubr.f32.gmra.mrb[0].mxu0 %v991
    %v2288 = vpop.f32.mrb[0].mxu0
    %v2289 = vadd.f32 0.0, %v2288
    %v2290 = vpop.f32.mrb[0].mxu0
    %2291 = vmatprep.mubr.f32.mxu0 0.0
    %2292 = vmatmul.mubr.f32.gmra.mrb[0].mxu0 %v994
    %v2293 = vpop.f32.mrb[0].mxu0
    %v2294 = vadd.f32 0.0, %v2293
    %v2295 = vpop.f32.mrb[0].mxu0
    %2296 = vmatprep.mubr.f32.mxu0 0.0
    %2297 = vmatmul.mubr.f32.gmra.mrb[0].mxu0 %v997
    %v2298 = vpop.f32.mrb[0].mxu0
    %v2299 = vadd.f32 0.0, %v2298
    %v2300 = vpop.f32.mrb[0].mxu0
    %2301 = vmatprep.mubr.f32.mxu0 0.0
    %2302 = vmatmul.mubr.f32.gmra.mrb[0].mxu0 %v1000
    %v2303 = vpop.f32.mrb[0].mxu0
    %v2304 = vadd.f32 0.0, %v2303
    %v2305 = vpop.f32.mrb[0].mxu0
    %2306 = vmatprep.mubr.f32.mxu0 0.0
    %2307 = vmatmul.mubr.f32.gmra.mrb[0].mxu0 %v1003
    %v2308 = vpop.f32.mrb[0].mxu0
    %v2309 = vadd.f32 0.0, %v2308
    %v2310 = vpop.f32.mrb[0].mxu0
    %2311 = vmatprep.mubr.f32.mxu0 0.0
    %2312 = vmatmul.mubr.f32.gmra.mrb[0].mxu0 %v1006
    %v2313 = vpop.f32.mrb[0].mxu0
    %v2314 = vadd.f32 0.0, %v2313
    %v2315 = vpop.f32.mrb[0].mxu0
    %2316 = vmatprep.mubr.f32.mxu0 0.0
    %2317 = vmatmul.mubr.f32.gmra.mrb[0].mxu0 %v1009
    %v2318 = vpop.f32.mrb[0].mxu0
    %v2319 = vadd.f32 0.0, %v2318
    %v2320 = vpop.f32.mrb[0].mxu0
    %2321 = vmatprep.mubr.f32.mxu0 0.0
    %2322 = vmatmul.mubr.f32.gmra.mrb[0].mxu0 %v1012
    %v2323 = vpop.f32.mrb[0].mxu0
    %v2324 = vadd.f32 0.0, %v2323
    %v2325 = vpop.f32.mrb[0].mxu0
    %2326 = vmatprep.mubr.f32.mxu0 0.0
    %2327 = vmatmul.mubr.f32.gmra.mrb[0].mxu0 %v1015
    %v2328 = vpop.f32.mrb[0].mxu0
    %v2329 = vadd.f32 0.0, %v2328
    %v2330 = vpop.f32.mrb[0].mxu0
    %2331 = vmatprep.mubr.f32.mxu0 0.0
    %2332 = vmatmul.mubr.f32.gmra.mrb[0].mxu0 %v1018
    %v2333 = vpop.f32.mrb[0].mxu0
    %v2334 = vadd.f32 0.0, %v2333
    %v2335 = vpop.f32.mrb[0].mxu0
    %2336 = vmatprep.mubr.f32.mxu0 0.0
    %2337 = vmatmul.mubr.f32.gmra.mrb[0].mxu0 %v1021
    %v2338 = vpop.f32.mrb[0].mxu0
    %v2339 = vadd.f32 0.0, %v2338
    %v2340 = vpop.f32.mrb[0].mxu0
    %2341 = vmatprep.mubr.f32.mxu0 0.0
    %2342 = vmatmul.mubr.f32.gmra.mrb[0].mxu0 %v1024
    %v2343 = vpop.f32.mrb[0].mxu0
    %v2344 = vadd.f32 0.0, %v2343
    %v2345 = vpop.f32.mrb[0].mxu0
    %2346 = vmatprep.mubr.f32.mxu0 0.0
    %2347 = vmatmul.mubr.f32.gmra.mrb[0].mxu0 %v1027
    %v2348 = vpop.f32.mrb[0].mxu0
    %v2349 = vadd.f32 0.0, %v2348
    %v2350 = vpop.f32.mrb[0].mxu0
    %2351 = vmatprep.mubr.f32.mxu0 0.0
    %2352 = vmatmul.mubr.f32.gmra.mrb[0].mxu0 %v1030
    %v2353 = vpop.f32.mrb[0].mxu0
    %v2354 = vadd.f32 0.0, %v2353
    %v2355 = vpop.f32.mrb[0].mxu0
    %2356 = vmatprep.mubr.f32.mxu0 0.0
    %2357 = vmatmul.mubr.f32.gmra.mrb[0].mxu0 %v1033
    %v2358 = vpop.f32.mrb[0].mxu0
    %v2359 = vadd.f32 0.0, %v2358
    %v2360 = vpop.f32.mrb[0].mxu0
    %2361 = vmatprep.mubr.f32.mxu0 0.0
    %2362 = vmatmul.mubr.f32.gmra.mrb[0].mxu0 %v1036
    %v2363 = vpop.f32.mrb[0].mxu0
    %v2364 = vadd.f32 0.0, %v2363
    %v2365 = vpop.f32.mrb[0].mxu0
    %2366 = vmatprep.mubr.f32.mxu0 0.0
    %2367 = vmatmul.mubr.f32.gmra.mrb[0].mxu0 %v1039
    %v2368 = vpop.f32.mrb[0].mxu0
    %v2369 = vadd.f32 0.0, %v2368
    %v2370 = vpop.f32.mrb[0].mxu0
    %2371 = vmatprep.mubr.f32.mxu0 0.0
    %2372 = vmatmul.mubr.f32.gmra.mrb[0].mxu0 %v1042
    %v2373 = vpop.f32.mrb[0].mxu0
    %v2374 = vadd.f32 0.0, %v2373
    %v2375 = vpop.f32.mrb[0].mxu0
    %2376 = vmatprep.mubr.f32.mxu0 0.0
    %2377 = vmatmul.mubr.f32.gmra.mrb[0].mxu0 %v1045
    %v2378 = vpop.f32.mrb[0].mxu0
    %v2379 = vadd.f32 0.0, %v2378
    %v2380 = vpop.f32.mrb[0].mxu0
    %2381 = vmatprep.mubr.f32.mxu0 0.0
    %2382 = vmatmul.mubr.f32.gmra.mrb[0].mxu0 %v1048
    %v2383 = vpop.f32.mrb[0].mxu0
    %v2384 = vadd.f32 0.0, %v2383
    %v2385 = vpop.f32.mrb[0].mxu0
    %2386 = vmatprep.mubr.f32.mxu0 0.0
    %2387 = vmatmul.mubr.f32.gmra.mrb[0].mxu0 %v1051
    %v2388 = vpop.f32.mrb[0].mxu0
    %v2389 = vadd.f32 0.0, %v2388
    %v2390 = vpop.f32.mrb[0].mxu0
    %2391 = vmatprep.mubr.f32.mxu0 0.0
    %2392 = vmatmul.mubr.f32.gmra.mrb[0].mxu0 %v1054
    %v2393 = vpop.f32.mrb[0].mxu0
    %v2394 = vadd.f32 0.0, %v2393
    %v2395 = vpop.f32.mrb[0].mxu0
    %2396 = vmatprep.mubr.f32.mxu0 0.0
    %2397 = vmatmul.mubr.f32.gmra.mrb[0].mxu0 %v1057
    %v2398 = vpop.f32.mrb[0].mxu0
    %v2399 = vadd.f32 0.0, %v2398
    %v2400 = vpop.f32.mrb[0].mxu0
    %2401 = vmatprep.mubr.f32.mxu0 0.0
    %2402 = vmatmul.mubr.f32.gmra.mrb[0].mxu0 %v1060
    %v2403 = vpop.f32.mrb[0].mxu0
    %v2404 = vadd.f32 0.0, %v2403
    %v2405 = vpop.f32.mrb[0].mxu0
    %2406 = vmatprep.mubr.f32.mxu0 0.0
    %2407 = vmatmul.mubr.f32.gmra.mrb[0].mxu0 %v1063
    %v2408 = vpop.f32.mrb[0].mxu0
    %v2409 = vadd.f32 0.0, %v2408
    %v2410 = vpop.f32.mrb[0].mxu0
    %2411 = vmatprep.mubr.f32.mxu0 0.0
    %2412 = vmatmul.mubr.f32.gmra.mrb[0].mxu0 %v1066
    %v2413 = vpop.f32.mrb[0].mxu0
    %v2414 = vadd.f32 0.0, %v2413
    %v2415 = vpop.f32.mrb[0].mxu0
    %2416 = vdwg.mxu0
    %vm2417 = vcmask 523264
    %v2418 = vsel %vm2417, %v1139, 0.0
    %v2419 = vsel %vm2417, %v1144, 0.0
    %v2420 = vadd.f32 %v2418, %v2419
    %v2421 = vsel %vm2417, %v1149, 0.0
    %v2422 = vadd.f32 %v2420, %v2421
    %v2423 = vsel %vm2417, %v1154, 0.0
    %v2424 = vadd.f32 %v2422, %v2423
    %v2425 = vsel %vm2417, %v1159, 0.0
    %v2426 = vadd.f32 %v2424, %v2425
    %v2427 = vsel %vm2417, %v1164, 0.0
    %v2428 = vadd.f32 %v2426, %v2427
    %v2429 = vsel %vm2417, %v1169, 0.0
    %v2430 = vadd.f32 %v2428, %v2429
    %v2431 = vsel %vm2417, %v1174, 0.0
    %v2432 = vadd.f32 %v2430, %v2431
    %v2433 = vsel %vm2417, %v1179, 0.0
    %v2434 = vadd.f32 %v2432, %v2433
    %v2435 = vsel %vm2417, %v1184, 0.0
    %v2436 = vadd.f32 %v2434, %v2435
    %v2437 = vsel %vm2417, %v1189, 0.0
    %v2438 = vadd.f32 %v2436, %v2437
    %v2439 = vsel %vm2417, %v1194, 0.0
    %v2440 = vadd.f32 %v2438, %v2439
    %v2441 = vsel %vm2417, %v1199, 0.0
    %v2442 = vadd.f32 %v2440, %v2441
    %v2443 = vsel %vm2417, %v1204, 0.0
    %v2444 = vadd.f32 %v2442, %v2443
    %v2445 = vsel %vm2417, %v1209, 0.0
    %v2446 = vadd.f32 %v2444, %v2445
    %v2447 = vsel %vm2417, %v1214, 0.0
    %v2448 = vadd.f32 %v2446, %v2447
    %v2449 = vsel %vm2417, %v1219, 0.0
    %v2450 = vadd.f32 %v2448, %v2449
    %v2451 = vsel %vm2417, %v1224, 0.0
    %v2452 = vadd.f32 %v2450, %v2451
    %v2453 = vsel %vm2417, %v1229, 0.0
    %v2454 = vadd.f32 %v2452, %v2453
    %v2455 = vsel %vm2417, %v1234, 0.0
    %v2456 = vadd.f32 %v2454, %v2455
    %v2457 = vsel %vm2417, %v1239, 0.0
    %v2458 = vadd.f32 %v2456, %v2457
    %v2459 = vsel %vm2417, %v1244, 0.0
    %v2460 = vadd.f32 %v2458, %v2459
    %v2461 = vsel %vm2417, %v1249, 0.0
    %v2462 = vadd.f32 %v2460, %v2461
    %v2463 = vsel %vm2417, %v1254, 0.0
    %v2464 = vadd.f32 %v2462, %v2463
    %v2465 = vsel %vm2417, %v1259, 0.0
    %v2466 = vadd.f32 %v2464, %v2465
    %v2467 = vsel %vm2417, %v1264, 0.0
    %v2468 = vadd.f32 %v2466, %v2467
    %v2469 = vsel %vm2417, %v1269, 0.0
    %v2470 = vadd.f32 %v2468, %v2469
    %v2471 = vsel %vm2417, %v1274, 0.0
    %v2472 = vadd.f32 %v2470, %v2471
    %v2473 = vsel %vm2417, %v1279, 0.0
    %v2474 = vadd.f32 %v2472, %v2473
    %v2475 = vsel %vm2417, %v1284, 0.0
    %v2476 = vadd.f32 %v2474, %v2475
    %v2477 = vsel %vm2417, %v1289, 0.0
    %v2478 = vadd.f32 %v2476, %v2477
    %v2479 = vsel %vm2417, %v1294, 0.0
    %v2480 = vadd.f32 %v2478, %v2479
    %v2481 = vsel %vm2417, %v1299, 0.0
    %v2482 = vadd.f32 %v2480, %v2481
    %v2483 = vsel %vm2417, %v1304, 0.0
    %v2484 = vadd.f32 %v2482, %v2483
    %v2485 = vsel %vm2417, %v1309, 0.0
    %v2486 = vadd.f32 %v2484, %v2485
    %v2487 = vsel %vm2417, %v1314, 0.0
    %v2488 = vadd.f32 %v2486, %v2487
    %v2489 = vsel %vm2417, %v1319, 0.0
    %v2490 = vadd.f32 %v2488, %v2489
    %v2491 = vsel %vm2417, %v1324, 0.0
    %v2492 = vadd.f32 %v2490, %v2491
    %v2493 = vsel %vm2417, %v1329, 0.0
    %v2494 = vadd.f32 %v2492, %v2493
    %v2495 = vsel %vm2417, %v1334, 0.0
    %v2496 = vadd.f32 %v2494, %v2495
    %v2497 = vsel %vm2417, %v1339, 0.0
    %v2498 = vadd.f32 %v2496, %v2497
    %v2499 = vsel %vm2417, %v1344, 0.0
    %v2500 = vadd.f32 %v2498, %v2499
    %v2501 = vsel %vm2417, %v1349, 0.0
    %v2502 = vadd.f32 %v2500, %v2501
    %v2503 = vsel %vm2417, %v1354, 0.0
    %v2504 = vadd.f32 %v2502, %v2503
    %v2505 = vsel %vm2417, %v1359, 0.0
    %v2506 = vadd.f32 %v2504, %v2505
    %v2507 = vsel %vm2417, %v1364, 0.0
    %v2508 = vadd.f32 %v2506, %v2507
    %v2509 = vsel %vm2417, %v1369, 0.0
    %v2510 = vadd.f32 %v2508, %v2509
    %v2511 = vsel %vm2417, %v1374, 0.0
    %v2512 = vadd.f32 %v2510, %v2511
    %v2513 = vsel %vm2417, %v1379, 0.0
    %v2514 = vadd.f32 %v2512, %v2513
    %v2515 = vsel %vm2417, %v1384, 0.0
    %v2516 = vadd.f32 %v2514, %v2515
    %v2517 = vsel %vm2417, %v1389, 0.0
    %v2518 = vadd.f32 %v2516, %v2517
    %v2519 = vsel %vm2417, %v1394, 0.0
    %v2520 = vadd.f32 %v2518, %v2519
    %v2521 = vsel %vm2417, %v1399, 0.0
    %v2522 = vadd.f32 %v2520, %v2521
    %v2523 = vsel %vm2417, %v1404, 0.0
    %v2524 = vadd.f32 %v2522, %v2523
    %v2525 = vsel %vm2417, %v1409, 0.0
    %v2526 = vadd.f32 %v2524, %v2525
    %v2527 = vsel %vm2417, %v1414, 0.0
    %v2528 = vadd.f32 %v2526, %v2527
    %v2529 = vsel %vm2417, %v1419, 0.0
    %v2530 = vadd.f32 %v2528, %v2529
    %v2531 = vsel %vm2417, %v1424, 0.0
    %v2532 = vadd.f32 %v2530, %v2531
    %v2533 = vsel %vm2417, %v1429, 0.0
    %v2534 = vadd.f32 %v2532, %v2533
    %v2535 = vsel %vm2417, %v1434, 0.0
    %v2536 = vadd.f32 %v2534, %v2535
    %v2537 = vsel %vm2417, %v1439, 0.0
    %v2538 = vadd.f32 %v2536, %v2537
    %v2539 = vsel %vm2417, %v1444, 0.0
    %v2540 = vadd.f32 %v2538, %v2539
    %v2541 = vsel %vm2417, %v1449, 0.0
    %v2542 = vadd.f32 %v2540, %v2541
    %v2543 = vsel %vm2417, %v1454, 0.0
    %v2544 = vadd.f32 %v2542, %v2543
    %v2545 = vsel %vm2417, %v1459, 0.0
    %v2546 = vadd.f32 %v2544, %v2545
    %v2547 = vsel %vm2417, %v1464, 0.0
    %v2548 = vadd.f32 %v2546, %v2547
    %v2549 = vsel %vm2417, %v1469, 0.0
    %v2550 = vadd.f32 %v2548, %v2549
    %v2551 = vsel %vm2417, %v1474, 0.0
    %v2552 = vadd.f32 %v2550, %v2551
    %v2553 = vsel %vm2417, %v1479, 0.0
    %v2554 = vadd.f32 %v2552, %v2553
    %v2555 = vsel %vm2417, %v1484, 0.0
    %v2556 = vadd.f32 %v2554, %v2555
    %v2557 = vsel %vm2417, %v1489, 0.0
    %v2558 = vadd.f32 %v2556, %v2557
    %v2559 = vsel %vm2417, %v1494, 0.0
    %v2560 = vadd.f32 %v2558, %v2559
    %v2561 = vsel %vm2417, %v1499, 0.0
    %v2562 = vadd.f32 %v2560, %v2561
    %v2563 = vsel %vm2417, %v1504, 0.0
    %v2564 = vadd.f32 %v2562, %v2563
    %v2565 = vsel %vm2417, %v1509, 0.0
    %v2566 = vadd.f32 %v2564, %v2565
    %v2567 = vsel %vm2417, %v1514, 0.0
    %v2568 = vadd.f32 %v2566, %v2567
    %v2569 = vsel %vm2417, %v1519, 0.0
    %v2570 = vadd.f32 %v2568, %v2569
    %v2571 = vsel %vm2417, %v1524, 0.0
    %v2572 = vadd.f32 %v2570, %v2571
    %v2573 = vsel %vm2417, %v1529, 0.0
    %v2574 = vadd.f32 %v2572, %v2573
    %v2575 = vsel %vm2417, %v1534, 0.0
    %v2576 = vadd.f32 %v2574, %v2575
    %v2577 = vsel %vm2417, %v1539, 0.0
    %v2578 = vadd.f32 %v2576, %v2577
    %v2579 = vsel %vm2417, %v1544, 0.0
    %v2580 = vadd.f32 %v2578, %v2579
    %v2581 = vsel %vm2417, %v1549, 0.0
    %v2582 = vadd.f32 %v2580, %v2581
    %v2583 = vsel %vm2417, %v1554, 0.0
    %v2584 = vadd.f32 %v2582, %v2583
    %v2585 = vsel %vm2417, %v1559, 0.0
    %v2586 = vadd.f32 %v2584, %v2585
    %v2587 = vsel %vm2417, %v1564, 0.0
    %v2588 = vadd.f32 %v2586, %v2587
    %v2589 = vsel %vm2417, %v1569, 0.0
    %v2590 = vadd.f32 %v2588, %v2589
    %v2591 = vsel %vm2417, %v1574, 0.0
    %v2592 = vadd.f32 %v2590, %v2591
    %v2593 = vsel %vm2417, %v1579, 0.0
    %v2594 = vadd.f32 %v2592, %v2593
    %v2595 = vsel %vm2417, %v1584, 0.0
    %v2596 = vadd.f32 %v2594, %v2595
    %v2597 = vsel %vm2417, %v1589, 0.0
    %v2598 = vadd.f32 %v2596, %v2597
    %v2599 = vsel %vm2417, %v1594, 0.0
    %v2600 = vadd.f32 %v2598, %v2599
    %v2601 = vsel %vm2417, %v1599, 0.0
    %v2602 = vadd.f32 %v2600, %v2601
    %v2603 = vsel %vm2417, %v1604, 0.0
    %v2604 = vadd.f32 %v2602, %v2603
    %v2605 = vsel %vm2417, %v1609, 0.0
    %v2606 = vadd.f32 %v2604, %v2605
    %v2607 = vsel %vm2417, %v1614, 0.0
    %v2608 = vadd.f32 %v2606, %v2607
    %v2609 = vsel %vm2417, %v1619, 0.0
    %v2610 = vadd.f32 %v2608, %v2609
    %v2611 = vsel %vm2417, %v1624, 0.0
    %v2612 = vadd.f32 %v2610, %v2611
    %v2613 = vsel %vm2417, %v1629, 0.0
    %v2614 = vadd.f32 %v2612, %v2613
    %v2615 = vsel %vm2417, %v1634, 0.0
    %v2616 = vadd.f32 %v2614, %v2615
    %v2617 = vsel %vm2417, %v1639, 0.0
    %v2618 = vadd.f32 %v2616, %v2617
    %v2619 = vsel %vm2417, %v1644, 0.0
    %v2620 = vadd.f32 %v2618, %v2619
    %v2621 = vsel %vm2417, %v1649, 0.0
    %v2622 = vadd.f32 %v2620, %v2621
    %v2623 = vsel %vm2417, %v1654, 0.0
    %v2624 = vadd.f32 %v2622, %v2623
    %v2625 = vsel %vm2417, %v1659, 0.0
    %v2626 = vadd.f32 %v2624, %v2625
    %v2627 = vsel %vm2417, %v1664, 0.0
    %v2628 = vadd.f32 %v2626, %v2627
    %v2629 = vsel %vm2417, %v1669, 0.0
    %v2630 = vadd.f32 %v2628, %v2629
    %v2631 = vsel %vm2417, %v1674, 0.0
    %v2632 = vadd.f32 %v2630, %v2631
    %v2633 = vsel %vm2417, %v1679, 0.0
    %v2634 = vadd.f32 %v2632, %v2633
    %v2635 = vsel %vm2417, %v1684, 0.0
    %v2636 = vadd.f32 %v2634, %v2635
    %v2637 = vsel %vm2417, %v1689, 0.0
    %v2638 = vadd.f32 %v2636, %v2637
    %v2639 = vsel %vm2417, %v1694, 0.0
    %v2640 = vadd.f32 %v2638, %v2639
    %v2641 = vsel %vm2417, %v1699, 0.0
    %v2642 = vadd.f32 %v2640, %v2641
    %v2643 = vsel %vm2417, %v1704, 0.0
    %v2644 = vadd.f32 %v2642, %v2643
    %v2645 = vsel %vm2417, %v1709, 0.0
    %v2646 = vadd.f32 %v2644, %v2645
    %v2647 = vsel %vm2417, %v1714, 0.0
    %v2648 = vadd.f32 %v2646, %v2647
    %v2649 = vsel %vm2417, %v1719, 0.0
    %v2650 = vadd.f32 %v2648, %v2649
    %v2651 = vsel %vm2417, %v1724, 0.0
    %v2652 = vadd.f32 %v2650, %v2651
    %v2653 = vsel %vm2417, %v1729, 0.0
    %v2654 = vadd.f32 %v2652, %v2653
    %v2655 = vsel %vm2417, %v1734, 0.0
    %v2656 = vadd.f32 %v2654, %v2655
    %v2657 = vsel %vm2417, %v1739, 0.0
    %v2658 = vadd.f32 %v2656, %v2657
    %v2659 = vsel %vm2417, %v1744, 0.0
    %v2660 = vadd.f32 %v2658, %v2659
    %v2661 = vsel %vm2417, %v1749, 0.0
    %v2662 = vadd.f32 %v2660, %v2661
    %v2663 = vsel %vm2417, %v1754, 0.0
    %v2664 = vadd.f32 %v2662, %v2663
    %v2665 = vsel %vm2417, %v1759, 0.0
    %v2666 = vadd.f32 %v2664, %v2665
    %v2667 = vsel %vm2417, %v1764, 0.0
    %v2668 = vadd.f32 %v2666, %v2667
    %v2669 = vsel %vm2417, %v1769, 0.0
    %v2670 = vadd.f32 %v2668, %v2669
    %v2671 = vsel %vm2417, %v1774, 0.0
    %v2672 = vadd.f32 %v2670, %v2671
    %v2673 = vsel %vm2417, %v1779, 0.0
    %v2674 = vadd.f32 %v2672, %v2673
    %v2675 = vsel %vm2417, %v1784, 0.0
    %v2676 = vadd.f32 %v2674, %v2675
    %v2677 = vsel %vm2417, %v1789, 0.0
    %v2678 = vadd.f32 %v2676, %v2677
    %v2679 = vsel %vm2417, %v1794, 0.0
    %v2680 = vadd.f32 %v2678, %v2679
    %v2681 = vsel %vm2417, %v1799, 0.0
    %v2682 = vadd.f32 %v2680, %v2681
    %v2683 = vsel %vm2417, %v1804, 0.0
    %v2684 = vadd.f32 %v2682, %v2683
    %v2685 = vsel %vm2417, %v1809, 0.0
    %v2686 = vadd.f32 %v2684, %v2685
    %v2687 = vsel %vm2417, %v1814, 0.0
    %v2688 = vadd.f32 %v2686, %v2687
    %v2689 = vsel %vm2417, %v1819, 0.0
    %v2690 = vadd.f32 %v2688, %v2689
    %v2691 = vsel %vm2417, %v1824, 0.0
    %v2692 = vadd.f32 %v2690, %v2691
    %v2693 = vsel %vm2417, %v1829, 0.0
    %v2694 = vadd.f32 %v2692, %v2693
    %v2695 = vsel %vm2417, %v1834, 0.0
    %v2696 = vadd.f32 %v2694, %v2695
    %v2697 = vsel %vm2417, %v1839, 0.0
    %v2698 = vadd.f32 %v2696, %v2697
    %v2699 = vsel %vm2417, %v1844, 0.0
    %v2700 = vadd.f32 %v2698, %v2699
    %v2701 = vsel %vm2417, %v1849, 0.0
    %v2702 = vadd.f32 %v2700, %v2701
    %v2703 = vsel %vm2417, %v1854, 0.0
    %v2704 = vadd.f32 %v2702, %v2703
    %v2705 = vsel %vm2417, %v1859, 0.0
    %v2706 = vadd.f32 %v2704, %v2705
    %v2707 = vsel %vm2417, %v1864, 0.0
    %v2708 = vadd.f32 %v2706, %v2707
    %v2709 = vsel %vm2417, %v1869, 0.0
    %v2710 = vadd.f32 %v2708, %v2709
    %v2711 = vsel %vm2417, %v1874, 0.0
    %v2712 = vadd.f32 %v2710, %v2711
    %v2713 = vsel %vm2417, %v1879, 0.0
    %v2714 = vadd.f32 %v2712, %v2713
    %v2715 = vsel %vm2417, %v1884, 0.0
    %v2716 = vadd.f32 %v2714, %v2715
    %v2717 = vsel %vm2417, %v1889, 0.0
    %v2718 = vadd.f32 %v2716, %v2717
    %v2719 = vsel %vm2417, %v1894, 0.0
    %v2720 = vadd.f32 %v2718, %v2719
    %v2721 = vsel %vm2417, %v1899, 0.0
    %v2722 = vadd.f32 %v2720, %v2721
    %v2723 = vsel %vm2417, %v1904, 0.0
    %v2724 = vadd.f32 %v2722, %v2723
    %v2725 = vsel %vm2417, %v1909, 0.0
    %v2726 = vadd.f32 %v2724, %v2725
    %v2727 = vsel %vm2417, %v1914, 0.0
    %v2728 = vadd.f32 %v2726, %v2727
    %v2729 = vsel %vm2417, %v1919, 0.0
    %v2730 = vadd.f32 %v2728, %v2729
    %v2731 = vsel %vm2417, %v1924, 0.0
    %v2732 = vadd.f32 %v2730, %v2731
    %v2733 = vsel %vm2417, %v1929, 0.0
    %v2734 = vadd.f32 %v2732, %v2733
    %v2735 = vsel %vm2417, %v1934, 0.0
    %v2736 = vadd.f32 %v2734, %v2735
    %v2737 = vsel %vm2417, %v1939, 0.0
    %v2738 = vadd.f32 %v2736, %v2737
    %v2739 = vsel %vm2417, %v1944, 0.0
    %v2740 = vadd.f32 %v2738, %v2739
    %v2741 = vsel %vm2417, %v1949, 0.0
    %v2742 = vadd.f32 %v2740, %v2741
    %v2743 = vsel %vm2417, %v1954, 0.0
    %v2744 = vadd.f32 %v2742, %v2743
    %v2745 = vsel %vm2417, %v1959, 0.0
    %v2746 = vadd.f32 %v2744, %v2745
    %v2747 = vsel %vm2417, %v1964, 0.0
    %v2748 = vadd.f32 %v2746, %v2747
    %v2749 = vsel %vm2417, %v1969, 0.0
    %v2750 = vadd.f32 %v2748, %v2749
    %v2751 = vsel %vm2417, %v1974, 0.0
    %v2752 = vadd.f32 %v2750, %v2751
    %v2753 = vsel %vm2417, %v1979, 0.0
    %v2754 = vadd.f32 %v2752, %v2753
    %v2755 = vsel %vm2417, %v1984, 0.0
    %v2756 = vadd.f32 %v2754, %v2755
    %v2757 = vsel %vm2417, %v1989, 0.0
    %v2758 = vadd.f32 %v2756, %v2757
    %v2759 = vsel %vm2417, %v1994, 0.0
    %v2760 = vadd.f32 %v2758, %v2759
    %v2761 = vsel %vm2417, %v1999, 0.0
    %v2762 = vadd.f32 %v2760, %v2761
    %v2763 = vsel %vm2417, %v2004, 0.0
    %v2764 = vadd.f32 %v2762, %v2763
    %v2765 = vsel %vm2417, %v2009, 0.0
    %v2766 = vadd.f32 %v2764, %v2765
    %v2767 = vsel %vm2417, %v2014, 0.0
    %v2768 = vadd.f32 %v2766, %v2767
    %v2769 = vsel %vm2417, %v2019, 0.0
    %v2770 = vadd.f32 %v2768, %v2769
    %v2771 = vsel %vm2417, %v2024, 0.0
    %v2772 = vadd.f32 %v2770, %v2771
    %v2773 = vsel %vm2417, %v2029, 0.0
    %v2774 = vadd.f32 %v2772, %v2773
    %v2775 = vsel %vm2417, %v2034, 0.0
    %v2776 = vadd.f32 %v2774, %v2775
    %v2777 = vsel %vm2417, %v2039, 0.0
    %v2778 = vadd.f32 %v2776, %v2777
    %v2779 = vsel %vm2417, %v2044, 0.0
    %v2780 = vadd.f32 %v2778, %v2779
    %v2781 = vsel %vm2417, %v2049, 0.0
    %v2782 = vadd.f32 %v2780, %v2781
    %v2783 = vsel %vm2417, %v2054, 0.0
    %v2784 = vadd.f32 %v2782, %v2783
    %v2785 = vsel %vm2417, %v2059, 0.0
    %v2786 = vadd.f32 %v2784, %v2785
    %v2787 = vsel %vm2417, %v2064, 0.0
    %v2788 = vadd.f32 %v2786, %v2787
    %v2789 = vsel %vm2417, %v2069, 0.0
    %v2790 = vadd.f32 %v2788, %v2789
    %v2791 = vsel %vm2417, %v2074, 0.0
    %v2792 = vadd.f32 %v2790, %v2791
    %v2793 = vsel %vm2417, %v2079, 0.0
    %v2794 = vadd.f32 %v2792, %v2793
    %v2795 = vsel %vm2417, %v2084, 0.0
    %v2796 = vadd.f32 %v2794, %v2795
    %v2797 = vsel %vm2417, %v2089, 0.0
    %v2798 = vadd.f32 %v2796, %v2797
    %v2799 = vsel %vm2417, %v2094, 0.0
    %v2800 = vadd.f32 %v2798, %v2799
    %v2801 = vsel %vm2417, %v2099, 0.0
    %v2802 = vadd.f32 %v2800, %v2801
    %v2803 = vsel %vm2417, %v2104, 0.0
    %v2804 = vadd.f32 %v2802, %v2803
    %v2805 = vsel %vm2417, %v2109, 0.0
    %v2806 = vadd.f32 %v2804, %v2805
    %v2807 = vsel %vm2417, %v2114, 0.0
    %v2808 = vadd.f32 %v2806, %v2807
    %v2809 = vsel %vm2417, %v2119, 0.0
    %v2810 = vadd.f32 %v2808, %v2809
    %v2811 = vsel %vm2417, %v2124, 0.0
    %v2812 = vadd.f32 %v2810, %v2811
    %v2813 = vsel %vm2417, %v2129, 0.0
    %v2814 = vadd.f32 %v2812, %v2813
    %v2815 = vsel %vm2417, %v2134, 0.0
    %v2816 = vadd.f32 %v2814, %v2815
    %v2817 = vsel %vm2417, %v2139, 0.0
    %v2818 = vadd.f32 %v2816, %v2817
    %v2819 = vsel %vm2417, %v2144, 0.0
    %v2820 = vadd.f32 %v2818, %v2819
    %v2821 = vsel %vm2417, %v2149, 0.0
    %v2822 = vadd.f32 %v2820, %v2821
    %v2823 = vsel %vm2417, %v2154, 0.0
    %v2824 = vadd.f32 %v2822, %v2823
    %v2825 = vsel %vm2417, %v2159, 0.0
    %v2826 = vadd.f32 %v2824, %v2825
    %v2827 = vsel %vm2417, %v2164, 0.0
    %v2828 = vadd.f32 %v2826, %v2827
    %v2829 = vsel %vm2417, %v2169, 0.0
    %v2830 = vadd.f32 %v2828, %v2829
    %v2831 = vsel %vm2417, %v2174, 0.0
    %v2832 = vadd.f32 %v2830, %v2831
    %v2833 = vsel %vm2417, %v2179, 0.0
    %v2834 = vadd.f32 %v2832, %v2833
    %v2835 = vsel %vm2417, %v2184, 0.0
    %v2836 = vadd.f32 %v2834, %v2835
    %v2837 = vsel %vm2417, %v2189, 0.0
    %v2838 = vadd.f32 %v2836, %v2837
    %v2839 = vsel %vm2417, %v2194, 0.0
    %v2840 = vadd.f32 %v2838, %v2839
    %v2841 = vsel %vm2417, %v2199, 0.0
    %v2842 = vadd.f32 %v2840, %v2841
    %v2843 = vsel %vm2417, %v2204, 0.0
    %v2844 = vadd.f32 %v2842, %v2843
    %v2845 = vsel %vm2417, %v2209, 0.0
    %v2846 = vadd.f32 %v2844, %v2845
    %v2847 = vsel %vm2417, %v2214, 0.0
    %v2848 = vadd.f32 %v2846, %v2847
    %v2849 = vsel %vm2417, %v2219, 0.0
    %v2850 = vadd.f32 %v2848, %v2849
    %v2851 = vsel %vm2417, %v2224, 0.0
    %v2852 = vadd.f32 %v2850, %v2851
    %v2853 = vsel %vm2417, %v2229, 0.0
    %v2854 = vadd.f32 %v2852, %v2853
    %v2855 = vsel %vm2417, %v2234, 0.0
    %v2856 = vadd.f32 %v2854, %v2855
    %v2857 = vsel %vm2417, %v2239, 0.0
    %v2858 = vadd.f32 %v2856, %v2857
    %v2859 = vsel %vm2417, %v2244, 0.0
    %v2860 = vadd.f32 %v2858, %v2859
    %v2861 = vsel %vm2417, %v2249, 0.0
    %v2862 = vadd.f32 %v2860, %v2861
    %v2863 = vsel %vm2417, %v2254, 0.0
    %v2864 = vadd.f32 %v2862, %v2863
    %v2865 = vsel %vm2417, %v2259, 0.0
    %v2866 = vadd.f32 %v2864, %v2865
    %v2867 = vsel %vm2417, %v2264, 0.0
    %v2868 = vadd.f32 %v2866, %v2867
    %v2869 = vsel %vm2417, %v2269, 0.0
    %v2870 = vadd.f32 %v2868, %v2869
    %v2871 = vsel %vm2417, %v2274, 0.0
    %v2872 = vadd.f32 %v2870, %v2871
    %v2873 = vsel %vm2417, %v2279, 0.0
    %v2874 = vadd.f32 %v2872, %v2873
    %v2875 = vsel %vm2417, %v2284, 0.0
    %v2876 = vadd.f32 %v2874, %v2875
    %v2877 = vsel %vm2417, %v2289, 0.0
    %v2878 = vadd.f32 %v2876, %v2877
    %v2879 = vsel %vm2417, %v2294, 0.0
    %v2880 = vadd.f32 %v2878, %v2879
    %v2881 = vsel %vm2417, %v2299, 0.0
    %v2882 = vadd.f32 %v2880, %v2881
    %v2883 = vsel %vm2417, %v2304, 0.0
    %v2884 = vadd.f32 %v2882, %v2883
    %v2885 = vsel %vm2417, %v2309, 0.0
    %v2886 = vadd.f32 %v2884, %v2885
    %v2887 = vsel %vm2417, %v2314, 0.0
    %v2888 = vadd.f32 %v2886, %v2887
    %v2889 = vsel %vm2417, %v2319, 0.0
    %v2890 = vadd.f32 %v2888, %v2889
    %v2891 = vsel %vm2417, %v2324, 0.0
    %v2892 = vadd.f32 %v2890, %v2891
    %v2893 = vsel %vm2417, %v2329, 0.0
    %v2894 = vadd.f32 %v2892, %v2893
    %v2895 = vsel %vm2417, %v2334, 0.0
    %v2896 = vadd.f32 %v2894, %v2895
    %v2897 = vsel %vm2417, %v2339, 0.0
    %v2898 = vadd.f32 %v2896, %v2897
    %v2899 = vsel %vm2417, %v2344, 0.0
    %v2900 = vadd.f32 %v2898, %v2899
    %v2901 = vsel %vm2417, %v2349, 0.0
    %v2902 = vadd.f32 %v2900, %v2901
    %v2903 = vsel %vm2417, %v2354, 0.0
    %v2904 = vadd.f32 %v2902, %v2903
    %v2905 = vsel %vm2417, %v2359, 0.0
    %v2906 = vadd.f32 %v2904, %v2905
    %v2907 = vsel %vm2417, %v2364, 0.0
    %v2908 = vadd.f32 %v2906, %v2907
    %v2909 = vsel %vm2417, %v2369, 0.0
    %v2910 = vadd.f32 %v2908, %v2909
    %v2911 = vsel %vm2417, %v2374, 0.0
    %v2912 = vadd.f32 %v2910, %v2911
    %v2913 = vsel %vm2417, %v2379, 0.0
    %v2914 = vadd.f32 %v2912, %v2913
    %v2915 = vsel %vm2417, %v2384, 0.0
    %v2916 = vadd.f32 %v2914, %v2915
    %v2917 = vsel %vm2417, %v2389, 0.0
    %v2918 = vadd.f32 %v2916, %v2917
    %v2919 = vsel %vm2417, %v2394, 0.0
    %v2920 = vadd.f32 %v2918, %v2919
    %v2921 = vsel %vm2417, %v2399, 0.0
    %v2922 = vadd.f32 %v2920, %v2921
    %v2923 = vsel %vm2417, %v2404, 0.0
    %v2924 = vadd.f32 %v2922, %v2923
    %v2925 = vsel %vm2417, %v2409, 0.0
    %v2926 = vadd.f32 %v2924, %v2925
    %v2927 = vsel %vm2417, %v2414, 0.0
    %v2928 = vadd.f32 %v2926, %v2927
    %v2929 = vrot.slane %v2928, 4
    %v2930 = vadd.f32 %v2928, %v2929
    %v2931 = vrot.slane %v2930, 2
    %v2932 = vadd.f32 %v2930, %v2931
    %v2933 = vrot.slane %v2932, 1
    %v2934 = vadd.f32 %v2932, %v2933
    %v2935 = vrcp.pop 2048.0
    %v2936 = vmul.f32 %v2934, %v2935
    %v2937 = vsub.f32 %v1139, %v2936
    %v2938 = vsub.f32 %v1144, %v2936
    %v2939 = vsub.f32 %v1149, %v2936
    %v2940 = vsub.f32 %v1154, %v2936
    %v2941 = vsub.f32 %v1159, %v2936
    %v2942 = vsub.f32 %v1164, %v2936
    %v2943 = vsub.f32 %v1169, %v2936
    %v2944 = vsub.f32 %v1174, %v2936
    %v2945 = vsub.f32 %v1179, %v2936
    %v2946 = vsub.f32 %v1184, %v2936
    %v2947 = vsub.f32 %v1189, %v2936
    %v2948 = vsub.f32 %v1194, %v2936
    %v2949 = vsub.f32 %v1199, %v2936
    %v2950 = vsub.f32 %v1204, %v2936
    %v2951 = vsub.f32 %v1209, %v2936
    %v2952 = vsub.f32 %v1214, %v2936
    %v2953 = vsub.f32 %v1219, %v2936
    %v2954 = vsub.f32 %v1224, %v2936
    %v2955 = vsub.f32 %v1229, %v2936
    %v2956 = vsub.f32 %v1234, %v2936
    %v2957 = vsub.f32 %v1239, %v2936
    %v2958 = vsub.f32 %v1244, %v2936
    %v2959 = vsub.f32 %v1249, %v2936
    %v2960 = vsub.f32 %v1254, %v2936
    %v2961 = vsub.f32 %v1259, %v2936
    %v2962 = vsub.f32 %v1264, %v2936
    %v2963 = vsub.f32 %v1269, %v2936
    %v2964 = vsub.f32 %v1274, %v2936
    %v2965 = vsub.f32 %v1279, %v2936
    %v2966 = vsub.f32 %v1284, %v2936
    %v2967 = vsub.f32 %v1289, %v2936
    %v2968 = vsub.f32 %v1294, %v2936
    %v2969 = vsub.f32 %v1299, %v2936
    %v2970 = vsub.f32 %v1304, %v2936
    %v2971 = vsub.f32 %v1309, %v2936
    %v2972 = vsub.f32 %v1314, %v2936
    %v2973 = vsub.f32 %v1319, %v2936
    %v2974 = vsub.f32 %v1324, %v2936
    %v2975 = vsub.f32 %v1329, %v2936
    %v2976 = vsub.f32 %v1334, %v2936
    %v2977 = vsub.f32 %v1339, %v2936
    %v2978 = vsub.f32 %v1344, %v2936
    %v2979 = vsub.f32 %v1349, %v2936
    %v2980 = vsub.f32 %v1354, %v2936
    %v2981 = vsub.f32 %v1359, %v2936
    %v2982 = vsub.f32 %v1364, %v2936
    %v2983 = vsub.f32 %v1369, %v2936
    %v2984 = vsub.f32 %v1374, %v2936
    %v2985 = vsub.f32 %v1379, %v2936
    %v2986 = vsub.f32 %v1384, %v2936
    %v2987 = vsub.f32 %v1389, %v2936
    %v2988 = vsub.f32 %v1394, %v2936
    %v2989 = vsub.f32 %v1399, %v2936
    %v2990 = vsub.f32 %v1404, %v2936
    %v2991 = vsub.f32 %v1409, %v2936
    %v2992 = vsub.f32 %v1414, %v2936
    %v2993 = vsub.f32 %v1419, %v2936
    %v2994 = vsub.f32 %v1424, %v2936
    %v2995 = vsub.f32 %v1429, %v2936
    %v2996 = vsub.f32 %v1434, %v2936
    %v2997 = vsub.f32 %v1439, %v2936
    %v2998 = vsub.f32 %v1444, %v2936
    %v2999 = vsub.f32 %v1449, %v2936
    %v3000 = vsub.f32 %v1454, %v2936
    %v3001 = vsub.f32 %v1459, %v2936
    %v3002 = vsub.f32 %v1464, %v2936
    %v3003 = vsub.f32 %v1469, %v2936
    %v3004 = vsub.f32 %v1474, %v2936
    %v3005 = vsub.f32 %v1479, %v2936
    %v3006 = vsub.f32 %v1484, %v2936
    %v3007 = vsub.f32 %v1489, %v2936
    %v3008 = vsub.f32 %v1494, %v2936
    %v3009 = vsub.f32 %v1499, %v2936
    %v3010 = vsub.f32 %v1504, %v2936
    %v3011 = vsub.f32 %v1509, %v2936
    %v3012 = vsub.f32 %v1514, %v2936
    %v3013 = vsub.f32 %v1519, %v2936
    %v3014 = vsub.f32 %v1524, %v2936
    %v3015 = vsub.f32 %v1529, %v2936
    %v3016 = vsub.f32 %v1534, %v2936
    %v3017 = vsub.f32 %v1539, %v2936
    %v3018 = vsub.f32 %v1544, %v2936
    %v3019 = vsub.f32 %v1549, %v2936
    %v3020 = vsub.f32 %v1554, %v2936
    %v3021 = vsub.f32 %v1559, %v2936
    %v3022 = vsub.f32 %v1564, %v2936
    %v3023 = vsub.f32 %v1569, %v2936
    %v3024 = vsub.f32 %v1574, %v2936
    %v3025 = vsub.f32 %v1579, %v2936
    %v3026 = vsub.f32 %v1584, %v2936
    %v3027 = vsub.f32 %v1589, %v2936
    %v3028 = vsub.f32 %v1594, %v2936
    %v3029 = vsub.f32 %v1599, %v2936
    %v3030 = vsub.f32 %v1604, %v2936
    %v3031 = vsub.f32 %v1609, %v2936
    %v3032 = vsub.f32 %v1614, %v2936
    %v3033 = vsub.f32 %v1619, %v2936
    %v3034 = vsub.f32 %v1624, %v2936
    %v3035 = vsub.f32 %v1629, %v2936
    %v3036 = vsub.f32 %v1634, %v2936
    %v3037 = vsub.f32 %v1639, %v2936
    %v3038 = vsub.f32 %v1644, %v2936
    %v3039 = vsub.f32 %v1649, %v2936
    %v3040 = vsub.f32 %v1654, %v2936
    %v3041 = vsub.f32 %v1659, %v2936
    %v3042 = vsub.f32 %v1664, %v2936
    %v3043 = vsub.f32 %v1669, %v2936
    %v3044 = vsub.f32 %v1674, %v2936
    %v3045 = vsub.f32 %v1679, %v2936
    %v3046 = vsub.f32 %v1684, %v2936
    %v3047 = vsub.f32 %v1689, %v2936
    %v3048 = vsub.f32 %v1694, %v2936
    %v3049 = vsub.f32 %v1699, %v2936
    %v3050 = vsub.f32 %v1704, %v2936
    %v3051 = vsub.f32 %v1709, %v2936
    %v3052 = vsub.f32 %v1714, %v2936
    %v3053 = vsub.f32 %v1719, %v2936
    %v3054 = vsub.f32 %v1724, %v2936
    %v3055 = vsub.f32 %v1729, %v2936
    %v3056 = vsub.f32 %v1734, %v2936
    %v3057 = vsub.f32 %v1739, %v2936
    %v3058 = vsub.f32 %v1744, %v2936
    %v3059 = vsub.f32 %v1749, %v2936
    %v3060 = vsub.f32 %v1754, %v2936
    %v3061 = vsub.f32 %v1759, %v2936
    %v3062 = vsub.f32 %v1764, %v2936
    %v3063 = vsub.f32 %v1769, %v2936
    %v3064 = vsub.f32 %v1774, %v2936
    %v3065 = vsub.f32 %v1779, %v2936
    %v3066 = vsub.f32 %v1784, %v2936
    %v3067 = vsub.f32 %v1789, %v2936
    %v3068 = vsub.f32 %v1794, %v2936
    %v3069 = vsub.f32 %v1799, %v2936
    %v3070 = vsub.f32 %v1804, %v2936
    %v3071 = vsub.f32 %v1809, %v2936
    %v3072 = vsub.f32 %v1814, %v2936
    %v3073 = vsub.f32 %v1819, %v2936
    %v3074 = vsub.f32 %v1824, %v2936
    %v3075 = vsub.f32 %v1829, %v2936
    %v3076 = vsub.f32 %v1834, %v2936
    %v3077 = vsub.f32 %v1839, %v2936
    %v3078 = vsub.f32 %v1844, %v2936
    %v3079 = vsub.f32 %v1849, %v2936
    %v3080 = vsub.f32 %v1854, %v2936
    %v3081 = vsub.f32 %v1859, %v2936
    %v3082 = vsub.f32 %v1864, %v2936
    %v3083 = vsub.f32 %v1869, %v2936
    %v3084 = vsub.f32 %v1874, %v2936
    %v3085 = vsub.f32 %v1879, %v2936
    %v3086 = vsub.f32 %v1884, %v2936
    %v3087 = vsub.f32 %v1889, %v2936
    %v3088 = vsub.f32 %v1894, %v2936
    %v3089 = vsub.f32 %v1899, %v2936
    %v3090 = vsub.f32 %v1904, %v2936
    %v3091 = vsub.f32 %v1909, %v2936
    %v3092 = vsub.f32 %v1914, %v2936
    %v3093 = vsub.f32 %v1919, %v2936
    %v3094 = vsub.f32 %v1924, %v2936
    %v3095 = vsub.f32 %v1929, %v2936
    %v3096 = vsub.f32 %v1934, %v2936
    %v3097 = vsub.f32 %v1939, %v2936
    %v3098 = vsub.f32 %v1944, %v2936
    %v3099 = vsub.f32 %v1949, %v2936
    %v3100 = vsub.f32 %v1954, %v2936
    %v3101 = vsub.f32 %v1959, %v2936
    %v3102 = vsub.f32 %v1964, %v2936
    %v3103 = vsub.f32 %v1969, %v2936
    %v3104 = vsub.f32 %v1974, %v2936
    %v3105 = vsub.f32 %v1979, %v2936
    %v3106 = vsub.f32 %v1984, %v2936
    %v3107 = vsub.f32 %v1989, %v2936
    %v3108 = vsub.f32 %v1994, %v2936
    %v3109 = vsub.f32 %v1999, %v2936
    %v3110 = vsub.f32 %v2004, %v2936
    %v3111 = vsub.f32 %v2009, %v2936
    %v3112 = vsub.f32 %v2014, %v2936
    %v3113 = vsub.f32 %v2019, %v2936
    %v3114 = vsub.f32 %v2024, %v2936
    %v3115 = vsub.f32 %v2029, %v2936
    %v3116 = vsub.f32 %v2034, %v2936
    %v3117 = vsub.f32 %v2039, %v2936
    %v3118 = vsub.f32 %v2044, %v2936
    %v3119 = vsub.f32 %v2049, %v2936
    %v3120 = vsub.f32 %v2054, %v2936
    %v3121 = vsub.f32 %v2059, %v2936
    %v3122 = vsub.f32 %v2064, %v2936
    %v3123 = vsub.f32 %v2069, %v2936
    %v3124 = vsub.f32 %v2074, %v2936
    %v3125 = vsub.f32 %v2079, %v2936
    %v3126 = vsub.f32 %v2084, %v2936
    %v3127 = vsub.f32 %v2089, %v2936
    %v3128 = vsub.f32 %v2094, %v2936
    %v3129 = vsub.f32 %v2099, %v2936
    %v3130 = vsub.f32 %v2104, %v2936
    %v3131 = vsub.f32 %v2109, %v2936
    %v3132 = vsub.f32 %v2114, %v2936
    %v3133 = vsub.f32 %v2119, %v2936
    %v3134 = vsub.f32 %v2124, %v2936
    %v3135 = vsub.f32 %v2129, %v2936
    %v3136 = vsub.f32 %v2134, %v2936
    %v3137 = vsub.f32 %v2139, %v2936
    %v3138 = vsub.f32 %v2144, %v2936
    %v3139 = vsub.f32 %v2149, %v2936
    %v3140 = vsub.f32 %v2154, %v2936
    %v3141 = vsub.f32 %v2159, %v2936
    %v3142 = vsub.f32 %v2164, %v2936
    %v3143 = vsub.f32 %v2169, %v2936
    %v3144 = vsub.f32 %v2174, %v2936
    %v3145 = vsub.f32 %v2179, %v2936
    %v3146 = vsub.f32 %v2184, %v2936
    %v3147 = vsub.f32 %v2189, %v2936
    %v3148 = vsub.f32 %v2194, %v2936
    %v3149 = vsub.f32 %v2199, %v2936
    %v3150 = vsub.f32 %v2204, %v2936
    %v3151 = vsub.f32 %v2209, %v2936
    %v3152 = vsub.f32 %v2214, %v2936
    %v3153 = vsub.f32 %v2219, %v2936
    %v3154 = vsub.f32 %v2224, %v2936
    %v3155 = vsub.f32 %v2229, %v2936
    %v3156 = vsub.f32 %v2234, %v2936
    %v3157 = vsub.f32 %v2239, %v2936
    %v3158 = vsub.f32 %v2244, %v2936
    %v3159 = vsub.f32 %v2249, %v2936
    %v3160 = vsub.f32 %v2254, %v2936
    %v3161 = vsub.f32 %v2259, %v2936
    %v3162 = vsub.f32 %v2264, %v2936
    %v3163 = vsub.f32 %v2269, %v2936
    %v3164 = vsub.f32 %v2274, %v2936
    %v3165 = vsub.f32 %v2279, %v2936
    %v3166 = vsub.f32 %v2284, %v2936
    %v3167 = vsub.f32 %v2289, %v2936
    %v3168 = vsub.f32 %v2294, %v2936
    %v3169 = vsub.f32 %v2299, %v2936
    %v3170 = vsub.f32 %v2304, %v2936
    %v3171 = vsub.f32 %v2309, %v2936
    %v3172 = vsub.f32 %v2314, %v2936
    %v3173 = vsub.f32 %v2319, %v2936
    %v3174 = vsub.f32 %v2324, %v2936
    %v3175 = vsub.f32 %v2329, %v2936
    %v3176 = vsub.f32 %v2334, %v2936
    %v3177 = vsub.f32 %v2339, %v2936
    %v3178 = vsub.f32 %v2344, %v2936
    %v3179 = vsub.f32 %v2349, %v2936
    %v3180 = vsub.f32 %v2354, %v2936
    %v3181 = vsub.f32 %v2359, %v2936
    %v3182 = vsub.f32 %v2364, %v2936
    %v3183 = vsub.f32 %v2369, %v2936
    %v3184 = vsub.f32 %v2374, %v2936
    %v3185 = vsub.f32 %v2379, %v2936
    %v3186 = vsub.f32 %v2384, %v2936
    %v3187 = vsub.f32 %v2389, %v2936
    %v3188 = vsub.f32 %v2394, %v2936
    %v3189 = vsub.f32 %v2399, %v2936
    %v3190 = vsub.f32 %v2404, %v2936
    %v3191 = vsub.f32 %v2409, %v2936
    %v3192 = vsub.f32 %v2414, %v2936
    %v3193 = vmul.f32 %v2937, %v2937
    %v3194 = vmul.f32 %v2938, %v2938
    %v3195 = vmul.f32 %v2939, %v2939
    %v3196 = vmul.f32 %v2940, %v2940
    %v3197 = vmul.f32 %v2941, %v2941
    %v3198 = vmul.f32 %v2942, %v2942
    %v3199 = vmul.f32 %v2943, %v2943
    %v3200 = vmul.f32 %v2944, %v2944
    %v3201 = vmul.f32 %v2945, %v2945
    %v3202 = vmul.f32 %v2946, %v2946
    %v3203 = vmul.f32 %v2947, %v2947
    %v3204 = vmul.f32 %v2948, %v2948
    %v3205 = vmul.f32 %v2949, %v2949
    %v3206 = vmul.f32 %v2950, %v2950
    %v3207 = vmul.f32 %v2951, %v2951
    %v3208 = vmul.f32 %v2952, %v2952
    %v3209 = vmul.f32 %v2953, %v2953
    %v3210 = vmul.f32 %v2954, %v2954
    %v3211 = vmul.f32 %v2955, %v2955
    %v3212 = vmul.f32 %v2956, %v2956
    %v3213 = vmul.f32 %v2957, %v2957
    %v3214 = vmul.f32 %v2958, %v2958
    %v3215 = vmul.f32 %v2959, %v2959
    %v3216 = vmul.f32 %v2960, %v2960
    %v3217 = vmul.f32 %v2961, %v2961
    %v3218 = vmul.f32 %v2962, %v2962
    %v3219 = vmul.f32 %v2963, %v2963
    %v3220 = vmul.f32 %v2964, %v2964
    %v3221 = vmul.f32 %v2965, %v2965
    %v3222 = vmul.f32 %v2966, %v2966
    %v3223 = vmul.f32 %v2967, %v2967
    %v3224 = vmul.f32 %v2968, %v2968
    %v3225 = vmul.f32 %v2969, %v2969
    %v3226 = vmul.f32 %v2970, %v2970
    %v3227 = vmul.f32 %v2971, %v2971
    %v3228 = vmul.f32 %v2972, %v2972
    %v3229 = vmul.f32 %v2973, %v2973
    %v3230 = vmul.f32 %v2974, %v2974
    %v3231 = vmul.f32 %v2975, %v2975
    %v3232 = vmul.f32 %v2976, %v2976
    %v3233 = vmul.f32 %v2977, %v2977
    %v3234 = vmul.f32 %v2978, %v2978
    %v3235 = vmul.f32 %v2979, %v2979
    %v3236 = vmul.f32 %v2980, %v2980
    %v3237 = vmul.f32 %v2981, %v2981
    %v3238 = vmul.f32 %v2982, %v2982
    %v3239 = vmul.f32 %v2983, %v2983
    %v3240 = vmul.f32 %v2984, %v2984
    %v3241 = vmul.f32 %v2985, %v2985
    %v3242 = vmul.f32 %v2986, %v2986
    %v3243 = vmul.f32 %v2987, %v2987
    %v3244 = vmul.f32 %v2988, %v2988
    %v3245 = vmul.f32 %v2989, %v2989
    %v3246 = vmul.f32 %v2990, %v2990
    %v3247 = vmul.f32 %v2991, %v2991
    %v3248 = vmul.f32 %v2992, %v2992
    %v3249 = vmul.f32 %v2993, %v2993
    %v3250 = vmul.f32 %v2994, %v2994
    %v3251 = vmul.f32 %v2995, %v2995
    %v3252 = vmul.f32 %v2996, %v2996
    %v3253 = vmul.f32 %v2997, %v2997
    %v3254 = vmul.f32 %v2998, %v2998
    %v3255 = vmul.f32 %v2999, %v2999
    %v3256 = vmul.f32 %v3000, %v3000
    %v3257 = vmul.f32 %v3001, %v3001
    %v3258 = vmul.f32 %v3002, %v3002
    %v3259 = vmul.f32 %v3003, %v3003
    %v3260 = vmul.f32 %v3004, %v3004
    %v3261 = vmul.f32 %v3005, %v3005
    %v3262 = vmul.f32 %v3006, %v3006
    %v3263 = vmul.f32 %v3007, %v3007
    %v3264 = vmul.f32 %v3008, %v3008
    %v3265 = vmul.f32 %v3009, %v3009
    %v3266 = vmul.f32 %v3010, %v3010
    %v3267 = vmul.f32 %v3011, %v3011
    %v3268 = vmul.f32 %v3012, %v3012
    %v3269 = vmul.f32 %v3013, %v3013
    %v3270 = vmul.f32 %v3014, %v3014
    %v3271 = vmul.f32 %v3015, %v3015
    %v3272 = vmul.f32 %v3016, %v3016
    %v3273 = vmul.f32 %v3017, %v3017
    %v3274 = vmul.f32 %v3018, %v3018
    %v3275 = vmul.f32 %v3019, %v3019
    %v3276 = vmul.f32 %v3020, %v3020
    %v3277 = vmul.f32 %v3021, %v3021
    %v3278 = vmul.f32 %v3022, %v3022
    %v3279 = vmul.f32 %v3023, %v3023
    %v3280 = vmul.f32 %v3024, %v3024
    %v3281 = vmul.f32 %v3025, %v3025
    %v3282 = vmul.f32 %v3026, %v3026
    %v3283 = vmul.f32 %v3027, %v3027
    %v3284 = vmul.f32 %v3028, %v3028
    %v3285 = vmul.f32 %v3029, %v3029
    %v3286 = vmul.f32 %v3030, %v3030
    %v3287 = vmul.f32 %v3031, %v3031
    %v3288 = vmul.f32 %v3032, %v3032
    %v3289 = vmul.f32 %v3033, %v3033
    %v3290 = vmul.f32 %v3034, %v3034
    %v3291 = vmul.f32 %v3035, %v3035
    %v3292 = vmul.f32 %v3036, %v3036
    %v3293 = vmul.f32 %v3037, %v3037
    %v3294 = vmul.f32 %v3038, %v3038
    %v3295 = vmul.f32 %v3039, %v3039
    %v3296 = vmul.f32 %v3040, %v3040
    %v3297 = vmul.f32 %v3041, %v3041
    %v3298 = vmul.f32 %v3042, %v3042
    %v3299 = vmul.f32 %v3043, %v3043
    %v3300 = vmul.f32 %v3044, %v3044
    %v3301 = vmul.f32 %v3045, %v3045
    %v3302 = vmul.f32 %v3046, %v3046
    %v3303 = vmul.f32 %v3047, %v3047
    %v3304 = vmul.f32 %v3048, %v3048
    %v3305 = vmul.f32 %v3049, %v3049
    %v3306 = vmul.f32 %v3050, %v3050
    %v3307 = vmul.f32 %v3051, %v3051
    %v3308 = vmul.f32 %v3052, %v3052
    %v3309 = vmul.f32 %v3053, %v3053
    %v3310 = vmul.f32 %v3054, %v3054
    %v3311 = vmul.f32 %v3055, %v3055
    %v3312 = vmul.f32 %v3056, %v3056
    %v3313 = vmul.f32 %v3057, %v3057
    %v3314 = vmul.f32 %v3058, %v3058
    %v3315 = vmul.f32 %v3059, %v3059
    %v3316 = vmul.f32 %v3060, %v3060
    %v3317 = vmul.f32 %v3061, %v3061
    %v3318 = vmul.f32 %v3062, %v3062
    %v3319 = vmul.f32 %v3063, %v3063
    %v3320 = vmul.f32 %v3064, %v3064
    %v3321 = vmul.f32 %v3065, %v3065
    %v3322 = vmul.f32 %v3066, %v3066
    %v3323 = vmul.f32 %v3067, %v3067
    %v3324 = vmul.f32 %v3068, %v3068
    %v3325 = vmul.f32 %v3069, %v3069
    %v3326 = vmul.f32 %v3070, %v3070
    %v3327 = vmul.f32 %v3071, %v3071
    %v3328 = vmul.f32 %v3072, %v3072
    %v3329 = vmul.f32 %v3073, %v3073
    %v3330 = vmul.f32 %v3074, %v3074
    %v3331 = vmul.f32 %v3075, %v3075
    %v3332 = vmul.f32 %v3076, %v3076
    %v3333 = vmul.f32 %v3077, %v3077
    %v3334 = vmul.f32 %v3078, %v3078
    %v3335 = vmul.f32 %v3079, %v3079
    %v3336 = vmul.f32 %v3080, %v3080
    %v3337 = vmul.f32 %v3081, %v3081
    %v3338 = vmul.f32 %v3082, %v3082
    %v3339 = vmul.f32 %v3083, %v3083
    %v3340 = vmul.f32 %v3084, %v3084
    %v3341 = vmul.f32 %v3085, %v3085
    %v3342 = vmul.f32 %v3086, %v3086
    %v3343 = vmul.f32 %v3087, %v3087
    %v3344 = vmul.f32 %v3088, %v3088
    %v3345 = vmul.f32 %v3089, %v3089
    %v3346 = vmul.f32 %v3090, %v3090
    %v3347 = vmul.f32 %v3091, %v3091
    %v3348 = vmul.f32 %v3092, %v3092
    %v3349 = vmul.f32 %v3093, %v3093
    %v3350 = vmul.f32 %v3094, %v3094
    %v3351 = vmul.f32 %v3095, %v3095
    %v3352 = vmul.f32 %v3096, %v3096
    %v3353 = vmul.f32 %v3097, %v3097
    %v3354 = vmul.f32 %v3098, %v3098
    %v3355 = vmul.f32 %v3099, %v3099
    %v3356 = vmul.f32 %v3100, %v3100
    %v3357 = vmul.f32 %v3101, %v3101
    %v3358 = vmul.f32 %v3102, %v3102
    %v3359 = vmul.f32 %v3103, %v3103
    %v3360 = vmul.f32 %v3104, %v3104
    %v3361 = vmul.f32 %v3105, %v3105
    %v3362 = vmul.f32 %v3106, %v3106
    %v3363 = vmul.f32 %v3107, %v3107
    %v3364 = vmul.f32 %v3108, %v3108
    %v3365 = vmul.f32 %v3109, %v3109
    %v3366 = vmul.f32 %v3110, %v3110
    %v3367 = vmul.f32 %v3111, %v3111
    %v3368 = vmul.f32 %v3112, %v3112
    %v3369 = vmul.f32 %v3113, %v3113
    %v3370 = vmul.f32 %v3114, %v3114
    %v3371 = vmul.f32 %v3115, %v3115
    %v3372 = vmul.f32 %v3116, %v3116
    %v3373 = vmul.f32 %v3117, %v3117
    %v3374 = vmul.f32 %v3118, %v3118
    %v3375 = vmul.f32 %v3119, %v3119
    %v3376 = vmul.f32 %v3120, %v3120
    %v3377 = vmul.f32 %v3121, %v3121
    %v3378 = vmul.f32 %v3122, %v3122
    %v3379 = vmul.f32 %v3123, %v3123
    %v3380 = vmul.f32 %v3124, %v3124
    %v3381 = vmul.f32 %v3125, %v3125
    %v3382 = vmul.f32 %v3126, %v3126
    %v3383 = vmul.f32 %v3127, %v3127
    %v3384 = vmul.f32 %v3128, %v3128
    %v3385 = vmul.f32 %v3129, %v3129
    %v3386 = vmul.f32 %v3130, %v3130
    %v3387 = vmul.f32 %v3131, %v3131
    %v3388 = vmul.f32 %v3132, %v3132
    %v3389 = vmul.f32 %v3133, %v3133
    %v3390 = vmul.f32 %v3134, %v3134
    %v3391 = vmul.f32 %v3135, %v3135
    %v3392 = vmul.f32 %v3136, %v3136
    %v3393 = vmul.f32 %v3137, %v3137
    %v3394 = vmul.f32 %v3138, %v3138
    %v3395 = vmul.f32 %v3139, %v3139
    %v3396 = vmul.f32 %v3140, %v3140
    %v3397 = vmul.f32 %v3141, %v3141
    %v3398 = vmul.f32 %v3142, %v3142
    %v3399 = vmul.f32 %v3143, %v3143
    %v3400 = vmul.f32 %v3144, %v3144
    %v3401 = vmul.f32 %v3145, %v3145
    %v3402 = vmul.f32 %v3146, %v3146
    %v3403 = vmul.f32 %v3147, %v3147
    %v3404 = vmul.f32 %v3148, %v3148
    %v3405 = vmul.f32 %v3149, %v3149
    %v3406 = vmul.f32 %v3150, %v3150
    %v3407 = vmul.f32 %v3151, %v3151
    %v3408 = vmul.f32 %v3152, %v3152
    %v3409 = vmul.f32 %v3153, %v3153
    %v3410 = vmul.f32 %v3154, %v3154
    %v3411 = vmul.f32 %v3155, %v3155
    %v3412 = vmul.f32 %v3156, %v3156
    %v3413 = vmul.f32 %v3157, %v3157
    %v3414 = vmul.f32 %v3158, %v3158
    %v3415 = vmul.f32 %v3159, %v3159
    %v3416 = vmul.f32 %v3160, %v3160
    %v3417 = vmul.f32 %v3161, %v3161
    %v3418 = vmul.f32 %v3162, %v3162
    %v3419 = vmul.f32 %v3163, %v3163
    %v3420 = vmul.f32 %v3164, %v3164
    %v3421 = vmul.f32 %v3165, %v3165
    %v3422 = vmul.f32 %v3166, %v3166
    %v3423 = vmul.f32 %v3167, %v3167
    %v3424 = vmul.f32 %v3168, %v3168
    %v3425 = vmul.f32 %v3169, %v3169
    %v3426 = vmul.f32 %v3170, %v3170
    %v3427 = vmul.f32 %v3171, %v3171
    %v3428 = vmul.f32 %v3172, %v3172
    %v3429 = vmul.f32 %v3173, %v3173
    %v3430 = vmul.f32 %v3174, %v3174
    %v3431 = vmul.f32 %v3175, %v3175
    %v3432 = vmul.f32 %v3176, %v3176
    %v3433 = vmul.f32 %v3177, %v3177
    %v3434 = vmul.f32 %v3178, %v3178
    %v3435 = vmul.f32 %v3179, %v3179
    %v3436 = vmul.f32 %v3180, %v3180
    %v3437 = vmul.f32 %v3181, %v3181
    %v3438 = vmul.f32 %v3182, %v3182
    %v3439 = vmul.f32 %v3183, %v3183
    %v3440 = vmul.f32 %v3184, %v3184
    %v3441 = vmul.f32 %v3185, %v3185
    %v3442 = vmul.f32 %v3186, %v3186
    %v3443 = vmul.f32 %v3187, %v3187
    %v3444 = vmul.f32 %v3188, %v3188
    %v3445 = vmul.f32 %v3189, %v3189
    %v3446 = vmul.f32 %v3190, %v3190
    %v3447 = vmul.f32 %v3191, %v3191
    %v3448 = vmul.f32 %v3192, %v3192
    %v3449 = vsel %vm2417, %v3193, 0.0
    %v3450 = vsel %vm2417, %v3194, 0.0
    %v3451 = vadd.f32 %v3449, %v3450
    %v3452 = vsel %vm2417, %v3195, 0.0
    %v3453 = vadd.f32 %v3451, %v3452
    %v3454 = vsel %vm2417, %v3196, 0.0
    %v3455 = vadd.f32 %v3453, %v3454
    %v3456 = vsel %vm2417, %v3197, 0.0
    %v3457 = vadd.f32 %v3455, %v3456
    %v3458 = vsel %vm2417, %v3198, 0.0
    %v3459 = vadd.f32 %v3457, %v3458
    %v3460 = vsel %vm2417, %v3199, 0.0
    %v3461 = vadd.f32 %v3459, %v3460
    %v3462 = vsel %vm2417, %v3200, 0.0
    %v3463 = vadd.f32 %v3461, %v3462
    %v3464 = vsel %vm2417, %v3201, 0.0
    %v3465 = vadd.f32 %v3463, %v3464
    %v3466 = vsel %vm2417, %v3202, 0.0
    %v3467 = vadd.f32 %v3465, %v3466
    %v3468 = vsel %vm2417, %v3203, 0.0
    %v3469 = vadd.f32 %v3467, %v3468
    %v3470 = vsel %vm2417, %v3204, 0.0
    %v3471 = vadd.f32 %v3469, %v3470
    %v3472 = vsel %vm2417, %v3205, 0.0
    %v3473 = vadd.f32 %v3471, %v3472
    %v3474 = vsel %vm2417, %v3206, 0.0
    %v3475 = vadd.f32 %v3473, %v3474
    %v3476 = vsel %vm2417, %v3207, 0.0
    %v3477 = vadd.f32 %v3475, %v3476
    %v3478 = vsel %vm2417, %v3208, 0.0
    %v3479 = vadd.f32 %v3477, %v3478
    %v3480 = vsel %vm2417, %v3209, 0.0
    %v3481 = vadd.f32 %v3479, %v3480
    %v3482 = vsel %vm2417, %v3210, 0.0
    %v3483 = vadd.f32 %v3481, %v3482
    %v3484 = vsel %vm2417, %v3211, 0.0
    %v3485 = vadd.f32 %v3483, %v3484
    %v3486 = vsel %vm2417, %v3212, 0.0
    %v3487 = vadd.f32 %v3485, %v3486
    %v3488 = vsel %vm2417, %v3213, 0.0
    %v3489 = vadd.f32 %v3487, %v3488
    %v3490 = vsel %vm2417, %v3214, 0.0
    %v3491 = vadd.f32 %v3489, %v3490
    %v3492 = vsel %vm2417, %v3215, 0.0
    %v3493 = vadd.f32 %v3491, %v3492
    %v3494 = vsel %vm2417, %v3216, 0.0
    %v3495 = vadd.f32 %v3493, %v3494
    %v3496 = vsel %vm2417, %v3217, 0.0
    %v3497 = vadd.f32 %v3495, %v3496
    %v3498 = vsel %vm2417, %v3218, 0.0
    %v3499 = vadd.f32 %v3497, %v3498
    %v3500 = vsel %vm2417, %v3219, 0.0
    %v3501 = vadd.f32 %v3499, %v3500
    %v3502 = vsel %vm2417, %v3220, 0.0
    %v3503 = vadd.f32 %v3501, %v3502
    %v3504 = vsel %vm2417, %v3221, 0.0
    %v3505 = vadd.f32 %v3503, %v3504
    %v3506 = vsel %vm2417, %v3222, 0.0
    %v3507 = vadd.f32 %v3505, %v3506
    %v3508 = vsel %vm2417, %v3223, 0.0
    %v3509 = vadd.f32 %v3507, %v3508
    %v3510 = vsel %vm2417, %v3224, 0.0
    %v3511 = vadd.f32 %v3509, %v3510
    %v3512 = vsel %vm2417, %v3225, 0.0
    %v3513 = vadd.f32 %v3511, %v3512
    %v3514 = vsel %vm2417, %v3226, 0.0
    %v3515 = vadd.f32 %v3513, %v3514
    %v3516 = vsel %vm2417, %v3227, 0.0
    %v3517 = vadd.f32 %v3515, %v3516
    %v3518 = vsel %vm2417, %v3228, 0.0
    %v3519 = vadd.f32 %v3517, %v3518
    %v3520 = vsel %vm2417, %v3229, 0.0
    %v3521 = vadd.f32 %v3519, %v3520
    %v3522 = vsel %vm2417, %v3230, 0.0
    %v3523 = vadd.f32 %v3521, %v3522
    %v3524 = vsel %vm2417, %v3231, 0.0
    %v3525 = vadd.f32 %v3523, %v3524
    %v3526 = vsel %vm2417, %v3232, 0.0
    %v3527 = vadd.f32 %v3525, %v3526
    %v3528 = vsel %vm2417, %v3233, 0.0
    %v3529 = vadd.f32 %v3527, %v3528
    %v3530 = vsel %vm2417, %v3234, 0.0
    %v3531 = vadd.f32 %v3529, %v3530
    %v3532 = vsel %vm2417, %v3235, 0.0
    %v3533 = vadd.f32 %v3531, %v3532
    %v3534 = vsel %vm2417, %v3236, 0.0
    %v3535 = vadd.f32 %v3533, %v3534
    %v3536 = vsel %vm2417, %v3237, 0.0
    %v3537 = vadd.f32 %v3535, %v3536
    %v3538 = vsel %vm2417, %v3238, 0.0
    %v3539 = vadd.f32 %v3537, %v3538
    %v3540 = vsel %vm2417, %v3239, 0.0
    %v3541 = vadd.f32 %v3539, %v3540
    %v3542 = vsel %vm2417, %v3240, 0.0
    %v3543 = vadd.f32 %v3541, %v3542
    %v3544 = vsel %vm2417, %v3241, 0.0
    %v3545 = vadd.f32 %v3543, %v3544
    %v3546 = vsel %vm2417, %v3242, 0.0
    %v3547 = vadd.f32 %v3545, %v3546
    %v3548 = vsel %vm2417, %v3243, 0.0
    %v3549 = vadd.f32 %v3547, %v3548
    %v3550 = vsel %vm2417, %v3244, 0.0
    %v3551 = vadd.f32 %v3549, %v3550
    %v3552 = vsel %vm2417, %v3245, 0.0
    %v3553 = vadd.f32 %v3551, %v3552
    %v3554 = vsel %vm2417, %v3246, 0.0
    %v3555 = vadd.f32 %v3553, %v3554
    %v3556 = vsel %vm2417, %v3247, 0.0
    %v3557 = vadd.f32 %v3555, %v3556
    %v3558 = vsel %vm2417, %v3248, 0.0
    %v3559 = vadd.f32 %v3557, %v3558
    %v3560 = vsel %vm2417, %v3249, 0.0
    %v3561 = vadd.f32 %v3559, %v3560
    %v3562 = vsel %vm2417, %v3250, 0.0
    %v3563 = vadd.f32 %v3561, %v3562
    %v3564 = vsel %vm2417, %v3251, 0.0
    %v3565 = vadd.f32 %v3563, %v3564
    %v3566 = vsel %vm2417, %v3252, 0.0
    %v3567 = vadd.f32 %v3565, %v3566
    %v3568 = vsel %vm2417, %v3253, 0.0
    %v3569 = vadd.f32 %v3567, %v3568
    %v3570 = vsel %vm2417, %v3254, 0.0
    %v3571 = vadd.f32 %v3569, %v3570
    %v3572 = vsel %vm2417, %v3255, 0.0
    %v3573 = vadd.f32 %v3571, %v3572
    %v3574 = vsel %vm2417, %v3256, 0.0
    %v3575 = vadd.f32 %v3573, %v3574
    %v3576 = vsel %vm2417, %v3257, 0.0
    %v3577 = vadd.f32 %v3575, %v3576
    %v3578 = vsel %vm2417, %v3258, 0.0
    %v3579 = vadd.f32 %v3577, %v3578
    %v3580 = vsel %vm2417, %v3259, 0.0
    %v3581 = vadd.f32 %v3579, %v3580
    %v3582 = vsel %vm2417, %v3260, 0.0
    %v3583 = vadd.f32 %v3581, %v3582
    %v3584 = vsel %vm2417, %v3261, 0.0
    %v3585 = vadd.f32 %v3583, %v3584
    %v3586 = vsel %vm2417, %v3262, 0.0
    %v3587 = vadd.f32 %v3585, %v3586
    %v3588 = vsel %vm2417, %v3263, 0.0
    %v3589 = vadd.f32 %v3587, %v3588
    %v3590 = vsel %vm2417, %v3264, 0.0
    %v3591 = vadd.f32 %v3589, %v3590
    %v3592 = vsel %vm2417, %v3265, 0.0
    %v3593 = vadd.f32 %v3591, %v3592
    %v3594 = vsel %vm2417, %v3266, 0.0
    %v3595 = vadd.f32 %v3593, %v3594
    %v3596 = vsel %vm2417, %v3267, 0.0
    %v3597 = vadd.f32 %v3595, %v3596
    %v3598 = vsel %vm2417, %v3268, 0.0
    %v3599 = vadd.f32 %v3597, %v3598
    %v3600 = vsel %vm2417, %v3269, 0.0
    %v3601 = vadd.f32 %v3599, %v3600
    %v3602 = vsel %vm2417, %v3270, 0.0
    %v3603 = vadd.f32 %v3601, %v3602
    %v3604 = vsel %vm2417, %v3271, 0.0
    %v3605 = vadd.f32 %v3603, %v3604
    %v3606 = vsel %vm2417, %v3272, 0.0
    %v3607 = vadd.f32 %v3605, %v3606
    %v3608 = vsel %vm2417, %v3273, 0.0
    %v3609 = vadd.f32 %v3607, %v3608
    %v3610 = vsel %vm2417, %v3274, 0.0
    %v3611 = vadd.f32 %v3609, %v3610
    %v3612 = vsel %vm2417, %v3275, 0.0
    %v3613 = vadd.f32 %v3611, %v3612
    %v3614 = vsel %vm2417, %v3276, 0.0
    %v3615 = vadd.f32 %v3613, %v3614
    %v3616 = vsel %vm2417, %v3277, 0.0
    %v3617 = vadd.f32 %v3615, %v3616
    %v3618 = vsel %vm2417, %v3278, 0.0
    %v3619 = vadd.f32 %v3617, %v3618
    %v3620 = vsel %vm2417, %v3279, 0.0
    %v3621 = vadd.f32 %v3619, %v3620
    %v3622 = vsel %vm2417, %v3280, 0.0
    %v3623 = vadd.f32 %v3621, %v3622
    %v3624 = vsel %vm2417, %v3281, 0.0
    %v3625 = vadd.f32 %v3623, %v3624
    %v3626 = vsel %vm2417, %v3282, 0.0
    %v3627 = vadd.f32 %v3625, %v3626
    %v3628 = vsel %vm2417, %v3283, 0.0
    %v3629 = vadd.f32 %v3627, %v3628
    %v3630 = vsel %vm2417, %v3284, 0.0
    %v3631 = vadd.f32 %v3629, %v3630
    %v3632 = vsel %vm2417, %v3285, 0.0
    %v3633 = vadd.f32 %v3631, %v3632
    %v3634 = vsel %vm2417, %v3286, 0.0
    %v3635 = vadd.f32 %v3633, %v3634
    %v3636 = vsel %vm2417, %v3287, 0.0
    %v3637 = vadd.f32 %v3635, %v3636
    %v3638 = vsel %vm2417, %v3288, 0.0
    %v3639 = vadd.f32 %v3637, %v3638
    %v3640 = vsel %vm2417, %v3289, 0.0
    %v3641 = vadd.f32 %v3639, %v3640
    %v3642 = vsel %vm2417, %v3290, 0.0
    %v3643 = vadd.f32 %v3641, %v3642
    %v3644 = vsel %vm2417, %v3291, 0.0
    %v3645 = vadd.f32 %v3643, %v3644
    %v3646 = vsel %vm2417, %v3292, 0.0
    %v3647 = vadd.f32 %v3645, %v3646
    %v3648 = vsel %vm2417, %v3293, 0.0
    %v3649 = vadd.f32 %v3647, %v3648
    %v3650 = vsel %vm2417, %v3294, 0.0
    %v3651 = vadd.f32 %v3649, %v3650
    %v3652 = vsel %vm2417, %v3295, 0.0
    %v3653 = vadd.f32 %v3651, %v3652
    %v3654 = vsel %vm2417, %v3296, 0.0
    %v3655 = vadd.f32 %v3653, %v3654
    %v3656 = vsel %vm2417, %v3297, 0.0
    %v3657 = vadd.f32 %v3655, %v3656
    %v3658 = vsel %vm2417, %v3298, 0.0
    %v3659 = vadd.f32 %v3657, %v3658
    %v3660 = vsel %vm2417, %v3299, 0.0
    %v3661 = vadd.f32 %v3659, %v3660
    %v3662 = vsel %vm2417, %v3300, 0.0
    %v3663 = vadd.f32 %v3661, %v3662
    %v3664 = vsel %vm2417, %v3301, 0.0
    %v3665 = vadd.f32 %v3663, %v3664
    %v3666 = vsel %vm2417, %v3302, 0.0
    %v3667 = vadd.f32 %v3665, %v3666
    %v3668 = vsel %vm2417, %v3303, 0.0
    %v3669 = vadd.f32 %v3667, %v3668
    %v3670 = vsel %vm2417, %v3304, 0.0
    %v3671 = vadd.f32 %v3669, %v3670
    %v3672 = vsel %vm2417, %v3305, 0.0
    %v3673 = vadd.f32 %v3671, %v3672
    %v3674 = vsel %vm2417, %v3306, 0.0
    %v3675 = vadd.f32 %v3673, %v3674
    %v3676 = vsel %vm2417, %v3307, 0.0
    %v3677 = vadd.f32 %v3675, %v3676
    %v3678 = vsel %vm2417, %v3308, 0.0
    %v3679 = vadd.f32 %v3677, %v3678
    %v3680 = vsel %vm2417, %v3309, 0.0
    %v3681 = vadd.f32 %v3679, %v3680
    %v3682 = vsel %vm2417, %v3310, 0.0
    %v3683 = vadd.f32 %v3681, %v3682
    %v3684 = vsel %vm2417, %v3311, 0.0
    %v3685 = vadd.f32 %v3683, %v3684
    %v3686 = vsel %vm2417, %v3312, 0.0
    %v3687 = vadd.f32 %v3685, %v3686
    %v3688 = vsel %vm2417, %v3313, 0.0
    %v3689 = vadd.f32 %v3687, %v3688
    %v3690 = vsel %vm2417, %v3314, 0.0
    %v3691 = vadd.f32 %v3689, %v3690
    %v3692 = vsel %vm2417, %v3315, 0.0
    %v3693 = vadd.f32 %v3691, %v3692
    %v3694 = vsel %vm2417, %v3316, 0.0
    %v3695 = vadd.f32 %v3693, %v3694
    %v3696 = vsel %vm2417, %v3317, 0.0
    %v3697 = vadd.f32 %v3695, %v3696
    %v3698 = vsel %vm2417, %v3318, 0.0
    %v3699 = vadd.f32 %v3697, %v3698
    %v3700 = vsel %vm2417, %v3319, 0.0
    %v3701 = vadd.f32 %v3699, %v3700
    %v3702 = vsel %vm2417, %v3320, 0.0
    %v3703 = vadd.f32 %v3701, %v3702
    %v3704 = vsel %vm2417, %v3321, 0.0
    %v3705 = vadd.f32 %v3703, %v3704
    %v3706 = vsel %vm2417, %v3322, 0.0
    %v3707 = vadd.f32 %v3705, %v3706
    %v3708 = vsel %vm2417, %v3323, 0.0
    %v3709 = vadd.f32 %v3707, %v3708
    %v3710 = vsel %vm2417, %v3324, 0.0
    %v3711 = vadd.f32 %v3709, %v3710
    %v3712 = vsel %vm2417, %v3325, 0.0
    %v3713 = vadd.f32 %v3711, %v3712
    %v3714 = vsel %vm2417, %v3326, 0.0
    %v3715 = vadd.f32 %v3713, %v3714
    %v3716 = vsel %vm2417, %v3327, 0.0
    %v3717 = vadd.f32 %v3715, %v3716
    %v3718 = vsel %vm2417, %v3328, 0.0
    %v3719 = vadd.f32 %v3717, %v3718
    %v3720 = vsel %vm2417, %v3329, 0.0
    %v3721 = vadd.f32 %v3719, %v3720
    %v3722 = vsel %vm2417, %v3330, 0.0
    %v3723 = vadd.f32 %v3721, %v3722
    %v3724 = vsel %vm2417, %v3331, 0.0
    %v3725 = vadd.f32 %v3723, %v3724
    %v3726 = vsel %vm2417, %v3332, 0.0
    %v3727 = vadd.f32 %v3725, %v3726
    %v3728 = vsel %vm2417, %v3333, 0.0
    %v3729 = vadd.f32 %v3727, %v3728
    %v3730 = vsel %vm2417, %v3334, 0.0
    %v3731 = vadd.f32 %v3729, %v3730
    %v3732 = vsel %vm2417, %v3335, 0.0
    %v3733 = vadd.f32 %v3731, %v3732
    %v3734 = vsel %vm2417, %v3336, 0.0
    %v3735 = vadd.f32 %v3733, %v3734
    %v3736 = vsel %vm2417, %v3337, 0.0
    %v3737 = vadd.f32 %v3735, %v3736
    %v3738 = vsel %vm2417, %v3338, 0.0
    %v3739 = vadd.f32 %v3737, %v3738
    %v3740 = vsel %vm2417, %v3339, 0.0
    %v3741 = vadd.f32 %v3739, %v3740
    %v3742 = vsel %vm2417, %v3340, 0.0
    %v3743 = vadd.f32 %v3741, %v3742
    %v3744 = vsel %vm2417, %v3341, 0.0
    %v3745 = vadd.f32 %v3743, %v3744
    %v3746 = vsel %vm2417, %v3342, 0.0
    %v3747 = vadd.f32 %v3745, %v3746
    %v3748 = vsel %vm2417, %v3343, 0.0
    %v3749 = vadd.f32 %v3747, %v3748
    %v3750 = vsel %vm2417, %v3344, 0.0
    %v3751 = vadd.f32 %v3749, %v3750
    %v3752 = vsel %vm2417, %v3345, 0.0
    %v3753 = vadd.f32 %v3751, %v3752
    %v3754 = vsel %vm2417, %v3346, 0.0
    %v3755 = vadd.f32 %v3753, %v3754
    %v3756 = vsel %vm2417, %v3347, 0.0
    %v3757 = vadd.f32 %v3755, %v3756
    %v3758 = vsel %vm2417, %v3348, 0.0
    %v3759 = vadd.f32 %v3757, %v3758
    %v3760 = vsel %vm2417, %v3349, 0.0
    %v3761 = vadd.f32 %v3759, %v3760
    %v3762 = vsel %vm2417, %v3350, 0.0
    %v3763 = vadd.f32 %v3761, %v3762
    %v3764 = vsel %vm2417, %v3351, 0.0
    %v3765 = vadd.f32 %v3763, %v3764
    %v3766 = vsel %vm2417, %v3352, 0.0
    %v3767 = vadd.f32 %v3765, %v3766
    %v3768 = vsel %vm2417, %v3353, 0.0
    %v3769 = vadd.f32 %v3767, %v3768
    %v3770 = vsel %vm2417, %v3354, 0.0
    %v3771 = vadd.f32 %v3769, %v3770
    %v3772 = vsel %vm2417, %v3355, 0.0
    %v3773 = vadd.f32 %v3771, %v3772
    %v3774 = vsel %vm2417, %v3356, 0.0
    %v3775 = vadd.f32 %v3773, %v3774
    %v3776 = vsel %vm2417, %v3357, 0.0
    %v3777 = vadd.f32 %v3775, %v3776
    %v3778 = vsel %vm2417, %v3358, 0.0
    %v3779 = vadd.f32 %v3777, %v3778
    %v3780 = vsel %vm2417, %v3359, 0.0
    %v3781 = vadd.f32 %v3779, %v3780
    %v3782 = vsel %vm2417, %v3360, 0.0
    %v3783 = vadd.f32 %v3781, %v3782
    %v3784 = vsel %vm2417, %v3361, 0.0
    %v3785 = vadd.f32 %v3783, %v3784
    %v3786 = vsel %vm2417, %v3362, 0.0
    %v3787 = vadd.f32 %v3785, %v3786
    %v3788 = vsel %vm2417, %v3363, 0.0
    %v3789 = vadd.f32 %v3787, %v3788
    %v3790 = vsel %vm2417, %v3364, 0.0
    %v3791 = vadd.f32 %v3789, %v3790
    %v3792 = vsel %vm2417, %v3365, 0.0
    %v3793 = vadd.f32 %v3791, %v3792
    %v3794 = vsel %vm2417, %v3366, 0.0
    %v3795 = vadd.f32 %v3793, %v3794
    %v3796 = vsel %vm2417, %v3367, 0.0
    %v3797 = vadd.f32 %v3795, %v3796
    %v3798 = vsel %vm2417, %v3368, 0.0
    %v3799 = vadd.f32 %v3797, %v3798
    %v3800 = vsel %vm2417, %v3369, 0.0
    %v3801 = vadd.f32 %v3799, %v3800
    %v3802 = vsel %vm2417, %v3370, 0.0
    %v3803 = vadd.f32 %v3801, %v3802
    %v3804 = vsel %vm2417, %v3371, 0.0
    %v3805 = vadd.f32 %v3803, %v3804
    %v3806 = vsel %vm2417, %v3372, 0.0
    %v3807 = vadd.f32 %v3805, %v3806
    %v3808 = vsel %vm2417, %v3373, 0.0
    %v3809 = vadd.f32 %v3807, %v3808
    %v3810 = vsel %vm2417, %v3374, 0.0
    %v3811 = vadd.f32 %v3809, %v3810
    %v3812 = vsel %vm2417, %v3375, 0.0
    %v3813 = vadd.f32 %v3811, %v3812
    %v3814 = vsel %vm2417, %v3376, 0.0
    %v3815 = vadd.f32 %v3813, %v3814
    %v3816 = vsel %vm2417, %v3377, 0.0
    %v3817 = vadd.f32 %v3815, %v3816
    %v3818 = vsel %vm2417, %v3378, 0.0
    %v3819 = vadd.f32 %v3817, %v3818
    %v3820 = vsel %vm2417, %v3379, 0.0
    %v3821 = vadd.f32 %v3819, %v3820
    %v3822 = vsel %vm2417, %v3380, 0.0
    %v3823 = vadd.f32 %v3821, %v3822
    %v3824 = vsel %vm2417, %v3381, 0.0
    %v3825 = vadd.f32 %v3823, %v3824
    %v3826 = vsel %vm2417, %v3382, 0.0
    %v3827 = vadd.f32 %v3825, %v3826
    %v3828 = vsel %vm2417, %v3383, 0.0
    %v3829 = vadd.f32 %v3827, %v3828
    %v3830 = vsel %vm2417, %v3384, 0.0
    %v3831 = vadd.f32 %v3829, %v3830
    %v3832 = vsel %vm2417, %v3385, 0.0
    %v3833 = vadd.f32 %v3831, %v3832
    %v3834 = vsel %vm2417, %v3386, 0.0
    %v3835 = vadd.f32 %v3833, %v3834
    %v3836 = vsel %vm2417, %v3387, 0.0
    %v3837 = vadd.f32 %v3835, %v3836
    %v3838 = vsel %vm2417, %v3388, 0.0
    %v3839 = vadd.f32 %v3837, %v3838
    %v3840 = vsel %vm2417, %v3389, 0.0
    %v3841 = vadd.f32 %v3839, %v3840
    %v3842 = vsel %vm2417, %v3390, 0.0
    %v3843 = vadd.f32 %v3841, %v3842
    %v3844 = vsel %vm2417, %v3391, 0.0
    %v3845 = vadd.f32 %v3843, %v3844
    %v3846 = vsel %vm2417, %v3392, 0.0
    %v3847 = vadd.f32 %v3845, %v3846
    %v3848 = vsel %vm2417, %v3393, 0.0
    %v3849 = vadd.f32 %v3847, %v3848
    %v3850 = vsel %vm2417, %v3394, 0.0
    %v3851 = vadd.f32 %v3849, %v3850
    %v3852 = vsel %vm2417, %v3395, 0.0
    %v3853 = vadd.f32 %v3851, %v3852
    %v3854 = vsel %vm2417, %v3396, 0.0
    %v3855 = vadd.f32 %v3853, %v3854
    %v3856 = vsel %vm2417, %v3397, 0.0
    %v3857 = vadd.f32 %v3855, %v3856
    %v3858 = vsel %vm2417, %v3398, 0.0
    %v3859 = vadd.f32 %v3857, %v3858
    %v3860 = vsel %vm2417, %v3399, 0.0
    %v3861 = vadd.f32 %v3859, %v3860
    %v3862 = vsel %vm2417, %v3400, 0.0
    %v3863 = vadd.f32 %v3861, %v3862
    %v3864 = vsel %vm2417, %v3401, 0.0
    %v3865 = vadd.f32 %v3863, %v3864
    %v3866 = vsel %vm2417, %v3402, 0.0
    %v3867 = vadd.f32 %v3865, %v3866
    %v3868 = vsel %vm2417, %v3403, 0.0
    %v3869 = vadd.f32 %v3867, %v3868
    %v3870 = vsel %vm2417, %v3404, 0.0
    %v3871 = vadd.f32 %v3869, %v3870
    %v3872 = vsel %vm2417, %v3405, 0.0
    %v3873 = vadd.f32 %v3871, %v3872
    %v3874 = vsel %vm2417, %v3406, 0.0
    %v3875 = vadd.f32 %v3873, %v3874
    %v3876 = vsel %vm2417, %v3407, 0.0
    %v3877 = vadd.f32 %v3875, %v3876
    %v3878 = vsel %vm2417, %v3408, 0.0
    %v3879 = vadd.f32 %v3877, %v3878
    %v3880 = vsel %vm2417, %v3409, 0.0
    %v3881 = vadd.f32 %v3879, %v3880
    %v3882 = vsel %vm2417, %v3410, 0.0
    %v3883 = vadd.f32 %v3881, %v3882
    %v3884 = vsel %vm2417, %v3411, 0.0
    %v3885 = vadd.f32 %v3883, %v3884
    %v3886 = vsel %vm2417, %v3412, 0.0
    %v3887 = vadd.f32 %v3885, %v3886
    %v3888 = vsel %vm2417, %v3413, 0.0
    %v3889 = vadd.f32 %v3887, %v3888
    %v3890 = vsel %vm2417, %v3414, 0.0
    %v3891 = vadd.f32 %v3889, %v3890
    %v3892 = vsel %vm2417, %v3415, 0.0
    %v3893 = vadd.f32 %v3891, %v3892
    %v3894 = vsel %vm2417, %v3416, 0.0
    %v3895 = vadd.f32 %v3893, %v3894
    %v3896 = vsel %vm2417, %v3417, 0.0
    %v3897 = vadd.f32 %v3895, %v3896
    %v3898 = vsel %vm2417, %v3418, 0.0
    %v3899 = vadd.f32 %v3897, %v3898
    %v3900 = vsel %vm2417, %v3419, 0.0
    %v3901 = vadd.f32 %v3899, %v3900
    %v3902 = vsel %vm2417, %v3420, 0.0
    %v3903 = vadd.f32 %v3901, %v3902
    %v3904 = vsel %vm2417, %v3421, 0.0
    %v3905 = vadd.f32 %v3903, %v3904
    %v3906 = vsel %vm2417, %v3422, 0.0
    %v3907 = vadd.f32 %v3905, %v3906
    %v3908 = vsel %vm2417, %v3423, 0.0
    %v3909 = vadd.f32 %v3907, %v3908
    %v3910 = vsel %vm2417, %v3424, 0.0
    %v3911 = vadd.f32 %v3909, %v3910
    %v3912 = vsel %vm2417, %v3425, 0.0
    %v3913 = vadd.f32 %v3911, %v3912
    %v3914 = vsel %vm2417, %v3426, 0.0
    %v3915 = vadd.f32 %v3913, %v3914
    %v3916 = vsel %vm2417, %v3427, 0.0
    %v3917 = vadd.f32 %v3915, %v3916
    %v3918 = vsel %vm2417, %v3428, 0.0
    %v3919 = vadd.f32 %v3917, %v3918
    %v3920 = vsel %vm2417, %v3429, 0.0
    %v3921 = vadd.f32 %v3919, %v3920
    %v3922 = vsel %vm2417, %v3430, 0.0
    %v3923 = vadd.f32 %v3921, %v3922
    %v3924 = vsel %vm2417, %v3431, 0.0
    %v3925 = vadd.f32 %v3923, %v3924
    %v3926 = vsel %vm2417, %v3432, 0.0
    %v3927 = vadd.f32 %v3925, %v3926
    %v3928 = vsel %vm2417, %v3433, 0.0
    %v3929 = vadd.f32 %v3927, %v3928
    %v3930 = vsel %vm2417, %v3434, 0.0
    %v3931 = vadd.f32 %v3929, %v3930
    %v3932 = vsel %vm2417, %v3435, 0.0
    %v3933 = vadd.f32 %v3931, %v3932
    %v3934 = vsel %vm2417, %v3436, 0.0
    %v3935 = vadd.f32 %v3933, %v3934
    %v3936 = vsel %vm2417, %v3437, 0.0
    %v3937 = vadd.f32 %v3935, %v3936
    %v3938 = vsel %vm2417, %v3438, 0.0
    %v3939 = vadd.f32 %v3937, %v3938
    %v3940 = vsel %vm2417, %v3439, 0.0
    %v3941 = vadd.f32 %v3939, %v3940
    %v3942 = vsel %vm2417, %v3440, 0.0
    %v3943 = vadd.f32 %v3941, %v3942
    %v3944 = vsel %vm2417, %v3441, 0.0
    %v3945 = vadd.f32 %v3943, %v3944
    %v3946 = vsel %vm2417, %v3442, 0.0
    %v3947 = vadd.f32 %v3945, %v3946
    %v3948 = vsel %vm2417, %v3443, 0.0
    %v3949 = vadd.f32 %v3947, %v3948
    %v3950 = vsel %vm2417, %v3444, 0.0
    %v3951 = vadd.f32 %v3949, %v3950
    %v3952 = vsel %vm2417, %v3445, 0.0
    %v3953 = vadd.f32 %v3951, %v3952
    %v3954 = vsel %vm2417, %v3446, 0.0
    %v3955 = vadd.f32 %v3953, %v3954
    %v3956 = vsel %vm2417, %v3447, 0.0
    %v3957 = vadd.f32 %v3955, %v3956
    %v3958 = vsel %vm2417, %v3448, 0.0
    %v3959 = vadd.f32 %v3957, %v3958
    %v3960 = vrot.slane %v3959, 4
    %v3961 = vadd.f32 %v3959, %v3960
    %v3962 = vrot.slane %v3961, 2
    %v3963 = vadd.f32 %v3961, %v3962
    %v3964 = vrot.slane %v3963, 1
    %v3965 = vadd.f32 %v3963, %v3964
    %v3966 = vmul.f32 %v3965, %v2935
    %v3967 = vadd.f32 %v3966, 1e-05
    %v3968 = vrsqrt.pop %v3967
    %v3969 = vmul.f32 %v2937, %v3968
    %v3970 = vmul.f32 %v2938, %v3968
    %v3971 = vmul.f32 %v2939, %v3968
    %v3972 = vmul.f32 %v2940, %v3968
    %v3973 = vmul.f32 %v2941, %v3968
    %v3974 = vmul.f32 %v2942, %v3968
    %v3975 = vmul.f32 %v2943, %v3968
    %v3976 = vmul.f32 %v2944, %v3968
    %v3977 = vmul.f32 %v2945, %v3968
    %v3978 = vmul.f32 %v2946, %v3968
    %v3979 = vmul.f32 %v2947, %v3968
    %v3980 = vmul.f32 %v2948, %v3968
    %v3981 = vmul.f32 %v2949, %v3968
    %v3982 = vmul.f32 %v2950, %v3968
    %v3983 = vmul.f32 %v2951, %v3968
    %v3984 = vmul.f32 %v2952, %v3968
    %v3985 = vmul.f32 %v2953, %v3968
    %v3986 = vmul.f32 %v2954, %v3968
    %v3987 = vmul.f32 %v2955, %v3968
    %v3988 = vmul.f32 %v2956, %v3968
    %v3989 = vmul.f32 %v2957, %v3968
    %v3990 = vmul.f32 %v2958, %v3968
    %v3991 = vmul.f32 %v2959, %v3968
    %v3992 = vmul.f32 %v2960, %v3968
    %v3993 = vmul.f32 %v2961, %v3968
    %v3994 = vmul.f32 %v2962, %v3968
    %v3995 = vmul.f32 %v2963, %v3968
    %v3996 = vmul.f32 %v2964, %v3968
    %v3997 = vmul.f32 %v2965, %v3968
    %v3998 = vmul.f32 %v2966, %v3968
    %v3999 = vmul.f32 %v2967, %v3968
    %v4000 = vmul.f32 %v2968, %v3968
    %v4001 = vmul.f32 %v2969, %v3968
    %v4002 = vmul.f32 %v2970, %v3968
    %v4003 = vmul.f32 %v2971, %v3968
    %v4004 = vmul.f32 %v2972, %v3968
    %v4005 = vmul.f32 %v2973, %v3968
    %v4006 = vmul.f32 %v2974, %v3968
    %v4007 = vmul.f32 %v2975, %v3968
    %v4008 = vmul.f32 %v2976, %v3968
    %v4009 = vmul.f32 %v2977, %v3968
    %v4010 = vmul.f32 %v2978, %v3968
    %v4011 = vmul.f32 %v2979, %v3968
    %v4012 = vmul.f32 %v2980, %v3968
    %v4013 = vmul.f32 %v2981, %v3968
    %v4014 = vmul.f32 %v2982, %v3968
    %v4015 = vmul.f32 %v2983, %v3968
    %v4016 = vmul.f32 %v2984, %v3968
    %v4017 = vmul.f32 %v2985, %v3968
    %v4018 = vmul.f32 %v2986, %v3968
    %v4019 = vmul.f32 %v2987, %v3968
    %v4020 = vmul.f32 %v2988, %v3968
    %v4021 = vmul.f32 %v2989, %v3968
    %v4022 = vmul.f32 %v2990, %v3968
    %v4023 = vmul.f32 %v2991, %v3968
    %v4024 = vmul.f32 %v2992, %v3968
    %v4025 = vmul.f32 %v2993, %v3968
    %v4026 = vmul.f32 %v2994, %v3968
    %v4027 = vmul.f32 %v2995, %v3968
    %v4028 = vmul.f32 %v2996, %v3968
    %v4029 = vmul.f32 %v2997, %v3968
    %v4030 = vmul.f32 %v2998, %v3968
    %v4031 = vmul.f32 %v2999, %v3968
    %v4032 = vmul.f32 %v3000, %v3968
    %v4033 = vmul.f32 %v3001, %v3968
    %v4034 = vmul.f32 %v3002, %v3968
    %v4035 = vmul.f32 %v3003, %v3968
    %v4036 = vmul.f32 %v3004, %v3968
    %v4037 = vmul.f32 %v3005, %v3968
    %v4038 = vmul.f32 %v3006, %v3968
    %v4039 = vmul.f32 %v3007, %v3968
    %v4040 = vmul.f32 %v3008, %v3968
    %v4041 = vmul.f32 %v3009, %v3968
    %v4042 = vmul.f32 %v3010, %v3968
    %v4043 = vmul.f32 %v3011, %v3968
    %v4044 = vmul.f32 %v3012, %v3968
    %v4045 = vmul.f32 %v3013, %v3968
    %v4046 = vmul.f32 %v3014, %v3968
    %v4047 = vmul.f32 %v3015, %v3968
    %v4048 = vmul.f32 %v3016, %v3968
    %v4049 = vmul.f32 %v3017, %v3968
    %v4050 = vmul.f32 %v3018, %v3968
    %v4051 = vmul.f32 %v3019, %v3968
    %v4052 = vmul.f32 %v3020, %v3968
    %v4053 = vmul.f32 %v3021, %v3968
    %v4054 = vmul.f32 %v3022, %v3968
    %v4055 = vmul.f32 %v3023, %v3968
    %v4056 = vmul.f32 %v3024, %v3968
    %v4057 = vmul.f32 %v3025, %v3968
    %v4058 = vmul.f32 %v3026, %v3968
    %v4059 = vmul.f32 %v3027, %v3968
    %v4060 = vmul.f32 %v3028, %v3968
    %v4061 = vmul.f32 %v3029, %v3968
    %v4062 = vmul.f32 %v3030, %v3968
    %v4063 = vmul.f32 %v3031, %v3968
    %v4064 = vmul.f32 %v3032, %v3968
    %v4065 = vmul.f32 %v3033, %v3968
    %v4066 = vmul.f32 %v3034, %v3968
    %v4067 = vmul.f32 %v3035, %v3968
    %v4068 = vmul.f32 %v3036, %v3968
    %v4069 = vmul.f32 %v3037, %v3968
    %v4070 = vmul.f32 %v3038, %v3968
    %v4071 = vmul.f32 %v3039, %v3968
    %v4072 = vmul.f32 %v3040, %v3968
    %v4073 = vmul.f32 %v3041, %v3968
    %v4074 = vmul.f32 %v3042, %v3968
    %v4075 = vmul.f32 %v3043, %v3968
    %v4076 = vmul.f32 %v3044, %v3968
    %v4077 = vmul.f32 %v3045, %v3968
    %v4078 = vmul.f32 %v3046, %v3968
    %v4079 = vmul.f32 %v3047, %v3968
    %v4080 = vmul.f32 %v3048, %v3968
    %v4081 = vmul.f32 %v3049, %v3968
    %v4082 = vmul.f32 %v3050, %v3968
    %v4083 = vmul.f32 %v3051, %v3968
    %v4084 = vmul.f32 %v3052, %v3968
    %v4085 = vmul.f32 %v3053, %v3968
    %v4086 = vmul.f32 %v3054, %v3968
    %v4087 = vmul.f32 %v3055, %v3968
    %v4088 = vmul.f32 %v3056, %v3968
    %v4089 = vmul.f32 %v3057, %v3968
    %v4090 = vmul.f32 %v3058, %v3968
    %v4091 = vmul.f32 %v3059, %v3968
    %v4092 = vmul.f32 %v3060, %v3968
    %v4093 = vmul.f32 %v3061, %v3968
    %v4094 = vmul.f32 %v3062, %v3968
    %v4095 = vmul.f32 %v3063, %v3968
    %v4096 = vmul.f32 %v3064, %v3968
    %v4097 = vmul.f32 %v3065, %v3968
    %v4098 = vmul.f32 %v3066, %v3968
    %v4099 = vmul.f32 %v3067, %v3968
    %v4100 = vmul.f32 %v3068, %v3968
    %v4101 = vmul.f32 %v3069, %v3968
    %v4102 = vmul.f32 %v3070, %v3968
    %v4103 = vmul.f32 %v3071, %v3968
    %v4104 = vmul.f32 %v3072, %v3968
    %v4105 = vmul.f32 %v3073, %v3968
    %v4106 = vmul.f32 %v3074, %v3968
    %v4107 = vmul.f32 %v3075, %v3968
    %v4108 = vmul.f32 %v3076, %v3968
    %v4109 = vmul.f32 %v3077, %v3968
    %v4110 = vmul.f32 %v3078, %v3968
    %v4111 = vmul.f32 %v3079, %v3968
    %v4112 = vmul.f32 %v3080, %v3968
    %v4113 = vmul.f32 %v3081, %v3968
    %v4114 = vmul.f32 %v3082, %v3968
    %v4115 = vmul.f32 %v3083, %v3968
    %v4116 = vmul.f32 %v3084, %v3968
    %v4117 = vmul.f32 %v3085, %v3968
    %v4118 = vmul.f32 %v3086, %v3968
    %v4119 = vmul.f32 %v3087, %v3968
    %v4120 = vmul.f32 %v3088, %v3968
    %v4121 = vmul.f32 %v3089, %v3968
    %v4122 = vmul.f32 %v3090, %v3968
    %v4123 = vmul.f32 %v3091, %v3968
    %v4124 = vmul.f32 %v3092, %v3968
    %v4125 = vmul.f32 %v3093, %v3968
    %v4126 = vmul.f32 %v3094, %v3968
    %v4127 = vmul.f32 %v3095, %v3968
    %v4128 = vmul.f32 %v3096, %v3968
    %v4129 = vmul.f32 %v3097, %v3968
    %v4130 = vmul.f32 %v3098, %v3968
    %v4131 = vmul.f32 %v3099, %v3968
    %v4132 = vmul.f32 %v3100, %v3968
    %v4133 = vmul.f32 %v3101, %v3968
    %v4134 = vmul.f32 %v3102, %v3968
    %v4135 = vmul.f32 %v3103, %v3968
    %v4136 = vmul.f32 %v3104, %v3968
    %v4137 = vmul.f32 %v3105, %v3968
    %v4138 = vmul.f32 %v3106, %v3968
    %v4139 = vmul.f32 %v3107, %v3968
    %v4140 = vmul.f32 %v3108, %v3968
    %v4141 = vmul.f32 %v3109, %v3968
    %v4142 = vmul.f32 %v3110, %v3968
    %v4143 = vmul.f32 %v3111, %v3968
    %v4144 = vmul.f32 %v3112, %v3968
    %v4145 = vmul.f32 %v3113, %v3968
    %v4146 = vmul.f32 %v3114, %v3968
    %v4147 = vmul.f32 %v3115, %v3968
    %v4148 = vmul.f32 %v3116, %v3968
    %v4149 = vmul.f32 %v3117, %v3968
    %v4150 = vmul.f32 %v3118, %v3968
    %v4151 = vmul.f32 %v3119, %v3968
    %v4152 = vmul.f32 %v3120, %v3968
    %v4153 = vmul.f32 %v3121, %v3968
    %v4154 = vmul.f32 %v3122, %v3968
    %v4155 = vmul.f32 %v3123, %v3968
    %v4156 = vmul.f32 %v3124, %v3968
    %v4157 = vmul.f32 %v3125, %v3968
    %v4158 = vmul.f32 %v3126, %v3968
    %v4159 = vmul.f32 %v3127, %v3968
    %v4160 = vmul.f32 %v3128, %v3968
    %v4161 = vmul.f32 %v3129, %v3968
    %v4162 = vmul.f32 %v3130, %v3968
    %v4163 = vmul.f32 %v3131, %v3968
    %v4164 = vmul.f32 %v3132, %v3968
    %v4165 = vmul.f32 %v3133, %v3968
    %v4166 = vmul.f32 %v3134, %v3968
    %v4167 = vmul.f32 %v3135, %v3968
    %v4168 = vmul.f32 %v3136, %v3968
    %v4169 = vmul.f32 %v3137, %v3968
    %v4170 = vmul.f32 %v3138, %v3968
    %v4171 = vmul.f32 %v3139, %v3968
    %v4172 = vmul.f32 %v3140, %v3968
    %v4173 = vmul.f32 %v3141, %v3968
    %v4174 = vmul.f32 %v3142, %v3968
    %v4175 = vmul.f32 %v3143, %v3968
    %v4176 = vmul.f32 %v3144, %v3968
    %v4177 = vmul.f32 %v3145, %v3968
    %v4178 = vmul.f32 %v3146, %v3968
    %v4179 = vmul.f32 %v3147, %v3968
    %v4180 = vmul.f32 %v3148, %v3968
    %v4181 = vmul.f32 %v3149, %v3968
    %v4182 = vmul.f32 %v3150, %v3968
    %v4183 = vmul.f32 %v3151, %v3968
    %v4184 = vmul.f32 %v3152, %v3968
    %v4185 = vmul.f32 %v3153, %v3968
    %v4186 = vmul.f32 %v3154, %v3968
    %v4187 = vmul.f32 %v3155, %v3968
    %v4188 = vmul.f32 %v3156, %v3968
    %v4189 = vmul.f32 %v3157, %v3968
    %v4190 = vmul.f32 %v3158, %v3968
    %v4191 = vmul.f32 %v3159, %v3968
    %v4192 = vmul.f32 %v3160, %v3968
    %v4193 = vmul.f32 %v3161, %v3968
    %v4194 = vmul.f32 %v3162, %v3968
    %v4195 = vmul.f32 %v3163, %v3968
    %v4196 = vmul.f32 %v3164, %v3968
    %v4197 = vmul.f32 %v3165, %v3968
    %v4198 = vmul.f32 %v3166, %v3968
    %v4199 = vmul.f32 %v3167, %v3968
    %v4200 = vmul.f32 %v3168, %v3968
    %v4201 = vmul.f32 %v3169, %v3968
    %v4202 = vmul.f32 %v3170, %v3968
    %v4203 = vmul.f32 %v3171, %v3968
    %v4204 = vmul.f32 %v3172, %v3968
    %v4205 = vmul.f32 %v3173, %v3968
    %v4206 = vmul.f32 %v3174, %v3968
    %v4207 = vmul.f32 %v3175, %v3968
    %v4208 = vmul.f32 %v3176, %v3968
    %v4209 = vmul.f32 %v3177, %v3968
    %v4210 = vmul.f32 %v3178, %v3968
    %v4211 = vmul.f32 %v3179, %v3968
    %v4212 = vmul.f32 %v3180, %v3968
    %v4213 = vmul.f32 %v3181, %v3968
    %v4214 = vmul.f32 %v3182, %v3968
    %v4215 = vmul.f32 %v3183, %v3968
    %v4216 = vmul.f32 %v3184, %v3968
    %v4217 = vmul.f32 %v3185, %v3968
    %v4218 = vmul.f32 %v3186, %v3968
    %v4219 = vmul.f32 %v3187, %v3968
    %v4220 = vmul.f32 %v3188, %v3968
    %v4221 = vmul.f32 %v3189, %v3968
    %v4222 = vmul.f32 %v3190, %v3968
    %v4223 = vmul.f32 %v3191, %v3968
    %v4224 = vmul.f32 %v3192, %v3968
    %v4225 = vld [vmem:[#allocation2] sm:$0x1]
    %v4227 = vlaneseq
    %v4228 = vshrl.u32 %v4227, 7
    %v4229 = vsub.s32 0, %v4228
    %v4230 = vrot.slane %v4225, %v4229
    %v4232 = vmul.f32 %v3969, %v4230
    %v4233 = vmul.f32 %v3970, %v4230
    %v4234 = vmul.f32 %v3971, %v4230
    %v4235 = vmul.f32 %v3972, %v4230
    %v4236 = vmul.f32 %v3973, %v4230
    %v4237 = vmul.f32 %v3974, %v4230
    %v4238 = vmul.f32 %v3975, %v4230
    %v4239 = vmul.f32 %v3976, %v4230
    %v4240 = vmul.f32 %v3977, %v4230
    %v4241 = vmul.f32 %v3978, %v4230
    %v4242 = vmul.f32 %v3979, %v4230
    %v4243 = vmul.f32 %v3980, %v4230
    %v4244 = vmul.f32 %v3981, %v4230
    %v4245 = vmul.f32 %v3982, %v4230
    %v4246 = vmul.f32 %v3983, %v4230
    %v4247 = vmul.f32 %v3984, %v4230
    %v4248 = vmul.f32 %v3985, %v4230
    %v4249 = vmul.f32 %v3986, %v4230
    %v4250 = vmul.f32 %v3987, %v4230
    %v4251 = vmul.f32 %v3988, %v4230
    %v4252 = vmul.f32 %v3989, %v4230
    %v4253 = vmul.f32 %v3990, %v4230
    %v4254 = vmul.f32 %v3991, %v4230
    %v4255 = vmul.f32 %v3992, %v4230
    %v4256 = vmul.f32 %v3993, %v4230
    %v4257 = vmul.f32 %v3994, %v4230
    %v4258 = vmul.f32 %v3995, %v4230
    %v4259 = vmul.f32 %v3996, %v4230
    %v4260 = vmul.f32 %v3997, %v4230
    %v4261 = vmul.f32 %v3998, %v4230
    %v4262 = vmul.f32 %v3999, %v4230
    %v4263 = vmul.f32 %v4000, %v4230
    %v4264 = vmul.f32 %v4001, %v4230
    %v4265 = vmul.f32 %v4002, %v4230
    %v4266 = vmul.f32 %v4003, %v4230
    %v4267 = vmul.f32 %v4004, %v4230
    %v4268 = vmul.f32 %v4005, %v4230
    %v4269 = vmul.f32 %v4006, %v4230
    %v4270 = vmul.f32 %v4007, %v4230
    %v4271 = vmul.f32 %v4008, %v4230
    %v4272 = vmul.f32 %v4009, %v4230
    %v4273 = vmul.f32 %v4010, %v4230
    %v4274 = vmul.f32 %v4011, %v4230
    %v4275 = vmul.f32 %v4012, %v4230
    %v4276 = vmul.f32 %v4013, %v4230
    %v4277 = vmul.f32 %v4014, %v4230
    %v4278 = vmul.f32 %v4015, %v4230
    %v4279 = vmul.f32 %v4016, %v4230
    %v4280 = vmul.f32 %v4017, %v4230
    %v4281 = vmul.f32 %v4018, %v4230
    %v4282 = vmul.f32 %v4019, %v4230
    %v4283 = vmul.f32 %v4020, %v4230
    %v4284 = vmul.f32 %v4021, %v4230
    %v4285 = vmul.f32 %v4022, %v4230
    %v4286 = vmul.f32 %v4023, %v4230
    %v4287 = vmul.f32 %v4024, %v4230
    %v4288 = vmul.f32 %v4025, %v4230
    %v4289 = vmul.f32 %v4026, %v4230
    %v4290 = vmul.f32 %v4027, %v4230
    %v4291 = vmul.f32 %v4028, %v4230
    %v4292 = vmul.f32 %v4029, %v4230
    %v4293 = vmul.f32 %v4030, %v4230
    %v4294 = vmul.f32 %v4031, %v4230
    %v4295 = vmul.f32 %v4032, %v4230
    %v4296 = vmul.f32 %v4033, %v4230
    %v4297 = vmul.f32 %v4034, %v4230
    %v4298 = vmul.f32 %v4035, %v4230
    %v4299 = vmul.f32 %v4036, %v4230
    %v4300 = vmul.f32 %v4037, %v4230
    %v4301 = vmul.f32 %v4038, %v4230
    %v4302 = vmul.f32 %v4039, %v4230
    %v4303 = vmul.f32 %v4040, %v4230
    %v4304 = vmul.f32 %v4041, %v4230
    %v4305 = vmul.f32 %v4042, %v4230
    %v4306 = vmul.f32 %v4043, %v4230
    %v4307 = vmul.f32 %v4044, %v4230
    %v4308 = vmul.f32 %v4045, %v4230
    %v4309 = vmul.f32 %v4046, %v4230
    %v4310 = vmul.f32 %v4047, %v4230
    %v4311 = vmul.f32 %v4048, %v4230
    %v4312 = vmul.f32 %v4049, %v4230
    %v4313 = vmul.f32 %v4050, %v4230
    %v4314 = vmul.f32 %v4051, %v4230
    %v4315 = vmul.f32 %v4052, %v4230
    %v4316 = vmul.f32 %v4053, %v4230
    %v4317 = vmul.f32 %v4054, %v4230
    %v4318 = vmul.f32 %v4055, %v4230
    %v4319 = vmul.f32 %v4056, %v4230
    %v4320 = vmul.f32 %v4057, %v4230
    %v4321 = vmul.f32 %v4058, %v4230
    %v4322 = vmul.f32 %v4059, %v4230
    %v4323 = vmul.f32 %v4060, %v4230
    %v4324 = vmul.f32 %v4061, %v4230
    %v4325 = vmul.f32 %v4062, %v4230
    %v4326 = vmul.f32 %v4063, %v4230
    %v4327 = vmul.f32 %v4064, %v4230
    %v4328 = vmul.f32 %v4065, %v4230
    %v4329 = vmul.f32 %v4066, %v4230
    %v4330 = vmul.f32 %v4067, %v4230
    %v4331 = vmul.f32 %v4068, %v4230
    %v4332 = vmul.f32 %v4069, %v4230
    %v4333 = vmul.f32 %v4070, %v4230
    %v4334 = vmul.f32 %v4071, %v4230
    %v4335 = vmul.f32 %v4072, %v4230
    %v4336 = vmul.f32 %v4073, %v4230
    %v4337 = vmul.f32 %v4074, %v4230
    %v4338 = vmul.f32 %v4075, %v4230
    %v4339 = vmul.f32 %v4076, %v4230
    %v4340 = vmul.f32 %v4077, %v4230
    %v4341 = vmul.f32 %v4078, %v4230
    %v4342 = vmul.f32 %v4079, %v4230
    %v4343 = vmul.f32 %v4080, %v4230
    %v4344 = vmul.f32 %v4081, %v4230
    %v4345 = vmul.f32 %v4082, %v4230
    %v4346 = vmul.f32 %v4083, %v4230
    %v4347 = vmul.f32 %v4084, %v4230
    %v4348 = vmul.f32 %v4085, %v4230
    %v4349 = vmul.f32 %v4086, %v4230
    %v4350 = vmul.f32 %v4087, %v4230
    %v4351 = vmul.f32 %v4088, %v4230
    %v4352 = vmul.f32 %v4089, %v4230
    %v4353 = vmul.f32 %v4090, %v4230
    %v4354 = vmul.f32 %v4091, %v4230
    %v4355 = vmul.f32 %v4092, %v4230
    %v4356 = vmul.f32 %v4093, %v4230
    %v4357 = vmul.f32 %v4094, %v4230
    %v4358 = vmul.f32 %v4095, %v4230
    %v4359 = vmul.f32 %v4096, %v4230
    %v4360 = vmul.f32 %v4097, %v4230
    %v4361 = vmul.f32 %v4098, %v4230
    %v4362 = vmul.f32 %v4099, %v4230
    %v4363 = vmul.f32 %v4100, %v4230
    %v4364 = vmul.f32 %v4101, %v4230
    %v4365 = vmul.f32 %v4102, %v4230
    %v4366 = vmul.f32 %v4103, %v4230
    %v4367 = vmul.f32 %v4104, %v4230
    %v4368 = vmul.f32 %v4105, %v4230
    %v4369 = vmul.f32 %v4106, %v4230
    %v4370 = vmul.f32 %v4107, %v4230
    %v4371 = vmul.f32 %v4108, %v4230
    %v4372 = vmul.f32 %v4109, %v4230
    %v4373 = vmul.f32 %v4110, %v4230
    %v4374 = vmul.f32 %v4111, %v4230
    %v4375 = vmul.f32 %v4112, %v4230
    %v4376 = vmul.f32 %v4113, %v4230
    %v4377 = vmul.f32 %v4114, %v4230
    %v4378 = vmul.f32 %v4115, %v4230
    %v4379 = vmul.f32 %v4116, %v4230
    %v4380 = vmul.f32 %v4117, %v4230
    %v4381 = vmul.f32 %v4118, %v4230
    %v4382 = vmul.f32 %v4119, %v4230
    %v4383 = vmul.f32 %v4120, %v4230
    %v4384 = vmul.f32 %v4121, %v4230
    %v4385 = vmul.f32 %v4122, %v4230
    %v4386 = vmul.f32 %v4123, %v4230
    %v4387 = vmul.f32 %v4124, %v4230
    %v4388 = vmul.f32 %v4125, %v4230
    %v4389 = vmul.f32 %v4126, %v4230
    %v4390 = vmul.f32 %v4127, %v4230
    %v4391 = vmul.f32 %v4128, %v4230
    %v4392 = vmul.f32 %v4129, %v4230
    %v4393 = vmul.f32 %v4130, %v4230
    %v4394 = vmul.f32 %v4131, %v4230
    %v4395 = vmul.f32 %v4132, %v4230
    %v4396 = vmul.f32 %v4133, %v4230
    %v4397 = vmul.f32 %v4134, %v4230
    %v4398 = vmul.f32 %v4135, %v4230
    %v4399 = vmul.f32 %v4136, %v4230
    %v4400 = vmul.f32 %v4137, %v4230
    %v4401 = vmul.f32 %v4138, %v4230
    %v4402 = vmul.f32 %v4139, %v4230
    %v4403 = vmul.f32 %v4140, %v4230
    %v4404 = vmul.f32 %v4141, %v4230
    %v4405 = vmul.f32 %v4142, %v4230
    %v4406 = vmul.f32 %v4143, %v4230
    %v4407 = vmul.f32 %v4144, %v4230
    %v4408 = vmul.f32 %v4145, %v4230
    %v4409 = vmul.f32 %v4146, %v4230
    %v4410 = vmul.f32 %v4147, %v4230
    %v4411 = vmul.f32 %v4148, %v4230
    %v4412 = vmul.f32 %v4149, %v4230
    %v4413 = vmul.f32 %v4150, %v4230
    %v4414 = vmul.f32 %v4151, %v4230
    %v4415 = vmul.f32 %v4152, %v4230
    %v4416 = vmul.f32 %v4153, %v4230
    %v4417 = vmul.f32 %v4154, %v4230
    %v4418 = vmul.f32 %v4155, %v4230
    %v4419 = vmul.f32 %v4156, %v4230
    %v4420 = vmul.f32 %v4157, %v4230
    %v4421 = vmul.f32 %v4158, %v4230
    %v4422 = vmul.f32 %v4159, %v4230
    %v4423 = vmul.f32 %v4160, %v4230
    %v4424 = vmul.f32 %v4161, %v4230
    %v4425 = vmul.f32 %v4162, %v4230
    %v4426 = vmul.f32 %v4163, %v4230
    %v4427 = vmul.f32 %v4164, %v4230
    %v4428 = vmul.f32 %v4165, %v4230
    %v4429 = vmul.f32 %v4166, %v4230
    %v4430 = vmul.f32 %v4167, %v4230
    %v4431 = vmul.f32 %v4168, %v4230
    %v4432 = vmul.f32 %v4169, %v4230
    %v4433 = vmul.f32 %v4170, %v4230
    %v4434 = vmul.f32 %v4171, %v4230
    %v4435 = vmul.f32 %v4172, %v4230
    %v4436 = vmul.f32 %v4173, %v4230
    %v4437 = vmul.f32 %v4174, %v4230
    %v4438 = vmul.f32 %v4175, %v4230
    %v4439 = vmul.f32 %v4176, %v4230
    %v4440 = vmul.f32 %v4177, %v4230
    %v4441 = vmul.f32 %v4178, %v4230
    %v4442 = vmul.f32 %v4179, %v4230
    %v4443 = vmul.f32 %v4180, %v4230
    %v4444 = vmul.f32 %v4181, %v4230
    %v4445 = vmul.f32 %v4182, %v4230
    %v4446 = vmul.f32 %v4183, %v4230
    %v4447 = vmul.f32 %v4184, %v4230
    %v4448 = vmul.f32 %v4185, %v4230
    %v4449 = vmul.f32 %v4186, %v4230
    %v4450 = vmul.f32 %v4187, %v4230
    %v4451 = vmul.f32 %v4188, %v4230
    %v4452 = vmul.f32 %v4189, %v4230
    %v4453 = vmul.f32 %v4190, %v4230
    %v4454 = vmul.f32 %v4191, %v4230
    %v4455 = vmul.f32 %v4192, %v4230
    %v4456 = vmul.f32 %v4193, %v4230
    %v4457 = vmul.f32 %v4194, %v4230
    %v4458 = vmul.f32 %v4195, %v4230
    %v4459 = vmul.f32 %v4196, %v4230
    %v4460 = vmul.f32 %v4197, %v4230
    %v4461 = vmul.f32 %v4198, %v4230
    %v4462 = vmul.f32 %v4199, %v4230
    %v4463 = vmul.f32 %v4200, %v4230
    %v4464 = vmul.f32 %v4201, %v4230
    %v4465 = vmul.f32 %v4202, %v4230
    %v4466 = vmul.f32 %v4203, %v4230
    %v4467 = vmul.f32 %v4204, %v4230
    %v4468 = vmul.f32 %v4205, %v4230
    %v4469 = vmul.f32 %v4206, %v4230
    %v4470 = vmul.f32 %v4207, %v4230
    %v4471 = vmul.f32 %v4208, %v4230
    %v4472 = vmul.f32 %v4209, %v4230
    %v4473 = vmul.f32 %v4210, %v4230
    %v4474 = vmul.f32 %v4211, %v4230
    %v4475 = vmul.f32 %v4212, %v4230
    %v4476 = vmul.f32 %v4213, %v4230
    %v4477 = vmul.f32 %v4214, %v4230
    %v4478 = vmul.f32 %v4215, %v4230
    %v4479 = vmul.f32 %v4216, %v4230
    %v4480 = vmul.f32 %v4217, %v4230
    %v4481 = vmul.f32 %v4218, %v4230
    %v4482 = vmul.f32 %v4219, %v4230
    %v4483 = vmul.f32 %v4220, %v4230
    %v4484 = vmul.f32 %v4221, %v4230
    %v4485 = vmul.f32 %v4222, %v4230
    %v4486 = vmul.f32 %v4223, %v4230
    %v4487 = vmul.f32 %v4224, %v4230
    %v4488 = vld [vmem:[#allocation4] sm:$0x1]
    %v4490 = vlaneseq
    %v4491 = vshrl.u32 %v4490, 7
    %v4492 = vsub.s32 0, %v4491
    %v4493 = vrot.slane %v4488, %v4492
    %v4495 = vadd.f32 %v4232, %v4493
    %v4496 = vadd.f32 %v4233, %v4493
    %v4497 = vadd.f32 %v4234, %v4493
    %v4498 = vadd.f32 %v4235, %v4493
    %v4499 = vadd.f32 %v4236, %v4493
    %v4500 = vadd.f32 %v4237, %v4493
    %v4501 = vadd.f32 %v4238, %v4493
    %v4502 = vadd.f32 %v4239, %v4493
    %v4503 = vadd.f32 %v4240, %v4493
    %v4504 = vadd.f32 %v4241, %v4493
    %v4505 = vadd.f32 %v4242, %v4493
    %v4506 = vadd.f32 %v4243, %v4493
    %v4507 = vadd.f32 %v4244, %v4493
    %v4508 = vadd.f32 %v4245, %v4493
    %v4509 = vadd.f32 %v4246, %v4493
    %v4510 = vadd.f32 %v4247, %v4493
    %v4511 = vadd.f32 %v4248, %v4493
    %v4512 = vadd.f32 %v4249, %v4493
    %v4513 = vadd.f32 %v4250, %v4493
    %v4514 = vadd.f32 %v4251, %v4493
    %v4515 = vadd.f32 %v4252, %v4493
    %v4516 = vadd.f32 %v4253, %v4493
    %v4517 = vadd.f32 %v4254, %v4493
    %v4518 = vadd.f32 %v4255, %v4493
    %v4519 = vadd.f32 %v4256, %v4493
    %v4520 = vadd.f32 %v4257, %v4493
    %v4521 = vadd.f32 %v4258, %v4493
    %v4522 = vadd.f32 %v4259, %v4493
    %v4523 = vadd.f32 %v4260, %v4493
    %v4524 = vadd.f32 %v4261, %v4493
    %v4525 = vadd.f32 %v4262, %v4493
    %v4526 = vadd.f32 %v4263, %v4493
    %v4527 = vadd.f32 %v4264, %v4493
    %v4528 = vadd.f32 %v4265, %v4493
    %v4529 = vadd.f32 %v4266, %v4493
    %v4530 = vadd.f32 %v4267, %v4493
    %v4531 = vadd.f32 %v4268, %v4493
    %v4532 = vadd.f32 %v4269, %v4493
    %v4533 = vadd.f32 %v4270, %v4493
    %v4534 = vadd.f32 %v4271, %v4493
    %v4535 = vadd.f32 %v4272, %v4493
    %v4536 = vadd.f32 %v4273, %v4493
    %v4537 = vadd.f32 %v4274, %v4493
    %v4538 = vadd.f32 %v4275, %v4493
    %v4539 = vadd.f32 %v4276, %v4493
    %v4540 = vadd.f32 %v4277, %v4493
    %v4541 = vadd.f32 %v4278, %v4493
    %v4542 = vadd.f32 %v4279, %v4493
    %v4543 = vadd.f32 %v4280, %v4493
    %v4544 = vadd.f32 %v4281, %v4493
    %v4545 = vadd.f32 %v4282, %v4493
    %v4546 = vadd.f32 %v4283, %v4493
    %v4547 = vadd.f32 %v4284, %v4493
    %v4548 = vadd.f32 %v4285, %v4493
    %v4549 = vadd.f32 %v4286, %v4493
    %v4550 = vadd.f32 %v4287, %v4493
    %v4551 = vadd.f32 %v4288, %v4493
    %v4552 = vadd.f32 %v4289, %v4493
    %v4553 = vadd.f32 %v4290, %v4493
    %v4554 = vadd.f32 %v4291, %v4493
    %v4555 = vadd.f32 %v4292, %v4493
    %v4556 = vadd.f32 %v4293, %v4493
    %v4557 = vadd.f32 %v4294, %v4493
    %v4558 = vadd.f32 %v4295, %v4493
    %v4559 = vadd.f32 %v4296, %v4493
    %v4560 = vadd.f32 %v4297, %v4493
    %v4561 = vadd.f32 %v4298, %v4493
    %v4562 = vadd.f32 %v4299, %v4493
    %v4563 = vadd.f32 %v4300, %v4493
    %v4564 = vadd.f32 %v4301, %v4493
    %v4565 = vadd.f32 %v4302, %v4493
    %v4566 = vadd.f32 %v4303, %v4493
    %v4567 = vadd.f32 %v4304, %v4493
    %v4568 = vadd.f32 %v4305, %v4493
    %v4569 = vadd.f32 %v4306, %v4493
    %v4570 = vadd.f32 %v4307, %v4493
    %v4571 = vadd.f32 %v4308, %v4493
    %v4572 = vadd.f32 %v4309, %v4493
    %v4573 = vadd.f32 %v4310, %v4493
    %v4574 = vadd.f32 %v4311, %v4493
    %v4575 = vadd.f32 %v4312, %v4493
    %v4576 = vadd.f32 %v4313, %v4493
    %v4577 = vadd.f32 %v4314, %v4493
    %v4578 = vadd.f32 %v4315, %v4493
    %v4579 = vadd.f32 %v4316, %v4493
    %v4580 = vadd.f32 %v4317, %v4493
    %v4581 = vadd.f32 %v4318, %v4493
    %v4582 = vadd.f32 %v4319, %v4493
    %v4583 = vadd.f32 %v4320, %v4493
    %v4584 = vadd.f32 %v4321, %v4493
    %v4585 = vadd.f32 %v4322, %v4493
    %v4586 = vadd.f32 %v4323, %v4493
    %v4587 = vadd.f32 %v4324, %v4493
    %v4588 = vadd.f32 %v4325, %v4493
    %v4589 = vadd.f32 %v4326, %v4493
    %v4590 = vadd.f32 %v4327, %v4493
    %v4591 = vadd.f32 %v4328, %v4493
    %v4592 = vadd.f32 %v4329, %v4493
    %v4593 = vadd.f32 %v4330, %v4493
    %v4594 = vadd.f32 %v4331, %v4493
    %v4595 = vadd.f32 %v4332, %v4493
    %v4596 = vadd.f32 %v4333, %v4493
    %v4597 = vadd.f32 %v4334, %v4493
    %v4598 = vadd.f32 %v4335, %v4493
    %v4599 = vadd.f32 %v4336, %v4493
    %v4600 = vadd.f32 %v4337, %v4493
    %v4601 = vadd.f32 %v4338, %v4493
    %v4602 = vadd.f32 %v4339, %v4493
    %v4603 = vadd.f32 %v4340, %v4493
    %v4604 = vadd.f32 %v4341, %v4493
    %v4605 = vadd.f32 %v4342, %v4493
    %v4606 = vadd.f32 %v4343, %v4493
    %v4607 = vadd.f32 %v4344, %v4493
    %v4608 = vadd.f32 %v4345, %v4493
    %v4609 = vadd.f32 %v4346, %v4493
    %v4610 = vadd.f32 %v4347, %v4493
    %v4611 = vadd.f32 %v4348, %v4493
    %v4612 = vadd.f32 %v4349, %v4493
    %v4613 = vadd.f32 %v4350, %v4493
    %v4614 = vadd.f32 %v4351, %v4493
    %v4615 = vadd.f32 %v4352, %v4493
    %v4616 = vadd.f32 %v4353, %v4493
    %v4617 = vadd.f32 %v4354, %v4493
    %v4618 = vadd.f32 %v4355, %v4493
    %v4619 = vadd.f32 %v4356, %v4493
    %v4620 = vadd.f32 %v4357, %v4493
    %v4621 = vadd.f32 %v4358, %v4493
    %v4622 = vadd.f32 %v4359, %v4493
    %v4623 = vadd.f32 %v4360, %v4493
    %v4624 = vadd.f32 %v4361, %v4493
    %v4625 = vadd.f32 %v4362, %v4493
    %v4626 = vadd.f32 %v4363, %v4493
    %v4627 = vadd.f32 %v4364, %v4493
    %v4628 = vadd.f32 %v4365, %v4493
    %v4629 = vadd.f32 %v4366, %v4493
    %v4630 = vadd.f32 %v4367, %v4493
    %v4631 = vadd.f32 %v4368, %v4493
    %v4632 = vadd.f32 %v4369, %v4493
    %v4633 = vadd.f32 %v4370, %v4493
    %v4634 = vadd.f32 %v4371, %v4493
    %v4635 = vadd.f32 %v4372, %v4493
    %v4636 = vadd.f32 %v4373, %v4493
    %v4637 = vadd.f32 %v4374, %v4493
    %v4638 = vadd.f32 %v4375, %v4493
    %v4639 = vadd.f32 %v4376, %v4493
    %v4640 = vadd.f32 %v4377, %v4493
    %v4641 = vadd.f32 %v4378, %v4493
    %v4642 = vadd.f32 %v4379, %v4493
    %v4643 = vadd.f32 %v4380, %v4493
    %v4644 = vadd.f32 %v4381, %v4493
    %v4645 = vadd.f32 %v4382, %v4493
    %v4646 = vadd.f32 %v4383, %v4493
    %v4647 = vadd.f32 %v4384, %v4493
    %v4648 = vadd.f32 %v4385, %v4493
    %v4649 = vadd.f32 %v4386, %v4493
    %v4650 = vadd.f32 %v4387, %v4493
    %v4651 = vadd.f32 %v4388, %v4493
    %v4652 = vadd.f32 %v4389, %v4493
    %v4653 = vadd.f32 %v4390, %v4493
    %v4654 = vadd.f32 %v4391, %v4493
    %v4655 = vadd.f32 %v4392, %v4493
    %v4656 = vadd.f32 %v4393, %v4493
    %v4657 = vadd.f32 %v4394, %v4493
    %v4658 = vadd.f32 %v4395, %v4493
    %v4659 = vadd.f32 %v4396, %v4493
    %v4660 = vadd.f32 %v4397, %v4493
    %v4661 = vadd.f32 %v4398, %v4493
    %v4662 = vadd.f32 %v4399, %v4493
    %v4663 = vadd.f32 %v4400, %v4493
    %v4664 = vadd.f32 %v4401, %v4493
    %v4665 = vadd.f32 %v4402, %v4493
    %v4666 = vadd.f32 %v4403, %v4493
    %v4667 = vadd.f32 %v4404, %v4493
    %v4668 = vadd.f32 %v4405, %v4493
    %v4669 = vadd.f32 %v4406, %v4493
    %v4670 = vadd.f32 %v4407, %v4493
    %v4671 = vadd.f32 %v4408, %v4493
    %v4672 = vadd.f32 %v4409, %v4493
    %v4673 = vadd.f32 %v4410, %v4493
    %v4674 = vadd.f32 %v4411, %v4493
    %v4675 = vadd.f32 %v4412, %v4493
    %v4676 = vadd.f32 %v4413, %v4493
    %v4677 = vadd.f32 %v4414, %v4493
    %v4678 = vadd.f32 %v4415, %v4493
    %v4679 = vadd.f32 %v4416, %v4493
    %v4680 = vadd.f32 %v4417, %v4493
    %v4681 = vadd.f32 %v4418, %v4493
    %v4682 = vadd.f32 %v4419, %v4493
    %v4683 = vadd.f32 %v4420, %v4493
    %v4684 = vadd.f32 %v4421, %v4493
    %v4685 = vadd.f32 %v4422, %v4493
    %v4686 = vadd.f32 %v4423, %v4493
    %v4687 = vadd.f32 %v4424, %v4493
    %v4688 = vadd.f32 %v4425, %v4493
    %v4689 = vadd.f32 %v4426, %v4493
    %v4690 = vadd.f32 %v4427, %v4493
    %v4691 = vadd.f32 %v4428, %v4493
    %v4692 = vadd.f32 %v4429, %v4493
    %v4693 = vadd.f32 %v4430, %v4493
    %v4694 = vadd.f32 %v4431, %v4493
    %v4695 = vadd.f32 %v4432, %v4493
    %v4696 = vadd.f32 %v4433, %v4493
    %v4697 = vadd.f32 %v4434, %v4493
    %v4698 = vadd.f32 %v4435, %v4493
    %v4699 = vadd.f32 %v4436, %v4493
    %v4700 = vadd.f32 %v4437, %v4493
    %v4701 = vadd.f32 %v4438, %v4493
    %v4702 = vadd.f32 %v4439, %v4493
    %v4703 = vadd.f32 %v4440, %v4493
    %v4704 = vadd.f32 %v4441, %v4493
    %v4705 = vadd.f32 %v4442, %v4493
    %v4706 = vadd.f32 %v4443, %v4493
    %v4707 = vadd.f32 %v4444, %v4493
    %v4708 = vadd.f32 %v4445, %v4493
    %v4709 = vadd.f32 %v4446, %v4493
    %v4710 = vadd.f32 %v4447, %v4493
    %v4711 = vadd.f32 %v4448, %v4493
    %v4712 = vadd.f32 %v4449, %v4493
    %v4713 = vadd.f32 %v4450, %v4493
    %v4714 = vadd.f32 %v4451, %v4493
    %v4715 = vadd.f32 %v4452, %v4493
    %v4716 = vadd.f32 %v4453, %v4493
    %v4717 = vadd.f32 %v4454, %v4493
    %v4718 = vadd.f32 %v4455, %v4493
    %v4719 = vadd.f32 %v4456, %v4493
    %v4720 = vadd.f32 %v4457, %v4493
    %v4721 = vadd.f32 %v4458, %v4493
    %v4722 = vadd.f32 %v4459, %v4493
    %v4723 = vadd.f32 %v4460, %v4493
    %v4724 = vadd.f32 %v4461, %v4493
    %v4725 = vadd.f32 %v4462, %v4493
    %v4726 = vadd.f32 %v4463, %v4493
    %v4727 = vadd.f32 %v4464, %v4493
    %v4728 = vadd.f32 %v4465, %v4493
    %v4729 = vadd.f32 %v4466, %v4493
    %v4730 = vadd.f32 %v4467, %v4493
    %v4731 = vadd.f32 %v4468, %v4493
    %v4732 = vadd.f32 %v4469, %v4493
    %v4733 = vadd.f32 %v4470, %v4493
    %v4734 = vadd.f32 %v4471, %v4493
    %v4735 = vadd.f32 %v4472, %v4493
    %v4736 = vadd.f32 %v4473, %v4493
    %v4737 = vadd.f32 %v4474, %v4493
    %v4738 = vadd.f32 %v4475, %v4493
    %v4739 = vadd.f32 %v4476, %v4493
    %v4740 = vadd.f32 %v4477, %v4493
    %v4741 = vadd.f32 %v4478, %v4493
    %v4742 = vadd.f32 %v4479, %v4493
    %v4743 = vadd.f32 %v4480, %v4493
    %v4744 = vadd.f32 %v4481, %v4493
    %v4745 = vadd.f32 %v4482, %v4493
    %v4746 = vadd.f32 %v4483, %v4493
    %v4747 = vadd.f32 %v4484, %v4493
    %v4748 = vadd.f32 %v4485, %v4493
    %v4749 = vadd.f32 %v4486, %v4493
    %v4750 = vadd.f32 %v4487, %v4493
    %4751 = vst.msk [vmem:[%s4] sm:$0xff] %vm2417, %v4495
    %4752 = vst.msk [vmem:[%s4 + $0x8] sm:$0xff] %vm2417, %v4496
    %4753 = vst.msk [vmem:[%s4 + $0x10] sm:$0xff] %vm2417, %v4497
    %4754 = vst.msk [vmem:[%s4 + $0x18] sm:$0xff] %vm2417, %v4498
    %4755 = vst.msk [vmem:[%s4 + $0x20] sm:$0xff] %vm2417, %v4499
    %4756 = vst.msk [vmem:[%s4 + $0x28] sm:$0xff] %vm2417, %v4500
    %4757 = vst.msk [vmem:[%s4 + $0x30] sm:$0xff] %vm2417, %v4501
    %4758 = vst.msk [vmem:[%s4 + $0x38] sm:$0xff] %vm2417, %v4502
    %4759 = vst.msk [vmem:[%s4 + $0x40] sm:$0xff] %vm2417, %v4503
    %4760 = vst.msk [vmem:[%s4 + $0x48] sm:$0xff] %vm2417, %v4504
    %4761 = vst.msk [vmem:[%s4 + $0x50] sm:$0xff] %vm2417, %v4505
    %4762 = vst.msk [vmem:[%s4 + $0x58] sm:$0xff] %vm2417, %v4506
    %4763 = vst.msk [vmem:[%s4 + $0x60] sm:$0xff] %vm2417, %v4507
    %4764 = vst.msk [vmem:[%s4 + $0x68] sm:$0xff] %vm2417, %v4508
    %4765 = vst.msk [vmem:[%s4 + $0x70] sm:$0xff] %vm2417, %v4509
    %4766 = vst.msk [vmem:[%s4 + $0x78] sm:$0xff] %vm2417, %v4510
    %4767 = vst.msk [vmem:[%s4 + $0x80] sm:$0xff] %vm2417, %v4511
    %4768 = vst.msk [vmem:[%s4 + $0x88] sm:$0xff] %vm2417, %v4512
    %4769 = vst.msk [vmem:[%s4 + $0x90] sm:$0xff] %vm2417, %v4513
    %4770 = vst.msk [vmem:[%s4 + $0x98] sm:$0xff] %vm2417, %v4514
    %4771 = vst.msk [vmem:[%s4 + $0xa0] sm:$0xff] %vm2417, %v4515
    %4772 = vst.msk [vmem:[%s4 + $0xa8] sm:$0xff] %vm2417, %v4516
    %4773 = vst.msk [vmem:[%s4 + $0xb0] sm:$0xff] %vm2417, %v4517
    %4774 = vst.msk [vmem:[%s4 + $0xb8] sm:$0xff] %vm2417, %v4518
    %4775 = vst.msk [vmem:[%s4 + $0xc0] sm:$0xff] %vm2417, %v4519
    %4776 = vst.msk [vmem:[%s4 + $0xc8] sm:$0xff] %vm2417, %v4520
    %4777 = vst.msk [vmem:[%s4 + $0xd0] sm:$0xff] %vm2417, %v4521
    %4778 = vst.msk [vmem:[%s4 + $0xd8] sm:$0xff] %vm2417, %v4522
    %4779 = vst.msk [vmem:[%s4 + $0xe0] sm:$0xff] %vm2417, %v4523
    %4780 = vst.msk [vmem:[%s4 + $0xe8] sm:$0xff] %vm2417, %v4524
    %4781 = vst.msk [vmem:[%s4 + $0xf0] sm:$0xff] %vm2417, %v4525
    %4782 = vst.msk [vmem:[%s4 + $0xf8] sm:$0xff] %vm2417, %v4526
    %4783 = vst.msk [vmem:[%s4 + $0x100] sm:$0xff] %vm2417, %v4527
    %4784 = vst.msk [vmem:[%s4 + $0x108] sm:$0xff] %vm2417, %v4528
    %4785 = vst.msk [vmem:[%s4 + $0x110] sm:$0xff] %vm2417, %v4529
    %4786 = vst.msk [vmem:[%s4 + $0x118] sm:$0xff] %vm2417, %v4530
    %4787 = vst.msk [vmem:[%s4 + $0x120] sm:$0xff] %vm2417, %v4531
    %4788 = vst.msk [vmem:[%s4 + $0x128] sm:$0xff] %vm2417, %v4532
    %4789 = vst.msk [vmem:[%s4 + $0x130] sm:$0xff] %vm2417, %v4533
    %4790 = vst.msk [vmem:[%s4 + $0x138] sm:$0xff] %vm2417, %v4534
    %4791 = vst.msk [vmem:[%s4 + $0x140] sm:$0xff] %vm2417, %v4535
    %4792 = vst.msk [vmem:[%s4 + $0x148] sm:$0xff] %vm2417, %v4536
    %4793 = vst.msk [vmem:[%s4 + $0x150] sm:$0xff] %vm2417, %v4537
    %4794 = vst.msk [vmem:[%s4 + $0x158] sm:$0xff] %vm2417, %v4538
    %4795 = vst.msk [vmem:[%s4 + $0x160] sm:$0xff] %vm2417, %v4539
    %4796 = vst.msk [vmem:[%s4 + $0x168] sm:$0xff] %vm2417, %v4540
    %4797 = vst.msk [vmem:[%s4 + $0x170] sm:$0xff] %vm2417, %v4541
    %4798 = vst.msk [vmem:[%s4 + $0x178] sm:$0xff] %vm2417, %v4542
    %4799 = vst.msk [vmem:[%s4 + $0x180] sm:$0xff] %vm2417, %v4543
    %4800 = vst.msk [vmem:[%s4 + $0x188] sm:$0xff] %vm2417, %v4544
    %4801 = vst.msk [vmem:[%s4 + $0x190] sm:$0xff] %vm2417, %v4545
    %4802 = vst.msk [vmem:[%s4 + $0x198] sm:$0xff] %vm2417, %v4546
    %4803 = vst.msk [vmem:[%s4 + $0x1a0] sm:$0xff] %vm2417, %v4547
    %4804 = vst.msk [vmem:[%s4 + $0x1a8] sm:$0xff] %vm2417, %v4548
    %4805 = vst.msk [vmem:[%s4 + $0x1b0] sm:$0xff] %vm2417, %v4549
    %4806 = vst.msk [vmem:[%s4 + $0x1b8] sm:$0xff] %vm2417, %v4550
    %4807 = vst.msk [vmem:[%s4 + $0x1c0] sm:$0xff] %vm2417, %v4551
    %4808 = vst.msk [vmem:[%s4 + $0x1c8] sm:$0xff] %vm2417, %v4552
    %4809 = vst.msk [vmem:[%s4 + $0x1d0] sm:$0xff] %vm2417, %v4553
    %4810 = vst.msk [vmem:[%s4 + $0x1d8] sm:$0xff] %vm2417, %v4554
    %4811 = vst.msk [vmem:[%s4 + $0x1e0] sm:$0xff] %vm2417, %v4555
    %4812 = vst.msk [vmem:[%s4 + $0x1e8] sm:$0xff] %vm2417, %v4556
    %4813 = vst.msk [vmem:[%s4 + $0x1f0] sm:$0xff] %vm2417, %v4557
    %4814 = vst.msk [vmem:[%s4 + $0x1f8] sm:$0xff] %vm2417, %v4558
    %4815 = vst.msk [vmem:[%s4 + $0x200] sm:$0xff] %vm2417, %v4559
    %4816 = vst.msk [vmem:[%s4 + $0x208] sm:$0xff] %vm2417, %v4560
    %4817 = vst.msk [vmem:[%s4 + $0x210] sm:$0xff] %vm2417, %v4561
    %4818 = vst.msk [vmem:[%s4 + $0x218] sm:$0xff] %vm2417, %v4562
    %4819 = vst.msk [vmem:[%s4 + $0x220] sm:$0xff] %vm2417, %v4563
    %4820 = vst.msk [vmem:[%s4 + $0x228] sm:$0xff] %vm2417, %v4564
    %4821 = vst.msk [vmem:[%s4 + $0x230] sm:$0xff] %vm2417, %v4565
    %4822 = vst.msk [vmem:[%s4 + $0x238] sm:$0xff] %vm2417, %v4566
    %4823 = vst.msk [vmem:[%s4 + $0x240] sm:$0xff] %vm2417, %v4567
    %4824 = vst.msk [vmem:[%s4 + $0x248] sm:$0xff] %vm2417, %v4568
    %4825 = vst.msk [vmem:[%s4 + $0x250] sm:$0xff] %vm2417, %v4569
    %4826 = vst.msk [vmem:[%s4 + $0x258] sm:$0xff] %vm2417, %v4570
    %4827 = vst.msk [vmem:[%s4 + $0x260] sm:$0xff] %vm2417, %v4571
    %4828 = vst.msk [vmem:[%s4 + $0x268] sm:$0xff] %vm2417, %v4572
    %4829 = vst.msk [vmem:[%s4 + $0x270] sm:$0xff] %vm2417, %v4573
    %4830 = vst.msk [vmem:[%s4 + $0x278] sm:$0xff] %vm2417, %v4574
    %4831 = vst.msk [vmem:[%s4 + $0x280] sm:$0xff] %vm2417, %v4575
    %4832 = vst.msk [vmem:[%s4 + $0x288] sm:$0xff] %vm2417, %v4576
    %4833 = vst.msk [vmem:[%s4 + $0x290] sm:$0xff] %vm2417, %v4577
    %4834 = vst.msk [vmem:[%s4 + $0x298] sm:$0xff] %vm2417, %v4578
    %4835 = vst.msk [vmem:[%s4 + $0x2a0] sm:$0xff] %vm2417, %v4579
    %4836 = vst.msk [vmem:[%s4 + $0x2a8] sm:$0xff] %vm2417, %v4580
    %4837 = vst.msk [vmem:[%s4 + $0x2b0] sm:$0xff] %vm2417, %v4581
    %4838 = vst.msk [vmem:[%s4 + $0x2b8] sm:$0xff] %vm2417, %v4582
    %4839 = vst.msk [vmem:[%s4 + $0x2c0] sm:$0xff] %vm2417, %v4583
    %4840 = vst.msk [vmem:[%s4 + $0x2c8] sm:$0xff] %vm2417, %v4584
    %4841 = vst.msk [vmem:[%s4 + $0x2d0] sm:$0xff] %vm2417, %v4585
    %4842 = vst.msk [vmem:[%s4 + $0x2d8] sm:$0xff] %vm2417, %v4586
    %4843 = vst.msk [vmem:[%s4 + $0x2e0] sm:$0xff] %vm2417, %v4587
    %4844 = vst.msk [vmem:[%s4 + $0x2e8] sm:$0xff] %vm2417, %v4588
    %4845 = vst.msk [vmem:[%s4 + $0x2f0] sm:$0xff] %vm2417, %v4589
    %4846 = vst.msk [vmem:[%s4 + $0x2f8] sm:$0xff] %vm2417, %v4590
    %4847 = vst.msk [vmem:[%s4 + $0x300] sm:$0xff] %vm2417, %v4591
    %4848 = vst.msk [vmem:[%s4 + $0x308] sm:$0xff] %vm2417, %v4592
    %4849 = vst.msk [vmem:[%s4 + $0x310] sm:$0xff] %vm2417, %v4593
    %4850 = vst.msk [vmem:[%s4 + $0x318] sm:$0xff] %vm2417, %v4594
    %4851 = vst.msk [vmem:[%s4 + $0x320] sm:$0xff] %vm2417, %v4595
    %4852 = vst.msk [vmem:[%s4 + $0x328] sm:$0xff] %vm2417, %v4596
    %4853 = vst.msk [vmem:[%s4 + $0x330] sm:$0xff] %vm2417, %v4597
    %4854 = vst.msk [vmem:[%s4 + $0x338] sm:$0xff] %vm2417, %v4598
    %4855 = vst.msk [vmem:[%s4 + $0x340] sm:$0xff] %vm2417, %v4599
    %4856 = vst.msk [vmem:[%s4 + $0x348] sm:$0xff] %vm2417, %v4600
    %4857 = vst.msk [vmem:[%s4 + $0x350] sm:$0xff] %vm2417, %v4601
    %4858 = vst.msk [vmem:[%s4 + $0x358] sm:$0xff] %vm2417, %v4602
    %4859 = vst.msk [vmem:[%s4 + $0x360] sm:$0xff] %vm2417, %v4603
    %4860 = vst.msk [vmem:[%s4 + $0x368] sm:$0xff] %vm2417, %v4604
    %4861 = vst.msk [vmem:[%s4 + $0x370] sm:$0xff] %vm2417, %v4605
    %4862 = vst.msk [vmem:[%s4 + $0x378] sm:$0xff] %vm2417, %v4606
    %4863 = vst.msk [vmem:[%s4 + $0x380] sm:$0xff] %vm2417, %v4607
    %4864 = vst.msk [vmem:[%s4 + $0x388] sm:$0xff] %vm2417, %v4608
    %4865 = vst.msk [vmem:[%s4 + $0x390] sm:$0xff] %vm2417, %v4609
    %4866 = vst.msk [vmem:[%s4 + $0x398] sm:$0xff] %vm2417, %v4610
    %4867 = vst.msk [vmem:[%s4 + $0x3a0] sm:$0xff] %vm2417, %v4611
    %4868 = vst.msk [vmem:[%s4 + $0x3a8] sm:$0xff] %vm2417, %v4612
    %4869 = vst.msk [vmem:[%s4 + $0x3b0] sm:$0xff] %vm2417, %v4613
    %4870 = vst.msk [vmem:[%s4 + $0x3b8] sm:$0xff] %vm2417, %v4614
    %4871 = vst.msk [vmem:[%s4 + $0x3c0] sm:$0xff] %vm2417, %v4615
    %4872 = vst.msk [vmem:[%s4 + $0x3c8] sm:$0xff] %vm2417, %v4616
    %4873 = vst.msk [vmem:[%s4 + $0x3d0] sm:$0xff] %vm2417, %v4617
    %4874 = vst.msk [vmem:[%s4 + $0x3d8] sm:$0xff] %vm2417, %v4618
    %4875 = vst.msk [vmem:[%s4 + $0x3e0] sm:$0xff] %vm2417, %v4619
    %4876 = vst.msk [vmem:[%s4 + $0x3e8] sm:$0xff] %vm2417, %v4620
    %4877 = vst.msk [vmem:[%s4 + $0x3f0] sm:$0xff] %vm2417, %v4621
    %4878 = vst.msk [vmem:[%s4 + $0x3f8] sm:$0xff] %vm2417, %v4622
    %4879 = vst.msk [vmem:[%s4 + $0x400] sm:$0xff] %vm2417, %v4623
    %4880 = vst.msk [vmem:[%s4 + $0x408] sm:$0xff] %vm2417, %v4624
    %4881 = vst.msk [vmem:[%s4 + $0x410] sm:$0xff] %vm2417, %v4625
    %4882 = vst.msk [vmem:[%s4 + $0x418] sm:$0xff] %vm2417, %v4626
    %4883 = vst.msk [vmem:[%s4 + $0x420] sm:$0xff] %vm2417, %v4627
    %4884 = vst.msk [vmem:[%s4 + $0x428] sm:$0xff] %vm2417, %v4628
    %4885 = vst.msk [vmem:[%s4 + $0x430] sm:$0xff] %vm2417, %v4629
    %4886 = vst.msk [vmem:[%s4 + $0x438] sm:$0xff] %vm2417, %v4630
    %4887 = vst.msk [vmem:[%s4 + $0x440] sm:$0xff] %vm2417, %v4631
    %4888 = vst.msk [vmem:[%s4 + $0x448] sm:$0xff] %vm2417, %v4632
    %4889 = vst.msk [vmem:[%s4 + $0x450] sm:$0xff] %vm2417, %v4633
    %4890 = vst.msk [vmem:[%s4 + $0x458] sm:$0xff] %vm2417, %v4634
    %4891 = vst.msk [vmem:[%s4 + $0x460] sm:$0xff] %vm2417, %v4635
    %4892 = vst.msk [vmem:[%s4 + $0x468] sm:$0xff] %vm2417, %v4636
    %4893 = vst.msk [vmem:[%s4 + $0x470] sm:$0xff] %vm2417, %v4637
    %4894 = vst.msk [vmem:[%s4 + $0x478] sm:$0xff] %vm2417, %v4638
    %4895 = vst.msk [vmem:[%s4 + $0x480] sm:$0xff] %vm2417, %v4639
    %4896 = vst.msk [vmem:[%s4 + $0x488] sm:$0xff] %vm2417, %v4640
    %4897 = vst.msk [vmem:[%s4 + $0x490] sm:$0xff] %vm2417, %v4641
    %4898 = vst.msk [vmem:[%s4 + $0x498] sm:$0xff] %vm2417, %v4642
    %4899 = vst.msk [vmem:[%s4 + $0x4a0] sm:$0xff] %vm2417, %v4643
    %4900 = vst.msk [vmem:[%s4 + $0x4a8] sm:$0xff] %vm2417, %v4644
    %4901 = vst.msk [vmem:[%s4 + $0x4b0] sm:$0xff] %vm2417, %v4645
    %4902 = vst.msk [vmem:[%s4 + $0x4b8] sm:$0xff] %vm2417, %v4646
    %4903 = vst.msk [vmem:[%s4 + $0x4c0] sm:$0xff] %vm2417, %v4647
    %4904 = vst.msk [vmem:[%s4 + $0x4c8] sm:$0xff] %vm2417, %v4648
    %4905 = vst.msk [vmem:[%s4 + $0x4d0] sm:$0xff] %vm2417, %v4649
    %4906 = vst.msk [vmem:[%s4 + $0x4d8] sm:$0xff] %vm2417, %v4650
    %4907 = vst.msk [vmem:[%s4 + $0x4e0] sm:$0xff] %vm2417, %v4651
    %4908 = vst.msk [vmem:[%s4 + $0x4e8] sm:$0xff] %vm2417, %v4652
    %4909 = vst.msk [vmem:[%s4 + $0x4f0] sm:$0xff] %vm2417, %v4653
    %4910 = vst.msk [vmem:[%s4 + $0x4f8] sm:$0xff] %vm2417, %v4654
    %4911 = vst.msk [vmem:[%s4 + $0x500] sm:$0xff] %vm2417, %v4655
    %4912 = vst.msk [vmem:[%s4 + $0x508] sm:$0xff] %vm2417, %v4656
    %4913 = vst.msk [vmem:[%s4 + $0x510] sm:$0xff] %vm2417, %v4657
    %4914 = vst.msk [vmem:[%s4 + $0x518] sm:$0xff] %vm2417, %v4658
    %4915 = vst.msk [vmem:[%s4 + $0x520] sm:$0xff] %vm2417, %v4659
    %4916 = vst.msk [vmem:[%s4 + $0x528] sm:$0xff] %vm2417, %v4660
    %4917 = vst.msk [vmem:[%s4 + $0x530] sm:$0xff] %vm2417, %v4661
    %4918 = vst.msk [vmem:[%s4 + $0x538] sm:$0xff] %vm2417, %v4662
    %4919 = vst.msk [vmem:[%s4 + $0x540] sm:$0xff] %vm2417, %v4663
    %4920 = vst.msk [vmem:[%s4 + $0x548] sm:$0xff] %vm2417, %v4664
    %4921 = vst.msk [vmem:[%s4 + $0x550] sm:$0xff] %vm2417, %v4665
    %4922 = vst.msk [vmem:[%s4 + $0x558] sm:$0xff] %vm2417, %v4666
    %4923 = vst.msk [vmem:[%s4 + $0x560] sm:$0xff] %vm2417, %v4667
    %4924 = vst.msk [vmem:[%s4 + $0x568] sm:$0xff] %vm2417, %v4668
    %4925 = vst.msk [vmem:[%s4 + $0x570] sm:$0xff] %vm2417, %v4669
    %4926 = vst.msk [vmem:[%s4 + $0x578] sm:$0xff] %vm2417, %v4670
    %4927 = vst.msk [vmem:[%s4 + $0x580] sm:$0xff] %vm2417, %v4671
    %4928 = vst.msk [vmem:[%s4 + $0x588] sm:$0xff] %vm2417, %v4672
    %4929 = vst.msk [vmem:[%s4 + $0x590] sm:$0xff] %vm2417, %v4673
    %4930 = vst.msk [vmem:[%s4 + $0x598] sm:$0xff] %vm2417, %v4674
    %4931 = vst.msk [vmem:[%s4 + $0x5a0] sm:$0xff] %vm2417, %v4675
    %4932 = vst.msk [vmem:[%s4 + $0x5a8] sm:$0xff] %vm2417, %v4676
    %4933 = vst.msk [vmem:[%s4 + $0x5b0] sm:$0xff] %vm2417, %v4677
    %4934 = vst.msk [vmem:[%s4 + $0x5b8] sm:$0xff] %vm2417, %v4678
    %4935 = vst.msk [vmem:[%s4 + $0x5c0] sm:$0xff] %vm2417, %v4679
    %4936 = vst.msk [vmem:[%s4 + $0x5c8] sm:$0xff] %vm2417, %v4680
    %4937 = vst.msk [vmem:[%s4 + $0x5d0] sm:$0xff] %vm2417, %v4681
    %4938 = vst.msk [vmem:[%s4 + $0x5d8] sm:$0xff] %vm2417, %v4682
    %4939 = vst.msk [vmem:[%s4 + $0x5e0] sm:$0xff] %vm2417, %v4683
    %4940 = vst.msk [vmem:[%s4 + $0x5e8] sm:$0xff] %vm2417, %v4684
    %4941 = vst.msk [vmem:[%s4 + $0x5f0] sm:$0xff] %vm2417, %v4685
    %4942 = vst.msk [vmem:[%s4 + $0x5f8] sm:$0xff] %vm2417, %v4686
    %4943 = vst.msk [vmem:[%s4 + $0x600] sm:$0xff] %vm2417, %v4687
    %4944 = vst.msk [vmem:[%s4 + $0x608] sm:$0xff] %vm2417, %v4688
    %4945 = vst.msk [vmem:[%s4 + $0x610] sm:$0xff] %vm2417, %v4689
    %4946 = vst.msk [vmem:[%s4 + $0x618] sm:$0xff] %vm2417, %v4690
    %4947 = vst.msk [vmem:[%s4 + $0x620] sm:$0xff] %vm2417, %v4691
    %4948 = vst.msk [vmem:[%s4 + $0x628] sm:$0xff] %vm2417, %v4692
    %4949 = vst.msk [vmem:[%s4 + $0x630] sm:$0xff] %vm2417, %v4693
    %4950 = vst.msk [vmem:[%s4 + $0x638] sm:$0xff] %vm2417, %v4694
    %4951 = vst.msk [vmem:[%s4 + $0x640] sm:$0xff] %vm2417, %v4695
    %4952 = vst.msk [vmem:[%s4 + $0x648] sm:$0xff] %vm2417, %v4696
    %4953 = vst.msk [vmem:[%s4 + $0x650] sm:$0xff] %vm2417, %v4697
    %4954 = vst.msk [vmem:[%s4 + $0x658] sm:$0xff] %vm2417, %v4698
    %4955 = vst.msk [vmem:[%s4 + $0x660] sm:$0xff] %vm2417, %v4699
    %4956 = vst.msk [vmem:[%s4 + $0x668] sm:$0xff] %vm2417, %v4700
    %4957 = vst.msk [vmem:[%s4 + $0x670] sm:$0xff] %vm2417, %v4701
    %4958 = vst.msk [vmem:[%s4 + $0x678] sm:$0xff] %vm2417, %v4702
    %4959 = vst.msk [vmem:[%s4 + $0x680] sm:$0xff] %vm2417, %v4703
    %4960 = vst.msk [vmem:[%s4 + $0x688] sm:$0xff] %vm2417, %v4704
    %4961 = vst.msk [vmem:[%s4 + $0x690] sm:$0xff] %vm2417, %v4705
    %4962 = vst.msk [vmem:[%s4 + $0x698] sm:$0xff] %vm2417, %v4706
    %4963 = vst.msk [vmem:[%s4 + $0x6a0] sm:$0xff] %vm2417, %v4707
    %4964 = vst.msk [vmem:[%s4 + $0x6a8] sm:$0xff] %vm2417, %v4708
    %4965 = vst.msk [vmem:[%s4 + $0x6b0] sm:$0xff] %vm2417, %v4709
    %4966 = vst.msk [vmem:[%s4 + $0x6b8] sm:$0xff] %vm2417, %v4710
    %4967 = vst.msk [vmem:[%s4 + $0x6c0] sm:$0xff] %vm2417, %v4711
    %4968 = vst.msk [vmem:[%s4 + $0x6c8] sm:$0xff] %vm2417, %v4712
    %4969 = vst.msk [vmem:[%s4 + $0x6d0] sm:$0xff] %vm2417, %v4713
    %4970 = vst.msk [vmem:[%s4 + $0x6d8] sm:$0xff] %vm2417, %v4714
    %4971 = vst.msk [vmem:[%s4 + $0x6e0] sm:$0xff] %vm2417, %v4715
    %4972 = vst.msk [vmem:[%s4 + $0x6e8] sm:$0xff] %vm2417, %v4716
    %4973 = vst.msk [vmem:[%s4 + $0x6f0] sm:$0xff] %vm2417, %v4717
    %4974 = vst.msk [vmem:[%s4 + $0x6f8] sm:$0xff] %vm2417, %v4718
    %4975 = vst.msk [vmem:[%s4 + $0x700] sm:$0xff] %vm2417, %v4719
    %4976 = vst.msk [vmem:[%s4 + $0x708] sm:$0xff] %vm2417, %v4720
    %4977 = vst.msk [vmem:[%s4 + $0x710] sm:$0xff] %vm2417, %v4721
    %4978 = vst.msk [vmem:[%s4 + $0x718] sm:$0xff] %vm2417, %v4722
    %4979 = vst.msk [vmem:[%s4 + $0x720] sm:$0xff] %vm2417, %v4723
    %4980 = vst.msk [vmem:[%s4 + $0x728] sm:$0xff] %vm2417, %v4724
    %4981 = vst.msk [vmem:[%s4 + $0x730] sm:$0xff] %vm2417, %v4725
    %4982 = vst.msk [vmem:[%s4 + $0x738] sm:$0xff] %vm2417, %v4726
    %4983 = vst.msk [vmem:[%s4 + $0x740] sm:$0xff] %vm2417, %v4727
    %4984 = vst.msk [vmem:[%s4 + $0x748] sm:$0xff] %vm2417, %v4728
    %4985 = vst.msk [vmem:[%s4 + $0x750] sm:$0xff] %vm2417, %v4729
    %4986 = vst.msk [vmem:[%s4 + $0x758] sm:$0xff] %vm2417, %v4730
    %4987 = vst.msk [vmem:[%s4 + $0x760] sm:$0xff] %vm2417, %v4731
    %4988 = vst.msk [vmem:[%s4 + $0x768] sm:$0xff] %vm2417, %v4732
    %4989 = vst.msk [vmem:[%s4 + $0x770] sm:$0xff] %vm2417, %v4733
    %4990 = vst.msk [vmem:[%s4 + $0x778] sm:$0xff] %vm2417, %v4734
    %4991 = vst.msk [vmem:[%s4 + $0x780] sm:$0xff] %vm2417, %v4735
    %4992 = vst.msk [vmem:[%s4 + $0x788] sm:$0xff] %vm2417, %v4736
    %4993 = vst.msk [vmem:[%s4 + $0x790] sm:$0xff] %vm2417, %v4737
    %4994 = vst.msk [vmem:[%s4 + $0x798] sm:$0xff] %vm2417, %v4738
    %4995 = vst.msk [vmem:[%s4 + $0x7a0] sm:$0xff] %vm2417, %v4739
    %4996 = vst.msk [vmem:[%s4 + $0x7a8] sm:$0xff] %vm2417, %v4740
    %4997 = vst.msk [vmem:[%s4 + $0x7b0] sm:$0xff] %vm2417, %v4741
    %4998 = vst.msk [vmem:[%s4 + $0x7b8] sm:$0xff] %vm2417, %v4742
    %4999 = vst.msk [vmem:[%s4 + $0x7c0] sm:$0xff] %vm2417, %v4743
    %5000 = vst.msk [vmem:[%s4 + $0x7c8] sm:$0xff] %vm2417, %v4744
    %5001 = vst.msk [vmem:[%s4 + $0x7d0] sm:$0xff] %vm2417, %v4745
    %5002 = vst.msk [vmem:[%s4 + $0x7d8] sm:$0xff] %vm2417, %v4746
    %5003 = vst.msk [vmem:[%s4 + $0x7e0] sm:$0xff] %vm2417, %v4747
    %5004 = vst.msk [vmem:[%s4 + $0x7e8] sm:$0xff] %vm2417, %v4748
    %5005 = vst.msk [vmem:[%s4 + $0x7f0] sm:$0xff] %vm2417, %v4749
    %5006 = vst.msk [vmem:[%s4 + $0x7f8] sm:$0xff] %vm2417, %v4750
    // Predicated region
    $region26: #{model_forward.2} parent=1 // pred_check
      _
    $region27: #{model_forward.2} parent=1 // pred_check_branch
      %5008 = sbr.rel (0) target = $region29
    $region28: #{model_forward.2} parent=1 // pred_region
      _
    $region29: #{model_forward.2} parent=1 // pred_fallthru
      _
    // Predicated region
    $region30: #{model_forward.2} parent=1 // pred_check
      _
    $region31: #{model_forward.2} parent=1 // pred_check_branch
      %5010 = sbr.rel (0) target = $region33
    $region32: #{model_forward.2} parent=1 // pred_region
      _
    $region33: #{model_forward.2} parent=1 // pred_fallthru
      _
    %5011 = vsyncpa [#allocation3], 1
    %5012 = vsyncpa [#allocation5], 1

// kernel: model_forward.3
$region0: #{model_forward.3}
  #allocation0 [shape = 'u32[]', space=smem, size = 0x4, offset = 0x4, fixed_abs, tag = 'smem constant byte address 0x4 - core index']
  #allocation1 [shape = 'u32[144,128]{1,0:T(1,128)}', space=vmem, size = 0x12000, scoped, tag = 'internal scratch']
  %s0 = inlined_call_operand.vmem [shape: f32[2,65536], index: 0, kind: input, shape index: {}]
  %s1 = inlined_call_operand.vmem [shape: f32[13,65536], index: 1, kind: input, shape index: {}]
  %s2 = inlined_call_operand.vmem [shape: f32[1,13], index: 2, kind: input, shape index: {}]
  %s3 = inlined_call_operand.hbm [shape: f32[2,13], index: 3, kind: output, shape index: {}]
  %s4 = sld [smem:[#allocation0]]
  $region76: #{model_forward.3} parent=0
    _
  %s6 = ssub.s32 1, %s4
  %s7 = scalar_select 0, %s6, %s4
  $region1: #{model_forward.3} parent=0
    #allocation2 [shape = 'u8[2097152]{0}', space=vmem, size = 0x200000, scoped, tag = 'input window, operand 1']
    #allocation3 [shape = 'u8[1024]{0}', space=vmem, size = 0x400, scoped, tag = 'output window, operand 0, single buffered']
    #allocation4 [shape = 's32[2]{0}', space=sflag, size = 0x8, scoped, tag = 'scoped memory for model_forward.3']
    %8 = vsyncpa [#allocation4], 0
    loop: start=0, step=1, limit=6
    $region2: #{model_forward.3} parent=1 // loop_pre_header
      _
    $region3: #{model_forward.3} parent=1 // loop_header
      %s10 = sphi 0, %s14
      %p11 = scmp.ge.s32.totalorder %s10, 6
      %s20 = sphi 0, %s22
      %s23 = sphi 0, %s20
      %s24 = sphi 0, %s23
      %s40 = sphi 0, %s24
      %s46 = sphi 0, %s48
      %s49 = sphi 0, %s46
      %s50 = sphi 0, %s49
      %s66 = sphi 0, %s50
      %s70 = sphi 0, %s70
      %s72 = sphi 0, %s70
      %s73 = sphi 0, %s72
      %s87 = sphi 0, %s73
      %s91 = sphi 0, %s91
      %s93 = sphi 0, %s91
      %s94 = sphi 0, %s93
      %s108 = sphi 0, %s94
    $region4: #{model_forward.3} parent=1 // loop_header_branch
      %13 = sbr.rel (%p11) target = $region8
    $region5: #{model_forward.3} parent=1 // loop_body
      %s15 = ssub.s32 %s10, 1
      %s16 = ssub.s32 %s10, 2
      %s17 = sadd.s32 %s10, 1
      %s18 = ssub.s32 %s10, %s17
      %p19 = scmp.eq.s32.totalorder %s18, 0
      %s21 = sadd.s32 %s20, 1
      %s22 = scalar_select %p19, %s20, %s21
      %p25 = pneg %p19
      %p26 = scmp.eq.s32.totalorder %s10, 3
      %p27 = por %p25, %p26
      %p28 = scmp.ne.s32.totalorder %s20, %s23
      %p29 = scmp.eq.s32.totalorder %s10, 0
      %p30 = por %p28, %p29
      %p31 = scmp.ne.s32.totalorder %s20, %s23
      %p32 = scmp.eq.s32.totalorder %s15, 3
      %p33 = por %p31, %p32
      %p34 = scmp.ne.s32.totalorder %s23, %s24
      %p35 = scmp.eq.s32.totalorder %s15, 0
      %p36 = por %p34, %p35
      %p37 = scmp.ne.s32.totalorder %s23, %s24
      %p38 = scmp.eq.s32.totalorder %s16, 3
      %p39 = por %p37, %p38
      %p41 = scmp.ne.s32.totalorder %s24, %s40
      %p42 = scmp.eq.s32.totalorder %s16, 0
      %p43 = por %p41, %p42
      %s44 = ssub.s32 %s10, %s17
      %p45 = scmp.eq.s32.totalorder %s44, 0
      %s47 = sadd.s32 %s46, 1
      %s48 = scalar_select %p45, %s46, %s47
      %p51 = pneg %p45
      %p52 = scmp.eq.s32.totalorder %s10, 3
      %p53 = por %p51, %p52
      %p54 = scmp.ne.s32.totalorder %s46, %s49
      %p55 = scmp.eq.s32.totalorder %s10, 0
      %p56 = por %p54, %p55
      %p57 = scmp.ne.s32.totalorder %s46, %s49
      %p58 = scmp.eq.s32.totalorder %s15, 3
      %p59 = por %p57, %p58
      %p60 = scmp.ne.s32.totalorder %s49, %s50
      %p61 = scmp.eq.s32.totalorder %s15, 0
      %p62 = por %p60, %p61
      %p63 = scmp.ne.s32.totalorder %s49, %s50
      %p64 = scmp.eq.s32.totalorder %s16, 3
      %p65 = por %p63, %p64
      %p67 = scmp.ne.s32.totalorder %s50, %s66
      %p68 = scmp.eq.s32.totalorder %s16, 0
      %p69 = por %p67, %p68
      %s71 = sadd.s32 %s70, 1
      %p74 = scmp.eq.s32.totalorder %s10, 3
      %p75 = scmp.ne.s32.totalorder %s70, %s72
      %p76 = scmp.eq.s32.totalorder %s10, 0
      %p77 = por %p75, %p76
      %p78 = scmp.ne.s32.totalorder %s70, %s72
      %p79 = scmp.eq.s32.totalorder %s15, 3
      %p80 = por %p78, %p79
      %p81 = scmp.ne.s32.totalorder %s72, %s73
      %p82 = scmp.eq.s32.totalorder %s15, 0
      %p83 = por %p81, %p82
      %p84 = scmp.ne.s32.totalorder %s72, %s73
      %p85 = scmp.eq.s32.totalorder %s16, 3
      %p86 = por %p84, %p85
      %p88 = scmp.ne.s32.totalorder %s73, %s87
      %p89 = scmp.eq.s32.totalorder %s16, 0
      %p90 = por %p88, %p89
      %s92 = sadd.s32 %s91, 1
      %p95 = scmp.eq.s32.totalorder %s10, 3
      %p96 = scmp.ne.s32.totalorder %s91, %s93
      %p97 = scmp.eq.s32.totalorder %s10, 0
      %p98 = por %p96, %p97
      %p99 = scmp.ne.s32.totalorder %s91, %s93
      %p100 = scmp.eq.s32.totalorder %s15, 3
      %p101 = por %p99, %p100
      %p102 = scmp.ne.s32.totalorder %s93, %s94
      %p103 = scmp.eq.s32.totalorder %s15, 0
      %p104 = por %p102, %p103
      %p105 = scmp.ne.s32.totalorder %s93, %s94
      %p106 = scmp.eq.s32.totalorder %s16, 3
      %p107 = por %p105, %p106
      %p109 = scmp.ne.s32.totalorder %s94, %s108
      %p110 = scmp.eq.s32.totalorder %s16, 0
      %p111 = por %p109, %p110
      %p112 = scmp.le.s32.totalorder 1, %s10
      %p113 = scmp.lt.s32.totalorder %s10, 5
      %p114 = pnand %p112, %p113
      %p115 = pneg %p114
      // Predicated region
      $region9: #{model_forward.3} parent=5 // pred_check
        _
      $region10: #{model_forward.3} parent=5 // pred_check_branch
        %117 = sbr.rel (%p114) target = $region12
      $region11: #{model_forward.3} parent=5 // pred_region
        %s118 = ssub.s32 %s10, 1
        // Predicated region
        $region13: #{model_forward.3} parent=11 // pred_check
          %p119 = pneg %p83
        $region14: #{model_forward.3} parent=11 // pred_check_branch
          %121 = sbr.rel (%p119) target = $region16
        $region15: #{model_forward.3} parent=11 // pred_region
          _
        $region16: #{model_forward.3} parent=11 // pred_fallthru
          _
      $region12: #{model_forward.3} parent=5 // pred_fallthru
        _
      %p122 = scmp.lt.s32.totalorder %s10, 4
      // Predicated region
      $region17: #{model_forward.3} parent=5 // pred_check
        %p123 = pneg %p122
      $region18: #{model_forward.3} parent=5 // pred_check_branch
        %125 = sbr.rel (%p123) target = $region20
      $region19: #{model_forward.3} parent=5 // pred_region
        // Predicated region
        $region21: #{model_forward.3} parent=19 // pred_check
          %p126 = pneg %p30
        $region22: #{model_forward.3} parent=19 // pred_check_branch
          %128 = sbr.rel (%p126) target = $region24
        $region23: #{model_forward.3} parent=19 // pred_region
          %s129 = smul.u32 128, %s10
          %p130 = scmp.lt.s32.totalorder %s129, 511
          %s131 = scalar_select %p130, %s129, 511
          %s132 = smul.addr %s131, 2
          %s133 = scalar_lea.vmem %s0, %s132
          %s134 = smul.u32 128, %s10
        $region24: #{model_forward.3} parent=19 // pred_fallthru
          _
        // Predicated region
        $region25: #{model_forward.3} parent=19 // pred_check
          %p135 = pneg %p56
        $region26: #{model_forward.3} parent=19 // pred_check_branch
          %137 = sbr.rel (%p135) target = $region28
        $region27: #{model_forward.3} parent=19 // pred_region
          %s138 = sand.u32 %s46, 1
          %s139 = sand.u32 %s46, 1
          %s140 = smul.addr %s139, 2048
          %s141 = scalar_lea.vmem [#allocation2], %s140
          %s142 = smul.u32 128, %s10
          %s143 = smul.addr %s142, 8
          %s144 = scalar_lea.vmem %s1, %s143
          // Predicated region
          $region29: #{model_forward.3} parent=27 // pred_check
            _
          $region30: #{model_forward.3} parent=27 // pred_check_branch
            %146 = sbr.rel (0) target = $region32
          $region31: #{model_forward.3} parent=27 // pred_region
            // Predicated region
            $region33: #{model_forward.3} parent=31 // pred_check
              _
            $region34: #{model_forward.3} parent=31 // pred_check_branch
              %148 = sbr.rel (0) target = $region36
            $region35: #{model_forward.3} parent=31 // pred_region
              loop: start=0, step=1, limit=1
              $region37: #{model_forward.3} parent=35 // loop_pre_header
                _
              $region38: #{model_forward.3} parent=35 // loop_header
                %s150 = sphi 0, %s154
                %p151 = scmp.ge.s32.totalorder %s150, 1
                %s155 = sphi %s144, %s144
                %s156 = sphi %s141, %s141
              $region39: #{model_forward.3} parent=35 // loop_header_branch
                %153 = sbr.rel (%p151) target = $region43
              $region40: #{model_forward.3} parent=35 // loop_body
                %v157 = vld [vmem:[%s155] sm:$0xff]
                %158 = vst [vmem:[%s156] sm:$0xff] %v157
                %v159 = vld [vmem:[%s155 + $0x8] sm:$0xff]
                %160 = vst [vmem:[%s156 + $0x8] sm:$0xff] %v159
                %v161 = vld [vmem:[%s155 + $0x10] sm:$0xff]
                %162 = vst [vmem:[%s156 + $0x10] sm:$0xff] %v161
                %v163 = vld [vmem:[%s155 + $0x18] sm:$0xff]
                %164 = vst [vmem:[%s156 + $0x18] sm:$0xff] %v163
                %v165 = vld [vmem:[%s155 + $0x20] sm:$0xff]
                %166 = vst [vmem:[%s156 + $0x20] sm:$0xff] %v165
                %v167 = vld [vmem:[%s155 + $0x28] sm:$0xff]
                %168 = vst [vmem:[%s156 + $0x28] sm:$0xff] %v167
                %v169 = vld [vmem:[%s155 + $0x30] sm:$0xff]
                %170 = vst [vmem:[%s156 + $0x30] sm:$0xff] %v169
                %v171 = vld [vmem:[%s155 + $0x38] sm:$0xff]
                %172 = vst [vmem:[%s156 + $0x38] sm:$0xff] %v171
                %v173 = vld [vmem:[%s155 + $0x40] sm:$0xff]
                %174 = vst [vmem:[%s156 + $0x40] sm:$0xff] %v173
                %v175 = vld [vmem:[%s155 + $0x48] sm:$0xff]
                %176 = vst [vmem:[%s156 + $0x48] sm:$0xff] %v175
                %v177 = vld [vmem:[%s155 + $0x50] sm:$0xff]
                %178 = vst [vmem:[%s156 + $0x50] sm:$0xff] %v177
                %v179 = vld [vmem:[%s155 + $0x58] sm:$0xff]
                %180 = vst [vmem:[%s156 + $0x58] sm:$0xff] %v179
                %v181 = vld [vmem:[%s155 + $0x60] sm:$0xff]
                %182 = vst [vmem:[%s156 + $0x60] sm:$0xff] %v181
                %v183 = vld [vmem:[%s155 + $0x68] sm:$0xff]
                %184 = vst [vmem:[%s156 + $0x68] sm:$0xff] %v183
                %v185 = vld [vmem:[%s155 + $0x70] sm:$0xff]
                %186 = vst [vmem:[%s156 + $0x70] sm:$0xff] %v185
                %v187 = vld [vmem:[%s155 + $0x78] sm:$0xff]
                %188 = vst [vmem:[%s156 + $0x78] sm:$0xff] %v187
                %v189 = vld [vmem:[%s155 + $0x80] sm:$0xff]
                %190 = vst [vmem:[%s156 + $0x80] sm:$0xff] %v189
                %v191 = vld [vmem:[%s155 + $0x88] sm:$0xff]
                %192 = vst [vmem:[%s156 + $0x88] sm:$0xff] %v191
                %v193 = vld [vmem:[%s155 + $0x90] sm:$0xff]
                %194 = vst [vmem:[%s156 + $0x90] sm:$0xff] %v193
                %v195 = vld [vmem:[%s155 + $0x98] sm:$0xff]
                %196 = vst [vmem:[%s156 + $0x98] sm:$0xff] %v195
                %v197 = vld [vmem:[%s155 + $0xa0] sm:$0xff]
                %198 = vst [vmem:[%s156 + $0xa0] sm:$0xff] %v197
                %v199 = vld [vmem:[%s155 + $0xa8] sm:$0xff]
                %200 = vst [vmem:[%s156 + $0xa8] sm:$0xff] %v199
                %v201 = vld [vmem:[%s155 + $0xb0] sm:$0xff]
                %202 = vst [vmem:[%s156 + $0xb0] sm:$0xff] %v201
                %v203 = vld [vmem:[%s155 + $0xb8] sm:$0xff]
                %204 = vst [vmem:[%s156 + $0xb8] sm:$0xff] %v203
                %v205 = vld [vmem:[%s155 + $0xc0] sm:$0xff]
                %206 = vst [vmem:[%s156 + $0xc0] sm:$0xff] %v205
                %v207 = vld [vmem:[%s155 + $0xc8] sm:$0xff]
                %208 = vst [vmem:[%s156 + $0xc8] sm:$0xff] %v207
                %v209 = vld [vmem:[%s155 + $0xd0] sm:$0xff]
                %210 = vst [vmem:[%s156 + $0xd0] sm:$0xff] %v209
                %v211 = vld [vmem:[%s155 + $0xd8] sm:$0xff]
                %212 = vst [vmem:[%s156 + $0xd8] sm:$0xff] %v211
                %v213 = vld [vmem:[%s155 + $0xe0] sm:$0xff]
                %214 = vst [vmem:[%s156 + $0xe0] sm:$0xff] %v213
                %v215 = vld [vmem:[%s155 + $0xe8] sm:$0xff]
                %216 = vst [vmem:[%s156 + $0xe8] sm:$0xff] %v215
                %v217 = vld [vmem:[%s155 + $0xf0] sm:$0xff]
                %218 = vst [vmem:[%s156 + $0xf0] sm:$0xff] %v217
                %v219 = vld [vmem:[%s155 + $0xf8] sm:$0xff]
                %220 = vst [vmem:[%s156 + $0xf8] sm:$0xff] %v219
                %v221 = vld [vmem:[%s155 + $0x100] sm:$0xff]
                %222 = vst [vmem:[%s156 + $0x100] sm:$0xff] %v221
                %v223 = vld [vmem:[%s155 + $0x108] sm:$0xff]
                %224 = vst [vmem:[%s156 + $0x108] sm:$0xff] %v223
                %v225 = vld [vmem:[%s155 + $0x110] sm:$0xff]
                %226 = vst [vmem:[%s156 + $0x110] sm:$0xff] %v225
                %v227 = vld [vmem:[%s155 + $0x118] sm:$0xff]
                %228 = vst [vmem:[%s156 + $0x118] sm:$0xff] %v227
                %v229 = vld [vmem:[%s155 + $0x120] sm:$0xff]
                %230 = vst [vmem:[%s156 + $0x120] sm:$0xff] %v229
                %v231 = vld [vmem:[%s155 + $0x128] sm:$0xff]
                %232 = vst [vmem:[%s156 + $0x128] sm:$0xff] %v231
                %v233 = vld [vmem:[%s155 + $0x130] sm:$0xff]
                %234 = vst [vmem:[%s156 + $0x130] sm:$0xff] %v233
                %v235 = vld [vmem:[%s155 + $0x138] sm:$0xff]
                %236 = vst [vmem:[%s156 + $0x138] sm:$0xff] %v235
                %v237 = vld [vmem:[%s155 + $0x140] sm:$0xff]
                %238 = vst [vmem:[%s156 + $0x140] sm:$0xff] %v237
                %v239 = vld [vmem:[%s155 + $0x148] sm:$0xff]
                %240 = vst [vmem:[%s156 + $0x148] sm:$0xff] %v239
                %v241 = vld [vmem:[%s155 + $0x150] sm:$0xff]
                %242 = vst [vmem:[%s156 + $0x150] sm:$0xff] %v241
                %v243 = vld [vmem:[%s155 + $0x158] sm:$0xff]
                %244 = vst [vmem:[%s156 + $0x158] sm:$0xff] %v243
                %v245 = vld [vmem:[%s155 + $0x160] sm:$0xff]
                %246 = vst [vmem:[%s156 + $0x160] sm:$0xff] %v245
                %v247 = vld [vmem:[%s155 + $0x168] sm:$0xff]
                %248 = vst [vmem:[%s156 + $0x168] sm:$0xff] %v247
                %v249 = vld [vmem:[%s155 + $0x170] sm:$0xff]
                %250 = vst [vmem:[%s156 + $0x170] sm:$0xff] %v249
                %v251 = vld [vmem:[%s155 + $0x178] sm:$0xff]
                %252 = vst [vmem:[%s156 + $0x178] sm:$0xff] %v251
                %v253 = vld [vmem:[%s155 + $0x180] sm:$0xff]
                %254 = vst [vmem:[%s156 + $0x180] sm:$0xff] %v253
                %v255 = vld [vmem:[%s155 + $0x188] sm:$0xff]
                %256 = vst [vmem:[%s156 + $0x188] sm:$0xff] %v255
                %v257 = vld [vmem:[%s155 + $0x190] sm:$0xff]
                %258 = vst [vmem:[%s156 + $0x190] sm:$0xff] %v257
                %v259 = vld [vmem:[%s155 + $0x198] sm:$0xff]
                %260 = vst [vmem:[%s156 + $0x198] sm:$0xff] %v259
                %v261 = vld [vmem:[%s155 + $0x1a0] sm:$0xff]
                %262 = vst [vmem:[%s156 + $0x1a0] sm:$0xff] %v261
                %v263 = vld [vmem:[%s155 + $0x1a8] sm:$0xff]
                %264 = vst [vmem:[%s156 + $0x1a8] sm:$0xff] %v263
                %v265 = vld [vmem:[%s155 + $0x1b0] sm:$0xff]
                %266 = vst [vmem:[%s156 + $0x1b0] sm:$0xff] %v265
                %v267 = vld [vmem:[%s155 + $0x1b8] sm:$0xff]
                %268 = vst [vmem:[%s156 + $0x1b8] sm:$0xff] %v267
                %v269 = vld [vmem:[%s155 + $0x1c0] sm:$0xff]
                %270 = vst [vmem:[%s156 + $0x1c0] sm:$0xff] %v269
                %v271 = vld [vmem:[%s155 + $0x1c8] sm:$0xff]
                %272 = vst [vmem:[%s156 + $0x1c8] sm:$0xff] %v271
                %v273 = vld [vmem:[%s155 + $0x1d0] sm:$0xff]
                %274 = vst [vmem:[%s156 + $0x1d0] sm:$0xff] %v273
                %v275 = vld [vmem:[%s155 + $0x1d8] sm:$0xff]
                %276 = vst [vmem:[%s156 + $0x1d8] sm:$0xff] %v275
                %v277 = vld [vmem:[%s155 + $0x1e0] sm:$0xff]
                %278 = vst [vmem:[%s156 + $0x1e0] sm:$0xff] %v277
                %v279 = vld [vmem:[%s155 + $0x1e8] sm:$0xff]
                %280 = vst [vmem:[%s156 + $0x1e8] sm:$0xff] %v279
                %v281 = vld [vmem:[%s155 + $0x1f0] sm:$0xff]
                %282 = vst [vmem:[%s156 + $0x1f0] sm:$0xff] %v281
                %v283 = vld [vmem:[%s155 + $0x1f8] sm:$0xff]
                %284 = vst [vmem:[%s156 + $0x1f8] sm:$0xff] %v283
                %v285 = vld [vmem:[%s155 + $0x200] sm:$0xff]
                %286 = vst [vmem:[%s156 + $0x200] sm:$0xff] %v285
                %v287 = vld [vmem:[%s155 + $0x208] sm:$0xff]
                %288 = vst [vmem:[%s156 + $0x208] sm:$0xff] %v287
                %v289 = vld [vmem:[%s155 + $0x210] sm:$0xff]
                %290 = vst [vmem:[%s156 + $0x210] sm:$0xff] %v289
                %v291 = vld [vmem:[%s155 + $0x218] sm:$0xff]
                %292 = vst [vmem:[%s156 + $0x218] sm:$0xff] %v291
                %v293 = vld [vmem:[%s155 + $0x220] sm:$0xff]
                %294 = vst [vmem:[%s156 + $0x220] sm:$0xff] %v293
                %v295 = vld [vmem:[%s155 + $0x228] sm:$0xff]
                %296 = vst [vmem:[%s156 + $0x228] sm:$0xff] %v295
                %v297 = vld [vmem:[%s155 + $0x230] sm:$0xff]
                %298 = vst [vmem:[%s156 + $0x230] sm:$0xff] %v297
                %v299 = vld [vmem:[%s155 + $0x238] sm:$0xff]
                %300 = vst [vmem:[%s156 + $0x238] sm:$0xff] %v299
                %v301 = vld [vmem:[%s155 + $0x240] sm:$0xff]
                %302 = vst [vmem:[%s156 + $0x240] sm:$0xff] %v301
                %v303 = vld [vmem:[%s155 + $0x248] sm:$0xff]
                %304 = vst [vmem:[%s156 + $0x248] sm:$0xff] %v303
                %v305 = vld [vmem:[%s155 + $0x250] sm:$0xff]
                %306 = vst [vmem:[%s156 + $0x250] sm:$0xff] %v305
                %v307 = vld [vmem:[%s155 + $0x258] sm:$0xff]
                %308 = vst [vmem:[%s156 + $0x258] sm:$0xff] %v307
                %v309 = vld [vmem:[%s155 + $0x260] sm:$0xff]
                %310 = vst [vmem:[%s156 + $0x260] sm:$0xff] %v309
                %v311 = vld [vmem:[%s155 + $0x268] sm:$0xff]
                %312 = vst [vmem:[%s156 + $0x268] sm:$0xff] %v311
                %v313 = vld [vmem:[%s155 + $0x270] sm:$0xff]
                %314 = vst [vmem:[%s156 + $0x270] sm:$0xff] %v313
                %v315 = vld [vmem:[%s155 + $0x278] sm:$0xff]
                %316 = vst [vmem:[%s156 + $0x278] sm:$0xff] %v315
                %v317 = vld [vmem:[%s155 + $0x280] sm:$0xff]
                %318 = vst [vmem:[%s156 + $0x280] sm:$0xff] %v317
                %v319 = vld [vmem:[%s155 + $0x288] sm:$0xff]
                %320 = vst [vmem:[%s156 + $0x288] sm:$0xff] %v319
                %v321 = vld [vmem:[%s155 + $0x290] sm:$0xff]
                %322 = vst [vmem:[%s156 + $0x290] sm:$0xff] %v321
                %v323 = vld [vmem:[%s155 + $0x298] sm:$0xff]
                %324 = vst [vmem:[%s156 + $0x298] sm:$0xff] %v323
                %v325 = vld [vmem:[%s155 + $0x2a0] sm:$0xff]
                %326 = vst [vmem:[%s156 + $0x2a0] sm:$0xff] %v325
                %v327 = vld [vmem:[%s155 + $0x2a8] sm:$0xff]
                %328 = vst [vmem:[%s156 + $0x2a8] sm:$0xff] %v327
                %v329 = vld [vmem:[%s155 + $0x2b0] sm:$0xff]
                %330 = vst [vmem:[%s156 + $0x2b0] sm:$0xff] %v329
                %v331 = vld [vmem:[%s155 + $0x2b8] sm:$0xff]
                %332 = vst [vmem:[%s156 + $0x2b8] sm:$0xff] %v331
                %v333 = vld [vmem:[%s155 + $0x2c0] sm:$0xff]
                %334 = vst [vmem:[%s156 + $0x2c0] sm:$0xff] %v333
                %v335 = vld [vmem:[%s155 + $0x2c8] sm:$0xff]
                %336 = vst [vmem:[%s156 + $0x2c8] sm:$0xff] %v335
                %v337 = vld [vmem:[%s155 + $0x2d0] sm:$0xff]
                %338 = vst [vmem:[%s156 + $0x2d0] sm:$0xff] %v337
                %v339 = vld [vmem:[%s155 + $0x2d8] sm:$0xff]
                %340 = vst [vmem:[%s156 + $0x2d8] sm:$0xff] %v339
                %v341 = vld [vmem:[%s155 + $0x2e0] sm:$0xff]
                %342 = vst [vmem:[%s156 + $0x2e0] sm:$0xff] %v341
                %v343 = vld [vmem:[%s155 + $0x2e8] sm:$0xff]
                %344 = vst [vmem:[%s156 + $0x2e8] sm:$0xff] %v343
                %v345 = vld [vmem:[%s155 + $0x2f0] sm:$0xff]
                %346 = vst [vmem:[%s156 + $0x2f0] sm:$0xff] %v345
                %v347 = vld [vmem:[%s155 + $0x2f8] sm:$0xff]
                %348 = vst [vmem:[%s156 + $0x2f8] sm:$0xff] %v347
                %v349 = vld [vmem:[%s155 + $0x300] sm:$0xff]
                %350 = vst [vmem:[%s156 + $0x300] sm:$0xff] %v349
                %v351 = vld [vmem:[%s155 + $0x308] sm:$0xff]
                %352 = vst [vmem:[%s156 + $0x308] sm:$0xff] %v351
                %v353 = vld [vmem:[%s155 + $0x310] sm:$0xff]
                %354 = vst [vmem:[%s156 + $0x310] sm:$0xff] %v353
                %v355 = vld [vmem:[%s155 + $0x318] sm:$0xff]
                %356 = vst [vmem:[%s156 + $0x318] sm:$0xff] %v355
                %v357 = vld [vmem:[%s155 + $0x320] sm:$0xff]
                %358 = vst [vmem:[%s156 + $0x320] sm:$0xff] %v357
                %v359 = vld [vmem:[%s155 + $0x328] sm:$0xff]
                %360 = vst [vmem:[%s156 + $0x328] sm:$0xff] %v359
                %v361 = vld [vmem:[%s155 + $0x330] sm:$0xff]
                %362 = vst [vmem:[%s156 + $0x330] sm:$0xff] %v361
                %v363 = vld [vmem:[%s155 + $0x338] sm:$0xff]
                %364 = vst [vmem:[%s156 + $0x338] sm:$0xff] %v363
                %v365 = vld [vmem:[%s155 + $0x340] sm:$0xff]
                %366 = vst [vmem:[%s156 + $0x340] sm:$0xff] %v365
                %v367 = vld [vmem:[%s155 + $0x348] sm:$0xff]
                %368 = vst [vmem:[%s156 + $0x348] sm:$0xff] %v367
                %v369 = vld [vmem:[%s155 + $0x350] sm:$0xff]
                %370 = vst [vmem:[%s156 + $0x350] sm:$0xff] %v369
                %v371 = vld [vmem:[%s155 + $0x358] sm:$0xff]
                %372 = vst [vmem:[%s156 + $0x358] sm:$0xff] %v371
                %v373 = vld [vmem:[%s155 + $0x360] sm:$0xff]
                %374 = vst [vmem:[%s156 + $0x360] sm:$0xff] %v373
                %v375 = vld [vmem:[%s155 + $0x368] sm:$0xff]
                %376 = vst [vmem:[%s156 + $0x368] sm:$0xff] %v375
                %v377 = vld [vmem:[%s155 + $0x370] sm:$0xff]
                %378 = vst [vmem:[%s156 + $0x370] sm:$0xff] %v377
                %v379 = vld [vmem:[%s155 + $0x378] sm:$0xff]
                %380 = vst [vmem:[%s156 + $0x378] sm:$0xff] %v379
                %v381 = vld [vmem:[%s155 + $0x380] sm:$0xff]
                %382 = vst [vmem:[%s156 + $0x380] sm:$0xff] %v381
                %v383 = vld [vmem:[%s155 + $0x388] sm:$0xff]
                %384 = vst [vmem:[%s156 + $0x388] sm:$0xff] %v383
                %v385 = vld [vmem:[%s155 + $0x390] sm:$0xff]
                %386 = vst [vmem:[%s156 + $0x390] sm:$0xff] %v385
                %v387 = vld [vmem:[%s155 + $0x398] sm:$0xff]
                %388 = vst [vmem:[%s156 + $0x398] sm:$0xff] %v387
                %v389 = vld [vmem:[%s155 + $0x3a0] sm:$0xff]
                %390 = vst [vmem:[%s156 + $0x3a0] sm:$0xff] %v389
                %v391 = vld [vmem:[%s155 + $0x3a8] sm:$0xff]
                %392 = vst [vmem:[%s156 + $0x3a8] sm:$0xff] %v391
                %v393 = vld [vmem:[%s155 + $0x3b0] sm:$0xff]
                %394 = vst [vmem:[%s156 + $0x3b0] sm:$0xff] %v393
                %v395 = vld [vmem:[%s155 + $0x3b8] sm:$0xff]
                %396 = vst [vmem:[%s156 + $0x3b8] sm:$0xff] %v395
                %v397 = vld [vmem:[%s155 + $0x3c0] sm:$0xff]
                %398 = vst [vmem:[%s156 + $0x3c0] sm:$0xff] %v397
                %v399 = vld [vmem:[%s155 + $0x3c8] sm:$0xff]
                %400 = vst [vmem:[%s156 + $0x3c8] sm:$0xff] %v399
                %v401 = vld [vmem:[%s155 + $0x3d0] sm:$0xff]
                %402 = vst [vmem:[%s156 + $0x3d0] sm:$0xff] %v401
                %v403 = vld [vmem:[%s155 + $0x3d8] sm:$0xff]
                %404 = vst [vmem:[%s156 + $0x3d8] sm:$0xff] %v403
                %v405 = vld [vmem:[%s155 + $0x3e0] sm:$0xff]
                %406 = vst [vmem:[%s156 + $0x3e0] sm:$0xff] %v405
                %v407 = vld [vmem:[%s155 + $0x3e8] sm:$0xff]
                %408 = vst [vmem:[%s156 + $0x3e8] sm:$0xff] %v407
                %v409 = vld [vmem:[%s155 + $0x3f0] sm:$0xff]
                %410 = vst [vmem:[%s156 + $0x3f0] sm:$0xff] %v409
                %v411 = vld [vmem:[%s155 + $0x3f8] sm:$0xff]
                %412 = vst [vmem:[%s156 + $0x3f8] sm:$0xff] %v411
                %v413 = vld [vmem:[%s155 + $0x1000] sm:$0xff]
                %414 = vst [vmem:[%s156 + $0x400] sm:$0xff] %v413
                %v415 = vld [vmem:[%s155 + $0x1008] sm:$0xff]
                %416 = vst [vmem:[%s156 + $0x408] sm:$0xff] %v415
                %v417 = vld [vmem:[%s155 + $0x1010] sm:$0xff]
                %418 = vst [vmem:[%s156 + $0x410] sm:$0xff] %v417
                %v419 = vld [vmem:[%s155 + $0x1018] sm:$0xff]
                %420 = vst [vmem:[%s156 + $0x418] sm:$0xff] %v419
                %v421 = vld [vmem:[%s155 + $0x1020] sm:$0xff]
                %422 = vst [vmem:[%s156 + $0x420] sm:$0xff] %v421
                %v423 = vld [vmem:[%s155 + $0x1028] sm:$0xff]
                %424 = vst [vmem:[%s156 + $0x428] sm:$0xff] %v423
                %v425 = vld [vmem:[%s155 + $0x1030] sm:$0xff]
                %426 = vst [vmem:[%s156 + $0x430] sm:$0xff] %v425
                %v427 = vld [vmem:[%s155 + $0x1038] sm:$0xff]
                %428 = vst [vmem:[%s156 + $0x438] sm:$0xff] %v427
                %v429 = vld [vmem:[%s155 + $0x1040] sm:$0xff]
                %430 = vst [vmem:[%s156 + $0x440] sm:$0xff] %v429
                %v431 = vld [vmem:[%s155 + $0x1048] sm:$0xff]
                %432 = vst [vmem:[%s156 + $0x448] sm:$0xff] %v431
                %v433 = vld [vmem:[%s155 + $0x1050] sm:$0xff]
                %434 = vst [vmem:[%s156 + $0x450] sm:$0xff] %v433
                %v435 = vld [vmem:[%s155 + $0x1058] sm:$0xff]
                %436 = vst [vmem:[%s156 + $0x458] sm:$0xff] %v435
                %v437 = vld [vmem:[%s155 + $0x1060] sm:$0xff]
                %438 = vst [vmem:[%s156 + $0x460] sm:$0xff] %v437
                %v439 = vld [vmem:[%s155 + $0x1068] sm:$0xff]
                %440 = vst [vmem:[%s156 + $0x468] sm:$0xff] %v439
                %v441 = vld [vmem:[%s155 + $0x1070] sm:$0xff]
                %442 = vst [vmem:[%s156 + $0x470] sm:$0xff] %v441
                %v443 = vld [vmem:[%s155 + $0x1078] sm:$0xff]
                %444 = vst [vmem:[%s156 + $0x478] sm:$0xff] %v443
                %v445 = vld [vmem:[%s155 + $0x1080] sm:$0xff]
                %446 = vst [vmem:[%s156 + $0x480] sm:$0xff] %v445
                %v447 = vld [vmem:[%s155 + $0x1088] sm:$0xff]
                %448 = vst [vmem:[%s156 + $0x488] sm:$0xff] %v447
                %v449 = vld [vmem:[%s155 + $0x1090] sm:$0xff]
                %450 = vst [vmem:[%s156 + $0x490] sm:$0xff] %v449
                %v451 = vld [vmem:[%s155 + $0x1098] sm:$0xff]
                %452 = vst [vmem:[%s156 + $0x498] sm:$0xff] %v451
                %v453 = vld [vmem:[%s155 + $0x10a0] sm:$0xff]
                %454 = vst [vmem:[%s156 + $0x4a0] sm:$0xff] %v453
                %v455 = vld [vmem:[%s155 + $0x10a8] sm:$0xff]
                %456 = vst [vmem:[%s156 + $0x4a8] sm:$0xff] %v455
                %v457 = vld [vmem:[%s155 + $0x10b0] sm:$0xff]
                %458 = vst [vmem:[%s156 + $0x4b0] sm:$0xff] %v457
                %v459 = vld [vmem:[%s155 + $0x10b8] sm:$0xff]
                %460 = vst [vmem:[%s156 + $0x4b8] sm:$0xff] %v459
                %v461 = vld [vmem:[%s155 + $0x10c0] sm:$0xff]
                %462 = vst [vmem:[%s156 + $0x4c0] sm:$0xff] %v461
                %v463 = vld [vmem:[%s155 + $0x10c8] sm:$0xff]
                %464 = vst [vmem:[%s156 + $0x4c8] sm:$0xff] %v463
                %v465 = vld [vmem:[%s155 + $0x10d0] sm:$0xff]
                %466 = vst [vmem:[%s156 + $0x4d0] sm:$0xff] %v465
                %v467 = vld [vmem:[%s155 + $0x10d8] sm:$0xff]
                %468 = vst [vmem:[%s156 + $0x4d8] sm:$0xff] %v467
                %v469 = vld [vmem:[%s155 + $0x10e0] sm:$0xff]
                %470 = vst [vmem:[%s156 + $0x4e0] sm:$0xff] %v469
                %v471 = vld [vmem:[%s155 + $0x10e8] sm:$0xff]
                %472 = vst [vmem:[%s156 + $0x4e8] sm:$0xff] %v471
                %v473 = vld [vmem:[%s155 + $0x10f0] sm:$0xff]
                %474 = vst [vmem:[%s156 + $0x4f0] sm:$0xff] %v473
                %v475 = vld [vmem:[%s155 + $0x10f8] sm:$0xff]
                %476 = vst [vmem:[%s156 + $0x4f8] sm:$0xff] %v475
                %v477 = vld [vmem:[%s155 + $0x1100] sm:$0xff]
                %478 = vst [vmem:[%s156 + $0x500] sm:$0xff] %v477
                %v479 = vld [vmem:[%s155 + $0x1108] sm:$0xff]
                %480 = vst [vmem:[%s156 + $0x508] sm:$0xff] %v479
                %v481 = vld [vmem:[%s155 + $0x1110] sm:$0xff]
                %482 = vst [vmem:[%s156 + $0x510] sm:$0xff] %v481
                %v483 = vld [vmem:[%s155 + $0x1118] sm:$0xff]
                %484 = vst [vmem:[%s156 + $0x518] sm:$0xff] %v483
                %v485 = vld [vmem:[%s155 + $0x1120] sm:$0xff]
                %486 = vst [vmem:[%s156 + $0x520] sm:$0xff] %v485
                %v487 = vld [vmem:[%s155 + $0x1128] sm:$0xff]
                %488 = vst [vmem:[%s156 + $0x528] sm:$0xff] %v487
                %v489 = vld [vmem:[%s155 + $0x1130] sm:$0xff]
                %490 = vst [vmem:[%s156 + $0x530] sm:$0xff] %v489
                %v491 = vld [vmem:[%s155 + $0x1138] sm:$0xff]
                %492 = vst [vmem:[%s156 + $0x538] sm:$0xff] %v491
                %v493 = vld [vmem:[%s155 + $0x1140] sm:$0xff]
                %494 = vst [vmem:[%s156 + $0x540] sm:$0xff] %v493
                %v495 = vld [vmem:[%s155 + $0x1148] sm:$0xff]
                %496 = vst [vmem:[%s156 + $0x548] sm:$0xff] %v495
                %v497 = vld [vmem:[%s155 + $0x1150] sm:$0xff]
                %498 = vst [vmem:[%s156 + $0x550] sm:$0xff] %v497
                %v499 = vld [vmem:[%s155 + $0x1158] sm:$0xff]
                %500 = vst [vmem:[%s156 + $0x558] sm:$0xff] %v499
                %v501 = vld [vmem:[%s155 + $0x1160] sm:$0xff]
                %502 = vst [vmem:[%s156 + $0x560] sm:$0xff] %v501
                %v503 = vld [vmem:[%s155 + $0x1168] sm:$0xff]
                %504 = vst [vmem:[%s156 + $0x568] sm:$0xff] %v503
                %v505 = vld [vmem:[%s155 + $0x1170] sm:$0xff]
                %506 = vst [vmem:[%s156 + $0x570] sm:$0xff] %v505
                %v507 = vld [vmem:[%s155 + $0x1178] sm:$0xff]
                %508 = vst [vmem:[%s156 + $0x578] sm:$0xff] %v507
                %v509 = vld [vmem:[%s155 + $0x1180] sm:$0xff]
                %510 = vst [vmem:[%s156 + $0x580] sm:$0xff] %v509
                %v511 = vld [vmem:[%s155 + $0x1188] sm:$0xff]
                %512 = vst [vmem:[%s156 + $0x588] sm:$0xff] %v511
                %v513 = vld [vmem:[%s155 + $0x1190] sm:$0xff]
                %514 = vst [vmem:[%s156 + $0x590] sm:$0xff] %v513
                %v515 = vld [vmem:[%s155 + $0x1198] sm:$0xff]
                %516 = vst [vmem:[%s156 + $0x598] sm:$0xff] %v515
                %v517 = vld [vmem:[%s155 + $0x11a0] sm:$0xff]
                %518 = vst [vmem:[%s156 + $0x5a0] sm:$0xff] %v517
                %v519 = vld [vmem:[%s155 + $0x11a8] sm:$0xff]
                %520 = vst [vmem:[%s156 + $0x5a8] sm:$0xff] %v519
                %v521 = vld [vmem:[%s155 + $0x11b0] sm:$0xff]
                %522 = vst [vmem:[%s156 + $0x5b0] sm:$0xff] %v521
                %v523 = vld [vmem:[%s155 + $0x11b8] sm:$0xff]
                %524 = vst [vmem:[%s156 + $0x5b8] sm:$0xff] %v523
                %v525 = vld [vmem:[%s155 + $0x11c0] sm:$0xff]
                %526 = vst [vmem:[%s156 + $0x5c0] sm:$0xff] %v525
                %v527 = vld [vmem:[%s155 + $0x11c8] sm:$0xff]
                %528 = vst [vmem:[%s156 + $0x5c8] sm:$0xff] %v527
                %v529 = vld [vmem:[%s155 + $0x11d0] sm:$0xff]
                %530 = vst [vmem:[%s156 + $0x5d0] sm:$0xff] %v529
                %v531 = vld [vmem:[%s155 + $0x11d8] sm:$0xff]
                %532 = vst [vmem:[%s156 + $0x5d8] sm:$0xff] %v531
                %v533 = vld [vmem:[%s155 + $0x11e0] sm:$0xff]
                %534 = vst [vmem:[%s156 + $0x5e0] sm:$0xff] %v533
                %v535 = vld [vmem:[%s155 + $0x11e8] sm:$0xff]
                %536 = vst [vmem:[%s156 + $0x5e8] sm:$0xff] %v535
                %v537 = vld [vmem:[%s155 + $0x11f0] sm:$0xff]
                %538 = vst [vmem:[%s156 + $0x5f0] sm:$0xff] %v537
                %v539 = vld [vmem:[%s155 + $0x11f8] sm:$0xff]
                %540 = vst [vmem:[%s156 + $0x5f8] sm:$0xff] %v539
                %v541 = vld [vmem:[%s155 + $0x1200] sm:$0xff]
                %542 = vst [vmem:[%s156 + $0x600] sm:$0xff] %v541
                %v543 = vld [vmem:[%s155 + $0x1208] sm:$0xff]
                %544 = vst [vmem:[%s156 + $0x608] sm:$0xff] %v543
                %v545 = vld [vmem:[%s155 + $0x1210] sm:$0xff]
                %546 = vst [vmem:[%s156 + $0x610] sm:$0xff] %v545
                %v547 = vld [vmem:[%s155 + $0x1218] sm:$0xff]
                %548 = vst [vmem:[%s156 + $0x618] sm:$0xff] %v547
                %v549 = vld [vmem:[%s155 + $0x1220] sm:$0xff]
                %550 = vst [vmem:[%s156 + $0x620] sm:$0xff] %v549
                %v551 = vld [vmem:[%s155 + $0x1228] sm:$0xff]
                %552 = vst [vmem:[%s156 + $0x628] sm:$0xff] %v551
                %v553 = vld [vmem:[%s155 + $0x1230] sm:$0xff]
                %554 = vst [vmem:[%s156 + $0x630] sm:$0xff] %v553
                %v555 = vld [vmem:[%s155 + $0x1238] sm:$0xff]
                %556 = vst [vmem:[%s156 + $0x638] sm:$0xff] %v555
                %v557 = vld [vmem:[%s155 + $0x1240] sm:$0xff]
                %558 = vst [vmem:[%s156 + $0x640] sm:$0xff] %v557
                %v559 = vld [vmem:[%s155 + $0x1248] sm:$0xff]
                %560 = vst [vmem:[%s156 + $0x648] sm:$0xff] %v559
                %v561 = vld [vmem:[%s155 + $0x1250] sm:$0xff]
                %562 = vst [vmem:[%s156 + $0x650] sm:$0xff] %v561
                %v563 = vld [vmem:[%s155 + $0x1258] sm:$0xff]
                %564 = vst [vmem:[%s156 + $0x658] sm:$0xff] %v563
                %v565 = vld [vmem:[%s155 + $0x1260] sm:$0xff]
                %566 = vst [vmem:[%s156 + $0x660] sm:$0xff] %v565
                %v567 = vld [vmem:[%s155 + $0x1268] sm:$0xff]
                %568 = vst [vmem:[%s156 + $0x668] sm:$0xff] %v567
                %v569 = vld [vmem:[%s155 + $0x1270] sm:$0xff]
                %570 = vst [vmem:[%s156 + $0x670] sm:$0xff] %v569
                %v571 = vld [vmem:[%s155 + $0x1278] sm:$0xff]
                %572 = vst [vmem:[%s156 + $0x678] sm:$0xff] %v571
                %v573 = vld [vmem:[%s155 + $0x1280] sm:$0xff]
                %574 = vst [vmem:[%s156 + $0x680] sm:$0xff] %v573
                %v575 = vld [vmem:[%s155 + $0x1288] sm:$0xff]
                %576 = vst [vmem:[%s156 + $0x688] sm:$0xff] %v575
                %v577 = vld [vmem:[%s155 + $0x1290] sm:$0xff]
                %578 = vst [vmem:[%s156 + $0x690] sm:$0xff] %v577
                %v579 = vld [vmem:[%s155 + $0x1298] sm:$0xff]
                %580 = vst [vmem:[%s156 + $0x698] sm:$0xff] %v579
                %v581 = vld [vmem:[%s155 + $0x12a0] sm:$0xff]
                %582 = vst [vmem:[%s156 + $0x6a0] sm:$0xff] %v581
                %v583 = vld [vmem:[%s155 + $0x12a8] sm:$0xff]
                %584 = vst [vmem:[%s156 + $0x6a8] sm:$0xff] %v583
                %v585 = vld [vmem:[%s155 + $0x12b0] sm:$0xff]
                %586 = vst [vmem:[%s156 + $0x6b0] sm:$0xff] %v585
                %v587 = vld [vmem:[%s155 + $0x12b8] sm:$0xff]
                %588 = vst [vmem:[%s156 + $0x6b8] sm:$0xff] %v587
                %v589 = vld [vmem:[%s155 + $0x12c0] sm:$0xff]
                %590 = vst [vmem:[%s156 + $0x6c0] sm:$0xff] %v589
                %v591 = vld [vmem:[%s155 + $0x12c8] sm:$0xff]
                %592 = vst [vmem:[%s156 + $0x6c8] sm:$0xff] %v591
                %v593 = vld [vmem:[%s155 + $0x12d0] sm:$0xff]
                %594 = vst [vmem:[%s156 + $0x6d0] sm:$0xff] %v593
                %v595 = vld [vmem:[%s155 + $0x12d8] sm:$0xff]
                %596 = vst [vmem:[%s156 + $0x6d8] sm:$0xff] %v595
                %v597 = vld [vmem:[%s155 + $0x12e0] sm:$0xff]
                %598 = vst [vmem:[%s156 + $0x6e0] sm:$0xff] %v597
                %v599 = vld [vmem:[%s155 + $0x12e8] sm:$0xff]
                %600 = vst [vmem:[%s156 + $0x6e8] sm:$0xff] %v599
                %v601 = vld [vmem:[%s155 + $0x12f0] sm:$0xff]
                %602 = vst [vmem:[%s156 + $0x6f0] sm:$0xff] %v601
                %v603 = vld [vmem:[%s155 + $0x12f8] sm:$0xff]
                %604 = vst [vmem:[%s156 + $0x6f8] sm:$0xff] %v603
                %v605 = vld [vmem:[%s155 + $0x1300] sm:$0xff]
                %606 = vst [vmem:[%s156 + $0x700] sm:$0xff] %v605
                %v607 = vld [vmem:[%s155 + $0x1308] sm:$0xff]
                %608 = vst [vmem:[%s156 + $0x708] sm:$0xff] %v607
                %v609 = vld [vmem:[%s155 + $0x1310] sm:$0xff]
                %610 = vst [vmem:[%s156 + $0x710] sm:$0xff] %v609
                %v611 = vld [vmem:[%s155 + $0x1318] sm:$0xff]
                %612 = vst [vmem:[%s156 + $0x718] sm:$0xff] %v611
                %v613 = vld [vmem:[%s155 + $0x1320] sm:$0xff]
                %614 = vst [vmem:[%s156 + $0x720] sm:$0xff] %v613
                %v615 = vld [vmem:[%s155 + $0x1328] sm:$0xff]
                %616 = vst [vmem:[%s156 + $0x728] sm:$0xff] %v615
                %v617 = vld [vmem:[%s155 + $0x1330] sm:$0xff]
                %618 = vst [vmem:[%s156 + $0x730] sm:$0xff] %v617
                %v619 = vld [vmem:[%s155 + $0x1338] sm:$0xff]
                %620 = vst [vmem:[%s156 + $0x738] sm:$0xff] %v619
                %v621 = vld [vmem:[%s155 + $0x1340] sm:$0xff]
                %622 = vst [vmem:[%s156 + $0x740] sm:$0xff] %v621
                %v623 = vld [vmem:[%s155 + $0x1348] sm:$0xff]
                %624 = vst [vmem:[%s156 + $0x748] sm:$0xff] %v623
                %v625 = vld [vmem:[%s155 + $0x1350] sm:$0xff]
                %626 = vst [vmem:[%s156 + $0x750] sm:$0xff] %v625
                %v627 = vld [vmem:[%s155 + $0x1358] sm:$0xff]
                %628 = vst [vmem:[%s156 + $0x758] sm:$0xff] %v627
                %v629 = vld [vmem:[%s155 + $0x1360] sm:$0xff]
                %630 = vst [vmem:[%s156 + $0x760] sm:$0xff] %v629
                %v631 = vld [vmem:[%s155 + $0x1368] sm:$0xff]
                %632 = vst [vmem:[%s156 + $0x768] sm:$0xff] %v631
                %v633 = vld [vmem:[%s155 + $0x1370] sm:$0xff]
                %634 = vst [vmem:[%s156 + $0x770] sm:$0xff] %v633
                %v635 = vld [vmem:[%s155 + $0x1378] sm:$0xff]
                %636 = vst [vmem:[%s156 + $0x778] sm:$0xff] %v635
                %v637 = vld [vmem:[%s155 + $0x1380] sm:$0xff]
                %638 = vst [vmem:[%s156 + $0x780] sm:$0xff] %v637
                %v639 = vld [vmem:[%s155 + $0x1388] sm:$0xff]
                %640 = vst [vmem:[%s156 + $0x788] sm:$0xff] %v639
                %v641 = vld [vmem:[%s155 + $0x1390] sm:$0xff]
                %642 = vst [vmem:[%s156 + $0x790] sm:$0xff] %v641
                %v643 = vld [vmem:[%s155 + $0x1398] sm:$0xff]
                %644 = vst [vmem:[%s156 + $0x798] sm:$0xff] %v643
                %v645 = vld [vmem:[%s155 + $0x13a0] sm:$0xff]
                %646 = vst [vmem:[%s156 + $0x7a0] sm:$0xff] %v645
                %v647 = vld [vmem:[%s155 + $0x13a8] sm:$0xff]
                %648 = vst [vmem:[%s156 + $0x7a8] sm:$0xff] %v647
                %v649 = vld [vmem:[%s155 + $0x13b0] sm:$0xff]
                %650 = vst [vmem:[%s156 + $0x7b0] sm:$0xff] %v649
                %v651 = vld [vmem:[%s155 + $0x13b8] sm:$0xff]
                %652 = vst [vmem:[%s156 + $0x7b8] sm:$0xff] %v651
                %v653 = vld [vmem:[%s155 + $0x13c0] sm:$0xff]
                %654 = vst [vmem:[%s156 + $0x7c0] sm:$0xff] %v653
                %v655 = vld [vmem:[%s155 + $0x13c8] sm:$0xff]
                %656 = vst [vmem:[%s156 + $0x7c8] sm:$0xff] %v655
                %v657 = vld [vmem:[%s155 + $0x13d0] sm:$0xff]
                %658 = vst [vmem:[%s156 + $0x7d0] sm:$0xff] %v657
                %v659 = vld [vmem:[%s155 + $0x13d8] sm:$0xff]
                %660 = vst [vmem:[%s156 + $0x7d8] sm:$0xff] %v659
                %v661 = vld [vmem:[%s155 + $0x13e0] sm:$0xff]
                %662 = vst [vmem:[%s156 + $0x7e0] sm:$0xff] %v661
                %v663 = vld [vmem:[%s155 + $0x13e8] sm:$0xff]
                %664 = vst [vmem:[%s156 + $0x7e8] sm:$0xff] %v663
                %v665 = vld [vmem:[%s155 + $0x13f0] sm:$0xff]
                %666 = vst [vmem:[%s156 + $0x7f0] sm:$0xff] %v665
                %v667 = vld [vmem:[%s155 + $0x13f8] sm:$0xff]
                %668 = vst [vmem:[%s156 + $0x7f8] sm:$0xff] %v667
              $region41: #{model_forward.3} parent=35 // loop_footer
                %s154 = sadd.s32 1, %s150
              $region42: #{model_forward.3} parent=35 // loop_footer_branch
                %149 = sbr.rel target = $region38
              $region43: #{model_forward.3} parent=35 // loop_exit
                _
            $region36: #{model_forward.3} parent=31 // pred_fallthru
              _
            // Predicated region
            $region44: #{model_forward.3} parent=31 // pred_check
              _
            $region45: #{model_forward.3} parent=31 // pred_check_branch
              %670 = sbr.rel target = $region47
            $region46: #{model_forward.3} parent=31 // pred_region
              _
            $region47: #{model_forward.3} parent=31 // pred_fallthru
              _
          $region32: #{model_forward.3} parent=27 // pred_fallthru
            _
          %671 = vnop
        $region28: #{model_forward.3} parent=19 // pred_fallthru
          _
      $region20: #{model_forward.3} parent=5 // pred_fallthru
        _
      %p672 = scmp.le.s32.totalorder 1, %s10
      %p673 = scmp.lt.s32.totalorder %s10, 5
      %p674 = pnand %p672, %p673
      %p675 = pneg %p674
      // Predicated region
      $region48: #{model_forward.3} parent=5 // pred_check
        _
      $region49: #{model_forward.3} parent=5 // pred_check_branch
        %677 = sbr.rel (%p674) target = $region51
      $region50: #{model_forward.3} parent=5 // pred_region
        %s678 = ssub.s32 %s10, 1
        %s679 = sand.u32 %s49, 1
        %s680 = sand.u32 %s49, 1
        %s681 = smul.addr %s680, 2048
        %s682 = scalar_lea.vmem [#allocation2], %s681
        // Predicated region
        $region52: #{model_forward.3} parent=50 // pred_check
          %p683 = pneg %p62
        $region53: #{model_forward.3} parent=50 // pred_check_branch
          %685 = sbr.rel (%p683) target = $region55
        $region54: #{model_forward.3} parent=50 // pred_region
          _
        $region55: #{model_forward.3} parent=50 // pred_fallthru
          _
        %s686 = smul.u32 128, %s15
        %p687 = scmp.lt.s32.totalorder %s686, 511
        %s688 = scalar_select %p687, %s686, 511
        %s689 = smul.addr %s688, 2
        %s690 = scalar_lea.vmem %s0, %s689
        %p691 = pneg %p36
        %p692 = pneg %p33
        %s693 = sand.u32 %s49, 1
        %s694 = sand.u32 %s49, 1
        %s695 = smul.addr %s694, 2048
        %s696 = scalar_lea.vmem [#allocation2], %s695
        %p697 = pneg %p62
        %p698 = pneg %p59
        %p699 = pneg %p83
        %p700 = pneg %p80
        %p701 = pneg %p104
        %p702 = pneg %p101
        %s703 = smul.u32 128, %s15
        %p704 = scmp.lt.s32.totalorder %s703, 511
        %s705 = scalar_select %p704, %s703, 511
        %s706 = smul.addr %s705, 2
        %s707 = scalar_lea.vmem %s0, %s706
        %s708 = smul.u32 128, %s15
        %s709 = smul.u32 128, %s15
        %p710 = scmp.eq.s32.totalorder %s15, 0
        // Predicated region
        $region56: #{model_forward.3} parent=50 // pred_check
          %p711 = pneg %p710
        $region57: #{model_forward.3} parent=50 // pred_check_branch
          %713 = sbr.rel (%p711) target = $region59
        $region58: #{model_forward.3} parent=50 // pred_region
          %v714 = vld [vmem:[%s2] sm:$0x1]
          %v716 = vlaneseq
          %v717 = vshrl.u32 %v716, 7
          %v718 = vsub.s32 0, %v717
          %v719 = vrot.slane %v714, %v718
          %vm721 = vcmask 99328
          %722 = vst.msk [vmem:[#allocation3] sm:$0x3] %vm721, %v719
        $region59: #{model_forward.3} parent=50 // pred_fallthru
          _
        %v723 = vld [vmem:[#allocation3] sm:$0x3]
        %v724 = vld [vmem:[%s707] sm:$0xff]
        %v725 = vld [vmem:[%s707 + $0x8] sm:$0xff]
        %v726 = vld [vmem:[%s707 + $0x10] sm:$0xff]
        %v727 = vld [vmem:[%s707 + $0x18] sm:$0xff]
        %v728 = vld [vmem:[%s707 + $0x20] sm:$0xff]
        %v729 = vld [vmem:[%s707 + $0x28] sm:$0xff]
        %v730 = vld [vmem:[%s707 + $0x30] sm:$0xff]
        %v731 = vld [vmem:[%s707 + $0x38] sm:$0xff]
        %v732 = vld [vmem:[%s707 + $0x40] sm:$0xff]
        %v733 = vld [vmem:[%s707 + $0x48] sm:$0xff]
        %v734 = vld [vmem:[%s707 + $0x50] sm:$0xff]
        %v735 = vld [vmem:[%s707 + $0x58] sm:$0xff]
        %v736 = vld [vmem:[%s707 + $0x60] sm:$0xff]
        %v737 = vld [vmem:[%s707 + $0x68] sm:$0xff]
        %v738 = vld [vmem:[%s707 + $0x70] sm:$0xff]
        %v739 = vld [vmem:[%s707 + $0x78] sm:$0xff]
        %v740 = vld [vmem:[%s707 + $0x80] sm:$0xff]
        %v741 = vld [vmem:[%s707 + $0x88] sm:$0xff]
        %v742 = vld [vmem:[%s707 + $0x90] sm:$0xff]
        %v743 = vld [vmem:[%s707 + $0x98] sm:$0xff]
        %v744 = vld [vmem:[%s707 + $0xa0] sm:$0xff]
        %v745 = vld [vmem:[%s707 + $0xa8] sm:$0xff]
        %v746 = vld [vmem:[%s707 + $0xb0] sm:$0xff]
        %v747 = vld [vmem:[%s707 + $0xb8] sm:$0xff]
        %v748 = vld [vmem:[%s707 + $0xc0] sm:$0xff]
        %v749 = vld [vmem:[%s707 + $0xc8] sm:$0xff]
        %v750 = vld [vmem:[%s707 + $0xd0] sm:$0xff]
        %v751 = vld [vmem:[%s707 + $0xd8] sm:$0xff]
        %v752 = vld [vmem:[%s707 + $0xe0] sm:$0xff]
        %v753 = vld [vmem:[%s707 + $0xe8] sm:$0xff]
        %v754 = vld [vmem:[%s707 + $0xf0] sm:$0xff]
        %v755 = vld [vmem:[%s707 + $0xf8] sm:$0xff]
        %v756 = vld [vmem:[%s682] sm:$0xff]
        %v757 = vld [vmem:[%s682 + $0x8] sm:$0xff]
        %v758 = vld [vmem:[%s682 + $0x10] sm:$0xff]
        %v759 = vld [vmem:[%s682 + $0x18] sm:$0xff]
        %v760 = vld [vmem:[%s682 + $0x20] sm:$0xff]
        %v761 = vld [vmem:[%s682 + $0x28] sm:$0xff]
        %v762 = vld [vmem:[%s682 + $0x30] sm:$0xff]
        %v763 = vld [vmem:[%s682 + $0x38] sm:$0xff]
        %v764 = vld [vmem:[%s682 + $0x40] sm:$0xff]
        %v765 = vld [vmem:[%s682 + $0x48] sm:$0xff]
        %v766 = vld [vmem:[%s682 + $0x50] sm:$0xff]
        %v767 = vld [vmem:[%s682 + $0x58] sm:$0xff]
        %v768 = vld [vmem:[%s682 + $0x60] sm:$0xff]
        %v769 = vld [vmem:[%s682 + $0x68] sm:$0xff]
        %v770 = vld [vmem:[%s682 + $0x70] sm:$0xff]
        %v771 = vld [vmem:[%s682 + $0x78] sm:$0xff]
        %v772 = vld [vmem:[%s682 + $0x80] sm:$0xff]
        %v773 = vld [vmem:[%s682 + $0x88] sm:$0xff]
        %v774 = vld [vmem:[%s682 + $0x90] sm:$0xff]
        %v775 = vld [vmem:[%s682 + $0x98] sm:$0xff]
        %v776 = vld [vmem:[%s682 + $0xa0] sm:$0xff]
        %v777 = vld [vmem:[%s682 + $0xa8] sm:$0xff]
        %v778 = vld [vmem:[%s682 + $0xb0] sm:$0xff]
        %v779 = vld [vmem:[%s682 + $0xb8] sm:$0xff]
        %v780 = vld [vmem:[%s682 + $0xc0] sm:$0xff]
        %v781 = vld [vmem:[%s682 + $0xc8] sm:$0xff]
        %v782 = vld [vmem:[%s682 + $0xd0] sm:$0xff]
        %v783 = vld [vmem:[%s682 + $0xd8] sm:$0xff]
        %v784 = vld [vmem:[%s682 + $0xe0] sm:$0xff]
        %v785 = vld [vmem:[%s682 + $0xe8] sm:$0xff]
        %v786 = vld [vmem:[%s682 + $0xf0] sm:$0xff]
        %v787 = vld [vmem:[%s682 + $0xf8] sm:$0xff]
        %v788 = vld [vmem:[%s682 + $0x100] sm:$0xff]
        %v789 = vld [vmem:[%s682 + $0x108] sm:$0xff]
        %v790 = vld [vmem:[%s682 + $0x110] sm:$0xff]
        %v791 = vld [vmem:[%s682 + $0x118] sm:$0xff]
        %v792 = vld [vmem:[%s682 + $0x120] sm:$0xff]
        %v793 = vld [vmem:[%s682 + $0x128] sm:$0xff]
        %v794 = vld [vmem:[%s682 + $0x130] sm:$0xff]
        %v795 = vld [vmem:[%s682 + $0x138] sm:$0xff]
        %v796 = vld [vmem:[%s682 + $0x140] sm:$0xff]
        %v797 = vld [vmem:[%s682 + $0x148] sm:$0xff]
        %v798 = vld [vmem:[%s682 + $0x150] sm:$0xff]
        %v799 = vld [vmem:[%s682 + $0x158] sm:$0xff]
        %v800 = vld [vmem:[%s682 + $0x160] sm:$0xff]
        %v801 = vld [vmem:[%s682 + $0x168] sm:$0xff]
        %v802 = vld [vmem:[%s682 + $0x170] sm:$0xff]
        %v803 = vld [vmem:[%s682 + $0x178] sm:$0xff]
        %v804 = vld [vmem:[%s682 + $0x180] sm:$0xff]
        %v805 = vld [vmem:[%s682 + $0x188] sm:$0xff]
        %v806 = vld [vmem:[%s682 + $0x190] sm:$0xff]
        %v807 = vld [vmem:[%s682 + $0x198] sm:$0xff]
        %v808 = vld [vmem:[%s682 + $0x1a0] sm:$0xff]
        %v809 = vld [vmem:[%s682 + $0x1a8] sm:$0xff]
        %v810 = vld [vmem:[%s682 + $0x1b0] sm:$0xff]
        %v811 = vld [vmem:[%s682 + $0x1b8] sm:$0xff]
        %v812 = vld [vmem:[%s682 + $0x1c0] sm:$0xff]
        %v813 = vld [vmem:[%s682 + $0x1c8] sm:$0xff]
        %v814 = vld [vmem:[%s682 + $0x1d0] sm:$0xff]
        %v815 = vld [vmem:[%s682 + $0x1d8] sm:$0xff]
        %v816 = vld [vmem:[%s682 + $0x1e0] sm:$0xff]
        %v817 = vld [vmem:[%s682 + $0x1e8] sm:$0xff]
        %v818 = vld [vmem:[%s682 + $0x1f0] sm:$0xff]
        %v819 = vld [vmem:[%s682 + $0x1f8] sm:$0xff]
        %v820 = vld [vmem:[%s682 + $0x200] sm:$0xff]
        %v821 = vld [vmem:[%s682 + $0x208] sm:$0xff]
        %v822 = vld [vmem:[%s682 + $0x210] sm:$0xff]
        %v823 = vld [vmem:[%s682 + $0x218] sm:$0xff]
        %v824 = vld [vmem:[%s682 + $0x220] sm:$0xff]
        %v825 = vld [vmem:[%s682 + $0x228] sm:$0xff]
        %v826 = vld [vmem:[%s682 + $0x230] sm:$0xff]
        %v827 = vld [vmem:[%s682 + $0x238] sm:$0xff]
        %v828 = vld [vmem:[%s682 + $0x240] sm:$0xff]
        %v829 = vld [vmem:[%s682 + $0x248] sm:$0xff]
        %v830 = vld [vmem:[%s682 + $0x250] sm:$0xff]
        %v831 = vld [vmem:[%s682 + $0x258] sm:$0xff]
        %v832 = vld [vmem:[%s682 + $0x260] sm:$0xff]
        %v833 = vld [vmem:[%s682 + $0x268] sm:$0xff]
        %v834 = vld [vmem:[%s682 + $0x270] sm:$0xff]
        %v835 = vld [vmem:[%s682 + $0x278] sm:$0xff]
        %v836 = vld [vmem:[%s682 + $0x280] sm:$0xff]
        %v837 = vld [vmem:[%s682 + $0x288] sm:$0xff]
        %v838 = vld [vmem:[%s682 + $0x290] sm:$0xff]
        %v839 = vld [vmem:[%s682 + $0x298] sm:$0xff]
        %v840 = vld [vmem:[%s682 + $0x2a0] sm:$0xff]
        %v841 = vld [vmem:[%s682 + $0x2a8] sm:$0xff]
        %v842 = vld [vmem:[%s682 + $0x2b0] sm:$0xff]
        %v843 = vld [vmem:[%s682 + $0x2b8] sm:$0xff]
        %v844 = vld [vmem:[%s682 + $0x2c0] sm:$0xff]
        %v845 = vld [vmem:[%s682 + $0x2c8] sm:$0xff]
        %v846 = vld [vmem:[%s682 + $0x2d0] sm:$0xff]
        %v847 = vld [vmem:[%s682 + $0x2d8] sm:$0xff]
        %v848 = vld [vmem:[%s682 + $0x2e0] sm:$0xff]
        %v849 = vld [vmem:[%s682 + $0x2e8] sm:$0xff]
        %v850 = vld [vmem:[%s682 + $0x2f0] sm:$0xff]
        %v851 = vld [vmem:[%s682 + $0x2f8] sm:$0xff]
        %v852 = vld [vmem:[%s682 + $0x300] sm:$0xff]
        %v853 = vld [vmem:[%s682 + $0x308] sm:$0xff]
        %v854 = vld [vmem:[%s682 + $0x310] sm:$0xff]
        %v855 = vld [vmem:[%s682 + $0x318] sm:$0xff]
        %v856 = vld [vmem:[%s682 + $0x320] sm:$0xff]
        %v857 = vld [vmem:[%s682 + $0x328] sm:$0xff]
        %v858 = vld [vmem:[%s682 + $0x330] sm:$0xff]
        %v859 = vld [vmem:[%s682 + $0x338] sm:$0xff]
        %v860 = vld [vmem:[%s682 + $0x340] sm:$0xff]
        %v861 = vld [vmem:[%s682 + $0x348] sm:$0xff]
        %v862 = vld [vmem:[%s682 + $0x350] sm:$0xff]
        %v863 = vld [vmem:[%s682 + $0x358] sm:$0xff]
        %v864 = vld [vmem:[%s682 + $0x360] sm:$0xff]
        %v865 = vld [vmem:[%s682 + $0x368] sm:$0xff]
        %v866 = vld [vmem:[%s682 + $0x370] sm:$0xff]
        %v867 = vld [vmem:[%s682 + $0x378] sm:$0xff]
        %v868 = vld [vmem:[%s682 + $0x380] sm:$0xff]
        %v869 = vld [vmem:[%s682 + $0x388] sm:$0xff]
        %v870 = vld [vmem:[%s682 + $0x390] sm:$0xff]
        %v871 = vld [vmem:[%s682 + $0x398] sm:$0xff]
        %v872 = vld [vmem:[%s682 + $0x3a0] sm:$0xff]
        %v873 = vld [vmem:[%s682 + $0x3a8] sm:$0xff]
        %v874 = vld [vmem:[%s682 + $0x3b0] sm:$0xff]
        %v875 = vld [vmem:[%s682 + $0x3b8] sm:$0xff]
        %v876 = vld [vmem:[%s682 + $0x3c0] sm:$0xff]
        %v877 = vld [vmem:[%s682 + $0x3c8] sm:$0xff]
        %v878 = vld [vmem:[%s682 + $0x3d0] sm:$0xff]
        %v879 = vld [vmem:[%s682 + $0x3d8] sm:$0xff]
        %v880 = vld [vmem:[%s682 + $0x3e0] sm:$0xff]
        %v881 = vld [vmem:[%s682 + $0x3e8] sm:$0xff]
        %v882 = vld [vmem:[%s682 + $0x3f0] sm:$0xff]
        %v883 = vld [vmem:[%s682 + $0x3f8] sm:$0xff]
        %v884 = vld [vmem:[%s682 + $0x400] sm:$0x1f]
        %v885 = vld [vmem:[%s682 + $0x408] sm:$0x1f]
        %v886 = vld [vmem:[%s682 + $0x410] sm:$0x1f]
        %v887 = vld [vmem:[%s682 + $0x418] sm:$0x1f]
        %v888 = vld [vmem:[%s682 + $0x420] sm:$0x1f]
        %v889 = vld [vmem:[%s682 + $0x428] sm:$0x1f]
        %v890 = vld [vmem:[%s682 + $0x430] sm:$0x1f]
        %v891 = vld [vmem:[%s682 + $0x438] sm:$0x1f]
        %v892 = vld [vmem:[%s682 + $0x440] sm:$0x1f]
        %v893 = vld [vmem:[%s682 + $0x448] sm:$0x1f]
        %v894 = vld [vmem:[%s682 + $0x450] sm:$0x1f]
        %v895 = vld [vmem:[%s682 + $0x458] sm:$0x1f]
        %v896 = vld [vmem:[%s682 + $0x460] sm:$0x1f]
        %v897 = vld [vmem:[%s682 + $0x468] sm:$0x1f]
        %v898 = vld [vmem:[%s682 + $0x470] sm:$0x1f]
        %v899 = vld [vmem:[%s682 + $0x478] sm:$0x1f]
        %v900 = vld [vmem:[%s682 + $0x480] sm:$0x1f]
        %v901 = vld [vmem:[%s682 + $0x488] sm:$0x1f]
        %v902 = vld [vmem:[%s682 + $0x490] sm:$0x1f]
        %v903 = vld [vmem:[%s682 + $0x498] sm:$0x1f]
        %v904 = vld [vmem:[%s682 + $0x4a0] sm:$0x1f]
        %v905 = vld [vmem:[%s682 + $0x4a8] sm:$0x1f]
        %v906 = vld [vmem:[%s682 + $0x4b0] sm:$0x1f]
        %v907 = vld [vmem:[%s682 + $0x4b8] sm:$0x1f]
        %v908 = vld [vmem:[%s682 + $0x4c0] sm:$0x1f]
        %v909 = vld [vmem:[%s682 + $0x4c8] sm:$0x1f]
        %v910 = vld [vmem:[%s682 + $0x4d0] sm:$0x1f]
        %v911 = vld [vmem:[%s682 + $0x4d8] sm:$0x1f]
        %v912 = vld [vmem:[%s682 + $0x4e0] sm:$0x1f]
        %v913 = vld [vmem:[%s682 + $0x4e8] sm:$0x1f]
        %v914 = vld [vmem:[%s682 + $0x4f0] sm:$0x1f]
        %v915 = vld [vmem:[%s682 + $0x4f8] sm:$0x1f]
        %v916 = vld [vmem:[%s682 + $0x500] sm:$0x1f]
        %v917 = vld [vmem:[%s682 + $0x508] sm:$0x1f]
        %v918 = vld [vmem:[%s682 + $0x510] sm:$0x1f]
        %v919 = vld [vmem:[%s682 + $0x518] sm:$0x1f]
        %v920 = vld [vmem:[%s682 + $0x520] sm:$0x1f]
        %v921 = vld [vmem:[%s682 + $0x528] sm:$0x1f]
        %v922 = vld [vmem:[%s682 + $0x530] sm:$0x1f]
        %v923 = vld [vmem:[%s682 + $0x538] sm:$0x1f]
        %v924 = vld [vmem:[%s682 + $0x540] sm:$0x1f]
        %v925 = vld [vmem:[%s682 + $0x548] sm:$0x1f]
        %v926 = vld [vmem:[%s682 + $0x550] sm:$0x1f]
        %v927 = vld [vmem:[%s682 + $0x558] sm:$0x1f]
        %v928 = vld [vmem:[%s682 + $0x560] sm:$0x1f]
        %v929 = vld [vmem:[%s682 + $0x568] sm:$0x1f]
        %v930 = vld [vmem:[%s682 + $0x570] sm:$0x1f]
        %v931 = vld [vmem:[%s682 + $0x578] sm:$0x1f]
        %v932 = vld [vmem:[%s682 + $0x580] sm:$0x1f]
        %v933 = vld [vmem:[%s682 + $0x588] sm:$0x1f]
        %v934 = vld [vmem:[%s682 + $0x590] sm:$0x1f]
        %v935 = vld [vmem:[%s682 + $0x598] sm:$0x1f]
        %v936 = vld [vmem:[%s682 + $0x5a0] sm:$0x1f]
        %v937 = vld [vmem:[%s682 + $0x5a8] sm:$0x1f]
        %v938 = vld [vmem:[%s682 + $0x5b0] sm:$0x1f]
        %v939 = vld [vmem:[%s682 + $0x5b8] sm:$0x1f]
        %v940 = vld [vmem:[%s682 + $0x5c0] sm:$0x1f]
        %v941 = vld [vmem:[%s682 + $0x5c8] sm:$0x1f]
        %v942 = vld [vmem:[%s682 + $0x5d0] sm:$0x1f]
        %v943 = vld [vmem:[%s682 + $0x5d8] sm:$0x1f]
        %v944 = vld [vmem:[%s682 + $0x5e0] sm:$0x1f]
        %v945 = vld [vmem:[%s682 + $0x5e8] sm:$0x1f]
        %v946 = vld [vmem:[%s682 + $0x5f0] sm:$0x1f]
        %v947 = vld [vmem:[%s682 + $0x5f8] sm:$0x1f]
        %v948 = vld [vmem:[%s682 + $0x600] sm:$0x1f]
        %v949 = vld [vmem:[%s682 + $0x608] sm:$0x1f]
        %v950 = vld [vmem:[%s682 + $0x610] sm:$0x1f]
        %v951 = vld [vmem:[%s682 + $0x618] sm:$0x1f]
        %v952 = vld [vmem:[%s682 + $0x620] sm:$0x1f]
        %v953 = vld [vmem:[%s682 + $0x628] sm:$0x1f]
        %v954 = vld [vmem:[%s682 + $0x630] sm:$0x1f]
        %v955 = vld [vmem:[%s682 + $0x638] sm:$0x1f]
        %v956 = vld [vmem:[%s682 + $0x640] sm:$0x1f]
        %v957 = vld [vmem:[%s682 + $0x648] sm:$0x1f]
        %v958 = vld [vmem:[%s682 + $0x650] sm:$0x1f]
        %v959 = vld [vmem:[%s682 + $0x658] sm:$0x1f]
        %v960 = vld [vmem:[%s682 + $0x660] sm:$0x1f]
        %v961 = vld [vmem:[%s682 + $0x668] sm:$0x1f]
        %v962 = vld [vmem:[%s682 + $0x670] sm:$0x1f]
        %v963 = vld [vmem:[%s682 + $0x678] sm:$0x1f]
        %v964 = vld [vmem:[%s682 + $0x680] sm:$0x1f]
        %v965 = vld [vmem:[%s682 + $0x688] sm:$0x1f]
        %v966 = vld [vmem:[%s682 + $0x690] sm:$0x1f]
        %v967 = vld [vmem:[%s682 + $0x698] sm:$0x1f]
        %v968 = vld [vmem:[%s682 + $0x6a0] sm:$0x1f]
        %v969 = vld [vmem:[%s682 + $0x6a8] sm:$0x1f]
        %v970 = vld [vmem:[%s682 + $0x6b0] sm:$0x1f]
        %v971 = vld [vmem:[%s682 + $0x6b8] sm:$0x1f]
        %v972 = vld [vmem:[%s682 + $0x6c0] sm:$0x1f]
        %v973 = vld [vmem:[%s682 + $0x6c8] sm:$0x1f]
        %v974 = vld [vmem:[%s682 + $0x6d0] sm:$0x1f]
        %v975 = vld [vmem:[%s682 + $0x6d8] sm:$0x1f]
        %v976 = vld [vmem:[%s682 + $0x6e0] sm:$0x1f]
        %v977 = vld [vmem:[%s682 + $0x6e8] sm:$0x1f]
        %v978 = vld [vmem:[%s682 + $0x6f0] sm:$0x1f]
        %v979 = vld [vmem:[%s682 + $0x6f8] sm:$0x1f]
        %v980 = vld [vmem:[%s682 + $0x700] sm:$0x1f]
        %v981 = vld [vmem:[%s682 + $0x708] sm:$0x1f]
        %v982 = vld [vmem:[%s682 + $0x710] sm:$0x1f]
        %v983 = vld [vmem:[%s682 + $0x718] sm:$0x1f]
        %v984 = vld [vmem:[%s682 + $0x720] sm:$0x1f]
        %v985 = vld [vmem:[%s682 + $0x728] sm:$0x1f]
        %v986 = vld [vmem:[%s682 + $0x730] sm:$0x1f]
        %v987 = vld [vmem:[%s682 + $0x738] sm:$0x1f]
        %v988 = vld [vmem:[%s682 + $0x740] sm:$0x1f]
        %v989 = vld [vmem:[%s682 + $0x748] sm:$0x1f]
        %v990 = vld [vmem:[%s682 + $0x750] sm:$0x1f]
        %v991 = vld [vmem:[%s682 + $0x758] sm:$0x1f]
        %v992 = vld [vmem:[%s682 + $0x760] sm:$0x1f]
        %v993 = vld [vmem:[%s682 + $0x768] sm:$0x1f]
        %v994 = vld [vmem:[%s682 + $0x770] sm:$0x1f]
        %v995 = vld [vmem:[%s682 + $0x778] sm:$0x1f]
        %v996 = vld [vmem:[%s682 + $0x780] sm:$0x1f]
        %v997 = vld [vmem:[%s682 + $0x788] sm:$0x1f]
        %v998 = vld [vmem:[%s682 + $0x790] sm:$0x1f]
        %v999 = vld [vmem:[%s682 + $0x798] sm:$0x1f]
        %v1000 = vld [vmem:[%s682 + $0x7a0] sm:$0x1f]
        %v1001 = vld [vmem:[%s682 + $0x7a8] sm:$0x1f]
        %v1002 = vld [vmem:[%s682 + $0x7b0] sm:$0x1f]
        %v1003 = vld [vmem:[%s682 + $0x7b8] sm:$0x1f]
        %v1004 = vld [vmem:[%s682 + $0x7c0] sm:$0x1f]
        %v1005 = vld [vmem:[%s682 + $0x7c8] sm:$0x1f]
        %v1006 = vld [vmem:[%s682 + $0x7d0] sm:$0x1f]
        %v1007 = vld [vmem:[%s682 + $0x7d8] sm:$0x1f]
        %v1008 = vld [vmem:[%s682 + $0x7e0] sm:$0x1f]
        %v1009 = vld [vmem:[%s682 + $0x7e8] sm:$0x1f]
        %v1010 = vld [vmem:[%s682 + $0x7f0] sm:$0x1f]
        %v1011 = vld [vmem:[%s682 + $0x7f8] sm:$0x1f]
        %v1044 = vcombine.high %v724, %v724
        %v1046 = vunpack.c.l.s4 1983009808
        %v1047 = vunpack.c.0.s8 %v1046
        %v1048 = vlaneseq
        %v1049 = vshrl.u32 %v1048, 7
        %v1050 = vsub.s32 %v1047, %v1049
        %v1051 = vrot.slane %v724, %v1050
        %v1053 = vunpack.c.l.s4 1983009808
        %v1054 = vunpack.c.0.s8 %v1053
        %v1055 = vlaneseq
        %v1056 = vshrl.u32 %v1055, 7
        %v1057 = vsub.s32 %v1054, %v1056
        %v1058 = vrot.slane %v1044, %v1057
        %v1059 = vcombine.high %v1051, %v1051
        %v1060 = vcombine.high %v1058, %v1058
        %v1061 = vcombine.high %v725, %v725
        %v1063 = vunpack.c.l.s4 1983009808
        %v1064 = vunpack.c.0.s8 %v1063
        %v1065 = vlaneseq
        %v1066 = vshrl.u32 %v1065, 7
        %v1067 = vsub.s32 %v1064, %v1066
        %v1068 = vrot.slane %v725, %v1067
        %v1070 = vunpack.c.l.s4 1983009808
        %v1071 = vunpack.c.0.s8 %v1070
        %v1072 = vlaneseq
        %v1073 = vshrl.u32 %v1072, 7
        %v1074 = vsub.s32 %v1071, %v1073
        %v1075 = vrot.slane %v1061, %v1074
        %v1076 = vcombine.high %v1068, %v1068
        %v1077 = vcombine.high %v1075, %v1075
        %v1078 = vcombine.high %v726, %v726
        %v1080 = vunpack.c.l.s4 1983009808
        %v1081 = vunpack.c.0.s8 %v1080
        %v1082 = vlaneseq
        %v1083 = vshrl.u32 %v1082, 7
        %v1084 = vsub.s32 %v1081, %v1083
        %v1085 = vrot.slane %v726, %v1084
        %v1087 = vunpack.c.l.s4 1983009808
        %v1088 = vunpack.c.0.s8 %v1087
        %v1089 = vlaneseq
        %v1090 = vshrl.u32 %v1089, 7
        %v1091 = vsub.s32 %v1088, %v1090
        %v1092 = vrot.slane %v1078, %v1091
        %v1093 = vcombine.high %v1085, %v1085
        %v1094 = vcombine.high %v1092, %v1092
        %v1095 = vcombine.high %v727, %v727
        %v1097 = vunpack.c.l.s4 1983009808
        %v1098 = vunpack.c.0.s8 %v1097
        %v1099 = vlaneseq
        %v1100 = vshrl.u32 %v1099, 7
        %v1101 = vsub.s32 %v1098, %v1100
        %v1102 = vrot.slane %v727, %v1101
        %v1104 = vunpack.c.l.s4 1983009808
        %v1105 = vunpack.c.0.s8 %v1104
        %v1106 = vlaneseq
        %v1107 = vshrl.u32 %v1106, 7
        %v1108 = vsub.s32 %v1105, %v1107
        %v1109 = vrot.slane %v1095, %v1108
        %v1110 = vcombine.high %v1102, %v1102
        %v1111 = vcombine.high %v1109, %v1109
        %v1112 = vcombine.high %v728, %v728
        %v1114 = vunpack.c.l.s4 1983009808
        %v1115 = vunpack.c.0.s8 %v1114
        %v1116 = vlaneseq
        %v1117 = vshrl.u32 %v1116, 7
        %v1118 = vsub.s32 %v1115, %v1117
        %v1119 = vrot.slane %v728, %v1118
        %v1121 = vunpack.c.l.s4 1983009808
        %v1122 = vunpack.c.0.s8 %v1121
        %v1123 = vlaneseq
        %v1124 = vshrl.u32 %v1123, 7
        %v1125 = vsub.s32 %v1122, %v1124
        %v1126 = vrot.slane %v1112, %v1125
        %v1127 = vcombine.high %v1119, %v1119
        %v1128 = vcombine.high %v1126, %v1126
        %v1129 = vcombine.high %v729, %v729
        %v1131 = vunpack.c.l.s4 1983009808
        %v1132 = vunpack.c.0.s8 %v1131
        %v1133 = vlaneseq
        %v1134 = vshrl.u32 %v1133, 7
        %v1135 = vsub.s32 %v1132, %v1134
        %v1136 = vrot.slane %v729, %v1135
        %v1138 = vunpack.c.l.s4 1983009808
        %v1139 = vunpack.c.0.s8 %v1138
        %v1140 = vlaneseq
        %v1141 = vshrl.u32 %v1140, 7
        %v1142 = vsub.s32 %v1139, %v1141
        %v1143 = vrot.slane %v1129, %v1142
        %v1144 = vcombine.high %v1136, %v1136
        %v1145 = vcombine.high %v1143, %v1143
        %v1146 = vcombine.high %v730, %v730
        %v1148 = vunpack.c.l.s4 1983009808
        %v1149 = vunpack.c.0.s8 %v1148
        %v1150 = vlaneseq
        %v1151 = vshrl.u32 %v1150, 7
        %v1152 = vsub.s32 %v1149, %v1151
        %v1153 = vrot.slane %v730, %v1152
        %v1155 = vunpack.c.l.s4 1983009808
        %v1156 = vunpack.c.0.s8 %v1155
        %v1157 = vlaneseq
        %v1158 = vshrl.u32 %v1157, 7
        %v1159 = vsub.s32 %v1156, %v1158
        %v1160 = vrot.slane %v1146, %v1159
        %v1161 = vcombine.high %v1153, %v1153
        %v1162 = vcombine.high %v1160, %v1160
        %v1163 = vcombine.high %v731, %v731
        %v1165 = vunpack.c.l.s4 1983009808
        %v1166 = vunpack.c.0.s8 %v1165
        %v1167 = vlaneseq
        %v1168 = vshrl.u32 %v1167, 7
        %v1169 = vsub.s32 %v1166, %v1168
        %v1170 = vrot.slane %v731, %v1169
        %v1172 = vunpack.c.l.s4 1983009808
        %v1173 = vunpack.c.0.s8 %v1172
        %v1174 = vlaneseq
        %v1175 = vshrl.u32 %v1174, 7
        %v1176 = vsub.s32 %v1173, %v1175
        %v1177 = vrot.slane %v1163, %v1176
        %v1178 = vcombine.high %v1170, %v1170
        %v1179 = vcombine.high %v1177, %v1177
        %v1180 = vcombine.high %v732, %v732
        %v1182 = vunpack.c.l.s4 1983009808
        %v1183 = vunpack.c.0.s8 %v1182
        %v1184 = vlaneseq
        %v1185 = vshrl.u32 %v1184, 7
        %v1186 = vsub.s32 %v1183, %v1185
        %v1187 = vrot.slane %v732, %v1186
        %v1189 = vunpack.c.l.s4 1983009808
        %v1190 = vunpack.c.0.s8 %v1189
        %v1191 = vlaneseq
        %v1192 = vshrl.u32 %v1191, 7
        %v1193 = vsub.s32 %v1190, %v1192
        %v1194 = vrot.slane %v1180, %v1193
        %v1195 = vcombine.high %v1187, %v1187
        %v1196 = vcombine.high %v1194, %v1194
        %v1197 = vcombine.high %v733, %v733
        %v1199 = vunpack.c.l.s4 1983009808
        %v1200 = vunpack.c.0.s8 %v1199
        %v1201 = vlaneseq
        %v1202 = vshrl.u32 %v1201, 7
        %v1203 = vsub.s32 %v1200, %v1202
        %v1204 = vrot.slane %v733, %v1203
        %v1206 = vunpack.c.l.s4 1983009808
        %v1207 = vunpack.c.0.s8 %v1206
        %v1208 = vlaneseq
        %v1209 = vshrl.u32 %v1208, 7
        %v1210 = vsub.s32 %v1207, %v1209
        %v1211 = vrot.slane %v1197, %v1210
        %v1212 = vcombine.high %v1204, %v1204
        %v1213 = vcombine.high %v1211, %v1211
        %v1214 = vcombine.high %v734, %v734
        %v1216 = vunpack.c.l.s4 1983009808
        %v1217 = vunpack.c.0.s8 %v1216
        %v1218 = vlaneseq
        %v1219 = vshrl.u32 %v1218, 7
        %v1220 = vsub.s32 %v1217, %v1219
        %v1221 = vrot.slane %v734, %v1220
        %v1223 = vunpack.c.l.s4 1983009808
        %v1224 = vunpack.c.0.s8 %v1223
        %v1225 = vlaneseq
        %v1226 = vshrl.u32 %v1225, 7
        %v1227 = vsub.s32 %v1224, %v1226
        %v1228 = vrot.slane %v1214, %v1227
        %v1229 = vcombine.high %v1221, %v1221
        %v1230 = vcombine.high %v1228, %v1228
        %v1231 = vcombine.high %v735, %v735
        %v1233 = vunpack.c.l.s4 1983009808
        %v1234 = vunpack.c.0.s8 %v1233
        %v1235 = vlaneseq
        %v1236 = vshrl.u32 %v1235, 7
        %v1237 = vsub.s32 %v1234, %v1236
        %v1238 = vrot.slane %v735, %v1237
        %v1240 = vunpack.c.l.s4 1983009808
        %v1241 = vunpack.c.0.s8 %v1240
        %v1242 = vlaneseq
        %v1243 = vshrl.u32 %v1242, 7
        %v1244 = vsub.s32 %v1241, %v1243
        %v1245 = vrot.slane %v1231, %v1244
        %v1246 = vcombine.high %v1238, %v1238
        %v1247 = vcombine.high %v1245, %v1245
        %v1248 = vcombine.high %v736, %v736
        %v1250 = vunpack.c.l.s4 1983009808
        %v1251 = vunpack.c.0.s8 %v1250
        %v1252 = vlaneseq
        %v1253 = vshrl.u32 %v1252, 7
        %v1254 = vsub.s32 %v1251, %v1253
        %v1255 = vrot.slane %v736, %v1254
        %v1257 = vunpack.c.l.s4 1983009808
        %v1258 = vunpack.c.0.s8 %v1257
        %v1259 = vlaneseq
        %v1260 = vshrl.u32 %v1259, 7
        %v1261 = vsub.s32 %v1258, %v1260
        %v1262 = vrot.slane %v1248, %v1261
        %v1263 = vcombine.high %v1255, %v1255
        %v1264 = vcombine.high %v1262, %v1262
        %v1265 = vcombine.high %v737, %v737
        %v1267 = vunpack.c.l.s4 1983009808
        %v1268 = vunpack.c.0.s8 %v1267
        %v1269 = vlaneseq
        %v1270 = vshrl.u32 %v1269, 7
        %v1271 = vsub.s32 %v1268, %v1270
        %v1272 = vrot.slane %v737, %v1271
        %v1274 = vunpack.c.l.s4 1983009808
        %v1275 = vunpack.c.0.s8 %v1274
        %v1276 = vlaneseq
        %v1277 = vshrl.u32 %v1276, 7
        %v1278 = vsub.s32 %v1275, %v1277
        %v1279 = vrot.slane %v1265, %v1278
        %v1280 = vcombine.high %v1272, %v1272
        %v1281 = vcombine.high %v1279, %v1279
        %v1282 = vcombine.high %v738, %v738
        %v1284 = vunpack.c.l.s4 1983009808
        %v1285 = vunpack.c.0.s8 %v1284
        %v1286 = vlaneseq
        %v1287 = vshrl.u32 %v1286, 7
        %v1288 = vsub.s32 %v1285, %v1287
        %v1289 = vrot.slane %v738, %v1288
        %v1291 = vunpack.c.l.s4 1983009808
        %v1292 = vunpack.c.0.s8 %v1291
        %v1293 = vlaneseq
        %v1294 = vshrl.u32 %v1293, 7
        %v1295 = vsub.s32 %v1292, %v1294
        %v1296 = vrot.slane %v1282, %v1295
        %v1297 = vcombine.high %v1289, %v1289
        %v1298 = vcombine.high %v1296, %v1296
        %v1299 = vcombine.high %v739, %v739
        %v1301 = vunpack.c.l.s4 1983009808
        %v1302 = vunpack.c.0.s8 %v1301
        %v1303 = vlaneseq
        %v1304 = vshrl.u32 %v1303, 7
        %v1305 = vsub.s32 %v1302, %v1304
        %v1306 = vrot.slane %v739, %v1305
        %v1308 = vunpack.c.l.s4 1983009808
        %v1309 = vunpack.c.0.s8 %v1308
        %v1310 = vlaneseq
        %v1311 = vshrl.u32 %v1310, 7
        %v1312 = vsub.s32 %v1309, %v1311
        %v1313 = vrot.slane %v1299, %v1312
        %v1314 = vcombine.high %v1306, %v1306
        %v1315 = vcombine.high %v1313, %v1313
        %v1316 = vcombine.high %v740, %v740
        %v1318 = vunpack.c.l.s4 1983009808
        %v1319 = vunpack.c.0.s8 %v1318
        %v1320 = vlaneseq
        %v1321 = vshrl.u32 %v1320, 7
        %v1322 = vsub.s32 %v1319, %v1321
        %v1323 = vrot.slane %v740, %v1322
        %v1325 = vunpack.c.l.s4 1983009808
        %v1326 = vunpack.c.0.s8 %v1325
        %v1327 = vlaneseq
        %v1328 = vshrl.u32 %v1327, 7
        %v1329 = vsub.s32 %v1326, %v1328
        %v1330 = vrot.slane %v1316, %v1329
        %v1331 = vcombine.high %v1323, %v1323
        %v1332 = vcombine.high %v1330, %v1330
        %v1333 = vcombine.high %v741, %v741
        %v1335 = vunpack.c.l.s4 1983009808
        %v1336 = vunpack.c.0.s8 %v1335
        %v1337 = vlaneseq
        %v1338 = vshrl.u32 %v1337, 7
        %v1339 = vsub.s32 %v1336, %v1338
        %v1340 = vrot.slane %v741, %v1339
        %v1342 = vunpack.c.l.s4 1983009808
        %v1343 = vunpack.c.0.s8 %v1342
        %v1344 = vlaneseq
        %v1345 = vshrl.u32 %v1344, 7
        %v1346 = vsub.s32 %v1343, %v1345
        %v1347 = vrot.slane %v1333, %v1346
        %v1348 = vcombine.high %v1340, %v1340
        %v1349 = vcombine.high %v1347, %v1347
        %v1350 = vcombine.high %v742, %v742
        %v1352 = vunpack.c.l.s4 1983009808
        %v1353 = vunpack.c.0.s8 %v1352
        %v1354 = vlaneseq
        %v1355 = vshrl.u32 %v1354, 7
        %v1356 = vsub.s32 %v1353, %v1355
        %v1357 = vrot.slane %v742, %v1356
        %v1359 = vunpack.c.l.s4 1983009808
        %v1360 = vunpack.c.0.s8 %v1359
        %v1361 = vlaneseq
        %v1362 = vshrl.u32 %v1361, 7
        %v1363 = vsub.s32 %v1360, %v1362
        %v1364 = vrot.slane %v1350, %v1363
        %v1365 = vcombine.high %v1357, %v1357
        %v1366 = vcombine.high %v1364, %v1364
        %v1367 = vcombine.high %v743, %v743
        %v1369 = vunpack.c.l.s4 1983009808
        %v1370 = vunpack.c.0.s8 %v1369
        %v1371 = vlaneseq
        %v1372 = vshrl.u32 %v1371, 7
        %v1373 = vsub.s32 %v1370, %v1372
        %v1374 = vrot.slane %v743, %v1373
        %v1376 = vunpack.c.l.s4 1983009808
        %v1377 = vunpack.c.0.s8 %v1376
        %v1378 = vlaneseq
        %v1379 = vshrl.u32 %v1378, 7
        %v1380 = vsub.s32 %v1377, %v1379
        %v1381 = vrot.slane %v1367, %v1380
        %v1382 = vcombine.high %v1374, %v1374
        %v1383 = vcombine.high %v1381, %v1381
        %v1384 = vcombine.high %v744, %v744
        %v1386 = vunpack.c.l.s4 1983009808
        %v1387 = vunpack.c.0.s8 %v1386
        %v1388 = vlaneseq
        %v1389 = vshrl.u32 %v1388, 7
        %v1390 = vsub.s32 %v1387, %v1389
        %v1391 = vrot.slane %v744, %v1390
        %v1393 = vunpack.c.l.s4 1983009808
        %v1394 = vunpack.c.0.s8 %v1393
        %v1395 = vlaneseq
        %v1396 = vshrl.u32 %v1395, 7
        %v1397 = vsub.s32 %v1394, %v1396
        %v1398 = vrot.slane %v1384, %v1397
        %v1399 = vcombine.high %v1391, %v1391
        %v1400 = vcombine.high %v1398, %v1398
        %v1401 = vcombine.high %v745, %v745
        %v1403 = vunpack.c.l.s4 1983009808
        %v1404 = vunpack.c.0.s8 %v1403
        %v1405 = vlaneseq
        %v1406 = vshrl.u32 %v1405, 7
        %v1407 = vsub.s32 %v1404, %v1406
        %v1408 = vrot.slane %v745, %v1407
        %v1410 = vunpack.c.l.s4 1983009808
        %v1411 = vunpack.c.0.s8 %v1410
        %v1412 = vlaneseq
        %v1413 = vshrl.u32 %v1412, 7
        %v1414 = vsub.s32 %v1411, %v1413
        %v1415 = vrot.slane %v1401, %v1414
        %v1416 = vcombine.high %v1408, %v1408
        %v1417 = vcombine.high %v1415, %v1415
        %v1418 = vcombine.high %v746, %v746
        %v1420 = vunpack.c.l.s4 1983009808
        %v1421 = vunpack.c.0.s8 %v1420
        %v1422 = vlaneseq
        %v1423 = vshrl.u32 %v1422, 7
        %v1424 = vsub.s32 %v1421, %v1423
        %v1425 = vrot.slane %v746, %v1424
        %v1427 = vunpack.c.l.s4 1983009808
        %v1428 = vunpack.c.0.s8 %v1427
        %v1429 = vlaneseq
        %v1430 = vshrl.u32 %v1429, 7
        %v1431 = vsub.s32 %v1428, %v1430
        %v1432 = vrot.slane %v1418, %v1431
        %v1433 = vcombine.high %v1425, %v1425
        %v1434 = vcombine.high %v1432, %v1432
        %v1435 = vcombine.high %v747, %v747
        %v1437 = vunpack.c.l.s4 1983009808
        %v1438 = vunpack.c.0.s8 %v1437
        %v1439 = vlaneseq
        %v1440 = vshrl.u32 %v1439, 7
        %v1441 = vsub.s32 %v1438, %v1440
        %v1442 = vrot.slane %v747, %v1441
        %v1444 = vunpack.c.l.s4 1983009808
        %v1445 = vunpack.c.0.s8 %v1444
        %v1446 = vlaneseq
        %v1447 = vshrl.u32 %v1446, 7
        %v1448 = vsub.s32 %v1445, %v1447
        %v1449 = vrot.slane %v1435, %v1448
        %v1450 = vcombine.high %v1442, %v1442
        %v1451 = vcombine.high %v1449, %v1449
        %v1452 = vcombine.high %v748, %v748
        %v1454 = vunpack.c.l.s4 1983009808
        %v1455 = vunpack.c.0.s8 %v1454
        %v1456 = vlaneseq
        %v1457 = vshrl.u32 %v1456, 7
        %v1458 = vsub.s32 %v1455, %v1457
        %v1459 = vrot.slane %v748, %v1458
        %v1461 = vunpack.c.l.s4 1983009808
        %v1462 = vunpack.c.0.s8 %v1461
        %v1463 = vlaneseq
        %v1464 = vshrl.u32 %v1463, 7
        %v1465 = vsub.s32 %v1462, %v1464
        %v1466 = vrot.slane %v1452, %v1465
        %v1467 = vcombine.high %v1459, %v1459
        %v1468 = vcombine.high %v1466, %v1466
        %v1469 = vcombine.high %v749, %v749
        %v1471 = vunpack.c.l.s4 1983009808
        %v1472 = vunpack.c.0.s8 %v1471
        %v1473 = vlaneseq
        %v1474 = vshrl.u32 %v1473, 7
        %v1475 = vsub.s32 %v1472, %v1474
        %v1476 = vrot.slane %v749, %v1475
        %v1478 = vunpack.c.l.s4 1983009808
        %v1479 = vunpack.c.0.s8 %v1478
        %v1480 = vlaneseq
        %v1481 = vshrl.u32 %v1480, 7
        %v1482 = vsub.s32 %v1479, %v1481
        %v1483 = vrot.slane %v1469, %v1482
        %v1484 = vcombine.high %v1476, %v1476
        %v1485 = vcombine.high %v1483, %v1483
        %v1486 = vcombine.high %v750, %v750
        %v1488 = vunpack.c.l.s4 1983009808
        %v1489 = vunpack.c.0.s8 %v1488
        %v1490 = vlaneseq
        %v1491 = vshrl.u32 %v1490, 7
        %v1492 = vsub.s32 %v1489, %v1491
        %v1493 = vrot.slane %v750, %v1492
        %v1495 = vunpack.c.l.s4 1983009808
        %v1496 = vunpack.c.0.s8 %v1495
        %v1497 = vlaneseq
        %v1498 = vshrl.u32 %v1497, 7
        %v1499 = vsub.s32 %v1496, %v1498
        %v1500 = vrot.slane %v1486, %v1499
        %v1501 = vcombine.high %v1493, %v1493
        %v1502 = vcombine.high %v1500, %v1500
        %v1503 = vcombine.high %v751, %v751
        %v1505 = vunpack.c.l.s4 1983009808
        %v1506 = vunpack.c.0.s8 %v1505
        %v1507 = vlaneseq
        %v1508 = vshrl.u32 %v1507, 7
        %v1509 = vsub.s32 %v1506, %v1508
        %v1510 = vrot.slane %v751, %v1509
        %v1512 = vunpack.c.l.s4 1983009808
        %v1513 = vunpack.c.0.s8 %v1512
        %v1514 = vlaneseq
        %v1515 = vshrl.u32 %v1514, 7
        %v1516 = vsub.s32 %v1513, %v1515
        %v1517 = vrot.slane %v1503, %v1516
        %v1518 = vcombine.high %v1510, %v1510
        %v1519 = vcombine.high %v1517, %v1517
        %v1520 = vcombine.high %v752, %v752
        %v1522 = vunpack.c.l.s4 1983009808
        %v1523 = vunpack.c.0.s8 %v1522
        %v1524 = vlaneseq
        %v1525 = vshrl.u32 %v1524, 7
        %v1526 = vsub.s32 %v1523, %v1525
        %v1527 = vrot.slane %v752, %v1526
        %v1529 = vunpack.c.l.s4 1983009808
        %v1530 = vunpack.c.0.s8 %v1529
        %v1531 = vlaneseq
        %v1532 = vshrl.u32 %v1531, 7
        %v1533 = vsub.s32 %v1530, %v1532
        %v1534 = vrot.slane %v1520, %v1533
        %v1535 = vcombine.high %v1527, %v1527
        %v1536 = vcombine.high %v1534, %v1534
        %v1537 = vcombine.high %v753, %v753
        %v1539 = vunpack.c.l.s4 1983009808
        %v1540 = vunpack.c.0.s8 %v1539
        %v1541 = vlaneseq
        %v1542 = vshrl.u32 %v1541, 7
        %v1543 = vsub.s32 %v1540, %v1542
        %v1544 = vrot.slane %v753, %v1543
        %v1546 = vunpack.c.l.s4 1983009808
        %v1547 = vunpack.c.0.s8 %v1546
        %v1548 = vlaneseq
        %v1549 = vshrl.u32 %v1548, 7
        %v1550 = vsub.s32 %v1547, %v1549
        %v1551 = vrot.slane %v1537, %v1550
        %v1552 = vcombine.high %v1544, %v1544
        %v1553 = vcombine.high %v1551, %v1551
        %v1554 = vcombine.high %v754, %v754
        %v1556 = vunpack.c.l.s4 1983009808
        %v1557 = vunpack.c.0.s8 %v1556
        %v1558 = vlaneseq
        %v1559 = vshrl.u32 %v1558, 7
        %v1560 = vsub.s32 %v1557, %v1559
        %v1561 = vrot.slane %v754, %v1560
        %v1563 = vunpack.c.l.s4 1983009808
        %v1564 = vunpack.c.0.s8 %v1563
        %v1565 = vlaneseq
        %v1566 = vshrl.u32 %v1565, 7
        %v1567 = vsub.s32 %v1564, %v1566
        %v1568 = vrot.slane %v1554, %v1567
        %v1569 = vcombine.high %v1561, %v1561
        %v1570 = vcombine.high %v1568, %v1568
        %v1571 = vcombine.high %v755, %v755
        %v1573 = vunpack.c.l.s4 1983009808
        %v1574 = vunpack.c.0.s8 %v1573
        %v1575 = vlaneseq
        %v1576 = vshrl.u32 %v1575, 7
        %v1577 = vsub.s32 %v1574, %v1576
        %v1578 = vrot.slane %v755, %v1577
        %v1580 = vunpack.c.l.s4 1983009808
        %v1581 = vunpack.c.0.s8 %v1580
        %v1582 = vlaneseq
        %v1583 = vshrl.u32 %v1582, 7
        %v1584 = vsub.s32 %v1581, %v1583
        %v1585 = vrot.slane %v1571, %v1584
        %v1586 = vcombine.high %v1578, %v1578
        %v1587 = vcombine.high %v1585, %v1585
        %1716 = vmatprep.subr.mxu0 %v757
        %1717 = vmatpush1.xpose.msra.mxu0 %v756
        %1718 = vmatprep.subr.mxu0 %v885
        %1719 = vmatpush1.xpose.msra.mxu0 %v884
        %1720 = vmatprep.subr.mxu0 0.0
        %1721 = vmatpush1.xpose.msra.mxu0 0.0
        %1722 = vmatprep.subr.mxu0 0.0
        %1723 = vmatpush1.xpose.msra.mxu0 0.0
        %1724 = vmatprep.subr.mxu0 0.0
        %1725 = vmatpush1.xpose.msra.mxu0 0.0
        %1726 = vmatprep.subr.mxu0 0.0
        %1727 = vmatpush1.xpose.msra.mxu0 0.0
        %1728 = vmatprep.subr.mxu0 0.0
        %1729 = vmatpush1.xpose.msra.mxu0 0.0
        %1730 = vmatprep.subr.mxu0 0.0
        %1731 = vmatpush1.xpose.msra.mxu0 0.0
        %1732 = vmatprep.subr.mxu0 0.0
        %1733 = vmatpush1.xpose.msra.mxu0 0.0
        %1734 = vmatprep.subr.mxu0 0.0
        %1735 = vmatpush1.xpose.msra.mxu0 0.0
        %1736 = vmatprep.subr.mxu0 0.0
        %1737 = vmatpush1.xpose.msra.mxu0 0.0
        %1738 = vmatprep.subr.mxu0 0.0
        %1739 = vmatpush1.xpose.msra.mxu0 0.0
        %1740 = vmatprep.subr.mxu0 0.0
        %1741 = vmatpush1.xpose.msra.mxu0 0.0
        %1742 = vmatprep.subr.mxu0 0.0
        %1743 = vmatpush1.xpose.msra.mxu0 0.0
        %1744 = vmatprep.subr.mxu0 0.0
        %1745 = vmatpush1.xpose.msra.mxu0 0.0
        %1746 = vmatprep.subr.mxu0 0.0
        %1747 = vmatpush1.xpose.msra.mxu0 0.0
        %1748 = vmatprep.subr.mxu0 0.0
        %1749 = vmatpush1.xpose.msra.mxu0 0.0
        %1750 = vmatprep.subr.mxu0 0.0
        %1751 = vmatpush1.xpose.msra.mxu0 0.0
        %1752 = vmatprep.subr.mxu0 0.0
        %1753 = vmatpush1.xpose.msra.mxu0 0.0
        %1754 = vmatprep.subr.mxu0 0.0
        %1755 = vmatpush1.xpose.msra.mxu0 0.0
        %1756 = vmatprep.subr.mxu0 0.0
        %1757 = vmatpush1.xpose.msra.mxu0 0.0
        %1758 = vmatprep.subr.mxu0 0.0
        %1759 = vmatpush1.xpose.msra.mxu0 0.0
        %1760 = vmatprep.subr.mxu0 0.0
        %1761 = vmatpush1.xpose.msra.mxu0 0.0
        %1762 = vmatprep.subr.mxu0 0.0
        %1763 = vmatpush1.xpose.msra.mxu0 0.0
        %1764 = vmatprep.subr.mxu0 0.0
        %1765 = vmatpush1.xpose.msra.mxu0 0.0
        %1766 = vmatprep.subr.mxu0 0.0
        %1767 = vmatpush1.xpose.msra.mxu0 0.0
        %1768 = vmatprep.subr.mxu0 0.0
        %1769 = vmatpush1.xpose.msra.mxu0 0.0
        %1770 = vmatprep.subr.mxu0 0.0
        %1771 = vmatpush1.xpose.msra.mxu0 0.0
        %1772 = vmatprep.subr.mxu0 0.0
        %1773 = vmatpush1.xpose.msra.mxu0 0.0
        %1774 = vmatprep.subr.mxu0 0.0
        %1775 = vmatpush1.xpose.msra.mxu0 0.0
        %1776 = vmatprep.subr.mxu0 0.0
        %1777 = vmatpush1.xpose.msra.mxu0 0.0
        %1778 = vmatprep.subr.mxu0 0.0
        %1779 = vmatpush1.xpose.msra.mxu0 0.0
        %1780 = vmatprep.mubr.f32.mxu0 %v1059
        %1781 = vmatmul.mubr.f32.gmra.mrb[0].mxu0 %v1051
        %v1782 = vpop.f32.mrb[0].mxu0
        %v1783 = vadd.f32 0.0, %v1782
        %v1784 = vpop.f32.mrb[0].mxu0
        %1785 = vdwg.mxu0
        %1786 = vmatprep.subr.mxu0 %v759
        %1787 = vmatpush1.xpose.msra.mxu0 %v758
        %1788 = vmatprep.subr.mxu0 %v887
        %1789 = vmatpush1.xpose.msra.mxu0 %v886
        %1790 = vmatprep.subr.mxu0 0.0
        %1791 = vmatpush1.xpose.msra.mxu0 0.0
        %1792 = vmatprep.subr.mxu0 0.0
        %1793 = vmatpush1.xpose.msra.mxu0 0.0
        %1794 = vmatprep.subr.mxu0 0.0
        %1795 = vmatpush1.xpose.msra.mxu0 0.0
        %1796 = vmatprep.subr.mxu0 0.0
        %1797 = vmatpush1.xpose.msra.mxu0 0.0
        %1798 = vmatprep.subr.mxu0 0.0
        %1799 = vmatpush1.xpose.msra.mxu0 0.0
        %1800 = vmatprep.subr.mxu0 0.0
        %1801 = vmatpush1.xpose.msra.mxu0 0.0
        %1802 = vmatprep.subr.mxu0 0.0
        %1803 = vmatpush1.xpose.msra.mxu0 0.0
        %1804 = vmatprep.subr.mxu0 0.0
        %1805 = vmatpush1.xpose.msra.mxu0 0.0
        %1806 = vmatprep.subr.mxu0 0.0
        %1807 = vmatpush1.xpose.msra.mxu0 0.0
        %1808 = vmatprep.subr.mxu0 0.0
        %1809 = vmatpush1.xpose.msra.mxu0 0.0
        %1810 = vmatprep.subr.mxu0 0.0
        %1811 = vmatpush1.xpose.msra.mxu0 0.0
        %1812 = vmatprep.subr.mxu0 0.0
        %1813 = vmatpush1.xpose.msra.mxu0 0.0
        %1814 = vmatprep.subr.mxu0 0.0
        %1815 = vmatpush1.xpose.msra.mxu0 0.0
        %1816 = vmatprep.subr.mxu0 0.0
        %1817 = vmatpush1.xpose.msra.mxu0 0.0
        %1818 = vmatprep.subr.mxu0 0.0
        %1819 = vmatpush1.xpose.msra.mxu0 0.0
        %1820 = vmatprep.subr.mxu0 0.0
        %1821 = vmatpush1.xpose.msra.mxu0 0.0
        %1822 = vmatprep.subr.mxu0 0.0
        %1823 = vmatpush1.xpose.msra.mxu0 0.0
        %1824 = vmatprep.subr.mxu0 0.0
        %1825 = vmatpush1.xpose.msra.mxu0 0.0
        %1826 = vmatprep.subr.mxu0 0.0
        %1827 = vmatpush1.xpose.msra.mxu0 0.0
        %1828 = vmatprep.subr.mxu0 0.0
        %1829 = vmatpush1.xpose.msra.mxu0 0.0
        %1830 = vmatprep.subr.mxu0 0.0
        %1831 = vmatpush1.xpose.msra.mxu0 0.0
        %1832 = vmatprep.subr.mxu0 0.0
        %1833 = vmatpush1.xpose.msra.mxu0 0.0
        %1834 = vmatprep.subr.mxu0 0.0
        %1835 = vmatpush1.xpose.msra.mxu0 0.0
        %1836 = vmatprep.subr.mxu0 0.0
        %1837 = vmatpush1.xpose.msra.mxu0 0.0
        %1838 = vmatprep.subr.mxu0 0.0
        %1839 = vmatpush1.xpose.msra.mxu0 0.0
        %1840 = vmatprep.subr.mxu0 0.0
        %1841 = vmatpush1.xpose.msra.mxu0 0.0
        %1842 = vmatprep.subr.mxu0 0.0
        %1843 = vmatpush1.xpose.msra.mxu0 0.0
        %1844 = vmatprep.subr.mxu0 0.0
        %1845 = vmatpush1.xpose.msra.mxu0 0.0
        %1846 = vmatprep.subr.mxu0 0.0
        %1847 = vmatpush1.xpose.msra.mxu0 0.0
        %1848 = vmatprep.subr.mxu0 0.0
        %1849 = vmatpush1.xpose.msra.mxu0 0.0
        %1850 = vmatprep.mubr.f32.mxu0 %v1060
        %1851 = vmatmul.mubr.f32.gmra.mrb[0].mxu0 %v1058
        %v1852 = vpop.f32.mrb[0].mxu0
        %v1853 = vadd.f32 %v1783, %v1852
        %v1854 = vpop.f32.mrb[0].mxu0
        %1855 = vdwg.mxu0
        %1856 = vmatprep.subr.mxu0 %v761
        %1857 = vmatpush1.xpose.msra.mxu0 %v760
        %1858 = vmatprep.subr.mxu0 %v889
        %1859 = vmatpush1.xpose.msra.mxu0 %v888
        %1860 = vmatprep.subr.mxu0 0.0
        %1861 = vmatpush1.xpose.msra.mxu0 0.0
        %1862 = vmatprep.subr.mxu0 0.0
        %1863 = vmatpush1.xpose.msra.mxu0 0.0
        %1864 = vmatprep.subr.mxu0 0.0
        %1865 = vmatpush1.xpose.msra.mxu0 0.0
        %1866 = vmatprep.subr.mxu0 0.0
        %1867 = vmatpush1.xpose.msra.mxu0 0.0
        %1868 = vmatprep.subr.mxu0 0.0
        %1869 = vmatpush1.xpose.msra.mxu0 0.0
        %1870 = vmatprep.subr.mxu0 0.0
        %1871 = vmatpush1.xpose.msra.mxu0 0.0
        %1872 = vmatprep.subr.mxu0 0.0
        %1873 = vmatpush1.xpose.msra.mxu0 0.0
        %1874 = vmatprep.subr.mxu0 0.0
        %1875 = vmatpush1.xpose.msra.mxu0 0.0
        %1876 = vmatprep.subr.mxu0 0.0
        %1877 = vmatpush1.xpose.msra.mxu0 0.0
        %1878 = vmatprep.subr.mxu0 0.0
        %1879 = vmatpush1.xpose.msra.mxu0 0.0
        %1880 = vmatprep.subr.mxu0 0.0
        %1881 = vmatpush1.xpose.msra.mxu0 0.0
        %1882 = vmatprep.subr.mxu0 0.0
        %1883 = vmatpush1.xpose.msra.mxu0 0.0
        %1884 = vmatprep.subr.mxu0 0.0
        %1885 = vmatpush1.xpose.msra.mxu0 0.0
        %1886 = vmatprep.subr.mxu0 0.0
        %1887 = vmatpush1.xpose.msra.mxu0 0.0
        %1888 = vmatprep.subr.mxu0 0.0
        %1889 = vmatpush1.xpose.msra.mxu0 0.0
        %1890 = vmatprep.subr.mxu0 0.0
        %1891 = vmatpush1.xpose.msra.mxu0 0.0
        %1892 = vmatprep.subr.mxu0 0.0
        %1893 = vmatpush1.xpose.msra.mxu0 0.0
        %1894 = vmatprep.subr.mxu0 0.0
        %1895 = vmatpush1.xpose.msra.mxu0 0.0
        %1896 = vmatprep.subr.mxu0 0.0
        %1897 = vmatpush1.xpose.msra.mxu0 0.0
        %1898 = vmatprep.subr.mxu0 0.0
        %1899 = vmatpush1.xpose.msra.mxu0 0.0
        %1900 = vmatprep.subr.mxu0 0.0
        %1901 = vmatpush1.xpose.msra.mxu0 0.0
        %1902 = vmatprep.subr.mxu0 0.0
        %1903 = vmatpush1.xpose.msra.mxu0 0.0
        %1904 = vmatprep.subr.mxu0 0.0
        %1905 = vmatpush1.xpose.msra.mxu0 0.0
        %1906 = vmatprep.subr.mxu0 0.0
        %1907 = vmatpush1.xpose.msra.mxu0 0.0
        %1908 = vmatprep.subr.mxu0 0.0
        %1909 = vmatpush1.xpose.msra.mxu0 0.0
        %1910 = vmatprep.subr.mxu0 0.0
        %1911 = vmatpush1.xpose.msra.mxu0 0.0
        %1912 = vmatprep.subr.mxu0 0.0
        %1913 = vmatpush1.xpose.msra.mxu0 0.0
        %1914 = vmatprep.subr.mxu0 0.0
        %1915 = vmatpush1.xpose.msra.mxu0 0.0
        %1916 = vmatprep.subr.mxu0 0.0
        %1917 = vmatpush1.xpose.msra.mxu0 0.0
        %1918 = vmatprep.subr.mxu0 0.0
        %1919 = vmatpush1.xpose.msra.mxu0 0.0
        %1920 = vmatprep.mubr.f32.mxu0 %v1076
        %1921 = vmatmul.mubr.f32.gmra.mrb[0].mxu0 %v1068
        %v1922 = vpop.f32.mrb[0].mxu0
        %v1923 = vadd.f32 %v1853, %v1922
        %v1924 = vpop.f32.mrb[0].mxu0
        %1925 = vdwg.mxu0
        %1926 = vmatprep.subr.mxu0 %v763
        %1927 = vmatpush1.xpose.msra.mxu0 %v762
        %1928 = vmatprep.subr.mxu0 %v891
        %1929 = vmatpush1.xpose.msra.mxu0 %v890
        %1930 = vmatprep.subr.mxu0 0.0
        %1931 = vmatpush1.xpose.msra.mxu0 0.0
        %1932 = vmatprep.subr.mxu0 0.0
        %1933 = vmatpush1.xpose.msra.mxu0 0.0
        %1934 = vmatprep.subr.mxu0 0.0
        %1935 = vmatpush1.xpose.msra.mxu0 0.0
        %1936 = vmatprep.subr.mxu0 0.0
        %1937 = vmatpush1.xpose.msra.mxu0 0.0
        %1938 = vmatprep.subr.mxu0 0.0
        %1939 = vmatpush1.xpose.msra.mxu0 0.0
        %1940 = vmatprep.subr.mxu0 0.0
        %1941 = vmatpush1.xpose.msra.mxu0 0.0
        %1942 = vmatprep.subr.mxu0 0.0
        %1943 = vmatpush1.xpose.msra.mxu0 0.0
        %1944 = vmatprep.subr.mxu0 0.0
        %1945 = vmatpush1.xpose.msra.mxu0 0.0
        %1946 = vmatprep.subr.mxu0 0.0
        %1947 = vmatpush1.xpose.msra.mxu0 0.0
        %1948 = vmatprep.subr.mxu0 0.0
        %1949 = vmatpush1.xpose.msra.mxu0 0.0
        %1950 = vmatprep.subr.mxu0 0.0
        %1951 = vmatpush1.xpose.msra.mxu0 0.0
        %1952 = vmatprep.subr.mxu0 0.0
        %1953 = vmatpush1.xpose.msra.mxu0 0.0
        %1954 = vmatprep.subr.mxu0 0.0
        %1955 = vmatpush1.xpose.msra.mxu0 0.0
        %1956 = vmatprep.subr.mxu0 0.0
        %1957 = vmatpush1.xpose.msra.mxu0 0.0
        %1958 = vmatprep.subr.mxu0 0.0
        %1959 = vmatpush1.xpose.msra.mxu0 0.0
        %1960 = vmatprep.subr.mxu0 0.0
        %1961 = vmatpush1.xpose.msra.mxu0 0.0
        %1962 = vmatprep.subr.mxu0 0.0
        %1963 = vmatpush1.xpose.msra.mxu0 0.0
        %1964 = vmatprep.subr.mxu0 0.0
        %1965 = vmatpush1.xpose.msra.mxu0 0.0
        %1966 = vmatprep.subr.mxu0 0.0
        %1967 = vmatpush1.xpose.msra.mxu0 0.0
        %1968 = vmatprep.subr.mxu0 0.0
        %1969 = vmatpush1.xpose.msra.mxu0 0.0
        %1970 = vmatprep.subr.mxu0 0.0
        %1971 = vmatpush1.xpose.msra.mxu0 0.0
        %1972 = vmatprep.subr.mxu0 0.0
        %1973 = vmatpush1.xpose.msra.mxu0 0.0
        %1974 = vmatprep.subr.mxu0 0.0
        %1975 = vmatpush1.xpose.msra.mxu0 0.0
        %1976 = vmatprep.subr.mxu0 0.0
        %1977 = vmatpush1.xpose.msra.mxu0 0.0
        %1978 = vmatprep.subr.mxu0 0.0
        %1979 = vmatpush1.xpose.msra.mxu0 0.0
        %1980 = vmatprep.subr.mxu0 0.0
        %1981 = vmatpush1.xpose.msra.mxu0 0.0
        %1982 = vmatprep.subr.mxu0 0.0
        %1983 = vmatpush1.xpose.msra.mxu0 0.0
        %1984 = vmatprep.subr.mxu0 0.0
        %1985 = vmatpush1.xpose.msra.mxu0 0.0
        %1986 = vmatprep.subr.mxu0 0.0
        %1987 = vmatpush1.xpose.msra.mxu0 0.0
        %1988 = vmatprep.subr.mxu0 0.0
        %1989 = vmatpush1.xpose.msra.mxu0 0.0
        %1990 = vmatprep.mubr.f32.mxu0 %v1077
        %1991 = vmatmul.mubr.f32.gmra.mrb[0].mxu0 %v1075
        %v1992 = vpop.f32.mrb[0].mxu0
        %v1993 = vadd.f32 %v1923, %v1992
        %v1994 = vpop.f32.mrb[0].mxu0
        %1995 = vdwg.mxu0
        %1996 = vmatprep.subr.mxu0 %v765
        %1997 = vmatpush1.xpose.msra.mxu0 %v764
        %1998 = vmatprep.subr.mxu0 %v893
        %1999 = vmatpush1.xpose.msra.mxu0 %v892
        %2000 = vmatprep.subr.mxu0 0.0
        %2001 = vmatpush1.xpose.msra.mxu0 0.0
        %2002 = vmatprep.subr.mxu0 0.0
        %2003 = vmatpush1.xpose.msra.mxu0 0.0
        %2004 = vmatprep.subr.mxu0 0.0
        %2005 = vmatpush1.xpose.msra.mxu0 0.0
        %2006 = vmatprep.subr.mxu0 0.0
        %2007 = vmatpush1.xpose.msra.mxu0 0.0
        %2008 = vmatprep.subr.mxu0 0.0
        %2009 = vmatpush1.xpose.msra.mxu0 0.0
        %2010 = vmatprep.subr.mxu0 0.0
        %2011 = vmatpush1.xpose.msra.mxu0 0.0
        %2012 = vmatprep.subr.mxu0 0.0
        %2013 = vmatpush1.xpose.msra.mxu0 0.0
        %2014 = vmatprep.subr.mxu0 0.0
        %2015 = vmatpush1.xpose.msra.mxu0 0.0
        %2016 = vmatprep.subr.mxu0 0.0
        %2017 = vmatpush1.xpose.msra.mxu0 0.0
        %2018 = vmatprep.subr.mxu0 0.0
        %2019 = vmatpush1.xpose.msra.mxu0 0.0
        %2020 = vmatprep.subr.mxu0 0.0
        %2021 = vmatpush1.xpose.msra.mxu0 0.0
        %2022 = vmatprep.subr.mxu0 0.0
        %2023 = vmatpush1.xpose.msra.mxu0 0.0
        %2024 = vmatprep.subr.mxu0 0.0
        %2025 = vmatpush1.xpose.msra.mxu0 0.0
        %2026 = vmatprep.subr.mxu0 0.0
        %2027 = vmatpush1.xpose.msra.mxu0 0.0
        %2028 = vmatprep.subr.mxu0 0.0
        %2029 = vmatpush1.xpose.msra.mxu0 0.0
        %2030 = vmatprep.subr.mxu0 0.0
        %2031 = vmatpush1.xpose.msra.mxu0 0.0
        %2032 = vmatprep.subr.mxu0 0.0
        %2033 = vmatpush1.xpose.msra.mxu0 0.0
        %2034 = vmatprep.subr.mxu0 0.0
        %2035 = vmatpush1.xpose.msra.mxu0 0.0
        %2036 = vmatprep.subr.mxu0 0.0
        %2037 = vmatpush1.xpose.msra.mxu0 0.0
        %2038 = vmatprep.subr.mxu0 0.0
        %2039 = vmatpush1.xpose.msra.mxu0 0.0
        %2040 = vmatprep.subr.mxu0 0.0
        %2041 = vmatpush1.xpose.msra.mxu0 0.0
        %2042 = vmatprep.subr.mxu0 0.0
        %2043 = vmatpush1.xpose.msra.mxu0 0.0
        %2044 = vmatprep.subr.mxu0 0.0
        %2045 = vmatpush1.xpose.msra.mxu0 0.0
        %2046 = vmatprep.subr.mxu0 0.0
        %2047 = vmatpush1.xpose.msra.mxu0 0.0
        %2048 = vmatprep.subr.mxu0 0.0
        %2049 = vmatpush1.xpose.msra.mxu0 0.0
        %2050 = vmatprep.subr.mxu0 0.0
        %2051 = vmatpush1.xpose.msra.mxu0 0.0
        %2052 = vmatprep.subr.mxu0 0.0
        %2053 = vmatpush1.xpose.msra.mxu0 0.0
        %2054 = vmatprep.subr.mxu0 0.0
        %2055 = vmatpush1.xpose.msra.mxu0 0.0
        %2056 = vmatprep.subr.mxu0 0.0
        %2057 = vmatpush1.xpose.msra.mxu0 0.0
        %2058 = vmatprep.subr.mxu0 0.0
        %2059 = vmatpush1.xpose.msra.mxu0 0.0
        %2060 = vmatprep.mubr.f32.mxu0 %v1093
        %2061 = vmatmul.mubr.f32.gmra.mrb[0].mxu0 %v1085
        %v2062 = vpop.f32.mrb[0].mxu0
        %v2063 = vadd.f32 %v1993, %v2062
        %v2064 = vpop.f32.mrb[0].mxu0
        %2065 = vdwg.mxu0
        %2066 = vmatprep.subr.mxu0 %v767
        %2067 = vmatpush1.xpose.msra.mxu0 %v766
        %2068 = vmatprep.subr.mxu0 %v895
        %2069 = vmatpush1.xpose.msra.mxu0 %v894
        %2070 = vmatprep.subr.mxu0 0.0
        %2071 = vmatpush1.xpose.msra.mxu0 0.0
        %2072 = vmatprep.subr.mxu0 0.0
        %2073 = vmatpush1.xpose.msra.mxu0 0.0
        %2074 = vmatprep.subr.mxu0 0.0
        %2075 = vmatpush1.xpose.msra.mxu0 0.0
        %2076 = vmatprep.subr.mxu0 0.0
        %2077 = vmatpush1.xpose.msra.mxu0 0.0
        %2078 = vmatprep.subr.mxu0 0.0
        %2079 = vmatpush1.xpose.msra.mxu0 0.0
        %2080 = vmatprep.subr.mxu0 0.0
        %2081 = vmatpush1.xpose.msra.mxu0 0.0
        %2082 = vmatprep.subr.mxu0 0.0
        %2083 = vmatpush1.xpose.msra.mxu0 0.0
        %2084 = vmatprep.subr.mxu0 0.0
        %2085 = vmatpush1.xpose.msra.mxu0 0.0
        %2086 = vmatprep.subr.mxu0 0.0
        %2087 = vmatpush1.xpose.msra.mxu0 0.0
        %2088 = vmatprep.subr.mxu0 0.0
        %2089 = vmatpush1.xpose.msra.mxu0 0.0
        %2090 = vmatprep.subr.mxu0 0.0
        %2091 = vmatpush1.xpose.msra.mxu0 0.0
        %2092 = vmatprep.subr.mxu0 0.0
        %2093 = vmatpush1.xpose.msra.mxu0 0.0
        %2094 = vmatprep.subr.mxu0 0.0
        %2095 = vmatpush1.xpose.msra.mxu0 0.0
        %2096 = vmatprep.subr.mxu0 0.0
        %2097 = vmatpush1.xpose.msra.mxu0 0.0
        %2098 = vmatprep.subr.mxu0 0.0
        %2099 = vmatpush1.xpose.msra.mxu0 0.0
        %2100 = vmatprep.subr.mxu0 0.0
        %2101 = vmatpush1.xpose.msra.mxu0 0.0
        %2102 = vmatprep.subr.mxu0 0.0
        %2103 = vmatpush1.xpose.msra.mxu0 0.0
        %2104 = vmatprep.subr.mxu0 0.0
        %2105 = vmatpush1.xpose.msra.mxu0 0.0
        %2106 = vmatprep.subr.mxu0 0.0
        %2107 = vmatpush1.xpose.msra.mxu0 0.0
        %2108 = vmatprep.subr.mxu0 0.0
        %2109 = vmatpush1.xpose.msra.mxu0 0.0
        %2110 = vmatprep.subr.mxu0 0.0
        %2111 = vmatpush1.xpose.msra.mxu0 0.0
        %2112 = vmatprep.subr.mxu0 0.0
        %2113 = vmatpush1.xpose.msra.mxu0 0.0
        %2114 = vmatprep.subr.mxu0 0.0
        %2115 = vmatpush1.xpose.msra.mxu0 0.0
        %2116 = vmatprep.subr.mxu0 0.0
        %2117 = vmatpush1.xpose.msra.mxu0 0.0
        %2118 = vmatprep.subr.mxu0 0.0
        %2119 = vmatpush1.xpose.msra.mxu0 0.0
        %2120 = vmatprep.subr.mxu0 0.0
        %2121 = vmatpush1.xpose.msra.mxu0 0.0
        %2122 = vmatprep.subr.mxu0 0.0
        %2123 = vmatpush1.xpose.msra.mxu0 0.0
        %2124 = vmatprep.subr.mxu0 0.0
        %2125 = vmatpush1.xpose.msra.mxu0 0.0
        %2126 = vmatprep.subr.mxu0 0.0
        %2127 = vmatpush1.xpose.msra.mxu0 0.0
        %2128 = vmatprep.subr.mxu0 0.0
        %2129 = vmatpush1.xpose.msra.mxu0 0.0
        %2130 = vmatprep.mubr.f32.mxu0 %v1094
        %2131 = vmatmul.mubr.f32.gmra.mrb[0].mxu0 %v1092
        %v2132 = vpop.f32.mrb[0].mxu0
        %v2133 = vadd.f32 %v2063, %v2132
        %v2134 = vpop.f32.mrb[0].mxu0
        %2135 = vdwg.mxu0
        %2136 = vmatprep.subr.mxu0 %v769
        %2137 = vmatpush1.xpose.msra.mxu0 %v768
        %2138 = vmatprep.subr.mxu0 %v897
        %2139 = vmatpush1.xpose.msra.mxu0 %v896
        %2140 = vmatprep.subr.mxu0 0.0
        %2141 = vmatpush1.xpose.msra.mxu0 0.0
        %2142 = vmatprep.subr.mxu0 0.0
        %2143 = vmatpush1.xpose.msra.mxu0 0.0
        %2144 = vmatprep.subr.mxu0 0.0
        %2145 = vmatpush1.xpose.msra.mxu0 0.0
        %2146 = vmatprep.subr.mxu0 0.0
        %2147 = vmatpush1.xpose.msra.mxu0 0.0
        %2148 = vmatprep.subr.mxu0 0.0
        %2149 = vmatpush1.xpose.msra.mxu0 0.0
        %2150 = vmatprep.subr.mxu0 0.0
        %2151 = vmatpush1.xpose.msra.mxu0 0.0
        %2152 = vmatprep.subr.mxu0 0.0
        %2153 = vmatpush1.xpose.msra.mxu0 0.0
        %2154 = vmatprep.subr.mxu0 0.0
        %2155 = vmatpush1.xpose.msra.mxu0 0.0
        %2156 = vmatprep.subr.mxu0 0.0
        %2157 = vmatpush1.xpose.msra.mxu0 0.0
        %2158 = vmatprep.subr.mxu0 0.0
        %2159 = vmatpush1.xpose.msra.mxu0 0.0
        %2160 = vmatprep.subr.mxu0 0.0
        %2161 = vmatpush1.xpose.msra.mxu0 0.0
        %2162 = vmatprep.subr.mxu0 0.0
        %2163 = vmatpush1.xpose.msra.mxu0 0.0
        %2164 = vmatprep.subr.mxu0 0.0
        %2165 = vmatpush1.xpose.msra.mxu0 0.0
        %2166 = vmatprep.subr.mxu0 0.0
        %2167 = vmatpush1.xpose.msra.mxu0 0.0
        %2168 = vmatprep.subr.mxu0 0.0
        %2169 = vmatpush1.xpose.msra.mxu0 0.0
        %2170 = vmatprep.subr.mxu0 0.0
        %2171 = vmatpush1.xpose.msra.mxu0 0.0
        %2172 = vmatprep.subr.mxu0 0.0
        %2173 = vmatpush1.xpose.msra.mxu0 0.0
        %2174 = vmatprep.subr.mxu0 0.0
        %2175 = vmatpush1.xpose.msra.mxu0 0.0
        %2176 = vmatprep.subr.mxu0 0.0
        %2177 = vmatpush1.xpose.msra.mxu0 0.0
        %2178 = vmatprep.subr.mxu0 0.0
        %2179 = vmatpush1.xpose.msra.mxu0 0.0
        %2180 = vmatprep.subr.mxu0 0.0
        %2181 = vmatpush1.xpose.msra.mxu0 0.0
        %2182 = vmatprep.subr.mxu0 0.0
        %2183 = vmatpush1.xpose.msra.mxu0 0.0
        %2184 = vmatprep.subr.mxu0 0.0
        %2185 = vmatpush1.xpose.msra.mxu0 0.0
        %2186 = vmatprep.subr.mxu0 0.0
        %2187 = vmatpush1.xpose.msra.mxu0 0.0
        %2188 = vmatprep.subr.mxu0 0.0
        %2189 = vmatpush1.xpose.msra.mxu0 0.0
        %2190 = vmatprep.subr.mxu0 0.0
        %2191 = vmatpush1.xpose.msra.mxu0 0.0
        %2192 = vmatprep.subr.mxu0 0.0
        %2193 = vmatpush1.xpose.msra.mxu0 0.0
        %2194 = vmatprep.subr.mxu0 0.0
        %2195 = vmatpush1.xpose.msra.mxu0 0.0
        %2196 = vmatprep.subr.mxu0 0.0
        %2197 = vmatpush1.xpose.msra.mxu0 0.0
        %2198 = vmatprep.subr.mxu0 0.0
        %2199 = vmatpush1.xpose.msra.mxu0 0.0
        %2200 = vmatprep.mubr.f32.mxu0 %v1110
        %2201 = vmatmul.mubr.f32.gmra.mrb[0].mxu0 %v1102
        %v2202 = vpop.f32.mrb[0].mxu0
        %v2203 = vadd.f32 %v2133, %v2202
        %v2204 = vpop.f32.mrb[0].mxu0
        %2205 = vdwg.mxu0
        %2206 = vmatprep.subr.mxu0 %v771
        %2207 = vmatpush1.xpose.msra.mxu0 %v770
        %2208 = vmatprep.subr.mxu0 %v899
        %2209 = vmatpush1.xpose.msra.mxu0 %v898
        %2210 = vmatprep.subr.mxu0 0.0
        %2211 = vmatpush1.xpose.msra.mxu0 0.0
        %2212 = vmatprep.subr.mxu0 0.0
        %2213 = vmatpush1.xpose.msra.mxu0 0.0
        %2214 = vmatprep.subr.mxu0 0.0
        %2215 = vmatpush1.xpose.msra.mxu0 0.0
        %2216 = vmatprep.subr.mxu0 0.0
        %2217 = vmatpush1.xpose.msra.mxu0 0.0
        %2218 = vmatprep.subr.mxu0 0.0
        %2219 = vmatpush1.xpose.msra.mxu0 0.0
        %2220 = vmatprep.subr.mxu0 0.0
        %2221 = vmatpush1.xpose.msra.mxu0 0.0
        %2222 = vmatprep.subr.mxu0 0.0
        %2223 = vmatpush1.xpose.msra.mxu0 0.0
        %2224 = vmatprep.subr.mxu0 0.0
        %2225 = vmatpush1.xpose.msra.mxu0 0.0
        %2226 = vmatprep.subr.mxu0 0.0
        %2227 = vmatpush1.xpose.msra.mxu0 0.0
        %2228 = vmatprep.subr.mxu0 0.0
        %2229 = vmatpush1.xpose.msra.mxu0 0.0
        %2230 = vmatprep.subr.mxu0 0.0
        %2231 = vmatpush1.xpose.msra.mxu0 0.0
        %2232 = vmatprep.subr.mxu0 0.0
        %2233 = vmatpush1.xpose.msra.mxu0 0.0
        %2234 = vmatprep.subr.mxu0 0.0
        %2235 = vmatpush1.xpose.msra.mxu0 0.0
        %2236 = vmatprep.subr.mxu0 0.0
        %2237 = vmatpush1.xpose.msra.mxu0 0.0
        %2238 = vmatprep.subr.mxu0 0.0
        %2239 = vmatpush1.xpose.msra.mxu0 0.0
        %2240 = vmatprep.subr.mxu0 0.0
        %2241 = vmatpush1.xpose.msra.mxu0 0.0
        %2242 = vmatprep.subr.mxu0 0.0
        %2243 = vmatpush1.xpose.msra.mxu0 0.0
        %2244 = vmatprep.subr.mxu0 0.0
        %2245 = vmatpush1.xpose.msra.mxu0 0.0
        %2246 = vmatprep.subr.mxu0 0.0
        %2247 = vmatpush1.xpose.msra.mxu0 0.0
        %2248 = vmatprep.subr.mxu0 0.0
        %2249 = vmatpush1.xpose.msra.mxu0 0.0
        %2250 = vmatprep.subr.mxu0 0.0
        %2251 = vmatpush1.xpose.msra.mxu0 0.0
        %2252 = vmatprep.subr.mxu0 0.0
        %2253 = vmatpush1.xpose.msra.mxu0 0.0
        %2254 = vmatprep.subr.mxu0 0.0
        %2255 = vmatpush1.xpose.msra.mxu0 0.0
        %2256 = vmatprep.subr.mxu0 0.0
        %2257 = vmatpush1.xpose.msra.mxu0 0.0
        %2258 = vmatprep.subr.mxu0 0.0
        %2259 = vmatpush1.xpose.msra.mxu0 0.0
        %2260 = vmatprep.subr.mxu0 0.0
        %2261 = vmatpush1.xpose.msra.mxu0 0.0
        %2262 = vmatprep.subr.mxu0 0.0
        %2263 = vmatpush1.xpose.msra.mxu0 0.0
        %2264 = vmatprep.subr.mxu0 0.0
        %2265 = vmatpush1.xpose.msra.mxu0 0.0
        %2266 = vmatprep.subr.mxu0 0.0
        %2267 = vmatpush1.xpose.msra.mxu0 0.0
        %2268 = vmatprep.subr.mxu0 0.0
        %2269 = vmatpush1.xpose.msra.mxu0 0.0
        %2270 = vmatprep.mubr.f32.mxu0 %v1111
        %2271 = vmatmul.mubr.f32.gmra.mrb[0].mxu0 %v1109
        %v2272 = vpop.f32.mrb[0].mxu0
        %v2273 = vadd.f32 %v2203, %v2272
        %v2274 = vpop.f32.mrb[0].mxu0
        %2275 = vdwg.mxu0
        %2276 = vmatprep.subr.mxu0 %v773
        %2277 = vmatpush1.xpose.msra.mxu0 %v772
        %2278 = vmatprep.subr.mxu0 %v901
        %2279 = vmatpush1.xpose.msra.mxu0 %v900
        %2280 = vmatprep.subr.mxu0 0.0
        %2281 = vmatpush1.xpose.msra.mxu0 0.0
        %2282 = vmatprep.subr.mxu0 0.0
        %2283 = vmatpush1.xpose.msra.mxu0 0.0
        %2284 = vmatprep.subr.mxu0 0.0
        %2285 = vmatpush1.xpose.msra.mxu0 0.0
        %2286 = vmatprep.subr.mxu0 0.0
        %2287 = vmatpush1.xpose.msra.mxu0 0.0
        %2288 = vmatprep.subr.mxu0 0.0
        %2289 = vmatpush1.xpose.msra.mxu0 0.0
        %2290 = vmatprep.subr.mxu0 0.0
        %2291 = vmatpush1.xpose.msra.mxu0 0.0
        %2292 = vmatprep.subr.mxu0 0.0
        %2293 = vmatpush1.xpose.msra.mxu0 0.0
        %2294 = vmatprep.subr.mxu0 0.0
        %2295 = vmatpush1.xpose.msra.mxu0 0.0
        %2296 = vmatprep.subr.mxu0 0.0
        %2297 = vmatpush1.xpose.msra.mxu0 0.0
        %2298 = vmatprep.subr.mxu0 0.0
        %2299 = vmatpush1.xpose.msra.mxu0 0.0
        %2300 = vmatprep.subr.mxu0 0.0
        %2301 = vmatpush1.xpose.msra.mxu0 0.0
        %2302 = vmatprep.subr.mxu0 0.0
        %2303 = vmatpush1.xpose.msra.mxu0 0.0
        %2304 = vmatprep.subr.mxu0 0.0
        %2305 = vmatpush1.xpose.msra.mxu0 0.0
        %2306 = vmatprep.subr.mxu0 0.0
        %2307 = vmatpush1.xpose.msra.mxu0 0.0
        %2308 = vmatprep.subr.mxu0 0.0
        %2309 = vmatpush1.xpose.msra.mxu0 0.0
        %2310 = vmatprep.subr.mxu0 0.0
        %2311 = vmatpush1.xpose.msra.mxu0 0.0
        %2312 = vmatprep.subr.mxu0 0.0
        %2313 = vmatpush1.xpose.msra.mxu0 0.0
        %2314 = vmatprep.subr.mxu0 0.0
        %2315 = vmatpush1.xpose.msra.mxu0 0.0
        %2316 = vmatprep.subr.mxu0 0.0
        %2317 = vmatpush1.xpose.msra.mxu0 0.0
        %2318 = vmatprep.subr.mxu0 0.0
        %2319 = vmatpush1.xpose.msra.mxu0 0.0
        %2320 = vmatprep.subr.mxu0 0.0
        %2321 = vmatpush1.xpose.msra.mxu0 0.0
        %2322 = vmatprep.subr.mxu0 0.0
        %2323 = vmatpush1.xpose.msra.mxu0 0.0
        %2324 = vmatprep.subr.mxu0 0.0
        %2325 = vmatpush1.xpose.msra.mxu0 0.0
        %2326 = vmatprep.subr.mxu0 0.0
        %2327 = vmatpush1.xpose.msra.mxu0 0.0
        %2328 = vmatprep.subr.mxu0 0.0
        %2329 = vmatpush1.xpose.msra.mxu0 0.0
        %2330 = vmatprep.subr.mxu0 0.0
        %2331 = vmatpush1.xpose.msra.mxu0 0.0
        %2332 = vmatprep.subr.mxu0 0.0
        %2333 = vmatpush1.xpose.msra.mxu0 0.0
        %2334 = vmatprep.subr.mxu0 0.0
        %2335 = vmatpush1.xpose.msra.mxu0 0.0
        %2336 = vmatprep.subr.mxu0 0.0
        %2337 = vmatpush1.xpose.msra.mxu0 0.0
        %2338 = vmatprep.subr.mxu0 0.0
        %2339 = vmatpush1.xpose.msra.mxu0 0.0
        %2340 = vmatprep.mubr.f32.mxu0 %v1127
        %2341 = vmatmul.mubr.f32.gmra.mrb[0].mxu0 %v1119
        %v2342 = vpop.f32.mrb[0].mxu0
        %v2343 = vadd.f32 %v2273, %v2342
        %v2344 = vpop.f32.mrb[0].mxu0
        %2345 = vdwg.mxu0
        %2346 = vmatprep.subr.mxu0 %v775
        %2347 = vmatpush1.xpose.msra.mxu0 %v774
        %2348 = vmatprep.subr.mxu0 %v903
        %2349 = vmatpush1.xpose.msra.mxu0 %v902
        %2350 = vmatprep.subr.mxu0 0.0
        %2351 = vmatpush1.xpose.msra.mxu0 0.0
        %2352 = vmatprep.subr.mxu0 0.0
        %2353 = vmatpush1.xpose.msra.mxu0 0.0
        %2354 = vmatprep.subr.mxu0 0.0
        %2355 = vmatpush1.xpose.msra.mxu0 0.0
        %2356 = vmatprep.subr.mxu0 0.0
        %2357 = vmatpush1.xpose.msra.mxu0 0.0
        %2358 = vmatprep.subr.mxu0 0.0
        %2359 = vmatpush1.xpose.msra.mxu0 0.0
        %2360 = vmatprep.subr.mxu0 0.0
        %2361 = vmatpush1.xpose.msra.mxu0 0.0
        %2362 = vmatprep.subr.mxu0 0.0
        %2363 = vmatpush1.xpose.msra.mxu0 0.0
        %2364 = vmatprep.subr.mxu0 0.0
        %2365 = vmatpush1.xpose.msra.mxu0 0.0
        %2366 = vmatprep.subr.mxu0 0.0
        %2367 = vmatpush1.xpose.msra.mxu0 0.0
        %2368 = vmatprep.subr.mxu0 0.0
        %2369 = vmatpush1.xpose.msra.mxu0 0.0
        %2370 = vmatprep.subr.mxu0 0.0
        %2371 = vmatpush1.xpose.msra.mxu0 0.0
        %2372 = vmatprep.subr.mxu0 0.0
        %2373 = vmatpush1.xpose.msra.mxu0 0.0
        %2374 = vmatprep.subr.mxu0 0.0
        %2375 = vmatpush1.xpose.msra.mxu0 0.0
        %2376 = vmatprep.subr.mxu0 0.0
        %2377 = vmatpush1.xpose.msra.mxu0 0.0
        %2378 = vmatprep.subr.mxu0 0.0
        %2379 = vmatpush1.xpose.msra.mxu0 0.0
        %2380 = vmatprep.subr.mxu0 0.0
        %2381 = vmatpush1.xpose.msra.mxu0 0.0
        %2382 = vmatprep.subr.mxu0 0.0
        %2383 = vmatpush1.xpose.msra.mxu0 0.0
        %2384 = vmatprep.subr.mxu0 0.0
        %2385 = vmatpush1.xpose.msra.mxu0 0.0
        %2386 = vmatprep.subr.mxu0 0.0
        %2387 = vmatpush1.xpose.msra.mxu0 0.0
        %2388 = vmatprep.subr.mxu0 0.0
        %2389 = vmatpush1.xpose.msra.mxu0 0.0
        %2390 = vmatprep.subr.mxu0 0.0
        %2391 = vmatpush1.xpose.msra.mxu0 0.0
        %2392 = vmatprep.subr.mxu0 0.0
        %2393 = vmatpush1.xpose.msra.mxu0 0.0
        %2394 = vmatprep.subr.mxu0 0.0
        %2395 = vmatpush1.xpose.msra.mxu0 0.0
        %2396 = vmatprep.subr.mxu0 0.0
        %2397 = vmatpush1.xpose.msra.mxu0 0.0
        %2398 = vmatprep.subr.mxu0 0.0
        %2399 = vmatpush1.xpose.msra.mxu0 0.0
        %2400 = vmatprep.subr.mxu0 0.0
        %2401 = vmatpush1.xpose.msra.mxu0 0.0
        %2402 = vmatprep.subr.mxu0 0.0
        %2403 = vmatpush1.xpose.msra.mxu0 0.0
        %2404 = vmatprep.subr.mxu0 0.0
        %2405 = vmatpush1.xpose.msra.mxu0 0.0
        %2406 = vmatprep.subr.mxu0 0.0
        %2407 = vmatpush1.xpose.msra.mxu0 0.0
        %2408 = vmatprep.subr.mxu0 0.0
        %2409 = vmatpush1.xpose.msra.mxu0 0.0
        %2410 = vmatprep.mubr.f32.mxu0 %v1128
        %2411 = vmatmul.mubr.f32.gmra.mrb[0].mxu0 %v1126
        %v2412 = vpop.f32.mrb[0].mxu0
        %v2413 = vadd.f32 %v2343, %v2412
        %v2414 = vpop.f32.mrb[0].mxu0
        %2415 = vdwg.mxu0
        %2416 = vmatprep.subr.mxu0 %v777
        %2417 = vmatpush1.xpose.msra.mxu0 %v776
        %2418 = vmatprep.subr.mxu0 %v905
        %2419 = vmatpush1.xpose.msra.mxu0 %v904
        %2420 = vmatprep.subr.mxu0 0.0
        %2421 = vmatpush1.xpose.msra.mxu0 0.0
        %2422 = vmatprep.subr.mxu0 0.0
        %2423 = vmatpush1.xpose.msra.mxu0 0.0
        %2424 = vmatprep.subr.mxu0 0.0
        %2425 = vmatpush1.xpose.msra.mxu0 0.0
        %2426 = vmatprep.subr.mxu0 0.0
        %2427 = vmatpush1.xpose.msra.mxu0 0.0
        %2428 = vmatprep.subr.mxu0 0.0
        %2429 = vmatpush1.xpose.msra.mxu0 0.0
        %2430 = vmatprep.subr.mxu0 0.0
        %2431 = vmatpush1.xpose.msra.mxu0 0.0
        %2432 = vmatprep.subr.mxu0 0.0
        %2433 = vmatpush1.xpose.msra.mxu0 0.0
        %2434 = vmatprep.subr.mxu0 0.0
        %2435 = vmatpush1.xpose.msra.mxu0 0.0
        %2436 = vmatprep.subr.mxu0 0.0
        %2437 = vmatpush1.xpose.msra.mxu0 0.0
        %2438 = vmatprep.subr.mxu0 0.0
        %2439 = vmatpush1.xpose.msra.mxu0 0.0
        %2440 = vmatprep.subr.mxu0 0.0
        %2441 = vmatpush1.xpose.msra.mxu0 0.0
        %2442 = vmatprep.subr.mxu0 0.0
        %2443 = vmatpush1.xpose.msra.mxu0 0.0
        %2444 = vmatprep.subr.mxu0 0.0
        %2445 = vmatpush1.xpose.msra.mxu0 0.0
        %2446 = vmatprep.subr.mxu0 0.0
        %2447 = vmatpush1.xpose.msra.mxu0 0.0
        %2448 = vmatprep.subr.mxu0 0.0
        %2449 = vmatpush1.xpose.msra.mxu0 0.0
        %2450 = vmatprep.subr.mxu0 0.0
        %2451 = vmatpush1.xpose.msra.mxu0 0.0
        %2452 = vmatprep.subr.mxu0 0.0
        %2453 = vmatpush1.xpose.msra.mxu0 0.0
        %2454 = vmatprep.subr.mxu0 0.0
        %2455 = vmatpush1.xpose.msra.mxu0 0.0
        %2456 = vmatprep.subr.mxu0 0.0
        %2457 = vmatpush1.xpose.msra.mxu0 0.0
        %2458 = vmatprep.subr.mxu0 0.0
        %2459 = vmatpush1.xpose.msra.mxu0 0.0
        %2460 = vmatprep.subr.mxu0 0.0
        %2461 = vmatpush1.xpose.msra.mxu0 0.0
        %2462 = vmatprep.subr.mxu0 0.0
        %2463 = vmatpush1.xpose.msra.mxu0 0.0
        %2464 = vmatprep.subr.mxu0 0.0
        %2465 = vmatpush1.xpose.msra.mxu0 0.0
        %2466 = vmatprep.subr.mxu0 0.0
        %2467 = vmatpush1.xpose.msra.mxu0 0.0
        %2468 = vmatprep.subr.mxu0 0.0
        %2469 = vmatpush1.xpose.msra.mxu0 0.0
        %2470 = vmatprep.subr.mxu0 0.0
        %2471 = vmatpush1.xpose.msra.mxu0 0.0
        %2472 = vmatprep.subr.mxu0 0.0
        %2473 = vmatpush1.xpose.msra.mxu0 0.0
        %2474 = vmatprep.subr.mxu0 0.0
        %2475 = vmatpush1.xpose.msra.mxu0 0.0
        %2476 = vmatprep.subr.mxu0 0.0
        %2477 = vmatpush1.xpose.msra.mxu0 0.0
        %2478 = vmatprep.subr.mxu0 0.0
        %2479 = vmatpush1.xpose.msra.mxu0 0.0
        %2480 = vmatprep.mubr.f32.mxu0 %v1144
        %2481 = vmatmul.mubr.f32.gmra.mrb[0].mxu0 %v1136
        %v2482 = vpop.f32.mrb[0].mxu0
        %v2483 = vadd.f32 %v2413, %v2482
        %v2484 = vpop.f32.mrb[0].mxu0
        %2485 = vdwg.mxu0
        %2486 = vmatprep.subr.mxu0 %v779
        %2487 = vmatpush1.xpose.msra.mxu0 %v778
        %2488 = vmatprep.subr.mxu0 %v907
        %2489 = vmatpush1.xpose.msra.mxu0 %v906
        %2490 = vmatprep.subr.mxu0 0.0
        %2491 = vmatpush1.xpose.msra.mxu0 0.0
        %2492 = vmatprep.subr.mxu0 0.0
        %2493 = vmatpush1.xpose.msra.mxu0 0.0
        %2494 = vmatprep.subr.mxu0 0.0
        %2495 = vmatpush1.xpose.msra.mxu0 0.0
        %2496 = vmatprep.subr.mxu0 0.0
        %2497 = vmatpush1.xpose.msra.mxu0 0.0
        %2498 = vmatprep.subr.mxu0 0.0
        %2499 = vmatpush1.xpose.msra.mxu0 0.0
        %2500 = vmatprep.subr.mxu0 0.0
        %2501 = vmatpush1.xpose.msra.mxu0 0.0
        %2502 = vmatprep.subr.mxu0 0.0
        %2503 = vmatpush1.xpose.msra.mxu0 0.0
        %2504 = vmatprep.subr.mxu0 0.0
        %2505 = vmatpush1.xpose.msra.mxu0 0.0
        %2506 = vmatprep.subr.mxu0 0.0
        %2507 = vmatpush1.xpose.msra.mxu0 0.0
        %2508 = vmatprep.subr.mxu0 0.0
        %2509 = vmatpush1.xpose.msra.mxu0 0.0
        %2510 = vmatprep.subr.mxu0 0.0
        %2511 = vmatpush1.xpose.msra.mxu0 0.0
        %2512 = vmatprep.subr.mxu0 0.0
        %2513 = vmatpush1.xpose.msra.mxu0 0.0
        %2514 = vmatprep.subr.mxu0 0.0
        %2515 = vmatpush1.xpose.msra.mxu0 0.0
        %2516 = vmatprep.subr.mxu0 0.0
        %2517 = vmatpush1.xpose.msra.mxu0 0.0
        %2518 = vmatprep.subr.mxu0 0.0
        %2519 = vmatpush1.xpose.msra.mxu0 0.0
        %2520 = vmatprep.subr.mxu0 0.0
        %2521 = vmatpush1.xpose.msra.mxu0 0.0
        %2522 = vmatprep.subr.mxu0 0.0
        %2523 = vmatpush1.xpose.msra.mxu0 0.0
        %2524 = vmatprep.subr.mxu0 0.0
        %2525 = vmatpush1.xpose.msra.mxu0 0.0
        %2526 = vmatprep.subr.mxu0 0.0
        %2527 = vmatpush1.xpose.msra.mxu0 0.0
        %2528 = vmatprep.subr.mxu0 0.0
        %2529 = vmatpush1.xpose.msra.mxu0 0.0
        %2530 = vmatprep.subr.mxu0 0.0
        %2531 = vmatpush1.xpose.msra.mxu0 0.0
        %2532 = vmatprep.subr.mxu0 0.0
        %2533 = vmatpush1.xpose.msra.mxu0 0.0
        %2534 = vmatprep.subr.mxu0 0.0
        %2535 = vmatpush1.xpose.msra.mxu0 0.0
        %2536 = vmatprep.subr.mxu0 0.0
        %2537 = vmatpush1.xpose.msra.mxu0 0.0
        %2538 = vmatprep.subr.mxu0 0.0
        %2539 = vmatpush1.xpose.msra.mxu0 0.0
        %2540 = vmatprep.subr.mxu0 0.0
        %2541 = vmatpush1.xpose.msra.mxu0 0.0
        %2542 = vmatprep.subr.mxu0 0.0
        %2543 = vmatpush1.xpose.msra.mxu0 0.0
        %2544 = vmatprep.subr.mxu0 0.0
        %2545 = vmatpush1.xpose.msra.mxu0 0.0
        %2546 = vmatprep.subr.mxu0 0.0
        %2547 = vmatpush1.xpose.msra.mxu0 0.0
        %2548 = vmatprep.subr.mxu0 0.0
        %2549 = vmatpush1.xpose.msra.mxu0 0.0
        %2550 = vmatprep.mubr.f32.mxu0 %v1145
        %2551 = vmatmul.mubr.f32.gmra.mrb[0].mxu0 %v1143
        %v2552 = vpop.f32.mrb[0].mxu0
        %v2553 = vadd.f32 %v2483, %v2552
        %v2554 = vpop.f32.mrb[0].mxu0
        %2555 = vdwg.mxu0
        %2556 = vmatprep.subr.mxu0 %v781
        %2557 = vmatpush1.xpose.msra.mxu0 %v780
        %2558 = vmatprep.subr.mxu0 %v909
        %2559 = vmatpush1.xpose.msra.mxu0 %v908
        %2560 = vmatprep.subr.mxu0 0.0
        %2561 = vmatpush1.xpose.msra.mxu0 0.0
        %2562 = vmatprep.subr.mxu0 0.0
        %2563 = vmatpush1.xpose.msra.mxu0 0.0
        %2564 = vmatprep.subr.mxu0 0.0
        %2565 = vmatpush1.xpose.msra.mxu0 0.0
        %2566 = vmatprep.subr.mxu0 0.0
        %2567 = vmatpush1.xpose.msra.mxu0 0.0
        %2568 = vmatprep.subr.mxu0 0.0
        %2569 = vmatpush1.xpose.msra.mxu0 0.0
        %2570 = vmatprep.subr.mxu0 0.0
        %2571 = vmatpush1.xpose.msra.mxu0 0.0
        %2572 = vmatprep.subr.mxu0 0.0
        %2573 = vmatpush1.xpose.msra.mxu0 0.0
        %2574 = vmatprep.subr.mxu0 0.0
        %2575 = vmatpush1.xpose.msra.mxu0 0.0
        %2576 = vmatprep.subr.mxu0 0.0
        %2577 = vmatpush1.xpose.msra.mxu0 0.0
        %2578 = vmatprep.subr.mxu0 0.0
        %2579 = vmatpush1.xpose.msra.mxu0 0.0
        %2580 = vmatprep.subr.mxu0 0.0
        %2581 = vmatpush1.xpose.msra.mxu0 0.0
        %2582 = vmatprep.subr.mxu0 0.0
        %2583 = vmatpush1.xpose.msra.mxu0 0.0
        %2584 = vmatprep.subr.mxu0 0.0
        %2585 = vmatpush1.xpose.msra.mxu0 0.0
        %2586 = vmatprep.subr.mxu0 0.0
        %2587 = vmatpush1.xpose.msra.mxu0 0.0
        %2588 = vmatprep.subr.mxu0 0.0
        %2589 = vmatpush1.xpose.msra.mxu0 0.0
        %2590 = vmatprep.subr.mxu0 0.0
        %2591 = vmatpush1.xpose.msra.mxu0 0.0
        %2592 = vmatprep.subr.mxu0 0.0
        %2593 = vmatpush1.xpose.msra.mxu0 0.0
        %2594 = vmatprep.subr.mxu0 0.0
        %2595 = vmatpush1.xpose.msra.mxu0 0.0
        %2596 = vmatprep.subr.mxu0 0.0
        %2597 = vmatpush1.xpose.msra.mxu0 0.0
        %2598 = vmatprep.subr.mxu0 0.0
        %2599 = vmatpush1.xpose.msra.mxu0 0.0
        %2600 = vmatprep.subr.mxu0 0.0
        %2601 = vmatpush1.xpose.msra.mxu0 0.0
        %2602 = vmatprep.subr.mxu0 0.0
        %2603 = vmatpush1.xpose.msra.mxu0 0.0
        %2604 = vmatprep.subr.mxu0 0.0
        %2605 = vmatpush1.xpose.msra.mxu0 0.0
        %2606 = vmatprep.subr.mxu0 0.0
        %2607 = vmatpush1.xpose.msra.mxu0 0.0
        %2608 = vmatprep.subr.mxu0 0.0
        %2609 = vmatpush1.xpose.msra.mxu0 0.0
        %2610 = vmatprep.subr.mxu0 0.0
        %2611 = vmatpush1.xpose.msra.mxu0 0.0
        %2612 = vmatprep.subr.mxu0 0.0
        %2613 = vmatpush1.xpose.msra.mxu0 0.0
        %2614 = vmatprep.subr.mxu0 0.0
        %2615 = vmatpush1.xpose.msra.mxu0 0.0
        %2616 = vmatprep.subr.mxu0 0.0
        %2617 = vmatpush1.xpose.msra.mxu0 0.0
        %2618 = vmatprep.subr.mxu0 0.0
        %2619 = vmatpush1.xpose.msra.mxu0 0.0
        %2620 = vmatprep.mubr.f32.mxu0 %v1161
        %2621 = vmatmul.mubr.f32.gmra.mrb[0].mxu0 %v1153
        %v2622 = vpop.f32.mrb[0].mxu0
        %v2623 = vadd.f32 %v2553, %v2622
        %v2624 = vpop.f32.mrb[0].mxu0
        %2625 = vdwg.mxu0
        %2626 = vmatprep.subr.mxu0 %v783
        %2627 = vmatpush1.xpose.msra.mxu0 %v782
        %2628 = vmatprep.subr.mxu0 %v911
        %2629 = vmatpush1.xpose.msra.mxu0 %v910
        %2630 = vmatprep.subr.mxu0 0.0
        %2631 = vmatpush1.xpose.msra.mxu0 0.0
        %2632 = vmatprep.subr.mxu0 0.0
        %2633 = vmatpush1.xpose.msra.mxu0 0.0
        %2634 = vmatprep.subr.mxu0 0.0
        %2635 = vmatpush1.xpose.msra.mxu0 0.0
        %2636 = vmatprep.subr.mxu0 0.0
        %2637 = vmatpush1.xpose.msra.mxu0 0.0
        %2638 = vmatprep.subr.mxu0 0.0
        %2639 = vmatpush1.xpose.msra.mxu0 0.0
        %2640 = vmatprep.subr.mxu0 0.0
        %2641 = vmatpush1.xpose.msra.mxu0 0.0
        %2642 = vmatprep.subr.mxu0 0.0
        %2643 = vmatpush1.xpose.msra.mxu0 0.0
        %2644 = vmatprep.subr.mxu0 0.0
        %2645 = vmatpush1.xpose.msra.mxu0 0.0
        %2646 = vmatprep.subr.mxu0 0.0
        %2647 = vmatpush1.xpose.msra.mxu0 0.0
        %2648 = vmatprep.subr.mxu0 0.0
        %2649 = vmatpush1.xpose.msra.mxu0 0.0
        %2650 = vmatprep.subr.mxu0 0.0
        %2651 = vmatpush1.xpose.msra.mxu0 0.0
        %2652 = vmatprep.subr.mxu0 0.0
        %2653 = vmatpush1.xpose.msra.mxu0 0.0
        %2654 = vmatprep.subr.mxu0 0.0
        %2655 = vmatpush1.xpose.msra.mxu0 0.0
        %2656 = vmatprep.subr.mxu0 0.0
        %2657 = vmatpush1.xpose.msra.mxu0 0.0
        %2658 = vmatprep.subr.mxu0 0.0
        %2659 = vmatpush1.xpose.msra.mxu0 0.0
        %2660 = vmatprep.subr.mxu0 0.0
        %2661 = vmatpush1.xpose.msra.mxu0 0.0
        %2662 = vmatprep.subr.mxu0 0.0
        %2663 = vmatpush1.xpose.msra.mxu0 0.0
        %2664 = vmatprep.subr.mxu0 0.0
        %2665 = vmatpush1.xpose.msra.mxu0 0.0
        %2666 = vmatprep.subr.mxu0 0.0
        %2667 = vmatpush1.xpose.msra.mxu0 0.0
        %2668 = vmatprep.subr.mxu0 0.0
        %2669 = vmatpush1.xpose.msra.mxu0 0.0
        %2670 = vmatprep.subr.mxu0 0.0
        %2671 = vmatpush1.xpose.msra.mxu0 0.0
        %2672 = vmatprep.subr.mxu0 0.0
        %2673 = vmatpush1.xpose.msra.mxu0 0.0
        %2674 = vmatprep.subr.mxu0 0.0
        %2675 = vmatpush1.xpose.msra.mxu0 0.0
        %2676 = vmatprep.subr.mxu0 0.0
        %2677 = vmatpush1.xpose.msra.mxu0 0.0
        %2678 = vmatprep.subr.mxu0 0.0
        %2679 = vmatpush1.xpose.msra.mxu0 0.0
        %2680 = vmatprep.subr.mxu0 0.0
        %2681 = vmatpush1.xpose.msra.mxu0 0.0
        %2682 = vmatprep.subr.mxu0 0.0
        %2683 = vmatpush1.xpose.msra.mxu0 0.0
        %2684 = vmatprep.subr.mxu0 0.0
        %2685 = vmatpush1.xpose.msra.mxu0 0.0
        %2686 = vmatprep.subr.mxu0 0.0
        %2687 = vmatpush1.xpose.msra.mxu0 0.0
        %2688 = vmatprep.subr.mxu0 0.0
        %2689 = vmatpush1.xpose.msra.mxu0 0.0
        %2690 = vmatprep.mubr.f32.mxu0 %v1162
        %2691 = vmatmul.mubr.f32.gmra.mrb[0].mxu0 %v1160
        %v2692 = vpop.f32.mrb[0].mxu0
        %v2693 = vadd.f32 %v2623, %v2692
        %v2694 = vpop.f32.mrb[0].mxu0
        %2695 = vdwg.mxu0
        %2696 = vmatprep.subr.mxu0 %v785
        %2697 = vmatpush1.xpose.msra.mxu0 %v784
        %2698 = vmatprep.subr.mxu0 %v913
        %2699 = vmatpush1.xpose.msra.mxu0 %v912
        %2700 = vmatprep.subr.mxu0 0.0
        %2701 = vmatpush1.xpose.msra.mxu0 0.0
        %2702 = vmatprep.subr.mxu0 0.0
        %2703 = vmatpush1.xpose.msra.mxu0 0.0
        %2704 = vmatprep.subr.mxu0 0.0
        %2705 = vmatpush1.xpose.msra.mxu0 0.0
        %2706 = vmatprep.subr.mxu0 0.0
        %2707 = vmatpush1.xpose.msra.mxu0 0.0
        %2708 = vmatprep.subr.mxu0 0.0
        %2709 = vmatpush1.xpose.msra.mxu0 0.0
        %2710 = vmatprep.subr.mxu0 0.0
        %2711 = vmatpush1.xpose.msra.mxu0 0.0
        %2712 = vmatprep.subr.mxu0 0.0
        %2713 = vmatpush1.xpose.msra.mxu0 0.0
        %2714 = vmatprep.subr.mxu0 0.0
        %2715 = vmatpush1.xpose.msra.mxu0 0.0
        %2716 = vmatprep.subr.mxu0 0.0
        %2717 = vmatpush1.xpose.msra.mxu0 0.0
        %2718 = vmatprep.subr.mxu0 0.0
        %2719 = vmatpush1.xpose.msra.mxu0 0.0
        %2720 = vmatprep.subr.mxu0 0.0
        %2721 = vmatpush1.xpose.msra.mxu0 0.0
        %2722 = vmatprep.subr.mxu0 0.0
        %2723 = vmatpush1.xpose.msra.mxu0 0.0
        %2724 = vmatprep.subr.mxu0 0.0
        %2725 = vmatpush1.xpose.msra.mxu0 0.0
        %2726 = vmatprep.subr.mxu0 0.0
        %2727 = vmatpush1.xpose.msra.mxu0 0.0
        %2728 = vmatprep.subr.mxu0 0.0
        %2729 = vmatpush1.xpose.msra.mxu0 0.0
        %2730 = vmatprep.subr.mxu0 0.0
        %2731 = vmatpush1.xpose.msra.mxu0 0.0
        %2732 = vmatprep.subr.mxu0 0.0
        %2733 = vmatpush1.xpose.msra.mxu0 0.0
        %2734 = vmatprep.subr.mxu0 0.0
        %2735 = vmatpush1.xpose.msra.mxu0 0.0
        %2736 = vmatprep.subr.mxu0 0.0
        %2737 = vmatpush1.xpose.msra.mxu0 0.0
        %2738 = vmatprep.subr.mxu0 0.0
        %2739 = vmatpush1.xpose.msra.mxu0 0.0
        %2740 = vmatprep.subr.mxu0 0.0
        %2741 = vmatpush1.xpose.msra.mxu0 0.0
        %2742 = vmatprep.subr.mxu0 0.0
        %2743 = vmatpush1.xpose.msra.mxu0 0.0
        %2744 = vmatprep.subr.mxu0 0.0
        %2745 = vmatpush1.xpose.msra.mxu0 0.0
        %2746 = vmatprep.subr.mxu0 0.0
        %2747 = vmatpush1.xpose.msra.mxu0 0.0
        %2748 = vmatprep.subr.mxu0 0.0
        %2749 = vmatpush1.xpose.msra.mxu0 0.0
        %2750 = vmatprep.subr.mxu0 0.0
        %2751 = vmatpush1.xpose.msra.mxu0 0.0
        %2752 = vmatprep.subr.mxu0 0.0
        %2753 = vmatpush1.xpose.msra.mxu0 0.0
        %2754 = vmatprep.subr.mxu0 0.0
        %2755 = vmatpush1.xpose.msra.mxu0 0.0
        %2756 = vmatprep.subr.mxu0 0.0
        %2757 = vmatpush1.xpose.msra.mxu0 0.0
        %2758 = vmatprep.subr.mxu0 0.0
        %2759 = vmatpush1.xpose.msra.mxu0 0.0
        %2760 = vmatprep.mubr.f32.mxu0 %v1178
        %2761 = vmatmul.mubr.f32.gmra.mrb[0].mxu0 %v1170
        %v2762 = vpop.f32.mrb[0].mxu0
        %v2763 = vadd.f32 %v2693, %v2762
        %v2764 = vpop.f32.mrb[0].mxu0
        %2765 = vdwg.mxu0
        %2766 = vmatprep.subr.mxu0 %v787
        %2767 = vmatpush1.xpose.msra.mxu0 %v786
        %2768 = vmatprep.subr.mxu0 %v915
        %2769 = vmatpush1.xpose.msra.mxu0 %v914
        %2770 = vmatprep.subr.mxu0 0.0
        %2771 = vmatpush1.xpose.msra.mxu0 0.0
        %2772 = vmatprep.subr.mxu0 0.0
        %2773 = vmatpush1.xpose.msra.mxu0 0.0
        %2774 = vmatprep.subr.mxu0 0.0
        %2775 = vmatpush1.xpose.msra.mxu0 0.0
        %2776 = vmatprep.subr.mxu0 0.0
        %2777 = vmatpush1.xpose.msra.mxu0 0.0
        %2778 = vmatprep.subr.mxu0 0.0
        %2779 = vmatpush1.xpose.msra.mxu0 0.0
        %2780 = vmatprep.subr.mxu0 0.0
        %2781 = vmatpush1.xpose.msra.mxu0 0.0
        %2782 = vmatprep.subr.mxu0 0.0
        %2783 = vmatpush1.xpose.msra.mxu0 0.0
        %2784 = vmatprep.subr.mxu0 0.0
        %2785 = vmatpush1.xpose.msra.mxu0 0.0
        %2786 = vmatprep.subr.mxu0 0.0
        %2787 = vmatpush1.xpose.msra.mxu0 0.0
        %2788 = vmatprep.subr.mxu0 0.0
        %2789 = vmatpush1.xpose.msra.mxu0 0.0
        %2790 = vmatprep.subr.mxu0 0.0
        %2791 = vmatpush1.xpose.msra.mxu0 0.0
        %2792 = vmatprep.subr.mxu0 0.0
        %2793 = vmatpush1.xpose.msra.mxu0 0.0
        %2794 = vmatprep.subr.mxu0 0.0
        %2795 = vmatpush1.xpose.msra.mxu0 0.0
        %2796 = vmatprep.subr.mxu0 0.0
        %2797 = vmatpush1.xpose.msra.mxu0 0.0
        %2798 = vmatprep.subr.mxu0 0.0
        %2799 = vmatpush1.xpose.msra.mxu0 0.0
        %2800 = vmatprep.subr.mxu0 0.0
        %2801 = vmatpush1.xpose.msra.mxu0 0.0
        %2802 = vmatprep.subr.mxu0 0.0
        %2803 = vmatpush1.xpose.msra.mxu0 0.0
        %2804 = vmatprep.subr.mxu0 0.0
        %2805 = vmatpush1.xpose.msra.mxu0 0.0
        %2806 = vmatprep.subr.mxu0 0.0
        %2807 = vmatpush1.xpose.msra.mxu0 0.0
        %2808 = vmatprep.subr.mxu0 0.0
        %2809 = vmatpush1.xpose.msra.mxu0 0.0
        %2810 = vmatprep.subr.mxu0 0.0
        %2811 = vmatpush1.xpose.msra.mxu0 0.0
        %2812 = vmatprep.subr.mxu0 0.0
        %2813 = vmatpush1.xpose.msra.mxu0 0.0
        %2814 = vmatprep.subr.mxu0 0.0
        %2815 = vmatpush1.xpose.msra.mxu0 0.0
        %2816 = vmatprep.subr.mxu0 0.0
        %2817 = vmatpush1.xpose.msra.mxu0 0.0
        %2818 = vmatprep.subr.mxu0 0.0
        %2819 = vmatpush1.xpose.msra.mxu0 0.0
        %2820 = vmatprep.subr.mxu0 0.0
        %2821 = vmatpush1.xpose.msra.mxu0 0.0
        %2822 = vmatprep.subr.mxu0 0.0
        %2823 = vmatpush1.xpose.msra.mxu0 0.0
        %2824 = vmatprep.subr.mxu0 0.0
        %2825 = vmatpush1.xpose.msra.mxu0 0.0
        %2826 = vmatprep.subr.mxu0 0.0
        %2827 = vmatpush1.xpose.msra.mxu0 0.0
        %2828 = vmatprep.subr.mxu0 0.0
        %2829 = vmatpush1.xpose.msra.mxu0 0.0
        %2830 = vmatprep.mubr.f32.mxu0 %v1179
        %2831 = vmatmul.mubr.f32.gmra.mrb[0].mxu0 %v1177
        %v2832 = vpop.f32.mrb[0].mxu0
        %v2833 = vadd.f32 %v2763, %v2832
        %v2834 = vpop.f32.mrb[0].mxu0
        %2835 = vdwg.mxu0
        %2836 = vmatprep.subr.mxu0 %v789
        %2837 = vmatpush1.xpose.msra.mxu0 %v788
        %2838 = vmatprep.subr.mxu0 %v917
        %2839 = vmatpush1.xpose.msra.mxu0 %v916
        %2840 = vmatprep.subr.mxu0 0.0
        %2841 = vmatpush1.xpose.msra.mxu0 0.0
        %2842 = vmatprep.subr.mxu0 0.0
        %2843 = vmatpush1.xpose.msra.mxu0 0.0
        %2844 = vmatprep.subr.mxu0 0.0
        %2845 = vmatpush1.xpose.msra.mxu0 0.0
        %2846 = vmatprep.subr.mxu0 0.0
        %2847 = vmatpush1.xpose.msra.mxu0 0.0
        %2848 = vmatprep.subr.mxu0 0.0
        %2849 = vmatpush1.xpose.msra.mxu0 0.0
        %2850 = vmatprep.subr.mxu0 0.0
        %2851 = vmatpush1.xpose.msra.mxu0 0.0
        %2852 = vmatprep.subr.mxu0 0.0
        %2853 = vmatpush1.xpose.msra.mxu0 0.0
        %2854 = vmatprep.subr.mxu0 0.0
        %2855 = vmatpush1.xpose.msra.mxu0 0.0
        %2856 = vmatprep.subr.mxu0 0.0
        %2857 = vmatpush1.xpose.msra.mxu0 0.0
        %2858 = vmatprep.subr.mxu0 0.0
        %2859 = vmatpush1.xpose.msra.mxu0 0.0
        %2860 = vmatprep.subr.mxu0 0.0
        %2861 = vmatpush1.xpose.msra.mxu0 0.0
        %2862 = vmatprep.subr.mxu0 0.0
        %2863 = vmatpush1.xpose.msra.mxu0 0.0
        %2864 = vmatprep.subr.mxu0 0.0
        %2865 = vmatpush1.xpose.msra.mxu0 0.0
        %2866 = vmatprep.subr.mxu0 0.0
        %2867 = vmatpush1.xpose.msra.mxu0 0.0
        %2868 = vmatprep.subr.mxu0 0.0
        %2869 = vmatpush1.xpose.msra.mxu0 0.0
        %2870 = vmatprep.subr.mxu0 0.0
        %2871 = vmatpush1.xpose.msra.mxu0 0.0
        %2872 = vmatprep.subr.mxu0 0.0
        %2873 = vmatpush1.xpose.msra.mxu0 0.0
        %2874 = vmatprep.subr.mxu0 0.0
        %2875 = vmatpush1.xpose.msra.mxu0 0.0
        %2876 = vmatprep.subr.mxu0 0.0
        %2877 = vmatpush1.xpose.msra.mxu0 0.0
        %2878 = vmatprep.subr.mxu0 0.0
        %2879 = vmatpush1.xpose.msra.mxu0 0.0
        %2880 = vmatprep.subr.mxu0 0.0
        %2881 = vmatpush1.xpose.msra.mxu0 0.0
        %2882 = vmatprep.subr.mxu0 0.0
        %2883 = vmatpush1.xpose.msra.mxu0 0.0
        %2884 = vmatprep.subr.mxu0 0.0
        %2885 = vmatpush1.xpose.msra.mxu0 0.0
        %2886 = vmatprep.subr.mxu0 0.0
        %2887 = vmatpush1.xpose.msra.mxu0 0.0
        %2888 = vmatprep.subr.mxu0 0.0
        %2889 = vmatpush1.xpose.msra.mxu0 0.0
        %2890 = vmatprep.subr.mxu0 0.0
        %2891 = vmatpush1.xpose.msra.mxu0 0.0
        %2892 = vmatprep.subr.mxu0 0.0
        %2893 = vmatpush1.xpose.msra.mxu0 0.0
        %2894 = vmatprep.subr.mxu0 0.0
        %2895 = vmatpush1.xpose.msra.mxu0 0.0
        %2896 = vmatprep.subr.mxu0 0.0
        %2897 = vmatpush1.xpose.msra.mxu0 0.0
        %2898 = vmatprep.subr.mxu0 0.0
        %2899 = vmatpush1.xpose.msra.mxu0 0.0
        %2900 = vmatprep.mubr.f32.mxu0 %v1195
        %2901 = vmatmul.mubr.f32.gmra.mrb[0].mxu0 %v1187
        %v2902 = vpop.f32.mrb[0].mxu0
        %v2903 = vadd.f32 %v2833, %v2902
        %v2904 = vpop.f32.mrb[0].mxu0
        %2905 = vdwg.mxu0
        %2906 = vmatprep.subr.mxu0 %v791
        %2907 = vmatpush1.xpose.msra.mxu0 %v790
        %2908 = vmatprep.subr.mxu0 %v919
        %2909 = vmatpush1.xpose.msra.mxu0 %v918
        %2910 = vmatprep.subr.mxu0 0.0
        %2911 = vmatpush1.xpose.msra.mxu0 0.0
        %2912 = vmatprep.subr.mxu0 0.0
        %2913 = vmatpush1.xpose.msra.mxu0 0.0
        %2914 = vmatprep.subr.mxu0 0.0
        %2915 = vmatpush1.xpose.msra.mxu0 0.0
        %2916 = vmatprep.subr.mxu0 0.0
        %2917 = vmatpush1.xpose.msra.mxu0 0.0
        %2918 = vmatprep.subr.mxu0 0.0
        %2919 = vmatpush1.xpose.msra.mxu0 0.0
        %2920 = vmatprep.subr.mxu0 0.0
        %2921 = vmatpush1.xpose.msra.mxu0 0.0
        %2922 = vmatprep.subr.mxu0 0.0
        %2923 = vmatpush1.xpose.msra.mxu0 0.0
        %2924 = vmatprep.subr.mxu0 0.0
        %2925 = vmatpush1.xpose.msra.mxu0 0.0
        %2926 = vmatprep.subr.mxu0 0.0
        %2927 = vmatpush1.xpose.msra.mxu0 0.0
        %2928 = vmatprep.subr.mxu0 0.0
        %2929 = vmatpush1.xpose.msra.mxu0 0.0
        %2930 = vmatprep.subr.mxu0 0.0
        %2931 = vmatpush1.xpose.msra.mxu0 0.0
        %2932 = vmatprep.subr.mxu0 0.0
        %2933 = vmatpush1.xpose.msra.mxu0 0.0
        %2934 = vmatprep.subr.mxu0 0.0
        %2935 = vmatpush1.xpose.msra.mxu0 0.0
        %2936 = vmatprep.subr.mxu0 0.0
        %2937 = vmatpush1.xpose.msra.mxu0 0.0
        %2938 = vmatprep.subr.mxu0 0.0
        %2939 = vmatpush1.xpose.msra.mxu0 0.0
        %2940 = vmatprep.subr.mxu0 0.0
        %2941 = vmatpush1.xpose.msra.mxu0 0.0
        %2942 = vmatprep.subr.mxu0 0.0
        %2943 = vmatpush1.xpose.msra.mxu0 0.0
        %2944 = vmatprep.subr.mxu0 0.0
        %2945 = vmatpush1.xpose.msra.mxu0 0.0
        %2946 = vmatprep.subr.mxu0 0.0
        %2947 = vmatpush1.xpose.msra.mxu0 0.0
        %2948 = vmatprep.subr.mxu0 0.0
        %2949 = vmatpush1.xpose.msra.mxu0 0.0
        %2950 = vmatprep.subr.mxu0 0.0
        %2951 = vmatpush1.xpose.msra.mxu0 0.0
        %2952 = vmatprep.subr.mxu0 0.0
        %2953 = vmatpush1.xpose.msra.mxu0 0.0
        %2954 = vmatprep.subr.mxu0 0.0
        %2955 = vmatpush1.xpose.msra.mxu0 0.0
        %2956 = vmatprep.subr.mxu0 0.0
        %2957 = vmatpush1.xpose.msra.mxu0 0.0
        %2958 = vmatprep.subr.mxu0 0.0
        %2959 = vmatpush1.xpose.msra.mxu0 0.0
        %2960 = vmatprep.subr.mxu0 0.0
        %2961 = vmatpush1.xpose.msra.mxu0 0.0
        %2962 = vmatprep.subr.mxu0 0.0
        %2963 = vmatpush1.xpose.msra.mxu0 0.0
        %2964 = vmatprep.subr.mxu0 0.0
        %2965 = vmatpush1.xpose.msra.mxu0 0.0
        %2966 = vmatprep.subr.mxu0 0.0
        %2967 = vmatpush1.xpose.msra.mxu0 0.0
        %2968 = vmatprep.subr.mxu0 0.0
        %2969 = vmatpush1.xpose.msra.mxu0 0.0
        %2970 = vmatprep.mubr.f32.mxu0 %v1196
        %2971 = vmatmul.mubr.f32.gmra.mrb[0].mxu0 %v1194
        %v2972 = vpop.f32.mrb[0].mxu0
        %v2973 = vadd.f32 %v2903, %v2972
        %v2974 = vpop.f32.mrb[0].mxu0
        %2975 = vdwg.mxu0
        %2976 = vmatprep.subr.mxu0 %v793
        %2977 = vmatpush1.xpose.msra.mxu0 %v792
        %2978 = vmatprep.subr.mxu0 %v921
        %2979 = vmatpush1.xpose.msra.mxu0 %v920
        %2980 = vmatprep.subr.mxu0 0.0
        %2981 = vmatpush1.xpose.msra.mxu0 0.0
        %2982 = vmatprep.subr.mxu0 0.0
        %2983 = vmatpush1.xpose.msra.mxu0 0.0
        %2984 = vmatprep.subr.mxu0 0.0
        %2985 = vmatpush1.xpose.msra.mxu0 0.0
        %2986 = vmatprep.subr.mxu0 0.0
        %2987 = vmatpush1.xpose.msra.mxu0 0.0
        %2988 = vmatprep.subr.mxu0 0.0
        %2989 = vmatpush1.xpose.msra.mxu0 0.0
        %2990 = vmatprep.subr.mxu0 0.0
        %2991 = vmatpush1.xpose.msra.mxu0 0.0
        %2992 = vmatprep.subr.mxu0 0.0
        %2993 = vmatpush1.xpose.msra.mxu0 0.0
        %2994 = vmatprep.subr.mxu0 0.0
        %2995 = vmatpush1.xpose.msra.mxu0 0.0
        %2996 = vmatprep.subr.mxu0 0.0
        %2997 = vmatpush1.xpose.msra.mxu0 0.0
        %2998 = vmatprep.subr.mxu0 0.0
        %2999 = vmatpush1.xpose.msra.mxu0 0.0
        %3000 = vmatprep.subr.mxu0 0.0
        %3001 = vmatpush1.xpose.msra.mxu0 0.0
        %3002 = vmatprep.subr.mxu0 0.0
        %3003 = vmatpush1.xpose.msra.mxu0 0.0
        %3004 = vmatprep.subr.mxu0 0.0
        %3005 = vmatpush1.xpose.msra.mxu0 0.0
        %3006 = vmatprep.subr.mxu0 0.0
        %3007 = vmatpush1.xpose.msra.mxu0 0.0
        %3008 = vmatprep.subr.mxu0 0.0
        %3009 = vmatpush1.xpose.msra.mxu0 0.0
        %3010 = vmatprep.subr.mxu0 0.0
        %3011 = vmatpush1.xpose.msra.mxu0 0.0
        %3012 = vmatprep.subr.mxu0 0.0
        %3013 = vmatpush1.xpose.msra.mxu0 0.0
        %3014 = vmatprep.subr.mxu0 0.0
        %3015 = vmatpush1.xpose.msra.mxu0 0.0
        %3016 = vmatprep.subr.mxu0 0.0
        %3017 = vmatpush1.xpose.msra.mxu0 0.0
        %3018 = vmatprep.subr.mxu0 0.0
        %3019 = vmatpush1.xpose.msra.mxu0 0.0
        %3020 = vmatprep.subr.mxu0 0.0
        %3021 = vmatpush1.xpose.msra.mxu0 0.0
        %3022 = vmatprep.subr.mxu0 0.0
        %3023 = vmatpush1.xpose.msra.mxu0 0.0
        %3024 = vmatprep.subr.mxu0 0.0
        %3025 = vmatpush1.xpose.msra.mxu0 0.0
        %3026 = vmatprep.subr.mxu0 0.0
        %3027 = vmatpush1.xpose.msra.mxu0 0.0
        %3028 = vmatprep.subr.mxu0 0.0
        %3029 = vmatpush1.xpose.msra.mxu0 0.0
        %3030 = vmatprep.subr.mxu0 0.0
        %3031 = vmatpush1.xpose.msra.mxu0 0.0
        %3032 = vmatprep.subr.mxu0 0.0
        %3033 = vmatpush1.xpose.msra.mxu0 0.0
        %3034 = vmatprep.subr.mxu0 0.0
        %3035 = vmatpush1.xpose.msra.mxu0 0.0
        %3036 = vmatprep.subr.mxu0 0.0
        %3037 = vmatpush1.xpose.msra.mxu0 0.0
        %3038 = vmatprep.subr.mxu0 0.0
        %3039 = vmatpush1.xpose.msra.mxu0 0.0
        %3040 = vmatprep.mubr.f32.mxu0 %v1212
        %3041 = vmatmul.mubr.f32.gmra.mrb[0].mxu0 %v1204
        %v3042 = vpop.f32.mrb[0].mxu0
        %v3043 = vadd.f32 %v2973, %v3042
        %v3044 = vpop.f32.mrb[0].mxu0
        %3045 = vdwg.mxu0
        %3046 = vmatprep.subr.mxu0 %v795
        %3047 = vmatpush1.xpose.msra.mxu0 %v794
        %3048 = vmatprep.subr.mxu0 %v923
        %3049 = vmatpush1.xpose.msra.mxu0 %v922
        %3050 = vmatprep.subr.mxu0 0.0
        %3051 = vmatpush1.xpose.msra.mxu0 0.0
        %3052 = vmatprep.subr.mxu0 0.0
        %3053 = vmatpush1.xpose.msra.mxu0 0.0
        %3054 = vmatprep.subr.mxu0 0.0
        %3055 = vmatpush1.xpose.msra.mxu0 0.0
        %3056 = vmatprep.subr.mxu0 0.0
        %3057 = vmatpush1.xpose.msra.mxu0 0.0
        %3058 = vmatprep.subr.mxu0 0.0
        %3059 = vmatpush1.xpose.msra.mxu0 0.0
        %3060 = vmatprep.subr.mxu0 0.0
        %3061 = vmatpush1.xpose.msra.mxu0 0.0
        %3062 = vmatprep.subr.mxu0 0.0
        %3063 = vmatpush1.xpose.msra.mxu0 0.0
        %3064 = vmatprep.subr.mxu0 0.0
        %3065 = vmatpush1.xpose.msra.mxu0 0.0
        %3066 = vmatprep.subr.mxu0 0.0
        %3067 = vmatpush1.xpose.msra.mxu0 0.0
        %3068 = vmatprep.subr.mxu0 0.0
        %3069 = vmatpush1.xpose.msra.mxu0 0.0
        %3070 = vmatprep.subr.mxu0 0.0
        %3071 = vmatpush1.xpose.msra.mxu0 0.0
        %3072 = vmatprep.subr.mxu0 0.0
        %3073 = vmatpush1.xpose.msra.mxu0 0.0
        %3074 = vmatprep.subr.mxu0 0.0
        %3075 = vmatpush1.xpose.msra.mxu0 0.0
        %3076 = vmatprep.subr.mxu0 0.0
        %3077 = vmatpush1.xpose.msra.mxu0 0.0
        %3078 = vmatprep.subr.mxu0 0.0
        %3079 = vmatpush1.xpose.msra.mxu0 0.0
        %3080 = vmatprep.subr.mxu0 0.0
        %3081 = vmatpush1.xpose.msra.mxu0 0.0
        %3082 = vmatprep.subr.mxu0 0.0
        %3083 = vmatpush1.xpose.msra.mxu0 0.0
        %3084 = vmatprep.subr.mxu0 0.0
        %3085 = vmatpush1.xpose.msra.mxu0 0.0
        %3086 = vmatprep.subr.mxu0 0.0
        %3087 = vmatpush1.xpose.msra.mxu0 0.0
        %3088 = vmatprep.subr.mxu0 0.0
        %3089 = vmatpush1.xpose.msra.mxu0 0.0
        %3090 = vmatprep.subr.mxu0 0.0
        %3091 = vmatpush1.xpose.msra.mxu0 0.0
        %3092 = vmatprep.subr.mxu0 0.0
        %3093 = vmatpush1.xpose.msra.mxu0 0.0
        %3094 = vmatprep.subr.mxu0 0.0
        %3095 = vmatpush1.xpose.msra.mxu0 0.0
        %3096 = vmatprep.subr.mxu0 0.0
        %3097 = vmatpush1.xpose.msra.mxu0 0.0
        %3098 = vmatprep.subr.mxu0 0.0
        %3099 = vmatpush1.xpose.msra.mxu0 0.0
        %3100 = vmatprep.subr.mxu0 0.0
        %3101 = vmatpush1.xpose.msra.mxu0 0.0
        %3102 = vmatprep.subr.mxu0 0.0
        %3103 = vmatpush1.xpose.msra.mxu0 0.0
        %3104 = vmatprep.subr.mxu0 0.0
        %3105 = vmatpush1.xpose.msra.mxu0 0.0
        %3106 = vmatprep.subr.mxu0 0.0
        %3107 = vmatpush1.xpose.msra.mxu0 0.0
        %3108 = vmatprep.subr.mxu0 0.0
        %3109 = vmatpush1.xpose.msra.mxu0 0.0
        %3110 = vmatprep.mubr.f32.mxu0 %v1213
        %3111 = vmatmul.mubr.f32.gmra.mrb[0].mxu0 %v1211
        %v3112 = vpop.f32.mrb[0].mxu0
        %v3113 = vadd.f32 %v3043, %v3112
        %v3114 = vpop.f32.mrb[0].mxu0
        %3115 = vdwg.mxu0
        %3116 = vmatprep.subr.mxu0 %v797
        %3117 = vmatpush1.xpose.msra.mxu0 %v796
        %3118 = vmatprep.subr.mxu0 %v925
        %3119 = vmatpush1.xpose.msra.mxu0 %v924
        %3120 = vmatprep.subr.mxu0 0.0
        %3121 = vmatpush1.xpose.msra.mxu0 0.0
        %3122 = vmatprep.subr.mxu0 0.0
        %3123 = vmatpush1.xpose.msra.mxu0 0.0
        %3124 = vmatprep.subr.mxu0 0.0
        %3125 = vmatpush1.xpose.msra.mxu0 0.0
        %3126 = vmatprep.subr.mxu0 0.0
        %3127 = vmatpush1.xpose.msra.mxu0 0.0
        %3128 = vmatprep.subr.mxu0 0.0
        %3129 = vmatpush1.xpose.msra.mxu0 0.0
        %3130 = vmatprep.subr.mxu0 0.0
        %3131 = vmatpush1.xpose.msra.mxu0 0.0
        %3132 = vmatprep.subr.mxu0 0.0
        %3133 = vmatpush1.xpose.msra.mxu0 0.0
        %3134 = vmatprep.subr.mxu0 0.0
        %3135 = vmatpush1.xpose.msra.mxu0 0.0
        %3136 = vmatprep.subr.mxu0 0.0
        %3137 = vmatpush1.xpose.msra.mxu0 0.0
        %3138 = vmatprep.subr.mxu0 0.0
        %3139 = vmatpush1.xpose.msra.mxu0 0.0
        %3140 = vmatprep.subr.mxu0 0.0
        %3141 = vmatpush1.xpose.msra.mxu0 0.0
        %3142 = vmatprep.subr.mxu0 0.0
        %3143 = vmatpush1.xpose.msra.mxu0 0.0
        %3144 = vmatprep.subr.mxu0 0.0
        %3145 = vmatpush1.xpose.msra.mxu0 0.0
        %3146 = vmatprep.subr.mxu0 0.0
        %3147 = vmatpush1.xpose.msra.mxu0 0.0
        %3148 = vmatprep.subr.mxu0 0.0
        %3149 = vmatpush1.xpose.msra.mxu0 0.0
        %3150 = vmatprep.subr.mxu0 0.0
        %3151 = vmatpush1.xpose.msra.mxu0 0.0
        %3152 = vmatprep.subr.mxu0 0.0
        %3153 = vmatpush1.xpose.msra.mxu0 0.0
        %3154 = vmatprep.subr.mxu0 0.0
        %3155 = vmatpush1.xpose.msra.mxu0 0.0
        %3156 = vmatprep.subr.mxu0 0.0
        %3157 = vmatpush1.xpose.msra.mxu0 0.0
        %3158 = vmatprep.subr.mxu0 0.0
        %3159 = vmatpush1.xpose.msra.mxu0 0.0
        %3160 = vmatprep.subr.mxu0 0.0
        %3161 = vmatpush1.xpose.msra.mxu0 0.0
        %3162 = vmatprep.subr.mxu0 0.0
        %3163 = vmatpush1.xpose.msra.mxu0 0.0
        %3164 = vmatprep.subr.mxu0 0.0
        %3165 = vmatpush1.xpose.msra.mxu0 0.0
        %3166 = vmatprep.subr.mxu0 0.0
        %3167 = vmatpush1.xpose.msra.mxu0 0.0
        %3168 = vmatprep.subr.mxu0 0.0
        %3169 = vmatpush1.xpose.msra.mxu0 0.0
        %3170 = vmatprep.subr.mxu0 0.0
        %3171 = vmatpush1.xpose.msra.mxu0 0.0
        %3172 = vmatprep.subr.mxu0 0.0
        %3173 = vmatpush1.xpose.msra.mxu0 0.0
        %3174 = vmatprep.subr.mxu0 0.0
        %3175 = vmatpush1.xpose.msra.mxu0 0.0
        %3176 = vmatprep.subr.mxu0 0.0
        %3177 = vmatpush1.xpose.msra.mxu0 0.0
        %3178 = vmatprep.subr.mxu0 0.0
        %3179 = vmatpush1.xpose.msra.mxu0 0.0
        %3180 = vmatprep.mubr.f32.mxu0 %v1229
        %3181 = vmatmul.mubr.f32.gmra.mrb[0].mxu0 %v1221
        %v3182 = vpop.f32.mrb[0].mxu0
        %v3183 = vadd.f32 %v3113, %v3182
        %v3184 = vpop.f32.mrb[0].mxu0
        %3185 = vdwg.mxu0
        %3186 = vmatprep.subr.mxu0 %v799
        %3187 = vmatpush1.xpose.msra.mxu0 %v798
        %3188 = vmatprep.subr.mxu0 %v927
        %3189 = vmatpush1.xpose.msra.mxu0 %v926
        %3190 = vmatprep.subr.mxu0 0.0
        %3191 = vmatpush1.xpose.msra.mxu0 0.0
        %3192 = vmatprep.subr.mxu0 0.0
        %3193 = vmatpush1.xpose.msra.mxu0 0.0
        %3194 = vmatprep.subr.mxu0 0.0
        %3195 = vmatpush1.xpose.msra.mxu0 0.0
        %3196 = vmatprep.subr.mxu0 0.0
        %3197 = vmatpush1.xpose.msra.mxu0 0.0
        %3198 = vmatprep.subr.mxu0 0.0
        %3199 = vmatpush1.xpose.msra.mxu0 0.0
        %3200 = vmatprep.subr.mxu0 0.0
        %3201 = vmatpush1.xpose.msra.mxu0 0.0
        %3202 = vmatprep.subr.mxu0 0.0
        %3203 = vmatpush1.xpose.msra.mxu0 0.0
        %3204 = vmatprep.subr.mxu0 0.0
        %3205 = vmatpush1.xpose.msra.mxu0 0.0
        %3206 = vmatprep.subr.mxu0 0.0
        %3207 = vmatpush1.xpose.msra.mxu0 0.0
        %3208 = vmatprep.subr.mxu0 0.0
        %3209 = vmatpush1.xpose.msra.mxu0 0.0
        %3210 = vmatprep.subr.mxu0 0.0
        %3211 = vmatpush1.xpose.msra.mxu0 0.0
        %3212 = vmatprep.subr.mxu0 0.0
        %3213 = vmatpush1.xpose.msra.mxu0 0.0
        %3214 = vmatprep.subr.mxu0 0.0
        %3215 = vmatpush1.xpose.msra.mxu0 0.0
        %3216 = vmatprep.subr.mxu0 0.0
        %3217 = vmatpush1.xpose.msra.mxu0 0.0
        %3218 = vmatprep.subr.mxu0 0.0
        %3219 = vmatpush1.xpose.msra.mxu0 0.0
        %3220 = vmatprep.subr.mxu0 0.0
        %3221 = vmatpush1.xpose.msra.mxu0 0.0
        %3222 = vmatprep.subr.mxu0 0.0
        %3223 = vmatpush1.xpose.msra.mxu0 0.0
        %3224 = vmatprep.subr.mxu0 0.0
        %3225 = vmatpush1.xpose.msra.mxu0 0.0
        %3226 = vmatprep.subr.mxu0 0.0
        %3227 = vmatpush1.xpose.msra.mxu0 0.0
        %3228 = vmatprep.subr.mxu0 0.0
        %3229 = vmatpush1.xpose.msra.mxu0 0.0
        %3230 = vmatprep.subr.mxu0 0.0
        %3231 = vmatpush1.xpose.msra.mxu0 0.0
        %3232 = vmatprep.subr.mxu0 0.0
        %3233 = vmatpush1.xpose.msra.mxu0 0.0
        %3234 = vmatprep.subr.mxu0 0.0
        %3235 = vmatpush1.xpose.msra.mxu0 0.0
        %3236 = vmatprep.subr.mxu0 0.0
        %3237 = vmatpush1.xpose.msra.mxu0 0.0
        %3238 = vmatprep.subr.mxu0 0.0
        %3239 = vmatpush1.xpose.msra.mxu0 0.0
        %3240 = vmatprep.subr.mxu0 0.0
        %3241 = vmatpush1.xpose.msra.mxu0 0.0
        %3242 = vmatprep.subr.mxu0 0.0
        %3243 = vmatpush1.xpose.msra.mxu0 0.0
        %3244 = vmatprep.subr.mxu0 0.0
        %3245 = vmatpush1.xpose.msra.mxu0 0.0
        %3246 = vmatprep.subr.mxu0 0.0
        %3247 = vmatpush1.xpose.msra.mxu0 0.0
        %3248 = vmatprep.subr.mxu0 0.0
        %3249 = vmatpush1.xpose.msra.mxu0 0.0
        %3250 = vmatprep.mubr.f32.mxu0 %v1230
        %3251 = vmatmul.mubr.f32.gmra.mrb[0].mxu0 %v1228
        %v3252 = vpop.f32.mrb[0].mxu0
        %v3253 = vadd.f32 %v3183, %v3252
        %v3254 = vpop.f32.mrb[0].mxu0
        %3255 = vdwg.mxu0
        %3256 = vmatprep.subr.mxu0 %v801
        %3257 = vmatpush1.xpose.msra.mxu0 %v800
        %3258 = vmatprep.subr.mxu0 %v929
        %3259 = vmatpush1.xpose.msra.mxu0 %v928
        %3260 = vmatprep.subr.mxu0 0.0
        %3261 = vmatpush1.xpose.msra.mxu0 0.0
        %3262 = vmatprep.subr.mxu0 0.0
        %3263 = vmatpush1.xpose.msra.mxu0 0.0
        %3264 = vmatprep.subr.mxu0 0.0
        %3265 = vmatpush1.xpose.msra.mxu0 0.0
        %3266 = vmatprep.subr.mxu0 0.0
        %3267 = vmatpush1.xpose.msra.mxu0 0.0
        %3268 = vmatprep.subr.mxu0 0.0
        %3269 = vmatpush1.xpose.msra.mxu0 0.0
        %3270 = vmatprep.subr.mxu0 0.0
        %3271 = vmatpush1.xpose.msra.mxu0 0.0
        %3272 = vmatprep.subr.mxu0 0.0
        %3273 = vmatpush1.xpose.msra.mxu0 0.0
        %3274 = vmatprep.subr.mxu0 0.0
        %3275 = vmatpush1.xpose.msra.mxu0 0.0
        %3276 = vmatprep.subr.mxu0 0.0
        %3277 = vmatpush1.xpose.msra.mxu0 0.0
        %3278 = vmatprep.subr.mxu0 0.0
        %3279 = vmatpush1.xpose.msra.mxu0 0.0
        %3280 = vmatprep.subr.mxu0 0.0
        %3281 = vmatpush1.xpose.msra.mxu0 0.0
        %3282 = vmatprep.subr.mxu0 0.0
        %3283 = vmatpush1.xpose.msra.mxu0 0.0
        %3284 = vmatprep.subr.mxu0 0.0
        %3285 = vmatpush1.xpose.msra.mxu0 0.0
        %3286 = vmatprep.subr.mxu0 0.0
        %3287 = vmatpush1.xpose.msra.mxu0 0.0
        %3288 = vmatprep.subr.mxu0 0.0
        %3289 = vmatpush1.xpose.msra.mxu0 0.0
        %3290 = vmatprep.subr.mxu0 0.0
        %3291 = vmatpush1.xpose.msra.mxu0 0.0
        %3292 = vmatprep.subr.mxu0 0.0
        %3293 = vmatpush1.xpose.msra.mxu0 0.0
        %3294 = vmatprep.subr.mxu0 0.0
        %3295 = vmatpush1.xpose.msra.mxu0 0.0
        %3296 = vmatprep.subr.mxu0 0.0
        %3297 = vmatpush1.xpose.msra.mxu0 0.0
        %3298 = vmatprep.subr.mxu0 0.0
        %3299 = vmatpush1.xpose.msra.mxu0 0.0
        %3300 = vmatprep.subr.mxu0 0.0
        %3301 = vmatpush1.xpose.msra.mxu0 0.0
        %3302 = vmatprep.subr.mxu0 0.0
        %3303 = vmatpush1.xpose.msra.mxu0 0.0
        %3304 = vmatprep.subr.mxu0 0.0
        %3305 = vmatpush1.xpose.msra.mxu0 0.0
        %3306 = vmatprep.subr.mxu0 0.0
        %3307 = vmatpush1.xpose.msra.mxu0 0.0
        %3308 = vmatprep.subr.mxu0 0.0
        %3309 = vmatpush1.xpose.msra.mxu0 0.0
        %3310 = vmatprep.subr.mxu0 0.0
        %3311 = vmatpush1.xpose.msra.mxu0 0.0
        %3312 = vmatprep.subr.mxu0 0.0
        %3313 = vmatpush1.xpose.msra.mxu0 0.0
        %3314 = vmatprep.subr.mxu0 0.0
        %3315 = vmatpush1.xpose.msra.mxu0 0.0
        %3316 = vmatprep.subr.mxu0 0.0
        %3317 = vmatpush1.xpose.msra.mxu0 0.0
        %3318 = vmatprep.subr.mxu0 0.0
        %3319 = vmatpush1.xpose.msra.mxu0 0.0
        %3320 = vmatprep.mubr.f32.mxu0 %v1246
        %3321 = vmatmul.mubr.f32.gmra.mrb[0].mxu0 %v1238
        %v3322 = vpop.f32.mrb[0].mxu0
        %v3323 = vadd.f32 %v3253, %v3322
        %v3324 = vpop.f32.mrb[0].mxu0
        %3325 = vdwg.mxu0
        %3326 = vmatprep.subr.mxu0 %v803
        %3327 = vmatpush1.xpose.msra.mxu0 %v802
        %3328 = vmatprep.subr.mxu0 %v931
        %3329 = vmatpush1.xpose.msra.mxu0 %v930
        %3330 = vmatprep.subr.mxu0 0.0
        %3331 = vmatpush1.xpose.msra.mxu0 0.0
        %3332 = vmatprep.subr.mxu0 0.0
        %3333 = vmatpush1.xpose.msra.mxu0 0.0
        %3334 = vmatprep.subr.mxu0 0.0
        %3335 = vmatpush1.xpose.msra.mxu0 0.0
        %3336 = vmatprep.subr.mxu0 0.0
        %3337 = vmatpush1.xpose.msra.mxu0 0.0
        %3338 = vmatprep.subr.mxu0 0.0
        %3339 = vmatpush1.xpose.msra.mxu0 0.0
        %3340 = vmatprep.subr.mxu0 0.0
        %3341 = vmatpush1.xpose.msra.mxu0 0.0
        %3342 = vmatprep.subr.mxu0 0.0
        %3343 = vmatpush1.xpose.msra.mxu0 0.0
        %3344 = vmatprep.subr.mxu0 0.0
        %3345 = vmatpush1.xpose.msra.mxu0 0.0
        %3346 = vmatprep.subr.mxu0 0.0
        %3347 = vmatpush1.xpose.msra.mxu0 0.0
        %3348 = vmatprep.subr.mxu0 0.0
        %3349 = vmatpush1.xpose.msra.mxu0 0.0
        %3350 = vmatprep.subr.mxu0 0.0
        %3351 = vmatpush1.xpose.msra.mxu0 0.0
        %3352 = vmatprep.subr.mxu0 0.0
        %3353 = vmatpush1.xpose.msra.mxu0 0.0
        %3354 = vmatprep.subr.mxu0 0.0
        %3355 = vmatpush1.xpose.msra.mxu0 0.0
        %3356 = vmatprep.subr.mxu0 0.0
        %3357 = vmatpush1.xpose.msra.mxu0 0.0
        %3358 = vmatprep.subr.mxu0 0.0
        %3359 = vmatpush1.xpose.msra.mxu0 0.0
        %3360 = vmatprep.subr.mxu0 0.0
        %3361 = vmatpush1.xpose.msra.mxu0 0.0
        %3362 = vmatprep.subr.mxu0 0.0
        %3363 = vmatpush1.xpose.msra.mxu0 0.0
        %3364 = vmatprep.subr.mxu0 0.0
        %3365 = vmatpush1.xpose.msra.mxu0 0.0
        %3366 = vmatprep.subr.mxu0 0.0
        %3367 = vmatpush1.xpose.msra.mxu0 0.0
        %3368 = vmatprep.subr.mxu0 0.0
        %3369 = vmatpush1.xpose.msra.mxu0 0.0
        %3370 = vmatprep.subr.mxu0 0.0
        %3371 = vmatpush1.xpose.msra.mxu0 0.0
        %3372 = vmatprep.subr.mxu0 0.0
        %3373 = vmatpush1.xpose.msra.mxu0 0.0
        %3374 = vmatprep.subr.mxu0 0.0
        %3375 = vmatpush1.xpose.msra.mxu0 0.0
        %3376 = vmatprep.subr.mxu0 0.0
        %3377 = vmatpush1.xpose.msra.mxu0 0.0
        %3378 = vmatprep.subr.mxu0 0.0
        %3379 = vmatpush1.xpose.msra.mxu0 0.0
        %3380 = vmatprep.subr.mxu0 0.0
        %3381 = vmatpush1.xpose.msra.mxu0 0.0
        %3382 = vmatprep.subr.mxu0 0.0
        %3383 = vmatpush1.xpose.msra.mxu0 0.0
        %3384 = vmatprep.subr.mxu0 0.0
        %3385 = vmatpush1.xpose.msra.mxu0 0.0
        %3386 = vmatprep.subr.mxu0 0.0
        %3387 = vmatpush1.xpose.msra.mxu0 0.0
        %3388 = vmatprep.subr.mxu0 0.0
        %3389 = vmatpush1.xpose.msra.mxu0 0.0
        %3390 = vmatprep.mubr.f32.mxu0 %v1247
        %3391 = vmatmul.mubr.f32.gmra.mrb[0].mxu0 %v1245
        %v3392 = vpop.f32.mrb[0].mxu0
        %v3393 = vadd.f32 %v3323, %v3392
        %v3394 = vpop.f32.mrb[0].mxu0
        %3395 = vdwg.mxu0
        %3396 = vmatprep.subr.mxu0 %v805
        %3397 = vmatpush1.xpose.msra.mxu0 %v804
        %3398 = vmatprep.subr.mxu0 %v933
        %3399 = vmatpush1.xpose.msra.mxu0 %v932
        %3400 = vmatprep.subr.mxu0 0.0
        %3401 = vmatpush1.xpose.msra.mxu0 0.0
        %3402 = vmatprep.subr.mxu0 0.0
        %3403 = vmatpush1.xpose.msra.mxu0 0.0
        %3404 = vmatprep.subr.mxu0 0.0
        %3405 = vmatpush1.xpose.msra.mxu0 0.0
        %3406 = vmatprep.subr.mxu0 0.0
        %3407 = vmatpush1.xpose.msra.mxu0 0.0
        %3408 = vmatprep.subr.mxu0 0.0
        %3409 = vmatpush1.xpose.msra.mxu0 0.0
        %3410 = vmatprep.subr.mxu0 0.0
        %3411 = vmatpush1.xpose.msra.mxu0 0.0
        %3412 = vmatprep.subr.mxu0 0.0
        %3413 = vmatpush1.xpose.msra.mxu0 0.0
        %3414 = vmatprep.subr.mxu0 0.0
        %3415 = vmatpush1.xpose.msra.mxu0 0.0
        %3416 = vmatprep.subr.mxu0 0.0
        %3417 = vmatpush1.xpose.msra.mxu0 0.0
        %3418 = vmatprep.subr.mxu0 0.0
        %3419 = vmatpush1.xpose.msra.mxu0 0.0
        %3420 = vmatprep.subr.mxu0 0.0
        %3421 = vmatpush1.xpose.msra.mxu0 0.0
        %3422 = vmatprep.subr.mxu0 0.0
        %3423 = vmatpush1.xpose.msra.mxu0 0.0
        %3424 = vmatprep.subr.mxu0 0.0
        %3425 = vmatpush1.xpose.msra.mxu0 0.0
        %3426 = vmatprep.subr.mxu0 0.0
        %3427 = vmatpush1.xpose.msra.mxu0 0.0
        %3428 = vmatprep.subr.mxu0 0.0
        %3429 = vmatpush1.xpose.msra.mxu0 0.0
        %3430 = vmatprep.subr.mxu0 0.0
        %3431 = vmatpush1.xpose.msra.mxu0 0.0
        %3432 = vmatprep.subr.mxu0 0.0
        %3433 = vmatpush1.xpose.msra.mxu0 0.0
        %3434 = vmatprep.subr.mxu0 0.0
        %3435 = vmatpush1.xpose.msra.mxu0 0.0
        %3436 = vmatprep.subr.mxu0 0.0
        %3437 = vmatpush1.xpose.msra.mxu0 0.0
        %3438 = vmatprep.subr.mxu0 0.0
        %3439 = vmatpush1.xpose.msra.mxu0 0.0
        %3440 = vmatprep.subr.mxu0 0.0
        %3441 = vmatpush1.xpose.msra.mxu0 0.0
        %3442 = vmatprep.subr.mxu0 0.0
        %3443 = vmatpush1.xpose.msra.mxu0 0.0
        %3444 = vmatprep.subr.mxu0 0.0
        %3445 = vmatpush1.xpose.msra.mxu0 0.0
        %3446 = vmatprep.subr.mxu0 0.0
        %3447 = vmatpush1.xpose.msra.mxu0 0.0
        %3448 = vmatprep.subr.mxu0 0.0
        %3449 = vmatpush1.xpose.msra.mxu0 0.0
        %3450 = vmatprep.subr.mxu0 0.0
        %3451 = vmatpush1.xpose.msra.mxu0 0.0
        %3452 = vmatprep.subr.mxu0 0.0
        %3453 = vmatpush1.xpose.msra.mxu0 0.0
        %3454 = vmatprep.subr.mxu0 0.0
        %3455 = vmatpush1.xpose.msra.mxu0 0.0
        %3456 = vmatprep.subr.mxu0 0.0
        %3457 = vmatpush1.xpose.msra.mxu0 0.0
        %3458 = vmatprep.subr.mxu0 0.0
        %3459 = vmatpush1.xpose.msra.mxu0 0.0
        %3460 = vmatprep.mubr.f32.mxu0 %v1263
        %3461 = vmatmul.mubr.f32.gmra.mrb[0].mxu0 %v1255
        %v3462 = vpop.f32.mrb[0].mxu0
        %v3463 = vadd.f32 %v3393, %v3462
        %v3464 = vpop.f32.mrb[0].mxu0
        %3465 = vdwg.mxu0
        %3466 = vmatprep.subr.mxu0 %v807
        %3467 = vmatpush1.xpose.msra.mxu0 %v806
        %3468 = vmatprep.subr.mxu0 %v935
        %3469 = vmatpush1.xpose.msra.mxu0 %v934
        %3470 = vmatprep.subr.mxu0 0.0
        %3471 = vmatpush1.xpose.msra.mxu0 0.0
        %3472 = vmatprep.subr.mxu0 0.0
        %3473 = vmatpush1.xpose.msra.mxu0 0.0
        %3474 = vmatprep.subr.mxu0 0.0
        %3475 = vmatpush1.xpose.msra.mxu0 0.0
        %3476 = vmatprep.subr.mxu0 0.0
        %3477 = vmatpush1.xpose.msra.mxu0 0.0
        %3478 = vmatprep.subr.mxu0 0.0
        %3479 = vmatpush1.xpose.msra.mxu0 0.0
        %3480 = vmatprep.subr.mxu0 0.0
        %3481 = vmatpush1.xpose.msra.mxu0 0.0
        %3482 = vmatprep.subr.mxu0 0.0
        %3483 = vmatpush1.xpose.msra.mxu0 0.0
        %3484 = vmatprep.subr.mxu0 0.0
        %3485 = vmatpush1.xpose.msra.mxu0 0.0
        %3486 = vmatprep.subr.mxu0 0.0
        %3487 = vmatpush1.xpose.msra.mxu0 0.0
        %3488 = vmatprep.subr.mxu0 0.0
        %3489 = vmatpush1.xpose.msra.mxu0 0.0
        %3490 = vmatprep.subr.mxu0 0.0
        %3491 = vmatpush1.xpose.msra.mxu0 0.0
        %3492 = vmatprep.subr.mxu0 0.0
        %3493 = vmatpush1.xpose.msra.mxu0 0.0
        %3494 = vmatprep.subr.mxu0 0.0
        %3495 = vmatpush1.xpose.msra.mxu0 0.0
        %3496 = vmatprep.subr.mxu0 0.0
        %3497 = vmatpush1.xpose.msra.mxu0 0.0
        %3498 = vmatprep.subr.mxu0 0.0
        %3499 = vmatpush1.xpose.msra.mxu0 0.0
        %3500 = vmatprep.subr.mxu0 0.0
        %3501 = vmatpush1.xpose.msra.mxu0 0.0
        %3502 = vmatprep.subr.mxu0 0.0
        %3503 = vmatpush1.xpose.msra.mxu0 0.0
        %3504 = vmatprep.subr.mxu0 0.0
        %3505 = vmatpush1.xpose.msra.mxu0 0.0
        %3506 = vmatprep.subr.mxu0 0.0
        %3507 = vmatpush1.xpose.msra.mxu0 0.0
        %3508 = vmatprep.subr.mxu0 0.0
        %3509 = vmatpush1.xpose.msra.mxu0 0.0
        %3510 = vmatprep.subr.mxu0 0.0
        %3511 = vmatpush1.xpose.msra.mxu0 0.0
        %3512 = vmatprep.subr.mxu0 0.0
        %3513 = vmatpush1.xpose.msra.mxu0 0.0
        %3514 = vmatprep.subr.mxu0 0.0
        %3515 = vmatpush1.xpose.msra.mxu0 0.0
        %3516 = vmatprep.subr.mxu0 0.0
        %3517 = vmatpush1.xpose.msra.mxu0 0.0
        %3518 = vmatprep.subr.mxu0 0.0
        %3519 = vmatpush1.xpose.msra.mxu0 0.0
        %3520 = vmatprep.subr.mxu0 0.0
        %3521 = vmatpush1.xpose.msra.mxu0 0.0
        %3522 = vmatprep.subr.mxu0 0.0
        %3523 = vmatpush1.xpose.msra.mxu0 0.0
        %3524 = vmatprep.subr.mxu0 0.0
        %3525 = vmatpush1.xpose.msra.mxu0 0.0
        %3526 = vmatprep.subr.mxu0 0.0
        %3527 = vmatpush1.xpose.msra.mxu0 0.0
        %3528 = vmatprep.subr.mxu0 0.0
        %3529 = vmatpush1.xpose.msra.mxu0 0.0
        %3530 = vmatprep.mubr.f32.mxu0 %v1264
        %3531 = vmatmul.mubr.f32.gmra.mrb[0].mxu0 %v1262
        %v3532 = vpop.f32.mrb[0].mxu0
        %v3533 = vadd.f32 %v3463, %v3532
        %v3534 = vpop.f32.mrb[0].mxu0
        %3535 = vdwg.mxu0
        %3536 = vmatprep.subr.mxu0 %v809
        %3537 = vmatpush1.xpose.msra.mxu0 %v808
        %3538 = vmatprep.subr.mxu0 %v937
        %3539 = vmatpush1.xpose.msra.mxu0 %v936
        %3540 = vmatprep.subr.mxu0 0.0
        %3541 = vmatpush1.xpose.msra.mxu0 0.0
        %3542 = vmatprep.subr.mxu0 0.0
        %3543 = vmatpush1.xpose.msra.mxu0 0.0
        %3544 = vmatprep.subr.mxu0 0.0
        %3545 = vmatpush1.xpose.msra.mxu0 0.0
        %3546 = vmatprep.subr.mxu0 0.0
        %3547 = vmatpush1.xpose.msra.mxu0 0.0
        %3548 = vmatprep.subr.mxu0 0.0
        %3549 = vmatpush1.xpose.msra.mxu0 0.0
        %3550 = vmatprep.subr.mxu0 0.0
        %3551 = vmatpush1.xpose.msra.mxu0 0.0
        %3552 = vmatprep.subr.mxu0 0.0
        %3553 = vmatpush1.xpose.msra.mxu0 0.0
        %3554 = vmatprep.subr.mxu0 0.0
        %3555 = vmatpush1.xpose.msra.mxu0 0.0
        %3556 = vmatprep.subr.mxu0 0.0
        %3557 = vmatpush1.xpose.msra.mxu0 0.0
        %3558 = vmatprep.subr.mxu0 0.0
        %3559 = vmatpush1.xpose.msra.mxu0 0.0
        %3560 = vmatprep.subr.mxu0 0.0
        %3561 = vmatpush1.xpose.msra.mxu0 0.0
        %3562 = vmatprep.subr.mxu0 0.0
        %3563 = vmatpush1.xpose.msra.mxu0 0.0
        %3564 = vmatprep.subr.mxu0 0.0
        %3565 = vmatpush1.xpose.msra.mxu0 0.0
        %3566 = vmatprep.subr.mxu0 0.0
        %3567 = vmatpush1.xpose.msra.mxu0 0.0
        %3568 = vmatprep.subr.mxu0 0.0
        %3569 = vmatpush1.xpose.msra.mxu0 0.0
        %3570 = vmatprep.subr.mxu0 0.0
        %3571 = vmatpush1.xpose.msra.mxu0 0.0
        %3572 = vmatprep.subr.mxu0 0.0
        %3573 = vmatpush1.xpose.msra.mxu0 0.0
        %3574 = vmatprep.subr.mxu0 0.0
        %3575 = vmatpush1.xpose.msra.mxu0 0.0
        %3576 = vmatprep.subr.mxu0 0.0
        %3577 = vmatpush1.xpose.msra.mxu0 0.0
        %3578 = vmatprep.subr.mxu0 0.0
        %3579 = vmatpush1.xpose.msra.mxu0 0.0
        %3580 = vmatprep.subr.mxu0 0.0
        %3581 = vmatpush1.xpose.msra.mxu0 0.0
        %3582 = vmatprep.subr.mxu0 0.0
        %3583 = vmatpush1.xpose.msra.mxu0 0.0
        %3584 = vmatprep.subr.mxu0 0.0
        %3585 = vmatpush1.xpose.msra.mxu0 0.0
        %3586 = vmatprep.subr.mxu0 0.0
        %3587 = vmatpush1.xpose.msra.mxu0 0.0
        %3588 = vmatprep.subr.mxu0 0.0
        %3589 = vmatpush1.xpose.msra.mxu0 0.0
        %3590 = vmatprep.subr.mxu0 0.0
        %3591 = vmatpush1.xpose.msra.mxu0 0.0
        %3592 = vmatprep.subr.mxu0 0.0
        %3593 = vmatpush1.xpose.msra.mxu0 0.0
        %3594 = vmatprep.subr.mxu0 0.0
        %3595 = vmatpush1.xpose.msra.mxu0 0.0
        %3596 = vmatprep.subr.mxu0 0.0
        %3597 = vmatpush1.xpose.msra.mxu0 0.0
        %3598 = vmatprep.subr.mxu0 0.0
        %3599 = vmatpush1.xpose.msra.mxu0 0.0
        %3600 = vmatprep.mubr.f32.mxu0 %v1280
        %3601 = vmatmul.mubr.f32.gmra.mrb[0].mxu0 %v1272
        %v3602 = vpop.f32.mrb[0].mxu0
        %v3603 = vadd.f32 %v3533, %v3602
        %v3604 = vpop.f32.mrb[0].mxu0
        %3605 = vdwg.mxu0
        %3606 = vmatprep.subr.mxu0 %v811
        %3607 = vmatpush1.xpose.msra.mxu0 %v810
        %3608 = vmatprep.subr.mxu0 %v939
        %3609 = vmatpush1.xpose.msra.mxu0 %v938
        %3610 = vmatprep.subr.mxu0 0.0
        %3611 = vmatpush1.xpose.msra.mxu0 0.0
        %3612 = vmatprep.subr.mxu0 0.0
        %3613 = vmatpush1.xpose.msra.mxu0 0.0
        %3614 = vmatprep.subr.mxu0 0.0
        %3615 = vmatpush1.xpose.msra.mxu0 0.0
        %3616 = vmatprep.subr.mxu0 0.0
        %3617 = vmatpush1.xpose.msra.mxu0 0.0
        %3618 = vmatprep.subr.mxu0 0.0
        %3619 = vmatpush1.xpose.msra.mxu0 0.0
        %3620 = vmatprep.subr.mxu0 0.0
        %3621 = vmatpush1.xpose.msra.mxu0 0.0
        %3622 = vmatprep.subr.mxu0 0.0
        %3623 = vmatpush1.xpose.msra.mxu0 0.0
        %3624 = vmatprep.subr.mxu0 0.0
        %3625 = vmatpush1.xpose.msra.mxu0 0.0
        %3626 = vmatprep.subr.mxu0 0.0
        %3627 = vmatpush1.xpose.msra.mxu0 0.0
        %3628 = vmatprep.subr.mxu0 0.0
        %3629 = vmatpush1.xpose.msra.mxu0 0.0
        %3630 = vmatprep.subr.mxu0 0.0
        %3631 = vmatpush1.xpose.msra.mxu0 0.0
        %3632 = vmatprep.subr.mxu0 0.0
        %3633 = vmatpush1.xpose.msra.mxu0 0.0
        %3634 = vmatprep.subr.mxu0 0.0
        %3635 = vmatpush1.xpose.msra.mxu0 0.0
        %3636 = vmatprep.subr.mxu0 0.0
        %3637 = vmatpush1.xpose.msra.mxu0 0.0
        %3638 = vmatprep.subr.mxu0 0.0
        %3639 = vmatpush1.xpose.msra.mxu0 0.0
        %3640 = vmatprep.subr.mxu0 0.0
        %3641 = vmatpush1.xpose.msra.mxu0 0.0
        %3642 = vmatprep.subr.mxu0 0.0
        %3643 = vmatpush1.xpose.msra.mxu0 0.0
        %3644 = vmatprep.subr.mxu0 0.0
        %3645 = vmatpush1.xpose.msra.mxu0 0.0
        %3646 = vmatprep.subr.mxu0 0.0
        %3647 = vmatpush1.xpose.msra.mxu0 0.0
        %3648 = vmatprep.subr.mxu0 0.0
        %3649 = vmatpush1.xpose.msra.mxu0 0.0
        %3650 = vmatprep.subr.mxu0 0.0
        %3651 = vmatpush1.xpose.msra.mxu0 0.0
        %3652 = vmatprep.subr.mxu0 0.0
        %3653 = vmatpush1.xpose.msra.mxu0 0.0
        %3654 = vmatprep.subr.mxu0 0.0
        %3655 = vmatpush1.xpose.msra.mxu0 0.0
        %3656 = vmatprep.subr.mxu0 0.0
        %3657 = vmatpush1.xpose.msra.mxu0 0.0
        %3658 = vmatprep.subr.mxu0 0.0
        %3659 = vmatpush1.xpose.msra.mxu0 0.0
        %3660 = vmatprep.subr.mxu0 0.0
        %3661 = vmatpush1.xpose.msra.mxu0 0.0
        %3662 = vmatprep.subr.mxu0 0.0
        %3663 = vmatpush1.xpose.msra.mxu0 0.0
        %3664 = vmatprep.subr.mxu0 0.0
        %3665 = vmatpush1.xpose.msra.mxu0 0.0
        %3666 = vmatprep.subr.mxu0 0.0
        %3667 = vmatpush1.xpose.msra.mxu0 0.0
        %3668 = vmatprep.subr.mxu0 0.0
        %3669 = vmatpush1.xpose.msra.mxu0 0.0
        %3670 = vmatprep.mubr.f32.mxu0 %v1281
        %3671 = vmatmul.mubr.f32.gmra.mrb[0].mxu0 %v1279
        %v3672 = vpop.f32.mrb[0].mxu0
        %v3673 = vadd.f32 %v3603, %v3672
        %v3674 = vpop.f32.mrb[0].mxu0
        %3675 = vdwg.mxu0
        %3676 = vmatprep.subr.mxu0 %v813
        %3677 = vmatpush1.xpose.msra.mxu0 %v812
        %3678 = vmatprep.subr.mxu0 %v941
        %3679 = vmatpush1.xpose.msra.mxu0 %v940
        %3680 = vmatprep.subr.mxu0 0.0
        %3681 = vmatpush1.xpose.msra.mxu0 0.0
        %3682 = vmatprep.subr.mxu0 0.0
        %3683 = vmatpush1.xpose.msra.mxu0 0.0
        %3684 = vmatprep.subr.mxu0 0.0
        %3685 = vmatpush1.xpose.msra.mxu0 0.0
        %3686 = vmatprep.subr.mxu0 0.0
        %3687 = vmatpush1.xpose.msra.mxu0 0.0
        %3688 = vmatprep.subr.mxu0 0.0
        %3689 = vmatpush1.xpose.msra.mxu0 0.0
        %3690 = vmatprep.subr.mxu0 0.0
        %3691 = vmatpush1.xpose.msra.mxu0 0.0
        %3692 = vmatprep.subr.mxu0 0.0
        %3693 = vmatpush1.xpose.msra.mxu0 0.0
        %3694 = vmatprep.subr.mxu0 0.0
        %3695 = vmatpush1.xpose.msra.mxu0 0.0
        %3696 = vmatprep.subr.mxu0 0.0
        %3697 = vmatpush1.xpose.msra.mxu0 0.0
        %3698 = vmatprep.subr.mxu0 0.0
        %3699 = vmatpush1.xpose.msra.mxu0 0.0
        %3700 = vmatprep.subr.mxu0 0.0
        %3701 = vmatpush1.xpose.msra.mxu0 0.0
        %3702 = vmatprep.subr.mxu0 0.0
        %3703 = vmatpush1.xpose.msra.mxu0 0.0
        %3704 = vmatprep.subr.mxu0 0.0
        %3705 = vmatpush1.xpose.msra.mxu0 0.0
        %3706 = vmatprep.subr.mxu0 0.0
        %3707 = vmatpush1.xpose.msra.mxu0 0.0
        %3708 = vmatprep.subr.mxu0 0.0
        %3709 = vmatpush1.xpose.msra.mxu0 0.0
        %3710 = vmatprep.subr.mxu0 0.0
        %3711 = vmatpush1.xpose.msra.mxu0 0.0
        %3712 = vmatprep.subr.mxu0 0.0
        %3713 = vmatpush1.xpose.msra.mxu0 0.0
        %3714 = vmatprep.subr.mxu0 0.0
        %3715 = vmatpush1.xpose.msra.mxu0 0.0
        %3716 = vmatprep.subr.mxu0 0.0
        %3717 = vmatpush1.xpose.msra.mxu0 0.0
        %3718 = vmatprep.subr.mxu0 0.0
        %3719 = vmatpush1.xpose.msra.mxu0 0.0
        %3720 = vmatprep.subr.mxu0 0.0
        %3721 = vmatpush1.xpose.msra.mxu0 0.0
        %3722 = vmatprep.subr.mxu0 0.0
        %3723 = vmatpush1.xpose.msra.mxu0 0.0
        %3724 = vmatprep.subr.mxu0 0.0
        %3725 = vmatpush1.xpose.msra.mxu0 0.0
        %3726 = vmatprep.subr.mxu0 0.0
        %3727 = vmatpush1.xpose.msra.mxu0 0.0
        %3728 = vmatprep.subr.mxu0 0.0
        %3729 = vmatpush1.xpose.msra.mxu0 0.0
        %3730 = vmatprep.subr.mxu0 0.0
        %3731 = vmatpush1.xpose.msra.mxu0 0.0
        %3732 = vmatprep.subr.mxu0 0.0
        %3733 = vmatpush1.xpose.msra.mxu0 0.0
        %3734 = vmatprep.subr.mxu0 0.0
        %3735 = vmatpush1.xpose.msra.mxu0 0.0
        %3736 = vmatprep.subr.mxu0 0.0
        %3737 = vmatpush1.xpose.msra.mxu0 0.0
        %3738 = vmatprep.subr.mxu0 0.0
        %3739 = vmatpush1.xpose.msra.mxu0 0.0
        %3740 = vmatprep.mubr.f32.mxu0 %v1297
        %3741 = vmatmul.mubr.f32.gmra.mrb[0].mxu0 %v1289
        %v3742 = vpop.f32.mrb[0].mxu0
        %v3743 = vadd.f32 %v3673, %v3742
        %v3744 = vpop.f32.mrb[0].mxu0
        %3745 = vdwg.mxu0
        %3746 = vmatprep.subr.mxu0 %v815
        %3747 = vmatpush1.xpose.msra.mxu0 %v814
        %3748 = vmatprep.subr.mxu0 %v943
        %3749 = vmatpush1.xpose.msra.mxu0 %v942
        %3750 = vmatprep.subr.mxu0 0.0
        %3751 = vmatpush1.xpose.msra.mxu0 0.0
        %3752 = vmatprep.subr.mxu0 0.0
        %3753 = vmatpush1.xpose.msra.mxu0 0.0
        %3754 = vmatprep.subr.mxu0 0.0
        %3755 = vmatpush1.xpose.msra.mxu0 0.0
        %3756 = vmatprep.subr.mxu0 0.0
        %3757 = vmatpush1.xpose.msra.mxu0 0.0
        %3758 = vmatprep.subr.mxu0 0.0
        %3759 = vmatpush1.xpose.msra.mxu0 0.0
        %3760 = vmatprep.subr.mxu0 0.0
        %3761 = vmatpush1.xpose.msra.mxu0 0.0
        %3762 = vmatprep.subr.mxu0 0.0
        %3763 = vmatpush1.xpose.msra.mxu0 0.0
        %3764 = vmatprep.subr.mxu0 0.0
        %3765 = vmatpush1.xpose.msra.mxu0 0.0
        %3766 = vmatprep.subr.mxu0 0.0
        %3767 = vmatpush1.xpose.msra.mxu0 0.0
        %3768 = vmatprep.subr.mxu0 0.0
        %3769 = vmatpush1.xpose.msra.mxu0 0.0
        %3770 = vmatprep.subr.mxu0 0.0
        %3771 = vmatpush1.xpose.msra.mxu0 0.0
        %3772 = vmatprep.subr.mxu0 0.0
        %3773 = vmatpush1.xpose.msra.mxu0 0.0
        %3774 = vmatprep.subr.mxu0 0.0
        %3775 = vmatpush1.xpose.msra.mxu0 0.0
        %3776 = vmatprep.subr.mxu0 0.0
        %3777 = vmatpush1.xpose.msra.mxu0 0.0
        %3778 = vmatprep.subr.mxu0 0.0
        %3779 = vmatpush1.xpose.msra.mxu0 0.0
        %3780 = vmatprep.subr.mxu0 0.0
        %3781 = vmatpush1.xpose.msra.mxu0 0.0
        %3782 = vmatprep.subr.mxu0 0.0
        %3783 = vmatpush1.xpose.msra.mxu0 0.0
        %3784 = vmatprep.subr.mxu0 0.0
        %3785 = vmatpush1.xpose.msra.mxu0 0.0
        %3786 = vmatprep.subr.mxu0 0.0
        %3787 = vmatpush1.xpose.msra.mxu0 0.0
        %3788 = vmatprep.subr.mxu0 0.0
        %3789 = vmatpush1.xpose.msra.mxu0 0.0
        %3790 = vmatprep.subr.mxu0 0.0
        %3791 = vmatpush1.xpose.msra.mxu0 0.0
        %3792 = vmatprep.subr.mxu0 0.0
        %3793 = vmatpush1.xpose.msra.mxu0 0.0
        %3794 = vmatprep.subr.mxu0 0.0
        %3795 = vmatpush1.xpose.msra.mxu0 0.0
        %3796 = vmatprep.subr.mxu0 0.0
        %3797 = vmatpush1.xpose.msra.mxu0 0.0
        %3798 = vmatprep.subr.mxu0 0.0
        %3799 = vmatpush1.xpose.msra.mxu0 0.0
        %3800 = vmatprep.subr.mxu0 0.0
        %3801 = vmatpush1.xpose.msra.mxu0 0.0
        %3802 = vmatprep.subr.mxu0 0.0
        %3803 = vmatpush1.xpose.msra.mxu0 0.0
        %3804 = vmatprep.subr.mxu0 0.0
        %3805 = vmatpush1.xpose.msra.mxu0 0.0
        %3806 = vmatprep.subr.mxu0 0.0
        %3807 = vmatpush1.xpose.msra.mxu0 0.0
        %3808 = vmatprep.subr.mxu0 0.0
        %3809 = vmatpush1.xpose.msra.mxu0 0.0
        %3810 = vmatprep.mubr.f32.mxu0 %v1298
        %3811 = vmatmul.mubr.f32.gmra.mrb[0].mxu0 %v1296
        %v3812 = vpop.f32.mrb[0].mxu0
        %v3813 = vadd.f32 %v3743, %v3812
        %v3814 = vpop.f32.mrb[0].mxu0
        %3815 = vdwg.mxu0
        %3816 = vmatprep.subr.mxu0 %v817
        %3817 = vmatpush1.xpose.msra.mxu0 %v816
        %3818 = vmatprep.subr.mxu0 %v945
        %3819 = vmatpush1.xpose.msra.mxu0 %v944
        %3820 = vmatprep.subr.mxu0 0.0
        %3821 = vmatpush1.xpose.msra.mxu0 0.0
        %3822 = vmatprep.subr.mxu0 0.0
        %3823 = vmatpush1.xpose.msra.mxu0 0.0
        %3824 = vmatprep.subr.mxu0 0.0
        %3825 = vmatpush1.xpose.msra.mxu0 0.0
        %3826 = vmatprep.subr.mxu0 0.0
        %3827 = vmatpush1.xpose.msra.mxu0 0.0
        %3828 = vmatprep.subr.mxu0 0.0
        %3829 = vmatpush1.xpose.msra.mxu0 0.0
        %3830 = vmatprep.subr.mxu0 0.0
        %3831 = vmatpush1.xpose.msra.mxu0 0.0
        %3832 = vmatprep.subr.mxu0 0.0
        %3833 = vmatpush1.xpose.msra.mxu0 0.0
        %3834 = vmatprep.subr.mxu0 0.0
        %3835 = vmatpush1.xpose.msra.mxu0 0.0
        %3836 = vmatprep.subr.mxu0 0.0
        %3837 = vmatpush1.xpose.msra.mxu0 0.0
        %3838 = vmatprep.subr.mxu0 0.0
        %3839 = vmatpush1.xpose.msra.mxu0 0.0
        %3840 = vmatprep.subr.mxu0 0.0
        %3841 = vmatpush1.xpose.msra.mxu0 0.0
        %3842 = vmatprep.subr.mxu0 0.0
        %3843 = vmatpush1.xpose.msra.mxu0 0.0
        %3844 = vmatprep.subr.mxu0 0.0
        %3845 = vmatpush1.xpose.msra.mxu0 0.0
        %3846 = vmatprep.subr.mxu0 0.0
        %3847 = vmatpush1.xpose.msra.mxu0 0.0
        %3848 = vmatprep.subr.mxu0 0.0
        %3849 = vmatpush1.xpose.msra.mxu0 0.0
        %3850 = vmatprep.subr.mxu0 0.0
        %3851 = vmatpush1.xpose.msra.mxu0 0.0
        %3852 = vmatprep.subr.mxu0 0.0
        %3853 = vmatpush1.xpose.msra.mxu0 0.0
        %3854 = vmatprep.subr.mxu0 0.0
        %3855 = vmatpush1.xpose.msra.mxu0 0.0
        %3856 = vmatprep.subr.mxu0 0.0
        %3857 = vmatpush1.xpose.msra.mxu0 0.0
        %3858 = vmatprep.subr.mxu0 0.0
        %3859 = vmatpush1.xpose.msra.mxu0 0.0
        %3860 = vmatprep.subr.mxu0 0.0
        %3861 = vmatpush1.xpose.msra.mxu0 0.0
        %3862 = vmatprep.subr.mxu0 0.0
        %3863 = vmatpush1.xpose.msra.mxu0 0.0
        %3864 = vmatprep.subr.mxu0 0.0
        %3865 = vmatpush1.xpose.msra.mxu0 0.0
        %3866 = vmatprep.subr.mxu0 0.0
        %3867 = vmatpush1.xpose.msra.mxu0 0.0
        %3868 = vmatprep.subr.mxu0 0.0
        %3869 = vmatpush1.xpose.msra.mxu0 0.0
        %3870 = vmatprep.subr.mxu0 0.0
        %3871 = vmatpush1.xpose.msra.mxu0 0.0
        %3872 = vmatprep.subr.mxu0 0.0
        %3873 = vmatpush1.xpose.msra.mxu0 0.0
        %3874 = vmatprep.subr.mxu0 0.0
        %3875 = vmatpush1.xpose.msra.mxu0 0.0
        %3876 = vmatprep.subr.mxu0 0.0
        %3877 = vmatpush1.xpose.msra.mxu0 0.0
        %3878 = vmatprep.subr.mxu0 0.0
        %3879 = vmatpush1.xpose.msra.mxu0 0.0
        %3880 = vmatprep.mubr.f32.mxu0 %v1314
        %3881 = vmatmul.mubr.f32.gmra.mrb[0].mxu0 %v1306
        %v3882 = vpop.f32.mrb[0].mxu0
        %v3883 = vadd.f32 %v3813, %v3882
        %v3884 = vpop.f32.mrb[0].mxu0
        %3885 = vdwg.mxu0
        %3886 = vmatprep.subr.mxu0 %v819
        %3887 = vmatpush1.xpose.msra.mxu0 %v818
        %3888 = vmatprep.subr.mxu0 %v947
        %3889 = vmatpush1.xpose.msra.mxu0 %v946
        %3890 = vmatprep.subr.mxu0 0.0
        %3891 = vmatpush1.xpose.msra.mxu0 0.0
        %3892 = vmatprep.subr.mxu0 0.0
        %3893 = vmatpush1.xpose.msra.mxu0 0.0
        %3894 = vmatprep.subr.mxu0 0.0
        %3895 = vmatpush1.xpose.msra.mxu0 0.0
        %3896 = vmatprep.subr.mxu0 0.0
        %3897 = vmatpush1.xpose.msra.mxu0 0.0
        %3898 = vmatprep.subr.mxu0 0.0
        %3899 = vmatpush1.xpose.msra.mxu0 0.0
        %3900 = vmatprep.subr.mxu0 0.0
        %3901 = vmatpush1.xpose.msra.mxu0 0.0
        %3902 = vmatprep.subr.mxu0 0.0
        %3903 = vmatpush1.xpose.msra.mxu0 0.0
        %3904 = vmatprep.subr.mxu0 0.0
        %3905 = vmatpush1.xpose.msra.mxu0 0.0
        %3906 = vmatprep.subr.mxu0 0.0
        %3907 = vmatpush1.xpose.msra.mxu0 0.0
        %3908 = vmatprep.subr.mxu0 0.0
        %3909 = vmatpush1.xpose.msra.mxu0 0.0
        %3910 = vmatprep.subr.mxu0 0.0
        %3911 = vmatpush1.xpose.msra.mxu0 0.0
        %3912 = vmatprep.subr.mxu0 0.0
        %3913 = vmatpush1.xpose.msra.mxu0 0.0
        %3914 = vmatprep.subr.mxu0 0.0
        %3915 = vmatpush1.xpose.msra.mxu0 0.0
        %3916 = vmatprep.subr.mxu0 0.0
        %3917 = vmatpush1.xpose.msra.mxu0 0.0
        %3918 = vmatprep.subr.mxu0 0.0
        %3919 = vmatpush1.xpose.msra.mxu0 0.0
        %3920 = vmatprep.subr.mxu0 0.0
        %3921 = vmatpush1.xpose.msra.mxu0 0.0
        %3922 = vmatprep.subr.mxu0 0.0
        %3923 = vmatpush1.xpose.msra.mxu0 0.0
        %3924 = vmatprep.subr.mxu0 0.0
        %3925 = vmatpush1.xpose.msra.mxu0 0.0
        %3926 = vmatprep.subr.mxu0 0.0
        %3927 = vmatpush1.xpose.msra.mxu0 0.0
        %3928 = vmatprep.subr.mxu0 0.0
        %3929 = vmatpush1.xpose.msra.mxu0 0.0
        %3930 = vmatprep.subr.mxu0 0.0
        %3931 = vmatpush1.xpose.msra.mxu0 0.0
        %3932 = vmatprep.subr.mxu0 0.0
        %3933 = vmatpush1.xpose.msra.mxu0 0.0
        %3934 = vmatprep.subr.mxu0 0.0
        %3935 = vmatpush1.xpose.msra.mxu0 0.0
        %3936 = vmatprep.subr.mxu0 0.0
        %3937 = vmatpush1.xpose.msra.mxu0 0.0
        %3938 = vmatprep.subr.mxu0 0.0
        %3939 = vmatpush1.xpose.msra.mxu0 0.0
        %3940 = vmatprep.subr.mxu0 0.0
        %3941 = vmatpush1.xpose.msra.mxu0 0.0
        %3942 = vmatprep.subr.mxu0 0.0
        %3943 = vmatpush1.xpose.msra.mxu0 0.0
        %3944 = vmatprep.subr.mxu0 0.0
        %3945 = vmatpush1.xpose.msra.mxu0 0.0
        %3946 = vmatprep.subr.mxu0 0.0
        %3947 = vmatpush1.xpose.msra.mxu0 0.0
        %3948 = vmatprep.subr.mxu0 0.0
        %3949 = vmatpush1.xpose.msra.mxu0 0.0
        %3950 = vmatprep.mubr.f32.mxu0 %v1315
        %3951 = vmatmul.mubr.f32.gmra.mrb[0].mxu0 %v1313
        %v3952 = vpop.f32.mrb[0].mxu0
        %v3953 = vadd.f32 %v3883, %v3952
        %v3954 = vpop.f32.mrb[0].mxu0
        %3955 = vdwg.mxu0
        %3956 = vmatprep.subr.mxu0 %v821
        %3957 = vmatpush1.xpose.msra.mxu0 %v820
        %3958 = vmatprep.subr.mxu0 %v949
        %3959 = vmatpush1.xpose.msra.mxu0 %v948
        %3960 = vmatprep.subr.mxu0 0.0
        %3961 = vmatpush1.xpose.msra.mxu0 0.0
        %3962 = vmatprep.subr.mxu0 0.0
        %3963 = vmatpush1.xpose.msra.mxu0 0.0
        %3964 = vmatprep.subr.mxu0 0.0
        %3965 = vmatpush1.xpose.msra.mxu0 0.0
        %3966 = vmatprep.subr.mxu0 0.0
        %3967 = vmatpush1.xpose.msra.mxu0 0.0
        %3968 = vmatprep.subr.mxu0 0.0
        %3969 = vmatpush1.xpose.msra.mxu0 0.0
        %3970 = vmatprep.subr.mxu0 0.0
        %3971 = vmatpush1.xpose.msra.mxu0 0.0
        %3972 = vmatprep.subr.mxu0 0.0
        %3973 = vmatpush1.xpose.msra.mxu0 0.0
        %3974 = vmatprep.subr.mxu0 0.0
        %3975 = vmatpush1.xpose.msra.mxu0 0.0
        %3976 = vmatprep.subr.mxu0 0.0
        %3977 = vmatpush1.xpose.msra.mxu0 0.0
        %3978 = vmatprep.subr.mxu0 0.0
        %3979 = vmatpush1.xpose.msra.mxu0 0.0
        %3980 = vmatprep.subr.mxu0 0.0
        %3981 = vmatpush1.xpose.msra.mxu0 0.0
        %3982 = vmatprep.subr.mxu0 0.0
        %3983 = vmatpush1.xpose.msra.mxu0 0.0
        %3984 = vmatprep.subr.mxu0 0.0
        %3985 = vmatpush1.xpose.msra.mxu0 0.0
        %3986 = vmatprep.subr.mxu0 0.0
        %3987 = vmatpush1.xpose.msra.mxu0 0.0
        %3988 = vmatprep.subr.mxu0 0.0
        %3989 = vmatpush1.xpose.msra.mxu0 0.0
        %3990 = vmatprep.subr.mxu0 0.0
        %3991 = vmatpush1.xpose.msra.mxu0 0.0
        %3992 = vmatprep.subr.mxu0 0.0
        %3993 = vmatpush1.xpose.msra.mxu0 0.0
        %3994 = vmatprep.subr.mxu0 0.0
        %3995 = vmatpush1.xpose.msra.mxu0 0.0
        %3996 = vmatprep.subr.mxu0 0.0
        %3997 = vmatpush1.xpose.msra.mxu0 0.0
        %3998 = vmatprep.subr.mxu0 0.0
        %3999 = vmatpush1.xpose.msra.mxu0 0.0
        %4000 = vmatprep.subr.mxu0 0.0
        %4001 = vmatpush1.xpose.msra.mxu0 0.0
        %4002 = vmatprep.subr.mxu0 0.0
        %4003 = vmatpush1.xpose.msra.mxu0 0.0
        %4004 = vmatprep.subr.mxu0 0.0
        %4005 = vmatpush1.xpose.msra.mxu0 0.0
        %4006 = vmatprep.subr.mxu0 0.0
        %4007 = vmatpush1.xpose.msra.mxu0 0.0
        %4008 = vmatprep.subr.mxu0 0.0
        %4009 = vmatpush1.xpose.msra.mxu0 0.0
        %4010 = vmatprep.subr.mxu0 0.0
        %4011 = vmatpush1.xpose.msra.mxu0 0.0
        %4012 = vmatprep.subr.mxu0 0.0
        %4013 = vmatpush1.xpose.msra.mxu0 0.0
        %4014 = vmatprep.subr.mxu0 0.0
        %4015 = vmatpush1.xpose.msra.mxu0 0.0
        %4016 = vmatprep.subr.mxu0 0.0
        %4017 = vmatpush1.xpose.msra.mxu0 0.0
        %4018 = vmatprep.subr.mxu0 0.0
        %4019 = vmatpush1.xpose.msra.mxu0 0.0
        %4020 = vmatprep.mubr.f32.mxu0 %v1331
        %4021 = vmatmul.mubr.f32.gmra.mrb[0].mxu0 %v1323
        %v4022 = vpop.f32.mrb[0].mxu0
        %v4023 = vadd.f32 %v3953, %v4022
        %v4024 = vpop.f32.mrb[0].mxu0
        %4025 = vdwg.mxu0
        %4026 = vmatprep.subr.mxu0 %v823
        %4027 = vmatpush1.xpose.msra.mxu0 %v822
        %4028 = vmatprep.subr.mxu0 %v951
        %4029 = vmatpush1.xpose.msra.mxu0 %v950
        %4030 = vmatprep.subr.mxu0 0.0
        %4031 = vmatpush1.xpose.msra.mxu0 0.0
        %4032 = vmatprep.subr.mxu0 0.0
        %4033 = vmatpush1.xpose.msra.mxu0 0.0
        %4034 = vmatprep.subr.mxu0 0.0
        %4035 = vmatpush1.xpose.msra.mxu0 0.0
        %4036 = vmatprep.subr.mxu0 0.0
        %4037 = vmatpush1.xpose.msra.mxu0 0.0
        %4038 = vmatprep.subr.mxu0 0.0
        %4039 = vmatpush1.xpose.msra.mxu0 0.0
        %4040 = vmatprep.subr.mxu0 0.0
        %4041 = vmatpush1.xpose.msra.mxu0 0.0
        %4042 = vmatprep.subr.mxu0 0.0
        %4043 = vmatpush1.xpose.msra.mxu0 0.0
        %4044 = vmatprep.subr.mxu0 0.0
        %4045 = vmatpush1.xpose.msra.mxu0 0.0
        %4046 = vmatprep.subr.mxu0 0.0
        %4047 = vmatpush1.xpose.msra.mxu0 0.0
        %4048 = vmatprep.subr.mxu0 0.0
        %4049 = vmatpush1.xpose.msra.mxu0 0.0
        %4050 = vmatprep.subr.mxu0 0.0
        %4051 = vmatpush1.xpose.msra.mxu0 0.0
        %4052 = vmatprep.subr.mxu0 0.0
        %4053 = vmatpush1.xpose.msra.mxu0 0.0
        %4054 = vmatprep.subr.mxu0 0.0
        %4055 = vmatpush1.xpose.msra.mxu0 0.0
        %4056 = vmatprep.subr.mxu0 0.0
        %4057 = vmatpush1.xpose.msra.mxu0 0.0
        %4058 = vmatprep.subr.mxu0 0.0
        %4059 = vmatpush1.xpose.msra.mxu0 0.0
        %4060 = vmatprep.subr.mxu0 0.0
        %4061 = vmatpush1.xpose.msra.mxu0 0.0
        %4062 = vmatprep.subr.mxu0 0.0
        %4063 = vmatpush1.xpose.msra.mxu0 0.0
        %4064 = vmatprep.subr.mxu0 0.0
        %4065 = vmatpush1.xpose.msra.mxu0 0.0
        %4066 = vmatprep.subr.mxu0 0.0
        %4067 = vmatpush1.xpose.msra.mxu0 0.0
        %4068 = vmatprep.subr.mxu0 0.0
        %4069 = vmatpush1.xpose.msra.mxu0 0.0
        %4070 = vmatprep.subr.mxu0 0.0
        %4071 = vmatpush1.xpose.msra.mxu0 0.0
        %4072 = vmatprep.subr.mxu0 0.0
        %4073 = vmatpush1.xpose.msra.mxu0 0.0
        %4074 = vmatprep.subr.mxu0 0.0
        %4075 = vmatpush1.xpose.msra.mxu0 0.0
        %4076 = vmatprep.subr.mxu0 0.0
        %4077 = vmatpush1.xpose.msra.mxu0 0.0
        %4078 = vmatprep.subr.mxu0 0.0
        %4079 = vmatpush1.xpose.msra.mxu0 0.0
        %4080 = vmatprep.subr.mxu0 0.0
        %4081 = vmatpush1.xpose.msra.mxu0 0.0
        %4082 = vmatprep.subr.mxu0 0.0
        %4083 = vmatpush1.xpose.msra.mxu0 0.0
        %4084 = vmatprep.subr.mxu0 0.0
        %4085 = vmatpush1.xpose.msra.mxu0 0.0
        %4086 = vmatprep.subr.mxu0 0.0
        %4087 = vmatpush1.xpose.msra.mxu0 0.0
        %4088 = vmatprep.subr.mxu0 0.0
        %4089 = vmatpush1.xpose.msra.mxu0 0.0
        %4090 = vmatprep.mubr.f32.mxu0 %v1332
        %4091 = vmatmul.mubr.f32.gmra.mrb[0].mxu0 %v1330
        %v4092 = vpop.f32.mrb[0].mxu0
        %v4093 = vadd.f32 %v4023, %v4092
        %v4094 = vpop.f32.mrb[0].mxu0
        %4095 = vdwg.mxu0
        %4096 = vmatprep.subr.mxu0 %v825
        %4097 = vmatpush1.xpose.msra.mxu0 %v824
        %4098 = vmatprep.subr.mxu0 %v953
        %4099 = vmatpush1.xpose.msra.mxu0 %v952
        %4100 = vmatprep.subr.mxu0 0.0
        %4101 = vmatpush1.xpose.msra.mxu0 0.0
        %4102 = vmatprep.subr.mxu0 0.0
        %4103 = vmatpush1.xpose.msra.mxu0 0.0
        %4104 = vmatprep.subr.mxu0 0.0
        %4105 = vmatpush1.xpose.msra.mxu0 0.0
        %4106 = vmatprep.subr.mxu0 0.0
        %4107 = vmatpush1.xpose.msra.mxu0 0.0
        %4108 = vmatprep.subr.mxu0 0.0
        %4109 = vmatpush1.xpose.msra.mxu0 0.0
        %4110 = vmatprep.subr.mxu0 0.0
        %4111 = vmatpush1.xpose.msra.mxu0 0.0
        %4112 = vmatprep.subr.mxu0 0.0
        %4113 = vmatpush1.xpose.msra.mxu0 0.0
        %4114 = vmatprep.subr.mxu0 0.0
        %4115 = vmatpush1.xpose.msra.mxu0 0.0
        %4116 = vmatprep.subr.mxu0 0.0
        %4117 = vmatpush1.xpose.msra.mxu0 0.0
        %4118 = vmatprep.subr.mxu0 0.0
        %4119 = vmatpush1.xpose.msra.mxu0 0.0
        %4120 = vmatprep.subr.mxu0 0.0
        %4121 = vmatpush1.xpose.msra.mxu0 0.0
        %4122 = vmatprep.subr.mxu0 0.0
        %4123 = vmatpush1.xpose.msra.mxu0 0.0
        %4124 = vmatprep.subr.mxu0 0.0
        %4125 = vmatpush1.xpose.msra.mxu0 0.0
        %4126 = vmatprep.subr.mxu0 0.0
        %4127 = vmatpush1.xpose.msra.mxu0 0.0
        %4128 = vmatprep.subr.mxu0 0.0
        %4129 = vmatpush1.xpose.msra.mxu0 0.0
        %4130 = vmatprep.subr.mxu0 0.0
        %4131 = vmatpush1.xpose.msra.mxu0 0.0
        %4132 = vmatprep.subr.mxu0 0.0
        %4133 = vmatpush1.xpose.msra.mxu0 0.0
        %4134 = vmatprep.subr.mxu0 0.0
        %4135 = vmatpush1.xpose.msra.mxu0 0.0
        %4136 = vmatprep.subr.mxu0 0.0
        %4137 = vmatpush1.xpose.msra.mxu0 0.0
        %4138 = vmatprep.subr.mxu0 0.0
        %4139 = vmatpush1.xpose.msra.mxu0 0.0
        %4140 = vmatprep.subr.mxu0 0.0
        %4141 = vmatpush1.xpose.msra.mxu0 0.0
        %4142 = vmatprep.subr.mxu0 0.0
        %4143 = vmatpush1.xpose.msra.mxu0 0.0
        %4144 = vmatprep.subr.mxu0 0.0
        %4145 = vmatpush1.xpose.msra.mxu0 0.0
        %4146 = vmatprep.subr.mxu0 0.0
        %4147 = vmatpush1.xpose.msra.mxu0 0.0
        %4148 = vmatprep.subr.mxu0 0.0
        %4149 = vmatpush1.xpose.msra.mxu0 0.0
        %4150 = vmatprep.subr.mxu0 0.0
        %4151 = vmatpush1.xpose.msra.mxu0 0.0
        %4152 = vmatprep.subr.mxu0 0.0
        %4153 = vmatpush1.xpose.msra.mxu0 0.0
        %4154 = vmatprep.subr.mxu0 0.0
        %4155 = vmatpush1.xpose.msra.mxu0 0.0
        %4156 = vmatprep.subr.mxu0 0.0
        %4157 = vmatpush1.xpose.msra.mxu0 0.0
        %4158 = vmatprep.subr.mxu0 0.0
        %4159 = vmatpush1.xpose.msra.mxu0 0.0
        %4160 = vmatprep.mubr.f32.mxu0 %v1348
        %4161 = vmatmul.mubr.f32.gmra.mrb[0].mxu0 %v1340
        %v4162 = vpop.f32.mrb[0].mxu0
        %v4163 = vadd.f32 %v4093, %v4162
        %v4164 = vpop.f32.mrb[0].mxu0
        %4165 = vdwg.mxu0
        %4166 = vmatprep.subr.mxu0 %v827
        %4167 = vmatpush1.xpose.msra.mxu0 %v826
        %4168 = vmatprep.subr.mxu0 %v955
        %4169 = vmatpush1.xpose.msra.mxu0 %v954
        %4170 = vmatprep.subr.mxu0 0.0
        %4171 = vmatpush1.xpose.msra.mxu0 0.0
        %4172 = vmatprep.subr.mxu0 0.0
        %4173 = vmatpush1.xpose.msra.mxu0 0.0
        %4174 = vmatprep.subr.mxu0 0.0
        %4175 = vmatpush1.xpose.msra.mxu0 0.0
        %4176 = vmatprep.subr.mxu0 0.0
        %4177 = vmatpush1.xpose.msra.mxu0 0.0
        %4178 = vmatprep.subr.mxu0 0.0
        %4179 = vmatpush1.xpose.msra.mxu0 0.0
        %4180 = vmatprep.subr.mxu0 0.0
        %4181 = vmatpush1.xpose.msra.mxu0 0.0
        %4182 = vmatprep.subr.mxu0 0.0
        %4183 = vmatpush1.xpose.msra.mxu0 0.0
        %4184 = vmatprep.subr.mxu0 0.0
        %4185 = vmatpush1.xpose.msra.mxu0 0.0
        %4186 = vmatprep.subr.mxu0 0.0
        %4187 = vmatpush1.xpose.msra.mxu0 0.0
        %4188 = vmatprep.subr.mxu0 0.0
        %4189 = vmatpush1.xpose.msra.mxu0 0.0
        %4190 = vmatprep.subr.mxu0 0.0
        %4191 = vmatpush1.xpose.msra.mxu0 0.0
        %4192 = vmatprep.subr.mxu0 0.0
        %4193 = vmatpush1.xpose.msra.mxu0 0.0
        %4194 = vmatprep.subr.mxu0 0.0
        %4195 = vmatpush1.xpose.msra.mxu0 0.0
        %4196 = vmatprep.subr.mxu0 0.0
        %4197 = vmatpush1.xpose.msra.mxu0 0.0
        %4198 = vmatprep.subr.mxu0 0.0
        %4199 = vmatpush1.xpose.msra.mxu0 0.0
        %4200 = vmatprep.subr.mxu0 0.0
        %4201 = vmatpush1.xpose.msra.mxu0 0.0
        %4202 = vmatprep.subr.mxu0 0.0
        %4203 = vmatpush1.xpose.msra.mxu0 0.0
        %4204 = vmatprep.subr.mxu0 0.0
        %4205 = vmatpush1.xpose.msra.mxu0 0.0
        %4206 = vmatprep.subr.mxu0 0.0
        %4207 = vmatpush1.xpose.msra.mxu0 0.0
        %4208 = vmatprep.subr.mxu0 0.0
        %4209 = vmatpush1.xpose.msra.mxu0 0.0
        %4210 = vmatprep.subr.mxu0 0.0
        %4211 = vmatpush1.xpose.msra.mxu0 0.0
        %4212 = vmatprep.subr.mxu0 0.0
        %4213 = vmatpush1.xpose.msra.mxu0 0.0
        %4214 = vmatprep.subr.mxu0 0.0
        %4215 = vmatpush1.xpose.msra.mxu0 0.0
        %4216 = vmatprep.subr.mxu0 0.0
        %4217 = vmatpush1.xpose.msra.mxu0 0.0
        %4218 = vmatprep.subr.mxu0 0.0
        %4219 = vmatpush1.xpose.msra.mxu0 0.0
        %4220 = vmatprep.subr.mxu0 0.0
        %4221 = vmatpush1.xpose.msra.mxu0 0.0
        %4222 = vmatprep.subr.mxu0 0.0
        %4223 = vmatpush1.xpose.msra.mxu0 0.0
        %4224 = vmatprep.subr.mxu0 0.0
        %4225 = vmatpush1.xpose.msra.mxu0 0.0
        %4226 = vmatprep.subr.mxu0 0.0
        %4227 = vmatpush1.xpose.msra.mxu0 0.0
        %4228 = vmatprep.subr.mxu0 0.0
        %4229 = vmatpush1.xpose.msra.mxu0 0.0
        %4230 = vmatprep.mubr.f32.mxu0 %v1349
        %4231 = vmatmul.mubr.f32.gmra.mrb[0].mxu0 %v1347
        %v4232 = vpop.f32.mrb[0].mxu0
        %v4233 = vadd.f32 %v4163, %v4232
        %v4234 = vpop.f32.mrb[0].mxu0
        %4235 = vdwg.mxu0
        %4236 = vmatprep.subr.mxu0 %v829
        %4237 = vmatpush1.xpose.msra.mxu0 %v828
        %4238 = vmatprep.subr.mxu0 %v957
        %4239 = vmatpush1.xpose.msra.mxu0 %v956
        %4240 = vmatprep.subr.mxu0 0.0
        %4241 = vmatpush1.xpose.msra.mxu0 0.0
        %4242 = vmatprep.subr.mxu0 0.0
        %4243 = vmatpush1.xpose.msra.mxu0 0.0
        %4244 = vmatprep.subr.mxu0 0.0
        %4245 = vmatpush1.xpose.msra.mxu0 0.0
        %4246 = vmatprep.subr.mxu0 0.0
        %4247 = vmatpush1.xpose.msra.mxu0 0.0
        %4248 = vmatprep.subr.mxu0 0.0
        %4249 = vmatpush1.xpose.msra.mxu0 0.0
        %4250 = vmatprep.subr.mxu0 0.0
        %4251 = vmatpush1.xpose.msra.mxu0 0.0
        %4252 = vmatprep.subr.mxu0 0.0
        %4253 = vmatpush1.xpose.msra.mxu0 0.0
        %4254 = vmatprep.subr.mxu0 0.0
        %4255 = vmatpush1.xpose.msra.mxu0 0.0
        %4256 = vmatprep.subr.mxu0 0.0
        %4257 = vmatpush1.xpose.msra.mxu0 0.0
        %4258 = vmatprep.subr.mxu0 0.0
        %4259 = vmatpush1.xpose.msra.mxu0 0.0
        %4260 = vmatprep.subr.mxu0 0.0
        %4261 = vmatpush1.xpose.msra.mxu0 0.0
        %4262 = vmatprep.subr.mxu0 0.0
        %4263 = vmatpush1.xpose.msra.mxu0 0.0
        %4264 = vmatprep.subr.mxu0 0.0
        %4265 = vmatpush1.xpose.msra.mxu0 0.0
        %4266 = vmatprep.subr.mxu0 0.0
        %4267 = vmatpush1.xpose.msra.mxu0 0.0
        %4268 = vmatprep.subr.mxu0 0.0
        %4269 = vmatpush1.xpose.msra.mxu0 0.0
        %4270 = vmatprep.subr.mxu0 0.0
        %4271 = vmatpush1.xpose.msra.mxu0 0.0
        %4272 = vmatprep.subr.mxu0 0.0
        %4273 = vmatpush1.xpose.msra.mxu0 0.0
        %4274 = vmatprep.subr.mxu0 0.0
        %4275 = vmatpush1.xpose.msra.mxu0 0.0
        %4276 = vmatprep.subr.mxu0 0.0
        %4277 = vmatpush1.xpose.msra.mxu0 0.0
        %4278 = vmatprep.subr.mxu0 0.0
        %4279 = vmatpush1.xpose.msra.mxu0 0.0
        %4280 = vmatprep.subr.mxu0 0.0
        %4281 = vmatpush1.xpose.msra.mxu0 0.0
        %4282 = vmatprep.subr.mxu0 0.0
        %4283 = vmatpush1.xpose.msra.mxu0 0.0
        %4284 = vmatprep.subr.mxu0 0.0
        %4285 = vmatpush1.xpose.msra.mxu0 0.0
        %4286 = vmatprep.subr.mxu0 0.0
        %4287 = vmatpush1.xpose.msra.mxu0 0.0
        %4288 = vmatprep.subr.mxu0 0.0
        %4289 = vmatpush1.xpose.msra.mxu0 0.0
        %4290 = vmatprep.subr.mxu0 0.0
        %4291 = vmatpush1.xpose.msra.mxu0 0.0
        %4292 = vmatprep.subr.mxu0 0.0
        %4293 = vmatpush1.xpose.msra.mxu0 0.0
        %4294 = vmatprep.subr.mxu0 0.0
        %4295 = vmatpush1.xpose.msra.mxu0 0.0
        %4296 = vmatprep.subr.mxu0 0.0
        %4297 = vmatpush1.xpose.msra.mxu0 0.0
        %4298 = vmatprep.subr.mxu0 0.0
        %4299 = vmatpush1.xpose.msra.mxu0 0.0
        %4300 = vmatprep.mubr.f32.mxu0 %v1365
        %4301 = vmatmul.mubr.f32.gmra.mrb[0].mxu0 %v1357
        %v4302 = vpop.f32.mrb[0].mxu0
        %v4303 = vadd.f32 %v4233, %v4302
        %v4304 = vpop.f32.mrb[0].mxu0
        %4305 = vdwg.mxu0
        %4306 = vmatprep.subr.mxu0 %v831
        %4307 = vmatpush1.xpose.msra.mxu0 %v830
        %4308 = vmatprep.subr.mxu0 %v959
        %4309 = vmatpush1.xpose.msra.mxu0 %v958
        %4310 = vmatprep.subr.mxu0 0.0
        %4311 = vmatpush1.xpose.msra.mxu0 0.0
        %4312 = vmatprep.subr.mxu0 0.0
        %4313 = vmatpush1.xpose.msra.mxu0 0.0
        %4314 = vmatprep.subr.mxu0 0.0
        %4315 = vmatpush1.xpose.msra.mxu0 0.0
        %4316 = vmatprep.subr.mxu0 0.0
        %4317 = vmatpush1.xpose.msra.mxu0 0.0
        %4318 = vmatprep.subr.mxu0 0.0
        %4319 = vmatpush1.xpose.msra.mxu0 0.0
        %4320 = vmatprep.subr.mxu0 0.0
        %4321 = vmatpush1.xpose.msra.mxu0 0.0
        %4322 = vmatprep.subr.mxu0 0.0
        %4323 = vmatpush1.xpose.msra.mxu0 0.0
        %4324 = vmatprep.subr.mxu0 0.0
        %4325 = vmatpush1.xpose.msra.mxu0 0.0
        %4326 = vmatprep.subr.mxu0 0.0
        %4327 = vmatpush1.xpose.msra.mxu0 0.0
        %4328 = vmatprep.subr.mxu0 0.0
        %4329 = vmatpush1.xpose.msra.mxu0 0.0
        %4330 = vmatprep.subr.mxu0 0.0
        %4331 = vmatpush1.xpose.msra.mxu0 0.0
        %4332 = vmatprep.subr.mxu0 0.0
        %4333 = vmatpush1.xpose.msra.mxu0 0.0
        %4334 = vmatprep.subr.mxu0 0.0
        %4335 = vmatpush1.xpose.msra.mxu0 0.0
        %4336 = vmatprep.subr.mxu0 0.0
        %4337 = vmatpush1.xpose.msra.mxu0 0.0
        %4338 = vmatprep.subr.mxu0 0.0
        %4339 = vmatpush1.xpose.msra.mxu0 0.0
        %4340 = vmatprep.subr.mxu0 0.0
        %4341 = vmatpush1.xpose.msra.mxu0 0.0
        %4342 = vmatprep.subr.mxu0 0.0
        %4343 = vmatpush1.xpose.msra.mxu0 0.0
        %4344 = vmatprep.subr.mxu0 0.0
        %4345 = vmatpush1.xpose.msra.mxu0 0.0
        %4346 = vmatprep.subr.mxu0 0.0
        %4347 = vmatpush1.xpose.msra.mxu0 0.0
        %4348 = vmatprep.subr.mxu0 0.0
        %4349 = vmatpush1.xpose.msra.mxu0 0.0
        %4350 = vmatprep.subr.mxu0 0.0
        %4351 = vmatpush1.xpose.msra.mxu0 0.0
        %4352 = vmatprep.subr.mxu0 0.0
        %4353 = vmatpush1.xpose.msra.mxu0 0.0
        %4354 = vmatprep.subr.mxu0 0.0
        %4355 = vmatpush1.xpose.msra.mxu0 0.0
        %4356 = vmatprep.subr.mxu0 0.0
        %4357 = vmatpush1.xpose.msra.mxu0 0.0
        %4358 = vmatprep.subr.mxu0 0.0
        %4359 = vmatpush1.xpose.msra.mxu0 0.0
        %4360 = vmatprep.subr.mxu0 0.0
        %4361 = vmatpush1.xpose.msra.mxu0 0.0
        %4362 = vmatprep.subr.mxu0 0.0
        %4363 = vmatpush1.xpose.msra.mxu0 0.0
        %4364 = vmatprep.subr.mxu0 0.0
        %4365 = vmatpush1.xpose.msra.mxu0 0.0
        %4366 = vmatprep.subr.mxu0 0.0
        %4367 = vmatpush1.xpose.msra.mxu0 0.0
        %4368 = vmatprep.subr.mxu0 0.0
        %4369 = vmatpush1.xpose.msra.mxu0 0.0
        %4370 = vmatprep.mubr.f32.mxu0 %v1366
        %4371 = vmatmul.mubr.f32.gmra.mrb[0].mxu0 %v1364
        %v4372 = vpop.f32.mrb[0].mxu0
        %v4373 = vadd.f32 %v4303, %v4372
        %v4374 = vpop.f32.mrb[0].mxu0
        %4375 = vdwg.mxu0
        %4376 = vmatprep.subr.mxu0 %v833
        %4377 = vmatpush1.xpose.msra.mxu0 %v832
        %4378 = vmatprep.subr.mxu0 %v961
        %4379 = vmatpush1.xpose.msra.mxu0 %v960
        %4380 = vmatprep.subr.mxu0 0.0
        %4381 = vmatpush1.xpose.msra.mxu0 0.0
        %4382 = vmatprep.subr.mxu0 0.0
        %4383 = vmatpush1.xpose.msra.mxu0 0.0
        %4384 = vmatprep.subr.mxu0 0.0
        %4385 = vmatpush1.xpose.msra.mxu0 0.0
        %4386 = vmatprep.subr.mxu0 0.0
        %4387 = vmatpush1.xpose.msra.mxu0 0.0
        %4388 = vmatprep.subr.mxu0 0.0
        %4389 = vmatpush1.xpose.msra.mxu0 0.0
        %4390 = vmatprep.subr.mxu0 0.0
        %4391 = vmatpush1.xpose.msra.mxu0 0.0
        %4392 = vmatprep.subr.mxu0 0.0
        %4393 = vmatpush1.xpose.msra.mxu0 0.0
        %4394 = vmatprep.subr.mxu0 0.0
        %4395 = vmatpush1.xpose.msra.mxu0 0.0
        %4396 = vmatprep.subr.mxu0 0.0
        %4397 = vmatpush1.xpose.msra.mxu0 0.0
        %4398 = vmatprep.subr.mxu0 0.0
        %4399 = vmatpush1.xpose.msra.mxu0 0.0
        %4400 = vmatprep.subr.mxu0 0.0
        %4401 = vmatpush1.xpose.msra.mxu0 0.0
        %4402 = vmatprep.subr.mxu0 0.0
        %4403 = vmatpush1.xpose.msra.mxu0 0.0
        %4404 = vmatprep.subr.mxu0 0.0
        %4405 = vmatpush1.xpose.msra.mxu0 0.0
        %4406 = vmatprep.subr.mxu0 0.0
        %4407 = vmatpush1.xpose.msra.mxu0 0.0
        %4408 = vmatprep.subr.mxu0 0.0
        %4409 = vmatpush1.xpose.msra.mxu0 0.0
        %4410 = vmatprep.subr.mxu0 0.0
        %4411 = vmatpush1.xpose.msra.mxu0 0.0
        %4412 = vmatprep.subr.mxu0 0.0
        %4413 = vmatpush1.xpose.msra.mxu0 0.0
        %4414 = vmatprep.subr.mxu0 0.0
        %4415 = vmatpush1.xpose.msra.mxu0 0.0
        %4416 = vmatprep.subr.mxu0 0.0
        %4417 = vmatpush1.xpose.msra.mxu0 0.0
        %4418 = vmatprep.subr.mxu0 0.0
        %4419 = vmatpush1.xpose.msra.mxu0 0.0
        %4420 = vmatprep.subr.mxu0 0.0
        %4421 = vmatpush1.xpose.msra.mxu0 0.0
        %4422 = vmatprep.subr.mxu0 0.0
        %4423 = vmatpush1.xpose.msra.mxu0 0.0
        %4424 = vmatprep.subr.mxu0 0.0
        %4425 = vmatpush1.xpose.msra.mxu0 0.0
        %4426 = vmatprep.subr.mxu0 0.0
        %4427 = vmatpush1.xpose.msra.mxu0 0.0
        %4428 = vmatprep.subr.mxu0 0.0
        %4429 = vmatpush1.xpose.msra.mxu0 0.0
        %4430 = vmatprep.subr.mxu0 0.0
        %4431 = vmatpush1.xpose.msra.mxu0 0.0
        %4432 = vmatprep.subr.mxu0 0.0
        %4433 = vmatpush1.xpose.msra.mxu0 0.0
        %4434 = vmatprep.subr.mxu0 0.0
        %4435 = vmatpush1.xpose.msra.mxu0 0.0
        %4436 = vmatprep.subr.mxu0 0.0
        %4437 = vmatpush1.xpose.msra.mxu0 0.0
        %4438 = vmatprep.subr.mxu0 0.0
        %4439 = vmatpush1.xpose.msra.mxu0 0.0
        %4440 = vmatprep.mubr.f32.mxu0 %v1382
        %4441 = vmatmul.mubr.f32.gmra.mrb[0].mxu0 %v1374
        %v4442 = vpop.f32.mrb[0].mxu0
        %v4443 = vadd.f32 %v4373, %v4442
        %v4444 = vpop.f32.mrb[0].mxu0
        %4445 = vdwg.mxu0
        %4446 = vmatprep.subr.mxu0 %v835
        %4447 = vmatpush1.xpose.msra.mxu0 %v834
        %4448 = vmatprep.subr.mxu0 %v963
        %4449 = vmatpush1.xpose.msra.mxu0 %v962
        %4450 = vmatprep.subr.mxu0 0.0
        %4451 = vmatpush1.xpose.msra.mxu0 0.0
        %4452 = vmatprep.subr.mxu0 0.0
        %4453 = vmatpush1.xpose.msra.mxu0 0.0
        %4454 = vmatprep.subr.mxu0 0.0
        %4455 = vmatpush1.xpose.msra.mxu0 0.0
        %4456 = vmatprep.subr.mxu0 0.0
        %4457 = vmatpush1.xpose.msra.mxu0 0.0
        %4458 = vmatprep.subr.mxu0 0.0
        %4459 = vmatpush1.xpose.msra.mxu0 0.0
        %4460 = vmatprep.subr.mxu0 0.0
        %4461 = vmatpush1.xpose.msra.mxu0 0.0
        %4462 = vmatprep.subr.mxu0 0.0
        %4463 = vmatpush1.xpose.msra.mxu0 0.0
        %4464 = vmatprep.subr.mxu0 0.0
        %4465 = vmatpush1.xpose.msra.mxu0 0.0
        %4466 = vmatprep.subr.mxu0 0.0
        %4467 = vmatpush1.xpose.msra.mxu0 0.0
        %4468 = vmatprep.subr.mxu0 0.0
        %4469 = vmatpush1.xpose.msra.mxu0 0.0
        %4470 = vmatprep.subr.mxu0 0.0
        %4471 = vmatpush1.xpose.msra.mxu0 0.0
        %4472 = vmatprep.subr.mxu0 0.0
        %4473 = vmatpush1.xpose.msra.mxu0 0.0
        %4474 = vmatprep.subr.mxu0 0.0
        %4475 = vmatpush1.xpose.msra.mxu0 0.0
        %4476 = vmatprep.subr.mxu0 0.0
        %4477 = vmatpush1.xpose.msra.mxu0 0.0
        %4478 = vmatprep.subr.mxu0 0.0
        %4479 = vmatpush1.xpose.msra.mxu0 0.0
        %4480 = vmatprep.subr.mxu0 0.0
        %4481 = vmatpush1.xpose.msra.mxu0 0.0
        %4482 = vmatprep.subr.mxu0 0.0
        %4483 = vmatpush1.xpose.msra.mxu0 0.0
        %4484 = vmatprep.subr.mxu0 0.0
        %4485 = vmatpush1.xpose.msra.mxu0 0.0
        %4486 = vmatprep.subr.mxu0 0.0
        %4487 = vmatpush1.xpose.msra.mxu0 0.0
        %4488 = vmatprep.subr.mxu0 0.0
        %4489 = vmatpush1.xpose.msra.mxu0 0.0
        %4490 = vmatprep.subr.mxu0 0.0
        %4491 = vmatpush1.xpose.msra.mxu0 0.0
        %4492 = vmatprep.subr.mxu0 0.0
        %4493 = vmatpush1.xpose.msra.mxu0 0.0
        %4494 = vmatprep.subr.mxu0 0.0
        %4495 = vmatpush1.xpose.msra.mxu0 0.0
        %4496 = vmatprep.subr.mxu0 0.0
        %4497 = vmatpush1.xpose.msra.mxu0 0.0
        %4498 = vmatprep.subr.mxu0 0.0
        %4499 = vmatpush1.xpose.msra.mxu0 0.0
        %4500 = vmatprep.subr.mxu0 0.0
        %4501 = vmatpush1.xpose.msra.mxu0 0.0
        %4502 = vmatprep.subr.mxu0 0.0
        %4503 = vmatpush1.xpose.msra.mxu0 0.0
        %4504 = vmatprep.subr.mxu0 0.0
        %4505 = vmatpush1.xpose.msra.mxu0 0.0
        %4506 = vmatprep.subr.mxu0 0.0
        %4507 = vmatpush1.xpose.msra.mxu0 0.0
        %4508 = vmatprep.subr.mxu0 0.0
        %4509 = vmatpush1.xpose.msra.mxu0 0.0
        %4510 = vmatprep.mubr.f32.mxu0 %v1383
        %4511 = vmatmul.mubr.f32.gmra.mrb[0].mxu0 %v1381
        %v4512 = vpop.f32.mrb[0].mxu0
        %v4513 = vadd.f32 %v4443, %v4512
        %v4514 = vpop.f32.mrb[0].mxu0
        %4515 = vdwg.mxu0
        %4516 = vmatprep.subr.mxu0 %v837
        %4517 = vmatpush1.xpose.msra.mxu0 %v836
        %4518 = vmatprep.subr.mxu0 %v965
        %4519 = vmatpush1.xpose.msra.mxu0 %v964
        %4520 = vmatprep.subr.mxu0 0.0
        %4521 = vmatpush1.xpose.msra.mxu0 0.0
        %4522 = vmatprep.subr.mxu0 0.0
        %4523 = vmatpush1.xpose.msra.mxu0 0.0
        %4524 = vmatprep.subr.mxu0 0.0
        %4525 = vmatpush1.xpose.msra.mxu0 0.0
        %4526 = vmatprep.subr.mxu0 0.0
        %4527 = vmatpush1.xpose.msra.mxu0 0.0
        %4528 = vmatprep.subr.mxu0 0.0
        %4529 = vmatpush1.xpose.msra.mxu0 0.0
        %4530 = vmatprep.subr.mxu0 0.0
        %4531 = vmatpush1.xpose.msra.mxu0 0.0
        %4532 = vmatprep.subr.mxu0 0.0
        %4533 = vmatpush1.xpose.msra.mxu0 0.0
        %4534 = vmatprep.subr.mxu0 0.0
        %4535 = vmatpush1.xpose.msra.mxu0 0.0
        %4536 = vmatprep.subr.mxu0 0.0
        %4537 = vmatpush1.xpose.msra.mxu0 0.0
        %4538 = vmatprep.subr.mxu0 0.0
        %4539 = vmatpush1.xpose.msra.mxu0 0.0
        %4540 = vmatprep.subr.mxu0 0.0
        %4541 = vmatpush1.xpose.msra.mxu0 0.0
        %4542 = vmatprep.subr.mxu0 0.0
        %4543 = vmatpush1.xpose.msra.mxu0 0.0
        %4544 = vmatprep.subr.mxu0 0.0
        %4545 = vmatpush1.xpose.msra.mxu0 0.0
        %4546 = vmatprep.subr.mxu0 0.0
        %4547 = vmatpush1.xpose.msra.mxu0 0.0
        %4548 = vmatprep.subr.mxu0 0.0
        %4549 = vmatpush1.xpose.msra.mxu0 0.0
        %4550 = vmatprep.subr.mxu0 0.0
        %4551 = vmatpush1.xpose.msra.mxu0 0.0
        %4552 = vmatprep.subr.mxu0 0.0
        %4553 = vmatpush1.xpose.msra.mxu0 0.0
        %4554 = vmatprep.subr.mxu0 0.0
        %4555 = vmatpush1.xpose.msra.mxu0 0.0
        %4556 = vmatprep.subr.mxu0 0.0
        %4557 = vmatpush1.xpose.msra.mxu0 0.0
        %4558 = vmatprep.subr.mxu0 0.0
        %4559 = vmatpush1.xpose.msra.mxu0 0.0
        %4560 = vmatprep.subr.mxu0 0.0
        %4561 = vmatpush1.xpose.msra.mxu0 0.0
        %4562 = vmatprep.subr.mxu0 0.0
        %4563 = vmatpush1.xpose.msra.mxu0 0.0
        %4564 = vmatprep.subr.mxu0 0.0
        %4565 = vmatpush1.xpose.msra.mxu0 0.0
        %4566 = vmatprep.subr.mxu0 0.0
        %4567 = vmatpush1.xpose.msra.mxu0 0.0
        %4568 = vmatprep.subr.mxu0 0.0
        %4569 = vmatpush1.xpose.msra.mxu0 0.0
        %4570 = vmatprep.subr.mxu0 0.0
        %4571 = vmatpush1.xpose.msra.mxu0 0.0
        %4572 = vmatprep.subr.mxu0 0.0
        %4573 = vmatpush1.xpose.msra.mxu0 0.0
        %4574 = vmatprep.subr.mxu0 0.0
        %4575 = vmatpush1.xpose.msra.mxu0 0.0
        %4576 = vmatprep.subr.mxu0 0.0
        %4577 = vmatpush1.xpose.msra.mxu0 0.0
        %4578 = vmatprep.subr.mxu0 0.0
        %4579 = vmatpush1.xpose.msra.mxu0 0.0
        %4580 = vmatprep.mubr.f32.mxu0 %v1399
        %4581 = vmatmul.mubr.f32.gmra.mrb[0].mxu0 %v1391
        %v4582 = vpop.f32.mrb[0].mxu0
        %v4583 = vadd.f32 %v4513, %v4582
        %v4584 = vpop.f32.mrb[0].mxu0
        %4585 = vdwg.mxu0
        %4586 = vmatprep.subr.mxu0 %v839
        %4587 = vmatpush1.xpose.msra.mxu0 %v838
        %4588 = vmatprep.subr.mxu0 %v967
        %4589 = vmatpush1.xpose.msra.mxu0 %v966
        %4590 = vmatprep.subr.mxu0 0.0
        %4591 = vmatpush1.xpose.msra.mxu0 0.0
        %4592 = vmatprep.subr.mxu0 0.0
        %4593 = vmatpush1.xpose.msra.mxu0 0.0
        %4594 = vmatprep.subr.mxu0 0.0
        %4595 = vmatpush1.xpose.msra.mxu0 0.0
        %4596 = vmatprep.subr.mxu0 0.0
        %4597 = vmatpush1.xpose.msra.mxu0 0.0
        %4598 = vmatprep.subr.mxu0 0.0
        %4599 = vmatpush1.xpose.msra.mxu0 0.0
        %4600 = vmatprep.subr.mxu0 0.0
        %4601 = vmatpush1.xpose.msra.mxu0 0.0
        %4602 = vmatprep.subr.mxu0 0.0
        %4603 = vmatpush1.xpose.msra.mxu0 0.0
        %4604 = vmatprep.subr.mxu0 0.0
        %4605 = vmatpush1.xpose.msra.mxu0 0.0
        %4606 = vmatprep.subr.mxu0 0.0
        %4607 = vmatpush1.xpose.msra.mxu0 0.0
        %4608 = vmatprep.subr.mxu0 0.0
        %4609 = vmatpush1.xpose.msra.mxu0 0.0
        %4610 = vmatprep.subr.mxu0 0.0
        %4611 = vmatpush1.xpose.msra.mxu0 0.0
        %4612 = vmatprep.subr.mxu0 0.0
        %4613 = vmatpush1.xpose.msra.mxu0 0.0
        %4614 = vmatprep.subr.mxu0 0.0
        %4615 = vmatpush1.xpose.msra.mxu0 0.0
        %4616 = vmatprep.subr.mxu0 0.0
        %4617 = vmatpush1.xpose.msra.mxu0 0.0
        %4618 = vmatprep.subr.mxu0 0.0
        %4619 = vmatpush1.xpose.msra.mxu0 0.0
        %4620 = vmatprep.subr.mxu0 0.0
        %4621 = vmatpush1.xpose.msra.mxu0 0.0
        %4622 = vmatprep.subr.mxu0 0.0
        %4623 = vmatpush1.xpose.msra.mxu0 0.0
        %4624 = vmatprep.subr.mxu0 0.0
        %4625 = vmatpush1.xpose.msra.mxu0 0.0
        %4626 = vmatprep.subr.mxu0 0.0
        %4627 = vmatpush1.xpose.msra.mxu0 0.0
        %4628 = vmatprep.subr.mxu0 0.0
        %4629 = vmatpush1.xpose.msra.mxu0 0.0
        %4630 = vmatprep.subr.mxu0 0.0
        %4631 = vmatpush1.xpose.msra.mxu0 0.0
        %4632 = vmatprep.subr.mxu0 0.0
        %4633 = vmatpush1.xpose.msra.mxu0 0.0
        %4634 = vmatprep.subr.mxu0 0.0
        %4635 = vmatpush1.xpose.msra.mxu0 0.0
        %4636 = vmatprep.subr.mxu0 0.0
        %4637 = vmatpush1.xpose.msra.mxu0 0.0
        %4638 = vmatprep.subr.mxu0 0.0
        %4639 = vmatpush1.xpose.msra.mxu0 0.0
        %4640 = vmatprep.subr.mxu0 0.0
        %4641 = vmatpush1.xpose.msra.mxu0 0.0
        %4642 = vmatprep.subr.mxu0 0.0
        %4643 = vmatpush1.xpose.msra.mxu0 0.0
        %4644 = vmatprep.subr.mxu0 0.0
        %4645 = vmatpush1.xpose.msra.mxu0 0.0
        %4646 = vmatprep.subr.mxu0 0.0
        %4647 = vmatpush1.xpose.msra.mxu0 0.0
        %4648 = vmatprep.subr.mxu0 0.0
        %4649 = vmatpush1.xpose.msra.mxu0 0.0
        %4650 = vmatprep.mubr.f32.mxu0 %v1400
        %4651 = vmatmul.mubr.f32.gmra.mrb[0].mxu0 %v1398
        %v4652 = vpop.f32.mrb[0].mxu0
        %v4653 = vadd.f32 %v4583, %v4652
        %v4654 = vpop.f32.mrb[0].mxu0
        %4655 = vdwg.mxu0
        %4656 = vmatprep.subr.mxu0 %v841
        %4657 = vmatpush1.xpose.msra.mxu0 %v840
        %4658 = vmatprep.subr.mxu0 %v969
        %4659 = vmatpush1.xpose.msra.mxu0 %v968
        %4660 = vmatprep.subr.mxu0 0.0
        %4661 = vmatpush1.xpose.msra.mxu0 0.0
        %4662 = vmatprep.subr.mxu0 0.0
        %4663 = vmatpush1.xpose.msra.mxu0 0.0
        %4664 = vmatprep.subr.mxu0 0.0
        %4665 = vmatpush1.xpose.msra.mxu0 0.0
        %4666 = vmatprep.subr.mxu0 0.0
        %4667 = vmatpush1.xpose.msra.mxu0 0.0
        %4668 = vmatprep.subr.mxu0 0.0
        %4669 = vmatpush1.xpose.msra.mxu0 0.0
        %4670 = vmatprep.subr.mxu0 0.0
        %4671 = vmatpush1.xpose.msra.mxu0 0.0
        %4672 = vmatprep.subr.mxu0 0.0
        %4673 = vmatpush1.xpose.msra.mxu0 0.0
        %4674 = vmatprep.subr.mxu0 0.0
        %4675 = vmatpush1.xpose.msra.mxu0 0.0
        %4676 = vmatprep.subr.mxu0 0.0
        %4677 = vmatpush1.xpose.msra.mxu0 0.0
        %4678 = vmatprep.subr.mxu0 0.0
        %4679 = vmatpush1.xpose.msra.mxu0 0.0
        %4680 = vmatprep.subr.mxu0 0.0
        %4681 = vmatpush1.xpose.msra.mxu0 0.0
        %4682 = vmatprep.subr.mxu0 0.0
        %4683 = vmatpush1.xpose.msra.mxu0 0.0
        %4684 = vmatprep.subr.mxu0 0.0
        %4685 = vmatpush1.xpose.msra.mxu0 0.0
        %4686 = vmatprep.subr.mxu0 0.0
        %4687 = vmatpush1.xpose.msra.mxu0 0.0
        %4688 = vmatprep.subr.mxu0 0.0
        %4689 = vmatpush1.xpose.msra.mxu0 0.0
        %4690 = vmatprep.subr.mxu0 0.0
        %4691 = vmatpush1.xpose.msra.mxu0 0.0
        %4692 = vmatprep.subr.mxu0 0.0
        %4693 = vmatpush1.xpose.msra.mxu0 0.0
        %4694 = vmatprep.subr.mxu0 0.0
        %4695 = vmatpush1.xpose.msra.mxu0 0.0
        %4696 = vmatprep.subr.mxu0 0.0
        %4697 = vmatpush1.xpose.msra.mxu0 0.0
        %4698 = vmatprep.subr.mxu0 0.0
        %4699 = vmatpush1.xpose.msra.mxu0 0.0
        %4700 = vmatprep.subr.mxu0 0.0
        %4701 = vmatpush1.xpose.msra.mxu0 0.0
        %4702 = vmatprep.subr.mxu0 0.0
        %4703 = vmatpush1.xpose.msra.mxu0 0.0
        %4704 = vmatprep.subr.mxu0 0.0
        %4705 = vmatpush1.xpose.msra.mxu0 0.0
        %4706 = vmatprep.subr.mxu0 0.0
        %4707 = vmatpush1.xpose.msra.mxu0 0.0
        %4708 = vmatprep.subr.mxu0 0.0
        %4709 = vmatpush1.xpose.msra.mxu0 0.0
        %4710 = vmatprep.subr.mxu0 0.0
        %4711 = vmatpush1.xpose.msra.mxu0 0.0
        %4712 = vmatprep.subr.mxu0 0.0
        %4713 = vmatpush1.xpose.msra.mxu0 0.0
        %4714 = vmatprep.subr.mxu0 0.0
        %4715 = vmatpush1.xpose.msra.mxu0 0.0
        %4716 = vmatprep.subr.mxu0 0.0
        %4717 = vmatpush1.xpose.msra.mxu0 0.0
        %4718 = vmatprep.subr.mxu0 0.0
        %4719 = vmatpush1.xpose.msra.mxu0 0.0
        %4720 = vmatprep.mubr.f32.mxu0 %v1416
        %4721 = vmatmul.mubr.f32.gmra.mrb[0].mxu0 %v1408
        %v4722 = vpop.f32.mrb[0].mxu0
        %v4723 = vadd.f32 %v4653, %v4722
        %v4724 = vpop.f32.mrb[0].mxu0
        %4725 = vdwg.mxu0
        %4726 = vmatprep.subr.mxu0 %v843
        %4727 = vmatpush1.xpose.msra.mxu0 %v842
        %4728 = vmatprep.subr.mxu0 %v971
        %4729 = vmatpush1.xpose.msra.mxu0 %v970
        %4730 = vmatprep.subr.mxu0 0.0
        %4731 = vmatpush1.xpose.msra.mxu0 0.0
        %4732 = vmatprep.subr.mxu0 0.0
        %4733 = vmatpush1.xpose.msra.mxu0 0.0
        %4734 = vmatprep.subr.mxu0 0.0
        %4735 = vmatpush1.xpose.msra.mxu0 0.0
        %4736 = vmatprep.subr.mxu0 0.0
        %4737 = vmatpush1.xpose.msra.mxu0 0.0
        %4738 = vmatprep.subr.mxu0 0.0
        %4739 = vmatpush1.xpose.msra.mxu0 0.0
        %4740 = vmatprep.subr.mxu0 0.0
        %4741 = vmatpush1.xpose.msra.mxu0 0.0
        %4742 = vmatprep.subr.mxu0 0.0
        %4743 = vmatpush1.xpose.msra.mxu0 0.0
        %4744 = vmatprep.subr.mxu0 0.0
        %4745 = vmatpush1.xpose.msra.mxu0 0.0
        %4746 = vmatprep.subr.mxu0 0.0
        %4747 = vmatpush1.xpose.msra.mxu0 0.0
        %4748 = vmatprep.subr.mxu0 0.0
        %4749 = vmatpush1.xpose.msra.mxu0 0.0
        %4750 = vmatprep.subr.mxu0 0.0
        %4751 = vmatpush1.xpose.msra.mxu0 0.0
        %4752 = vmatprep.subr.mxu0 0.0
        %4753 = vmatpush1.xpose.msra.mxu0 0.0
        %4754 = vmatprep.subr.mxu0 0.0
        %4755 = vmatpush1.xpose.msra.mxu0 0.0
        %4756 = vmatprep.subr.mxu0 0.0
        %4757 = vmatpush1.xpose.msra.mxu0 0.0
        %4758 = vmatprep.subr.mxu0 0.0
        %4759 = vmatpush1.xpose.msra.mxu0 0.0
        %4760 = vmatprep.subr.mxu0 0.0
        %4761 = vmatpush1.xpose.msra.mxu0 0.0
        %4762 = vmatprep.subr.mxu0 0.0
        %4763 = vmatpush1.xpose.msra.mxu0 0.0
        %4764 = vmatprep.subr.mxu0 0.0
        %4765 = vmatpush1.xpose.msra.mxu0 0.0
        %4766 = vmatprep.subr.mxu0 0.0
        %4767 = vmatpush1.xpose.msra.mxu0 0.0
        %4768 = vmatprep.subr.mxu0 0.0
        %4769 = vmatpush1.xpose.msra.mxu0 0.0
        %4770 = vmatprep.subr.mxu0 0.0
        %4771 = vmatpush1.xpose.msra.mxu0 0.0
        %4772 = vmatprep.subr.mxu0 0.0
        %4773 = vmatpush1.xpose.msra.mxu0 0.0
        %4774 = vmatprep.subr.mxu0 0.0
        %4775 = vmatpush1.xpose.msra.mxu0 0.0
        %4776 = vmatprep.subr.mxu0 0.0
        %4777 = vmatpush1.xpose.msra.mxu0 0.0
        %4778 = vmatprep.subr.mxu0 0.0
        %4779 = vmatpush1.xpose.msra.mxu0 0.0
        %4780 = vmatprep.subr.mxu0 0.0
        %4781 = vmatpush1.xpose.msra.mxu0 0.0
        %4782 = vmatprep.subr.mxu0 0.0
        %4783 = vmatpush1.xpose.msra.mxu0 0.0
        %4784 = vmatprep.subr.mxu0 0.0
        %4785 = vmatpush1.xpose.msra.mxu0 0.0
        %4786 = vmatprep.subr.mxu0 0.0
        %4787 = vmatpush1.xpose.msra.mxu0 0.0
        %4788 = vmatprep.subr.mxu0 0.0
        %4789 = vmatpush1.xpose.msra.mxu0 0.0
        %4790 = vmatprep.mubr.f32.mxu0 %v1417
        %4791 = vmatmul.mubr.f32.gmra.mrb[0].mxu0 %v1415
        %v4792 = vpop.f32.mrb[0].mxu0
        %v4793 = vadd.f32 %v4723, %v4792
        %v4794 = vpop.f32.mrb[0].mxu0
        %4795 = vdwg.mxu0
        %4796 = vmatprep.subr.mxu0 %v845
        %4797 = vmatpush1.xpose.msra.mxu0 %v844
        %4798 = vmatprep.subr.mxu0 %v973
        %4799 = vmatpush1.xpose.msra.mxu0 %v972
        %4800 = vmatprep.subr.mxu0 0.0
        %4801 = vmatpush1.xpose.msra.mxu0 0.0
        %4802 = vmatprep.subr.mxu0 0.0
        %4803 = vmatpush1.xpose.msra.mxu0 0.0
        %4804 = vmatprep.subr.mxu0 0.0
        %4805 = vmatpush1.xpose.msra.mxu0 0.0
        %4806 = vmatprep.subr.mxu0 0.0
        %4807 = vmatpush1.xpose.msra.mxu0 0.0
        %4808 = vmatprep.subr.mxu0 0.0
        %4809 = vmatpush1.xpose.msra.mxu0 0.0
        %4810 = vmatprep.subr.mxu0 0.0
        %4811 = vmatpush1.xpose.msra.mxu0 0.0
        %4812 = vmatprep.subr.mxu0 0.0
        %4813 = vmatpush1.xpose.msra.mxu0 0.0
        %4814 = vmatprep.subr.mxu0 0.0
        %4815 = vmatpush1.xpose.msra.mxu0 0.0
        %4816 = vmatprep.subr.mxu0 0.0
        %4817 = vmatpush1.xpose.msra.mxu0 0.0
        %4818 = vmatprep.subr.mxu0 0.0
        %4819 = vmatpush1.xpose.msra.mxu0 0.0
        %4820 = vmatprep.subr.mxu0 0.0
        %4821 = vmatpush1.xpose.msra.mxu0 0.0
        %4822 = vmatprep.subr.mxu0 0.0
        %4823 = vmatpush1.xpose.msra.mxu0 0.0
        %4824 = vmatprep.subr.mxu0 0.0
        %4825 = vmatpush1.xpose.msra.mxu0 0.0
        %4826 = vmatprep.subr.mxu0 0.0
        %4827 = vmatpush1.xpose.msra.mxu0 0.0
        %4828 = vmatprep.subr.mxu0 0.0
        %4829 = vmatpush1.xpose.msra.mxu0 0.0
        %4830 = vmatprep.subr.mxu0 0.0
        %4831 = vmatpush1.xpose.msra.mxu0 0.0
        %4832 = vmatprep.subr.mxu0 0.0
        %4833 = vmatpush1.xpose.msra.mxu0 0.0
        %4834 = vmatprep.subr.mxu0 0.0
        %4835 = vmatpush1.xpose.msra.mxu0 0.0
        %4836 = vmatprep.subr.mxu0 0.0
        %4837 = vmatpush1.xpose.msra.mxu0 0.0
        %4838 = vmatprep.subr.mxu0 0.0
        %4839 = vmatpush1.xpose.msra.mxu0 0.0
        %4840 = vmatprep.subr.mxu0 0.0
        %4841 = vmatpush1.xpose.msra.mxu0 0.0
        %4842 = vmatprep.subr.mxu0 0.0
        %4843 = vmatpush1.xpose.msra.mxu0 0.0
        %4844 = vmatprep.subr.mxu0 0.0
        %4845 = vmatpush1.xpose.msra.mxu0 0.0
        %4846 = vmatprep.subr.mxu0 0.0
        %4847 = vmatpush1.xpose.msra.mxu0 0.0
        %4848 = vmatprep.subr.mxu0 0.0
        %4849 = vmatpush1.xpose.msra.mxu0 0.0
        %4850 = vmatprep.subr.mxu0 0.0
        %4851 = vmatpush1.xpose.msra.mxu0 0.0
        %4852 = vmatprep.subr.mxu0 0.0
        %4853 = vmatpush1.xpose.msra.mxu0 0.0
        %4854 = vmatprep.subr.mxu0 0.0
        %4855 = vmatpush1.xpose.msra.mxu0 0.0
        %4856 = vmatprep.subr.mxu0 0.0
        %4857 = vmatpush1.xpose.msra.mxu0 0.0
        %4858 = vmatprep.subr.mxu0 0.0
        %4859 = vmatpush1.xpose.msra.mxu0 0.0
        %4860 = vmatprep.mubr.f32.mxu0 %v1433
        %4861 = vmatmul.mubr.f32.gmra.mrb[0].mxu0 %v1425
        %v4862 = vpop.f32.mrb[0].mxu0
        %v4863 = vadd.f32 %v4793, %v4862
        %v4864 = vpop.f32.mrb[0].mxu0
        %4865 = vdwg.mxu0
        %4866 = vmatprep.subr.mxu0 %v847
        %4867 = vmatpush1.xpose.msra.mxu0 %v846
        %4868 = vmatprep.subr.mxu0 %v975
        %4869 = vmatpush1.xpose.msra.mxu0 %v974
        %4870 = vmatprep.subr.mxu0 0.0
        %4871 = vmatpush1.xpose.msra.mxu0 0.0
        %4872 = vmatprep.subr.mxu0 0.0
        %4873 = vmatpush1.xpose.msra.mxu0 0.0
        %4874 = vmatprep.subr.mxu0 0.0
        %4875 = vmatpush1.xpose.msra.mxu0 0.0
        %4876 = vmatprep.subr.mxu0 0.0
        %4877 = vmatpush1.xpose.msra.mxu0 0.0
        %4878 = vmatprep.subr.mxu0 0.0
        %4879 = vmatpush1.xpose.msra.mxu0 0.0
        %4880 = vmatprep.subr.mxu0 0.0
        %4881 = vmatpush1.xpose.msra.mxu0 0.0
        %4882 = vmatprep.subr.mxu0 0.0
        %4883 = vmatpush1.xpose.msra.mxu0 0.0
        %4884 = vmatprep.subr.mxu0 0.0
        %4885 = vmatpush1.xpose.msra.mxu0 0.0
        %4886 = vmatprep.subr.mxu0 0.0
        %4887 = vmatpush1.xpose.msra.mxu0 0.0
        %4888 = vmatprep.subr.mxu0 0.0
        %4889 = vmatpush1.xpose.msra.mxu0 0.0
        %4890 = vmatprep.subr.mxu0 0.0
        %4891 = vmatpush1.xpose.msra.mxu0 0.0
        %4892 = vmatprep.subr.mxu0 0.0
        %4893 = vmatpush1.xpose.msra.mxu0 0.0
        %4894 = vmatprep.subr.mxu0 0.0
        %4895 = vmatpush1.xpose.msra.mxu0 0.0
        %4896 = vmatprep.subr.mxu0 0.0
        %4897 = vmatpush1.xpose.msra.mxu0 0.0
        %4898 = vmatprep.subr.mxu0 0.0
        %4899 = vmatpush1.xpose.msra.mxu0 0.0
        %4900 = vmatprep.subr.mxu0 0.0
        %4901 = vmatpush1.xpose.msra.mxu0 0.0
        %4902 = vmatprep.subr.mxu0 0.0
        %4903 = vmatpush1.xpose.msra.mxu0 0.0
        %4904 = vmatprep.subr.mxu0 0.0
        %4905 = vmatpush1.xpose.msra.mxu0 0.0
        %4906 = vmatprep.subr.mxu0 0.0
        %4907 = vmatpush1.xpose.msra.mxu0 0.0
        %4908 = vmatprep.subr.mxu0 0.0
        %4909 = vmatpush1.xpose.msra.mxu0 0.0
        %4910 = vmatprep.subr.mxu0 0.0
        %4911 = vmatpush1.xpose.msra.mxu0 0.0
        %4912 = vmatprep.subr.mxu0 0.0
        %4913 = vmatpush1.xpose.msra.mxu0 0.0
        %4914 = vmatprep.subr.mxu0 0.0
        %4915 = vmatpush1.xpose.msra.mxu0 0.0
        %4916 = vmatprep.subr.mxu0 0.0
        %4917 = vmatpush1.xpose.msra.mxu0 0.0
        %4918 = vmatprep.subr.mxu0 0.0
        %4919 = vmatpush1.xpose.msra.mxu0 0.0
        %4920 = vmatprep.subr.mxu0 0.0
        %4921 = vmatpush1.xpose.msra.mxu0 0.0
        %4922 = vmatprep.subr.mxu0 0.0
        %4923 = vmatpush1.xpose.msra.mxu0 0.0
        %4924 = vmatprep.subr.mxu0 0.0
        %4925 = vmatpush1.xpose.msra.mxu0 0.0
        %4926 = vmatprep.subr.mxu0 0.0
        %4927 = vmatpush1.xpose.msra.mxu0 0.0
        %4928 = vmatprep.subr.mxu0 0.0
        %4929 = vmatpush1.xpose.msra.mxu0 0.0
        %4930 = vmatprep.mubr.f32.mxu0 %v1434
        %4931 = vmatmul.mubr.f32.gmra.mrb[0].mxu0 %v1432
        %v4932 = vpop.f32.mrb[0].mxu0
        %v4933 = vadd.f32 %v4863, %v4932
        %v4934 = vpop.f32.mrb[0].mxu0
        %4935 = vdwg.mxu0
        %4936 = vmatprep.subr.mxu0 %v849
        %4937 = vmatpush1.xpose.msra.mxu0 %v848
        %4938 = vmatprep.subr.mxu0 %v977
        %4939 = vmatpush1.xpose.msra.mxu0 %v976
        %4940 = vmatprep.subr.mxu0 0.0
        %4941 = vmatpush1.xpose.msra.mxu0 0.0
        %4942 = vmatprep.subr.mxu0 0.0
        %4943 = vmatpush1.xpose.msra.mxu0 0.0
        %4944 = vmatprep.subr.mxu0 0.0
        %4945 = vmatpush1.xpose.msra.mxu0 0.0
        %4946 = vmatprep.subr.mxu0 0.0
        %4947 = vmatpush1.xpose.msra.mxu0 0.0
        %4948 = vmatprep.subr.mxu0 0.0
        %4949 = vmatpush1.xpose.msra.mxu0 0.0
        %4950 = vmatprep.subr.mxu0 0.0
        %4951 = vmatpush1.xpose.msra.mxu0 0.0
        %4952 = vmatprep.subr.mxu0 0.0
        %4953 = vmatpush1.xpose.msra.mxu0 0.0
        %4954 = vmatprep.subr.mxu0 0.0
        %4955 = vmatpush1.xpose.msra.mxu0 0.0
        %4956 = vmatprep.subr.mxu0 0.0
        %4957 = vmatpush1.xpose.msra.mxu0 0.0
        %4958 = vmatprep.subr.mxu0 0.0
        %4959 = vmatpush1.xpose.msra.mxu0 0.0
        %4960 = vmatprep.subr.mxu0 0.0
        %4961 = vmatpush1.xpose.msra.mxu0 0.0
        %4962 = vmatprep.subr.mxu0 0.0
        %4963 = vmatpush1.xpose.msra.mxu0 0.0
        %4964 = vmatprep.subr.mxu0 0.0
        %4965 = vmatpush1.xpose.msra.mxu0 0.0
        %4966 = vmatprep.subr.mxu0 0.0
        %4967 = vmatpush1.xpose.msra.mxu0 0.0
        %4968 = vmatprep.subr.mxu0 0.0
        %4969 = vmatpush1.xpose.msra.mxu0 0.0
        %4970 = vmatprep.subr.mxu0 0.0
        %4971 = vmatpush1.xpose.msra.mxu0 0.0
        %4972 = vmatprep.subr.mxu0 0.0
        %4973 = vmatpush1.xpose.msra.mxu0 0.0
        %4974 = vmatprep.subr.mxu0 0.0
        %4975 = vmatpush1.xpose.msra.mxu0 0.0
        %4976 = vmatprep.subr.mxu0 0.0
        %4977 = vmatpush1.xpose.msra.mxu0 0.0
        %4978 = vmatprep.subr.mxu0 0.0
        %4979 = vmatpush1.xpose.msra.mxu0 0.0
        %4980 = vmatprep.subr.mxu0 0.0
        %4981 = vmatpush1.xpose.msra.mxu0 0.0
        %4982 = vmatprep.subr.mxu0 0.0
        %4983 = vmatpush1.xpose.msra.mxu0 0.0
        %4984 = vmatprep.subr.mxu0 0.0
        %4985 = vmatpush1.xpose.msra.mxu0 0.0
        %4986 = vmatprep.subr.mxu0 0.0
        %4987 = vmatpush1.xpose.msra.mxu0 0.0
        %4988 = vmatprep.subr.mxu0 0.0
        %4989 = vmatpush1.xpose.msra.mxu0 0.0
        %4990 = vmatprep.subr.mxu0 0.0
        %4991 = vmatpush1.xpose.msra.mxu0 0.0
        %4992 = vmatprep.subr.mxu0 0.0
        %4993 = vmatpush1.xpose.msra.mxu0 0.0
        %4994 = vmatprep.subr.mxu0 0.0
        %4995 = vmatpush1.xpose.msra.mxu0 0.0
        %4996 = vmatprep.subr.mxu0 0.0
        %4997 = vmatpush1.xpose.msra.mxu0 0.0
        %4998 = vmatprep.subr.mxu0 0.0
        %4999 = vmatpush1.xpose.msra.mxu0 0.0
        %5000 = vmatprep.mubr.f32.mxu0 %v1450
        %5001 = vmatmul.mubr.f32.gmra.mrb[0].mxu0 %v1442
        %v5002 = vpop.f32.mrb[0].mxu0
        %v5003 = vadd.f32 %v4933, %v5002
        %v5004 = vpop.f32.mrb[0].mxu0
        %5005 = vdwg.mxu0
        %5006 = vmatprep.subr.mxu0 %v851
        %5007 = vmatpush1.xpose.msra.mxu0 %v850
        %5008 = vmatprep.subr.mxu0 %v979
        %5009 = vmatpush1.xpose.msra.mxu0 %v978
        %5010 = vmatprep.subr.mxu0 0.0
        %5011 = vmatpush1.xpose.msra.mxu0 0.0
        %5012 = vmatprep.subr.mxu0 0.0
        %5013 = vmatpush1.xpose.msra.mxu0 0.0
        %5014 = vmatprep.subr.mxu0 0.0
        %5015 = vmatpush1.xpose.msra.mxu0 0.0
        %5016 = vmatprep.subr.mxu0 0.0
        %5017 = vmatpush1.xpose.msra.mxu0 0.0
        %5018 = vmatprep.subr.mxu0 0.0
        %5019 = vmatpush1.xpose.msra.mxu0 0.0
        %5020 = vmatprep.subr.mxu0 0.0
        %5021 = vmatpush1.xpose.msra.mxu0 0.0
        %5022 = vmatprep.subr.mxu0 0.0
        %5023 = vmatpush1.xpose.msra.mxu0 0.0
        %5024 = vmatprep.subr.mxu0 0.0
        %5025 = vmatpush1.xpose.msra.mxu0 0.0
        %5026 = vmatprep.subr.mxu0 0.0
        %5027 = vmatpush1.xpose.msra.mxu0 0.0
        %5028 = vmatprep.subr.mxu0 0.0
        %5029 = vmatpush1.xpose.msra.mxu0 0.0
        %5030 = vmatprep.subr.mxu0 0.0
        %5031 = vmatpush1.xpose.msra.mxu0 0.0
        %5032 = vmatprep.subr.mxu0 0.0
        %5033 = vmatpush1.xpose.msra.mxu0 0.0
        %5034 = vmatprep.subr.mxu0 0.0
        %5035 = vmatpush1.xpose.msra.mxu0 0.0
        %5036 = vmatprep.subr.mxu0 0.0
        %5037 = vmatpush1.xpose.msra.mxu0 0.0
        %5038 = vmatprep.subr.mxu0 0.0
        %5039 = vmatpush1.xpose.msra.mxu0 0.0
        %5040 = vmatprep.subr.mxu0 0.0
        %5041 = vmatpush1.xpose.msra.mxu0 0.0
        %5042 = vmatprep.subr.mxu0 0.0
        %5043 = vmatpush1.xpose.msra.mxu0 0.0
        %5044 = vmatprep.subr.mxu0 0.0
        %5045 = vmatpush1.xpose.msra.mxu0 0.0
        %5046 = vmatprep.subr.mxu0 0.0
        %5047 = vmatpush1.xpose.msra.mxu0 0.0
        %5048 = vmatprep.subr.mxu0 0.0
        %5049 = vmatpush1.xpose.msra.mxu0 0.0
        %5050 = vmatprep.subr.mxu0 0.0
        %5051 = vmatpush1.xpose.msra.mxu0 0.0
        %5052 = vmatprep.subr.mxu0 0.0
        %5053 = vmatpush1.xpose.msra.mxu0 0.0
        %5054 = vmatprep.subr.mxu0 0.0
        %5055 = vmatpush1.xpose.msra.mxu0 0.0
        %5056 = vmatprep.subr.mxu0 0.0
        %5057 = vmatpush1.xpose.msra.mxu0 0.0
        %5058 = vmatprep.subr.mxu0 0.0
        %5059 = vmatpush1.xpose.msra.mxu0 0.0
        %5060 = vmatprep.subr.mxu0 0.0
        %5061 = vmatpush1.xpose.msra.mxu0 0.0
        %5062 = vmatprep.subr.mxu0 0.0
        %5063 = vmatpush1.xpose.msra.mxu0 0.0
        %5064 = vmatprep.subr.mxu0 0.0
        %5065 = vmatpush1.xpose.msra.mxu0 0.0
        %5066 = vmatprep.subr.mxu0 0.0
        %5067 = vmatpush1.xpose.msra.mxu0 0.0
        %5068 = vmatprep.subr.mxu0 0.0
        %5069 = vmatpush1.xpose.msra.mxu0 0.0
        %5070 = vmatprep.mubr.f32.mxu0 %v1451
        %5071 = vmatmul.mubr.f32.gmra.mrb[0].mxu0 %v1449
        %v5072 = vpop.f32.mrb[0].mxu0
        %v5073 = vadd.f32 %v5003, %v5072
        %v5074 = vpop.f32.mrb[0].mxu0
        %5075 = vdwg.mxu0
        %5076 = vmatprep.subr.mxu0 %v853
        %5077 = vmatpush1.xpose.msra.mxu0 %v852
        %5078 = vmatprep.subr.mxu0 %v981
        %5079 = vmatpush1.xpose.msra.mxu0 %v980
        %5080 = vmatprep.subr.mxu0 0.0
        %5081 = vmatpush1.xpose.msra.mxu0 0.0
        %5082 = vmatprep.subr.mxu0 0.0
        %5083 = vmatpush1.xpose.msra.mxu0 0.0
        %5084 = vmatprep.subr.mxu0 0.0
        %5085 = vmatpush1.xpose.msra.mxu0 0.0
        %5086 = vmatprep.subr.mxu0 0.0
        %5087 = vmatpush1.xpose.msra.mxu0 0.0
        %5088 = vmatprep.subr.mxu0 0.0
        %5089 = vmatpush1.xpose.msra.mxu0 0.0
        %5090 = vmatprep.subr.mxu0 0.0
        %5091 = vmatpush1.xpose.msra.mxu0 0.0
        %5092 = vmatprep.subr.mxu0 0.0
        %5093 = vmatpush1.xpose.msra.mxu0 0.0
        %5094 = vmatprep.subr.mxu0 0.0
        %5095 = vmatpush1.xpose.msra.mxu0 0.0
        %5096 = vmatprep.subr.mxu0 0.0
        %5097 = vmatpush1.xpose.msra.mxu0 0.0
        %5098 = vmatprep.subr.mxu0 0.0
        %5099 = vmatpush1.xpose.msra.mxu0 0.0
        %5100 = vmatprep.subr.mxu0 0.0
        %5101 = vmatpush1.xpose.msra.mxu0 0.0
        %5102 = vmatprep.subr.mxu0 0.0
        %5103 = vmatpush1.xpose.msra.mxu0 0.0
        %5104 = vmatprep.subr.mxu0 0.0
        %5105 = vmatpush1.xpose.msra.mxu0 0.0
        %5106 = vmatprep.subr.mxu0 0.0
        %5107 = vmatpush1.xpose.msra.mxu0 0.0
        %5108 = vmatprep.subr.mxu0 0.0
        %5109 = vmatpush1.xpose.msra.mxu0 0.0
        %5110 = vmatprep.subr.mxu0 0.0
        %5111 = vmatpush1.xpose.msra.mxu0 0.0
        %5112 = vmatprep.subr.mxu0 0.0
        %5113 = vmatpush1.xpose.msra.mxu0 0.0
        %5114 = vmatprep.subr.mxu0 0.0
        %5115 = vmatpush1.xpose.msra.mxu0 0.0
        %5116 = vmatprep.subr.mxu0 0.0
        %5117 = vmatpush1.xpose.msra.mxu0 0.0
        %5118 = vmatprep.subr.mxu0 0.0
        %5119 = vmatpush1.xpose.msra.mxu0 0.0
        %5120 = vmatprep.subr.mxu0 0.0
        %5121 = vmatpush1.xpose.msra.mxu0 0.0
        %5122 = vmatprep.subr.mxu0 0.0
        %5123 = vmatpush1.xpose.msra.mxu0 0.0
        %5124 = vmatprep.subr.mxu0 0.0
        %5125 = vmatpush1.xpose.msra.mxu0 0.0
        %5126 = vmatprep.subr.mxu0 0.0
        %5127 = vmatpush1.xpose.msra.mxu0 0.0
        %5128 = vmatprep.subr.mxu0 0.0
        %5129 = vmatpush1.xpose.msra.mxu0 0.0
        %5130 = vmatprep.subr.mxu0 0.0
        %5131 = vmatpush1.xpose.msra.mxu0 0.0
        %5132 = vmatprep.subr.mxu0 0.0
        %5133 = vmatpush1.xpose.msra.mxu0 0.0
        %5134 = vmatprep.subr.mxu0 0.0
        %5135 = vmatpush1.xpose.msra.mxu0 0.0
        %5136 = vmatprep.subr.mxu0 0.0
        %5137 = vmatpush1.xpose.msra.mxu0 0.0
        %5138 = vmatprep.subr.mxu0 0.0
        %5139 = vmatpush1.xpose.msra.mxu0 0.0
        %5140 = vmatprep.mubr.f32.mxu0 %v1467
        %5141 = vmatmul.mubr.f32.gmra.mrb[0].mxu0 %v1459
        %v5142 = vpop.f32.mrb[0].mxu0
        %v5143 = vadd.f32 %v5073, %v5142
        %v5144 = vpop.f32.mrb[0].mxu0
        %5145 = vdwg.mxu0
        %5146 = vmatprep.subr.mxu0 %v855
        %5147 = vmatpush1.xpose.msra.mxu0 %v854
        %5148 = vmatprep.subr.mxu0 %v983
        %5149 = vmatpush1.xpose.msra.mxu0 %v982
        %5150 = vmatprep.subr.mxu0 0.0
        %5151 = vmatpush1.xpose.msra.mxu0 0.0
        %5152 = vmatprep.subr.mxu0 0.0
        %5153 = vmatpush1.xpose.msra.mxu0 0.0
        %5154 = vmatprep.subr.mxu0 0.0
        %5155 = vmatpush1.xpose.msra.mxu0 0.0
        %5156 = vmatprep.subr.mxu0 0.0
        %5157 = vmatpush1.xpose.msra.mxu0 0.0
        %5158 = vmatprep.subr.mxu0 0.0
        %5159 = vmatpush1.xpose.msra.mxu0 0.0
        %5160 = vmatprep.subr.mxu0 0.0
        %5161 = vmatpush1.xpose.msra.mxu0 0.0
        %5162 = vmatprep.subr.mxu0 0.0
        %5163 = vmatpush1.xpose.msra.mxu0 0.0
        %5164 = vmatprep.subr.mxu0 0.0
        %5165 = vmatpush1.xpose.msra.mxu0 0.0
        %5166 = vmatprep.subr.mxu0 0.0
        %5167 = vmatpush1.xpose.msra.mxu0 0.0
        %5168 = vmatprep.subr.mxu0 0.0
        %5169 = vmatpush1.xpose.msra.mxu0 0.0
        %5170 = vmatprep.subr.mxu0 0.0
        %5171 = vmatpush1.xpose.msra.mxu0 0.0
        %5172 = vmatprep.subr.mxu0 0.0
        %5173 = vmatpush1.xpose.msra.mxu0 0.0
        %5174 = vmatprep.subr.mxu0 0.0
        %5175 = vmatpush1.xpose.msra.mxu0 0.0
        %5176 = vmatprep.subr.mxu0 0.0
        %5177 = vmatpush1.xpose.msra.mxu0 0.0
        %5178 = vmatprep.subr.mxu0 0.0
        %5179 = vmatpush1.xpose.msra.mxu0 0.0
        %5180 = vmatprep.subr.mxu0 0.0
        %5181 = vmatpush1.xpose.msra.mxu0 0.0
        %5182 = vmatprep.subr.mxu0 0.0
        %5183 = vmatpush1.xpose.msra.mxu0 0.0
        %5184 = vmatprep.subr.mxu0 0.0
        %5185 = vmatpush1.xpose.msra.mxu0 0.0
        %5186 = vmatprep.subr.mxu0 0.0
        %5187 = vmatpush1.xpose.msra.mxu0 0.0
        %5188 = vmatprep.subr.mxu0 0.0
        %5189 = vmatpush1.xpose.msra.mxu0 0.0
        %5190 = vmatprep.subr.mxu0 0.0
        %5191 = vmatpush1.xpose.msra.mxu0 0.0
        %5192 = vmatprep.subr.mxu0 0.0
        %5193 = vmatpush1.xpose.msra.mxu0 0.0
        %5194 = vmatprep.subr.mxu0 0.0
        %5195 = vmatpush1.xpose.msra.mxu0 0.0
        %5196 = vmatprep.subr.mxu0 0.0
        %5197 = vmatpush1.xpose.msra.mxu0 0.0
        %5198 = vmatprep.subr.mxu0 0.0
        %5199 = vmatpush1.xpose.msra.mxu0 0.0
        %5200 = vmatprep.subr.mxu0 0.0
        %5201 = vmatpush1.xpose.msra.mxu0 0.0
        %5202 = vmatprep.subr.mxu0 0.0
        %5203 = vmatpush1.xpose.msra.mxu0 0.0
        %5204 = vmatprep.subr.mxu0 0.0
        %5205 = vmatpush1.xpose.msra.mxu0 0.0
        %5206 = vmatprep.subr.mxu0 0.0
        %5207 = vmatpush1.xpose.msra.mxu0 0.0
        %5208 = vmatprep.subr.mxu0 0.0
        %5209 = vmatpush1.xpose.msra.mxu0 0.0
        %5210 = vmatprep.mubr.f32.mxu0 %v1468
        %5211 = vmatmul.mubr.f32.gmra.mrb[0].mxu0 %v1466
        %v5212 = vpop.f32.mrb[0].mxu0
        %v5213 = vadd.f32 %v5143, %v5212
        %v5214 = vpop.f32.mrb[0].mxu0
        %5215 = vdwg.mxu0
        %5216 = vmatprep.subr.mxu0 %v857
        %5217 = vmatpush1.xpose.msra.mxu0 %v856
        %5218 = vmatprep.subr.mxu0 %v985
        %5219 = vmatpush1.xpose.msra.mxu0 %v984
        %5220 = vmatprep.subr.mxu0 0.0
        %5221 = vmatpush1.xpose.msra.mxu0 0.0
        %5222 = vmatprep.subr.mxu0 0.0
        %5223 = vmatpush1.xpose.msra.mxu0 0.0
        %5224 = vmatprep.subr.mxu0 0.0
        %5225 = vmatpush1.xpose.msra.mxu0 0.0
        %5226 = vmatprep.subr.mxu0 0.0
        %5227 = vmatpush1.xpose.msra.mxu0 0.0
        %5228 = vmatprep.subr.mxu0 0.0
        %5229 = vmatpush1.xpose.msra.mxu0 0.0
        %5230 = vmatprep.subr.mxu0 0.0
        %5231 = vmatpush1.xpose.msra.mxu0 0.0
        %5232 = vmatprep.subr.mxu0 0.0
        %5233 = vmatpush1.xpose.msra.mxu0 0.0
        %5234 = vmatprep.subr.mxu0 0.0
        %5235 = vmatpush1.xpose.msra.mxu0 0.0
        %5236 = vmatprep.subr.mxu0 0.0
        %5237 = vmatpush1.xpose.msra.mxu0 0.0
        %5238 = vmatprep.subr.mxu0 0.0
        %5239 = vmatpush1.xpose.msra.mxu0 0.0
        %5240 = vmatprep.subr.mxu0 0.0
        %5241 = vmatpush1.xpose.msra.mxu0 0.0
        %5242 = vmatprep.subr.mxu0 0.0
        %5243 = vmatpush1.xpose.msra.mxu0 0.0
        %5244 = vmatprep.subr.mxu0 0.0
        %5245 = vmatpush1.xpose.msra.mxu0 0.0
        %5246 = vmatprep.subr.mxu0 0.0
        %5247 = vmatpush1.xpose.msra.mxu0 0.0
        %5248 = vmatprep.subr.mxu0 0.0
        %5249 = vmatpush1.xpose.msra.mxu0 0.0
        %5250 = vmatprep.subr.mxu0 0.0
        %5251 = vmatpush1.xpose.msra.mxu0 0.0
        %5252 = vmatprep.subr.mxu0 0.0
        %5253 = vmatpush1.xpose.msra.mxu0 0.0
        %5254 = vmatprep.subr.mxu0 0.0
        %5255 = vmatpush1.xpose.msra.mxu0 0.0
        %5256 = vmatprep.subr.mxu0 0.0
        %5257 = vmatpush1.xpose.msra.mxu0 0.0
        %5258 = vmatprep.subr.mxu0 0.0
        %5259 = vmatpush1.xpose.msra.mxu0 0.0
        %5260 = vmatprep.subr.mxu0 0.0
        %5261 = vmatpush1.xpose.msra.mxu0 0.0
        %5262 = vmatprep.subr.mxu0 0.0
        %5263 = vmatpush1.xpose.msra.mxu0 0.0
        %5264 = vmatprep.subr.mxu0 0.0
        %5265 = vmatpush1.xpose.msra.mxu0 0.0
        %5266 = vmatprep.subr.mxu0 0.0
        %5267 = vmatpush1.xpose.msra.mxu0 0.0
        %5268 = vmatprep.subr.mxu0 0.0
        %5269 = vmatpush1.xpose.msra.mxu0 0.0
        %5270 = vmatprep.subr.mxu0 0.0
        %5271 = vmatpush1.xpose.msra.mxu0 0.0
        %5272 = vmatprep.subr.mxu0 0.0
        %5273 = vmatpush1.xpose.msra.mxu0 0.0
        %5274 = vmatprep.subr.mxu0 0.0
        %5275 = vmatpush1.xpose.msra.mxu0 0.0
        %5276 = vmatprep.subr.mxu0 0.0
        %5277 = vmatpush1.xpose.msra.mxu0 0.0
        %5278 = vmatprep.subr.mxu0 0.0
        %5279 = vmatpush1.xpose.msra.mxu0 0.0
        %5280 = vmatprep.mubr.f32.mxu0 %v1484
        %5281 = vmatmul.mubr.f32.gmra.mrb[0].mxu0 %v1476
        %v5282 = vpop.f32.mrb[0].mxu0
        %v5283 = vadd.f32 %v5213, %v5282
        %v5284 = vpop.f32.mrb[0].mxu0
        %5285 = vdwg.mxu0
        %5286 = vmatprep.subr.mxu0 %v859
        %5287 = vmatpush1.xpose.msra.mxu0 %v858
        %5288 = vmatprep.subr.mxu0 %v987
        %5289 = vmatpush1.xpose.msra.mxu0 %v986
        %5290 = vmatprep.subr.mxu0 0.0
        %5291 = vmatpush1.xpose.msra.mxu0 0.0
        %5292 = vmatprep.subr.mxu0 0.0
        %5293 = vmatpush1.xpose.msra.mxu0 0.0
        %5294 = vmatprep.subr.mxu0 0.0
        %5295 = vmatpush1.xpose.msra.mxu0 0.0
        %5296 = vmatprep.subr.mxu0 0.0
        %5297 = vmatpush1.xpose.msra.mxu0 0.0
        %5298 = vmatprep.subr.mxu0 0.0
        %5299 = vmatpush1.xpose.msra.mxu0 0.0
        %5300 = vmatprep.subr.mxu0 0.0
        %5301 = vmatpush1.xpose.msra.mxu0 0.0
        %5302 = vmatprep.subr.mxu0 0.0
        %5303 = vmatpush1.xpose.msra.mxu0 0.0
        %5304 = vmatprep.subr.mxu0 0.0
        %5305 = vmatpush1.xpose.msra.mxu0 0.0
        %5306 = vmatprep.subr.mxu0 0.0
        %5307 = vmatpush1.xpose.msra.mxu0 0.0
        %5308 = vmatprep.subr.mxu0 0.0
        %5309 = vmatpush1.xpose.msra.mxu0 0.0
        %5310 = vmatprep.subr.mxu0 0.0
        %5311 = vmatpush1.xpose.msra.mxu0 0.0
        %5312 = vmatprep.subr.mxu0 0.0
        %5313 = vmatpush1.xpose.msra.mxu0 0.0
        %5314 = vmatprep.subr.mxu0 0.0
        %5315 = vmatpush1.xpose.msra.mxu0 0.0
        %5316 = vmatprep.subr.mxu0 0.0
        %5317 = vmatpush1.xpose.msra.mxu0 0.0
        %5318 = vmatprep.subr.mxu0 0.0
        %5319 = vmatpush1.xpose.msra.mxu0 0.0
        %5320 = vmatprep.subr.mxu0 0.0
        %5321 = vmatpush1.xpose.msra.mxu0 0.0
        %5322 = vmatprep.subr.mxu0 0.0
        %5323 = vmatpush1.xpose.msra.mxu0 0.0
        %5324 = vmatprep.subr.mxu0 0.0
        %5325 = vmatpush1.xpose.msra.mxu0 0.0
        %5326 = vmatprep.subr.mxu0 0.0
        %5327 = vmatpush1.xpose.msra.mxu0 0.0
        %5328 = vmatprep.subr.mxu0 0.0
        %5329 = vmatpush1.xpose.msra.mxu0 0.0
        %5330 = vmatprep.subr.mxu0 0.0
        %5331 = vmatpush1.xpose.msra.mxu0 0.0
        %5332 = vmatprep.subr.mxu0 0.0
        %5333 = vmatpush1.xpose.msra.mxu0 0.0
        %5334 = vmatprep.subr.mxu0 0.0
        %5335 = vmatpush1.xpose.msra.mxu0 0.0
        %5336 = vmatprep.subr.mxu0 0.0
        %5337 = vmatpush1.xpose.msra.mxu0 0.0
        %5338 = vmatprep.subr.mxu0 0.0
        %5339 = vmatpush1.xpose.msra.mxu0 0.0
        %5340 = vmatprep.subr.mxu0 0.0
        %5341 = vmatpush1.xpose.msra.mxu0 0.0
        %5342 = vmatprep.subr.mxu0 0.0
        %5343 = vmatpush1.xpose.msra.mxu0 0.0
        %5344 = vmatprep.subr.mxu0 0.0
        %5345 = vmatpush1.xpose.msra.mxu0 0.0
        %5346 = vmatprep.subr.mxu0 0.0
        %5347 = vmatpush1.xpose.msra.mxu0 0.0
        %5348 = vmatprep.subr.mxu0 0.0
        %5349 = vmatpush1.xpose.msra.mxu0 0.0
        %5350 = vmatprep.mubr.f32.mxu0 %v1485
        %5351 = vmatmul.mubr.f32.gmra.mrb[0].mxu0 %v1483
        %v5352 = vpop.f32.mrb[0].mxu0
        %v5353 = vadd.f32 %v5283, %v5352
        %v5354 = vpop.f32.mrb[0].mxu0
        %5355 = vdwg.mxu0
        %5356 = vmatprep.subr.mxu0 %v861
        %5357 = vmatpush1.xpose.msra.mxu0 %v860
        %5358 = vmatprep.subr.mxu0 %v989
        %5359 = vmatpush1.xpose.msra.mxu0 %v988
        %5360 = vmatprep.subr.mxu0 0.0
        %5361 = vmatpush1.xpose.msra.mxu0 0.0
        %5362 = vmatprep.subr.mxu0 0.0
        %5363 = vmatpush1.xpose.msra.mxu0 0.0
        %5364 = vmatprep.subr.mxu0 0.0
        %5365 = vmatpush1.xpose.msra.mxu0 0.0
        %5366 = vmatprep.subr.mxu0 0.0
        %5367 = vmatpush1.xpose.msra.mxu0 0.0
        %5368 = vmatprep.subr.mxu0 0.0
        %5369 = vmatpush1.xpose.msra.mxu0 0.0
        %5370 = vmatprep.subr.mxu0 0.0
        %5371 = vmatpush1.xpose.msra.mxu0 0.0
        %5372 = vmatprep.subr.mxu0 0.0
        %5373 = vmatpush1.xpose.msra.mxu0 0.0
        %5374 = vmatprep.subr.mxu0 0.0
        %5375 = vmatpush1.xpose.msra.mxu0 0.0
        %5376 = vmatprep.subr.mxu0 0.0
        %5377 = vmatpush1.xpose.msra.mxu0 0.0
        %5378 = vmatprep.subr.mxu0 0.0
        %5379 = vmatpush1.xpose.msra.mxu0 0.0
        %5380 = vmatprep.subr.mxu0 0.0
        %5381 = vmatpush1.xpose.msra.mxu0 0.0
        %5382 = vmatprep.subr.mxu0 0.0
        %5383 = vmatpush1.xpose.msra.mxu0 0.0
        %5384 = vmatprep.subr.mxu0 0.0
        %5385 = vmatpush1.xpose.msra.mxu0 0.0
        %5386 = vmatprep.subr.mxu0 0.0
        %5387 = vmatpush1.xpose.msra.mxu0 0.0
        %5388 = vmatprep.subr.mxu0 0.0
        %5389 = vmatpush1.xpose.msra.mxu0 0.0
        %5390 = vmatprep.subr.mxu0 0.0
        %5391 = vmatpush1.xpose.msra.mxu0 0.0
        %5392 = vmatprep.subr.mxu0 0.0
        %5393 = vmatpush1.xpose.msra.mxu0 0.0
        %5394 = vmatprep.subr.mxu0 0.0
        %5395 = vmatpush1.xpose.msra.mxu0 0.0
        %5396 = vmatprep.subr.mxu0 0.0
        %5397 = vmatpush1.xpose.msra.mxu0 0.0
        %5398 = vmatprep.subr.mxu0 0.0
        %5399 = vmatpush1.xpose.msra.mxu0 0.0
        %5400 = vmatprep.subr.mxu0 0.0
        %5401 = vmatpush1.xpose.msra.mxu0 0.0
        %5402 = vmatprep.subr.mxu0 0.0
        %5403 = vmatpush1.xpose.msra.mxu0 0.0
        %5404 = vmatprep.subr.mxu0 0.0
        %5405 = vmatpush1.xpose.msra.mxu0 0.0
        %5406 = vmatprep.subr.mxu0 0.0
        %5407 = vmatpush1.xpose.msra.mxu0 0.0
        %5408 = vmatprep.subr.mxu0 0.0
        %5409 = vmatpush1.xpose.msra.mxu0 0.0
        %5410 = vmatprep.subr.mxu0 0.0
        %5411 = vmatpush1.xpose.msra.mxu0 0.0
        %5412 = vmatprep.subr.mxu0 0.0
        %5413 = vmatpush1.xpose.msra.mxu0 0.0
        %5414 = vmatprep.subr.mxu0 0.0
        %5415 = vmatpush1.xpose.msra.mxu0 0.0
        %5416 = vmatprep.subr.mxu0 0.0
        %5417 = vmatpush1.xpose.msra.mxu0 0.0
        %5418 = vmatprep.subr.mxu0 0.0
        %5419 = vmatpush1.xpose.msra.mxu0 0.0
        %5420 = vmatprep.mubr.f32.mxu0 %v1501
        %5421 = vmatmul.mubr.f32.gmra.mrb[0].mxu0 %v1493
        %v5422 = vpop.f32.mrb[0].mxu0
        %v5423 = vadd.f32 %v5353, %v5422
        %v5424 = vpop.f32.mrb[0].mxu0
        %5425 = vdwg.mxu0
        %5426 = vmatprep.subr.mxu0 %v863
        %5427 = vmatpush1.xpose.msra.mxu0 %v862
        %5428 = vmatprep.subr.mxu0 %v991
        %5429 = vmatpush1.xpose.msra.mxu0 %v990
        %5430 = vmatprep.subr.mxu0 0.0
        %5431 = vmatpush1.xpose.msra.mxu0 0.0
        %5432 = vmatprep.subr.mxu0 0.0
        %5433 = vmatpush1.xpose.msra.mxu0 0.0
        %5434 = vmatprep.subr.mxu0 0.0
        %5435 = vmatpush1.xpose.msra.mxu0 0.0
        %5436 = vmatprep.subr.mxu0 0.0
        %5437 = vmatpush1.xpose.msra.mxu0 0.0
        %5438 = vmatprep.subr.mxu0 0.0
        %5439 = vmatpush1.xpose.msra.mxu0 0.0
        %5440 = vmatprep.subr.mxu0 0.0
        %5441 = vmatpush1.xpose.msra.mxu0 0.0
        %5442 = vmatprep.subr.mxu0 0.0
        %5443 = vmatpush1.xpose.msra.mxu0 0.0
        %5444 = vmatprep.subr.mxu0 0.0
        %5445 = vmatpush1.xpose.msra.mxu0 0.0
        %5446 = vmatprep.subr.mxu0 0.0
        %5447 = vmatpush1.xpose.msra.mxu0 0.0
        %5448 = vmatprep.subr.mxu0 0.0
        %5449 = vmatpush1.xpose.msra.mxu0 0.0
        %5450 = vmatprep.subr.mxu0 0.0
        %5451 = vmatpush1.xpose.msra.mxu0 0.0
        %5452 = vmatprep.subr.mxu0 0.0
        %5453 = vmatpush1.xpose.msra.mxu0 0.0
        %5454 = vmatprep.subr.mxu0 0.0
        %5455 = vmatpush1.xpose.msra.mxu0 0.0
        %5456 = vmatprep.subr.mxu0 0.0
        %5457 = vmatpush1.xpose.msra.mxu0 0.0
        %5458 = vmatprep.subr.mxu0 0.0
        %5459 = vmatpush1.xpose.msra.mxu0 0.0
        %5460 = vmatprep.subr.mxu0 0.0
        %5461 = vmatpush1.xpose.msra.mxu0 0.0
        %5462 = vmatprep.subr.mxu0 0.0
        %5463 = vmatpush1.xpose.msra.mxu0 0.0
        %5464 = vmatprep.subr.mxu0 0.0
        %5465 = vmatpush1.xpose.msra.mxu0 0.0
        %5466 = vmatprep.subr.mxu0 0.0
        %5467 = vmatpush1.xpose.msra.mxu0 0.0
        %5468 = vmatprep.subr.mxu0 0.0
        %5469 = vmatpush1.xpose.msra.mxu0 0.0
        %5470 = vmatprep.subr.mxu0 0.0
        %5471 = vmatpush1.xpose.msra.mxu0 0.0
        %5472 = vmatprep.subr.mxu0 0.0
        %5473 = vmatpush1.xpose.msra.mxu0 0.0
        %5474 = vmatprep.subr.mxu0 0.0
        %5475 = vmatpush1.xpose.msra.mxu0 0.0
        %5476 = vmatprep.subr.mxu0 0.0
        %5477 = vmatpush1.xpose.msra.mxu0 0.0
        %5478 = vmatprep.subr.mxu0 0.0
        %5479 = vmatpush1.xpose.msra.mxu0 0.0
        %5480 = vmatprep.subr.mxu0 0.0
        %5481 = vmatpush1.xpose.msra.mxu0 0.0
        %5482 = vmatprep.subr.mxu0 0.0
        %5483 = vmatpush1.xpose.msra.mxu0 0.0
        %5484 = vmatprep.subr.mxu0 0.0
        %5485 = vmatpush1.xpose.msra.mxu0 0.0
        %5486 = vmatprep.subr.mxu0 0.0
        %5487 = vmatpush1.xpose.msra.mxu0 0.0
        %5488 = vmatprep.subr.mxu0 0.0
        %5489 = vmatpush1.xpose.msra.mxu0 0.0
        %5490 = vmatprep.mubr.f32.mxu0 %v1502
        %5491 = vmatmul.mubr.f32.gmra.mrb[0].mxu0 %v1500
        %v5492 = vpop.f32.mrb[0].mxu0
        %v5493 = vadd.f32 %v5423, %v5492
        %v5494 = vpop.f32.mrb[0].mxu0
        %5495 = vdwg.mxu0
        %5496 = vmatprep.subr.mxu0 %v865
        %5497 = vmatpush1.xpose.msra.mxu0 %v864
        %5498 = vmatprep.subr.mxu0 %v993
        %5499 = vmatpush1.xpose.msra.mxu0 %v992
        %5500 = vmatprep.subr.mxu0 0.0
        %5501 = vmatpush1.xpose.msra.mxu0 0.0
        %5502 = vmatprep.subr.mxu0 0.0
        %5503 = vmatpush1.xpose.msra.mxu0 0.0
        %5504 = vmatprep.subr.mxu0 0.0
        %5505 = vmatpush1.xpose.msra.mxu0 0.0
        %5506 = vmatprep.subr.mxu0 0.0
        %5507 = vmatpush1.xpose.msra.mxu0 0.0
        %5508 = vmatprep.subr.mxu0 0.0
        %5509 = vmatpush1.xpose.msra.mxu0 0.0
        %5510 = vmatprep.subr.mxu0 0.0
        %5511 = vmatpush1.xpose.msra.mxu0 0.0
        %5512 = vmatprep.subr.mxu0 0.0
        %5513 = vmatpush1.xpose.msra.mxu0 0.0
        %5514 = vmatprep.subr.mxu0 0.0
        %5515 = vmatpush1.xpose.msra.mxu0 0.0
        %5516 = vmatprep.subr.mxu0 0.0
        %5517 = vmatpush1.xpose.msra.mxu0 0.0
        %5518 = vmatprep.subr.mxu0 0.0
        %5519 = vmatpush1.xpose.msra.mxu0 0.0
        %5520 = vmatprep.subr.mxu0 0.0
        %5521 = vmatpush1.xpose.msra.mxu0 0.0
        %5522 = vmatprep.subr.mxu0 0.0
        %5523 = vmatpush1.xpose.msra.mxu0 0.0
        %5524 = vmatprep.subr.mxu0 0.0
        %5525 = vmatpush1.xpose.msra.mxu0 0.0
        %5526 = vmatprep.subr.mxu0 0.0
        %5527 = vmatpush1.xpose.msra.mxu0 0.0
        %5528 = vmatprep.subr.mxu0 0.0
        %5529 = vmatpush1.xpose.msra.mxu0 0.0
        %5530 = vmatprep.subr.mxu0 0.0
        %5531 = vmatpush1.xpose.msra.mxu0 0.0
        %5532 = vmatprep.subr.mxu0 0.0
        %5533 = vmatpush1.xpose.msra.mxu0 0.0
        %5534 = vmatprep.subr.mxu0 0.0
        %5535 = vmatpush1.xpose.msra.mxu0 0.0
        %5536 = vmatprep.subr.mxu0 0.0
        %5537 = vmatpush1.xpose.msra.mxu0 0.0
        %5538 = vmatprep.subr.mxu0 0.0
        %5539 = vmatpush1.xpose.msra.mxu0 0.0
        %5540 = vmatprep.subr.mxu0 0.0
        %5541 = vmatpush1.xpose.msra.mxu0 0.0
        %5542 = vmatprep.subr.mxu0 0.0
        %5543 = vmatpush1.xpose.msra.mxu0 0.0
        %5544 = vmatprep.subr.mxu0 0.0
        %5545 = vmatpush1.xpose.msra.mxu0 0.0
        %5546 = vmatprep.subr.mxu0 0.0
        %5547 = vmatpush1.xpose.msra.mxu0 0.0
        %5548 = vmatprep.subr.mxu0 0.0
        %5549 = vmatpush1.xpose.msra.mxu0 0.0
        %5550 = vmatprep.subr.mxu0 0.0
        %5551 = vmatpush1.xpose.msra.mxu0 0.0
        %5552 = vmatprep.subr.mxu0 0.0
        %5553 = vmatpush1.xpose.msra.mxu0 0.0
        %5554 = vmatprep.subr.mxu0 0.0
        %5555 = vmatpush1.xpose.msra.mxu0 0.0
        %5556 = vmatprep.subr.mxu0 0.0
        %5557 = vmatpush1.xpose.msra.mxu0 0.0
        %5558 = vmatprep.subr.mxu0 0.0
        %5559 = vmatpush1.xpose.msra.mxu0 0.0
        %5560 = vmatprep.mubr.f32.mxu0 %v1518
        %5561 = vmatmul.mubr.f32.gmra.mrb[0].mxu0 %v1510
        %v5562 = vpop.f32.mrb[0].mxu0
        %v5563 = vadd.f32 %v5493, %v5562
        %v5564 = vpop.f32.mrb[0].mxu0
        %5565 = vdwg.mxu0
        %5566 = vmatprep.subr.mxu0 %v867
        %5567 = vmatpush1.xpose.msra.mxu0 %v866
        %5568 = vmatprep.subr.mxu0 %v995
        %5569 = vmatpush1.xpose.msra.mxu0 %v994
        %5570 = vmatprep.subr.mxu0 0.0
        %5571 = vmatpush1.xpose.msra.mxu0 0.0
        %5572 = vmatprep.subr.mxu0 0.0
        %5573 = vmatpush1.xpose.msra.mxu0 0.0
        %5574 = vmatprep.subr.mxu0 0.0
        %5575 = vmatpush1.xpose.msra.mxu0 0.0
        %5576 = vmatprep.subr.mxu0 0.0
        %5577 = vmatpush1.xpose.msra.mxu0 0.0
        %5578 = vmatprep.subr.mxu0 0.0
        %5579 = vmatpush1.xpose.msra.mxu0 0.0
        %5580 = vmatprep.subr.mxu0 0.0
        %5581 = vmatpush1.xpose.msra.mxu0 0.0
        %5582 = vmatprep.subr.mxu0 0.0
        %5583 = vmatpush1.xpose.msra.mxu0 0.0
        %5584 = vmatprep.subr.mxu0 0.0
        %5585 = vmatpush1.xpose.msra.mxu0 0.0
        %5586 = vmatprep.subr.mxu0 0.0
        %5587 = vmatpush1.xpose.msra.mxu0 0.0
        %5588 = vmatprep.subr.mxu0 0.0
        %5589 = vmatpush1.xpose.msra.mxu0 0.0
        %5590 = vmatprep.subr.mxu0 0.0
        %5591 = vmatpush1.xpose.msra.mxu0 0.0
        %5592 = vmatprep.subr.mxu0 0.0
        %5593 = vmatpush1.xpose.msra.mxu0 0.0
        %5594 = vmatprep.subr.mxu0 0.0
        %5595 = vmatpush1.xpose.msra.mxu0 0.0
        %5596 = vmatprep.subr.mxu0 0.0
        %5597 = vmatpush1.xpose.msra.mxu0 0.0
        %5598 = vmatprep.subr.mxu0 0.0
        %5599 = vmatpush1.xpose.msra.mxu0 0.0
        %5600 = vmatprep.subr.mxu0 0.0
        %5601 = vmatpush1.xpose.msra.mxu0 0.0
        %5602 = vmatprep.subr.mxu0 0.0
        %5603 = vmatpush1.xpose.msra.mxu0 0.0
        %5604 = vmatprep.subr.mxu0 0.0
        %5605 = vmatpush1.xpose.msra.mxu0 0.0
        %5606 = vmatprep.subr.mxu0 0.0
        %5607 = vmatpush1.xpose.msra.mxu0 0.0
        %5608 = vmatprep.subr.mxu0 0.0
        %5609 = vmatpush1.xpose.msra.mxu0 0.0
        %5610 = vmatprep.subr.mxu0 0.0
        %5611 = vmatpush1.xpose.msra.mxu0 0.0
        %5612 = vmatprep.subr.mxu0 0.0
        %5613 = vmatpush1.xpose.msra.mxu0 0.0
        %5614 = vmatprep.subr.mxu0 0.0
        %5615 = vmatpush1.xpose.msra.mxu0 0.0
        %5616 = vmatprep.subr.mxu0 0.0
        %5617 = vmatpush1.xpose.msra.mxu0 0.0
        %5618 = vmatprep.subr.mxu0 0.0
        %5619 = vmatpush1.xpose.msra.mxu0 0.0
        %5620 = vmatprep.subr.mxu0 0.0
        %5621 = vmatpush1.xpose.msra.mxu0 0.0
        %5622 = vmatprep.subr.mxu0 0.0
        %5623 = vmatpush1.xpose.msra.mxu0 0.0
        %5624 = vmatprep.subr.mxu0 0.0
        %5625 = vmatpush1.xpose.msra.mxu0 0.0
        %5626 = vmatprep.subr.mxu0 0.0
        %5627 = vmatpush1.xpose.msra.mxu0 0.0
        %5628 = vmatprep.subr.mxu0 0.0
        %5629 = vmatpush1.xpose.msra.mxu0 0.0
        %5630 = vmatprep.mubr.f32.mxu0 %v1519
        %5631 = vmatmul.mubr.f32.gmra.mrb[0].mxu0 %v1517
        %v5632 = vpop.f32.mrb[0].mxu0
        %v5633 = vadd.f32 %v5563, %v5632
        %v5634 = vpop.f32.mrb[0].mxu0
        %5635 = vdwg.mxu0
        %5636 = vmatprep.subr.mxu0 %v869
        %5637 = vmatpush1.xpose.msra.mxu0 %v868
        %5638 = vmatprep.subr.mxu0 %v997
        %5639 = vmatpush1.xpose.msra.mxu0 %v996
        %5640 = vmatprep.subr.mxu0 0.0
        %5641 = vmatpush1.xpose.msra.mxu0 0.0
        %5642 = vmatprep.subr.mxu0 0.0
        %5643 = vmatpush1.xpose.msra.mxu0 0.0
        %5644 = vmatprep.subr.mxu0 0.0
        %5645 = vmatpush1.xpose.msra.mxu0 0.0
        %5646 = vmatprep.subr.mxu0 0.0
        %5647 = vmatpush1.xpose.msra.mxu0 0.0
        %5648 = vmatprep.subr.mxu0 0.0
        %5649 = vmatpush1.xpose.msra.mxu0 0.0
        %5650 = vmatprep.subr.mxu0 0.0
        %5651 = vmatpush1.xpose.msra.mxu0 0.0
        %5652 = vmatprep.subr.mxu0 0.0
        %5653 = vmatpush1.xpose.msra.mxu0 0.0
        %5654 = vmatprep.subr.mxu0 0.0
        %5655 = vmatpush1.xpose.msra.mxu0 0.0
        %5656 = vmatprep.subr.mxu0 0.0
        %5657 = vmatpush1.xpose.msra.mxu0 0.0
        %5658 = vmatprep.subr.mxu0 0.0
        %5659 = vmatpush1.xpose.msra.mxu0 0.0
        %5660 = vmatprep.subr.mxu0 0.0
        %5661 = vmatpush1.xpose.msra.mxu0 0.0
        %5662 = vmatprep.subr.mxu0 0.0
        %5663 = vmatpush1.xpose.msra.mxu0 0.0
        %5664 = vmatprep.subr.mxu0 0.0
        %5665 = vmatpush1.xpose.msra.mxu0 0.0
        %5666 = vmatprep.subr.mxu0 0.0
        %5667 = vmatpush1.xpose.msra.mxu0 0.0
        %5668 = vmatprep.subr.mxu0 0.0
        %5669 = vmatpush1.xpose.msra.mxu0 0.0
        %5670 = vmatprep.subr.mxu0 0.0
        %5671 = vmatpush1.xpose.msra.mxu0 0.0
        %5672 = vmatprep.subr.mxu0 0.0
        %5673 = vmatpush1.xpose.msra.mxu0 0.0
        %5674 = vmatprep.subr.mxu0 0.0
        %5675 = vmatpush1.xpose.msra.mxu0 0.0
        %5676 = vmatprep.subr.mxu0 0.0
        %5677 = vmatpush1.xpose.msra.mxu0 0.0
        %5678 = vmatprep.subr.mxu0 0.0
        %5679 = vmatpush1.xpose.msra.mxu0 0.0
        %5680 = vmatprep.subr.mxu0 0.0
        %5681 = vmatpush1.xpose.msra.mxu0 0.0
        %5682 = vmatprep.subr.mxu0 0.0
        %5683 = vmatpush1.xpose.msra.mxu0 0.0
        %5684 = vmatprep.subr.mxu0 0.0
        %5685 = vmatpush1.xpose.msra.mxu0 0.0
        %5686 = vmatprep.subr.mxu0 0.0
        %5687 = vmatpush1.xpose.msra.mxu0 0.0
        %5688 = vmatprep.subr.mxu0 0.0
        %5689 = vmatpush1.xpose.msra.mxu0 0.0
        %5690 = vmatprep.subr.mxu0 0.0
        %5691 = vmatpush1.xpose.msra.mxu0 0.0
        %5692 = vmatprep.subr.mxu0 0.0
        %5693 = vmatpush1.xpose.msra.mxu0 0.0
        %5694 = vmatprep.subr.mxu0 0.0
        %5695 = vmatpush1.xpose.msra.mxu0 0.0
        %5696 = vmatprep.subr.mxu0 0.0
        %5697 = vmatpush1.xpose.msra.mxu0 0.0
        %5698 = vmatprep.subr.mxu0 0.0
        %5699 = vmatpush1.xpose.msra.mxu0 0.0
        %5700 = vmatprep.mubr.f32.mxu0 %v1535
        %5701 = vmatmul.mubr.f32.gmra.mrb[0].mxu0 %v1527
        %v5702 = vpop.f32.mrb[0].mxu0
        %v5703 = vadd.f32 %v5633, %v5702
        %v5704 = vpop.f32.mrb[0].mxu0
        %5705 = vdwg.mxu0
        %5706 = vmatprep.subr.mxu0 %v871
        %5707 = vmatpush1.xpose.msra.mxu0 %v870
        %5708 = vmatprep.subr.mxu0 %v999
        %5709 = vmatpush1.xpose.msra.mxu0 %v998
        %5710 = vmatprep.subr.mxu0 0.0
        %5711 = vmatpush1.xpose.msra.mxu0 0.0
        %5712 = vmatprep.subr.mxu0 0.0
        %5713 = vmatpush1.xpose.msra.mxu0 0.0
        %5714 = vmatprep.subr.mxu0 0.0
        %5715 = vmatpush1.xpose.msra.mxu0 0.0
        %5716 = vmatprep.subr.mxu0 0.0
        %5717 = vmatpush1.xpose.msra.mxu0 0.0
        %5718 = vmatprep.subr.mxu0 0.0
        %5719 = vmatpush1.xpose.msra.mxu0 0.0
        %5720 = vmatprep.subr.mxu0 0.0
        %5721 = vmatpush1.xpose.msra.mxu0 0.0
        %5722 = vmatprep.subr.mxu0 0.0
        %5723 = vmatpush1.xpose.msra.mxu0 0.0
        %5724 = vmatprep.subr.mxu0 0.0
        %5725 = vmatpush1.xpose.msra.mxu0 0.0
        %5726 = vmatprep.subr.mxu0 0.0
        %5727 = vmatpush1.xpose.msra.mxu0 0.0
        %5728 = vmatprep.subr.mxu0 0.0
        %5729 = vmatpush1.xpose.msra.mxu0 0.0
        %5730 = vmatprep.subr.mxu0 0.0
        %5731 = vmatpush1.xpose.msra.mxu0 0.0
        %5732 = vmatprep.subr.mxu0 0.0
        %5733 = vmatpush1.xpose.msra.mxu0 0.0
        %5734 = vmatprep.subr.mxu0 0.0
        %5735 = vmatpush1.xpose.msra.mxu0 0.0
        %5736 = vmatprep.subr.mxu0 0.0
        %5737 = vmatpush1.xpose.msra.mxu0 0.0
        %5738 = vmatprep.subr.mxu0 0.0
        %5739 = vmatpush1.xpose.msra.mxu0 0.0
        %5740 = vmatprep.subr.mxu0 0.0
        %5741 = vmatpush1.xpose.msra.mxu0 0.0
        %5742 = vmatprep.subr.mxu0 0.0
        %5743 = vmatpush1.xpose.msra.mxu0 0.0
        %5744 = vmatprep.subr.mxu0 0.0
        %5745 = vmatpush1.xpose.msra.mxu0 0.0
        %5746 = vmatprep.subr.mxu0 0.0
        %5747 = vmatpush1.xpose.msra.mxu0 0.0
        %5748 = vmatprep.subr.mxu0 0.0
        %5749 = vmatpush1.xpose.msra.mxu0 0.0
        %5750 = vmatprep.subr.mxu0 0.0
        %5751 = vmatpush1.xpose.msra.mxu0 0.0
        %5752 = vmatprep.subr.mxu0 0.0
        %5753 = vmatpush1.xpose.msra.mxu0 0.0
        %5754 = vmatprep.subr.mxu0 0.0
        %5755 = vmatpush1.xpose.msra.mxu0 0.0
        %5756 = vmatprep.subr.mxu0 0.0
        %5757 = vmatpush1.xpose.msra.mxu0 0.0
        %5758 = vmatprep.subr.mxu0 0.0
        %5759 = vmatpush1.xpose.msra.mxu0 0.0
        %5760 = vmatprep.subr.mxu0 0.0
        %5761 = vmatpush1.xpose.msra.mxu0 0.0
        %5762 = vmatprep.subr.mxu0 0.0
        %5763 = vmatpush1.xpose.msra.mxu0 0.0
        %5764 = vmatprep.subr.mxu0 0.0
        %5765 = vmatpush1.xpose.msra.mxu0 0.0
        %5766 = vmatprep.subr.mxu0 0.0
        %5767 = vmatpush1.xpose.msra.mxu0 0.0
        %5768 = vmatprep.subr.mxu0 0.0
        %5769 = vmatpush1.xpose.msra.mxu0 0.0
        %5770 = vmatprep.mubr.f32.mxu0 %v1536
        %5771 = vmatmul.mubr.f32.gmra.mrb[0].mxu0 %v1534
        %v5772 = vpop.f32.mrb[0].mxu0
        %v5773 = vadd.f32 %v5703, %v5772
        %v5774 = vpop.f32.mrb[0].mxu0
        %5775 = vdwg.mxu0
        %5776 = vmatprep.subr.mxu0 %v873
        %5777 = vmatpush1.xpose.msra.mxu0 %v872
        %5778 = vmatprep.subr.mxu0 %v1001
        %5779 = vmatpush1.xpose.msra.mxu0 %v1000
        %5780 = vmatprep.subr.mxu0 0.0
        %5781 = vmatpush1.xpose.msra.mxu0 0.0
        %5782 = vmatprep.subr.mxu0 0.0
        %5783 = vmatpush1.xpose.msra.mxu0 0.0
        %5784 = vmatprep.subr.mxu0 0.0
        %5785 = vmatpush1.xpose.msra.mxu0 0.0
        %5786 = vmatprep.subr.mxu0 0.0
        %5787 = vmatpush1.xpose.msra.mxu0 0.0
        %5788 = vmatprep.subr.mxu0 0.0
        %5789 = vmatpush1.xpose.msra.mxu0 0.0
        %5790 = vmatprep.subr.mxu0 0.0
        %5791 = vmatpush1.xpose.msra.mxu0 0.0
        %5792 = vmatprep.subr.mxu0 0.0
        %5793 = vmatpush1.xpose.msra.mxu0 0.0
        %5794 = vmatprep.subr.mxu0 0.0
        %5795 = vmatpush1.xpose.msra.mxu0 0.0
        %5796 = vmatprep.subr.mxu0 0.0
        %5797 = vmatpush1.xpose.msra.mxu0 0.0
        %5798 = vmatprep.subr.mxu0 0.0
        %5799 = vmatpush1.xpose.msra.mxu0 0.0
        %5800 = vmatprep.subr.mxu0 0.0
        %5801 = vmatpush1.xpose.msra.mxu0 0.0
        %5802 = vmatprep.subr.mxu0 0.0
        %5803 = vmatpush1.xpose.msra.mxu0 0.0
        %5804 = vmatprep.subr.mxu0 0.0
        %5805 = vmatpush1.xpose.msra.mxu0 0.0
        %5806 = vmatprep.subr.mxu0 0.0
        %5807 = vmatpush1.xpose.msra.mxu0 0.0
        %5808 = vmatprep.subr.mxu0 0.0
        %5809 = vmatpush1.xpose.msra.mxu0 0.0
        %5810 = vmatprep.subr.mxu0 0.0
        %5811 = vmatpush1.xpose.msra.mxu0 0.0
        %5812 = vmatprep.subr.mxu0 0.0
        %5813 = vmatpush1.xpose.msra.mxu0 0.0
        %5814 = vmatprep.subr.mxu0 0.0
        %5815 = vmatpush1.xpose.msra.mxu0 0.0
        %5816 = vmatprep.subr.mxu0 0.0
        %5817 = vmatpush1.xpose.msra.mxu0 0.0
        %5818 = vmatprep.subr.mxu0 0.0
        %5819 = vmatpush1.xpose.msra.mxu0 0.0
        %5820 = vmatprep.subr.mxu0 0.0
        %5821 = vmatpush1.xpose.msra.mxu0 0.0
        %5822 = vmatprep.subr.mxu0 0.0
        %5823 = vmatpush1.xpose.msra.mxu0 0.0
        %5824 = vmatprep.subr.mxu0 0.0
        %5825 = vmatpush1.xpose.msra.mxu0 0.0
        %5826 = vmatprep.subr.mxu0 0.0
        %5827 = vmatpush1.xpose.msra.mxu0 0.0
        %5828 = vmatprep.subr.mxu0 0.0
        %5829 = vmatpush1.xpose.msra.mxu0 0.0
        %5830 = vmatprep.subr.mxu0 0.0
        %5831 = vmatpush1.xpose.msra.mxu0 0.0
        %5832 = vmatprep.subr.mxu0 0.0
        %5833 = vmatpush1.xpose.msra.mxu0 0.0
        %5834 = vmatprep.subr.mxu0 0.0
        %5835 = vmatpush1.xpose.msra.mxu0 0.0
        %5836 = vmatprep.subr.mxu0 0.0
        %5837 = vmatpush1.xpose.msra.mxu0 0.0
        %5838 = vmatprep.subr.mxu0 0.0
        %5839 = vmatpush1.xpose.msra.mxu0 0.0
        %5840 = vmatprep.mubr.f32.mxu0 %v1552
        %5841 = vmatmul.mubr.f32.gmra.mrb[0].mxu0 %v1544
        %v5842 = vpop.f32.mrb[0].mxu0
        %v5843 = vadd.f32 %v5773, %v5842
        %v5844 = vpop.f32.mrb[0].mxu0
        %5845 = vdwg.mxu0
        %5846 = vmatprep.subr.mxu0 %v875
        %5847 = vmatpush1.xpose.msra.mxu0 %v874
        %5848 = vmatprep.subr.mxu0 %v1003
        %5849 = vmatpush1.xpose.msra.mxu0 %v1002
        %5850 = vmatprep.subr.mxu0 0.0
        %5851 = vmatpush1.xpose.msra.mxu0 0.0
        %5852 = vmatprep.subr.mxu0 0.0
        %5853 = vmatpush1.xpose.msra.mxu0 0.0
        %5854 = vmatprep.subr.mxu0 0.0
        %5855 = vmatpush1.xpose.msra.mxu0 0.0
        %5856 = vmatprep.subr.mxu0 0.0
        %5857 = vmatpush1.xpose.msra.mxu0 0.0
        %5858 = vmatprep.subr.mxu0 0.0
        %5859 = vmatpush1.xpose.msra.mxu0 0.0
        %5860 = vmatprep.subr.mxu0 0.0
        %5861 = vmatpush1.xpose.msra.mxu0 0.0
        %5862 = vmatprep.subr.mxu0 0.0
        %5863 = vmatpush1.xpose.msra.mxu0 0.0
        %5864 = vmatprep.subr.mxu0 0.0
        %5865 = vmatpush1.xpose.msra.mxu0 0.0
        %5866 = vmatprep.subr.mxu0 0.0
        %5867 = vmatpush1.xpose.msra.mxu0 0.0
        %5868 = vmatprep.subr.mxu0 0.0
        %5869 = vmatpush1.xpose.msra.mxu0 0.0
        %5870 = vmatprep.subr.mxu0 0.0
        %5871 = vmatpush1.xpose.msra.mxu0 0.0
        %5872 = vmatprep.subr.mxu0 0.0
        %5873 = vmatpush1.xpose.msra.mxu0 0.0
        %5874 = vmatprep.subr.mxu0 0.0
        %5875 = vmatpush1.xpose.msra.mxu0 0.0
        %5876 = vmatprep.subr.mxu0 0.0
        %5877 = vmatpush1.xpose.msra.mxu0 0.0
        %5878 = vmatprep.subr.mxu0 0.0
        %5879 = vmatpush1.xpose.msra.mxu0 0.0
        %5880 = vmatprep.subr.mxu0 0.0
        %5881 = vmatpush1.xpose.msra.mxu0 0.0
        %5882 = vmatprep.subr.mxu0 0.0
        %5883 = vmatpush1.xpose.msra.mxu0 0.0
        %5884 = vmatprep.subr.mxu0 0.0
        %5885 = vmatpush1.xpose.msra.mxu0 0.0
        %5886 = vmatprep.subr.mxu0 0.0
        %5887 = vmatpush1.xpose.msra.mxu0 0.0
        %5888 = vmatprep.subr.mxu0 0.0
        %5889 = vmatpush1.xpose.msra.mxu0 0.0
        %5890 = vmatprep.subr.mxu0 0.0
        %5891 = vmatpush1.xpose.msra.mxu0 0.0
        %5892 = vmatprep.subr.mxu0 0.0
        %5893 = vmatpush1.xpose.msra.mxu0 0.0
        %5894 = vmatprep.subr.mxu0 0.0
        %5895 = vmatpush1.xpose.msra.mxu0 0.0
        %5896 = vmatprep.subr.mxu0 0.0
        %5897 = vmatpush1.xpose.msra.mxu0 0.0
        %5898 = vmatprep.subr.mxu0 0.0
        %5899 = vmatpush1.xpose.msra.mxu0 0.0
        %5900 = vmatprep.subr.mxu0 0.0
        %5901 = vmatpush1.xpose.msra.mxu0 0.0
        %5902 = vmatprep.subr.mxu0 0.0
        %5903 = vmatpush1.xpose.msra.mxu0 0.0
        %5904 = vmatprep.subr.mxu0 0.0
        %5905 = vmatpush1.xpose.msra.mxu0 0.0
        %5906 = vmatprep.subr.mxu0 0.0
        %5907 = vmatpush1.xpose.msra.mxu0 0.0
        %5908 = vmatprep.subr.mxu0 0.0
        %5909 = vmatpush1.xpose.msra.mxu0 0.0
        %5910 = vmatprep.mubr.f32.mxu0 %v1553
        %5911 = vmatmul.mubr.f32.gmra.mrb[0].mxu0 %v1551
        %v5912 = vpop.f32.mrb[0].mxu0
        %v5913 = vadd.f32 %v5843, %v5912
        %v5914 = vpop.f32.mrb[0].mxu0
        %5915 = vdwg.mxu0
        %5916 = vmatprep.subr.mxu0 %v877
        %5917 = vmatpush1.xpose.msra.mxu0 %v876
        %5918 = vmatprep.subr.mxu0 %v1005
        %5919 = vmatpush1.xpose.msra.mxu0 %v1004
        %5920 = vmatprep.subr.mxu0 0.0
        %5921 = vmatpush1.xpose.msra.mxu0 0.0
        %5922 = vmatprep.subr.mxu0 0.0
        %5923 = vmatpush1.xpose.msra.mxu0 0.0
        %5924 = vmatprep.subr.mxu0 0.0
        %5925 = vmatpush1.xpose.msra.mxu0 0.0
        %5926 = vmatprep.subr.mxu0 0.0
        %5927 = vmatpush1.xpose.msra.mxu0 0.0
        %5928 = vmatprep.subr.mxu0 0.0
        %5929 = vmatpush1.xpose.msra.mxu0 0.0
        %5930 = vmatprep.subr.mxu0 0.0
        %5931 = vmatpush1.xpose.msra.mxu0 0.0
        %5932 = vmatprep.subr.mxu0 0.0
        %5933 = vmatpush1.xpose.msra.mxu0 0.0
        %5934 = vmatprep.subr.mxu0 0.0
        %5935 = vmatpush1.xpose.msra.mxu0 0.0
        %5936 = vmatprep.subr.mxu0 0.0
        %5937 = vmatpush1.xpose.msra.mxu0 0.0
        %5938 = vmatprep.subr.mxu0 0.0
        %5939 = vmatpush1.xpose.msra.mxu0 0.0
        %5940 = vmatprep.subr.mxu0 0.0
        %5941 = vmatpush1.xpose.msra.mxu0 0.0
        %5942 = vmatprep.subr.mxu0 0.0
        %5943 = vmatpush1.xpose.msra.mxu0 0.0
        %5944 = vmatprep.subr.mxu0 0.0
        %5945 = vmatpush1.xpose.msra.mxu0 0.0
        %5946 = vmatprep.subr.mxu0 0.0
        %5947 = vmatpush1.xpose.msra.mxu0 0.0
        %5948 = vmatprep.subr.mxu0 0.0
        %5949 = vmatpush1.xpose.msra.mxu0 0.0
        %5950 = vmatprep.subr.mxu0 0.0
        %5951 = vmatpush1.xpose.msra.mxu0 0.0
        %5952 = vmatprep.subr.mxu0 0.0
        %5953 = vmatpush1.xpose.msra.mxu0 0.0
        %5954 = vmatprep.subr.mxu0 0.0
        %5955 = vmatpush1.xpose.msra.mxu0 0.0
        %5956 = vmatprep.subr.mxu0 0.0
        %5957 = vmatpush1.xpose.msra.mxu0 0.0
        %5958 = vmatprep.subr.mxu0 0.0
        %5959 = vmatpush1.xpose.msra.mxu0 0.0
        %5960 = vmatprep.subr.mxu0 0.0
        %5961 = vmatpush1.xpose.msra.mxu0 0.0
        %5962 = vmatprep.subr.mxu0 0.0
        %5963 = vmatpush1.xpose.msra.mxu0 0.0
        %5964 = vmatprep.subr.mxu0 0.0
        %5965 = vmatpush1.xpose.msra.mxu0 0.0
        %5966 = vmatprep.subr.mxu0 0.0
        %5967 = vmatpush1.xpose.msra.mxu0 0.0
        %5968 = vmatprep.subr.mxu0 0.0
        %5969 = vmatpush1.xpose.msra.mxu0 0.0
        %5970 = vmatprep.subr.mxu0 0.0
        %5971 = vmatpush1.xpose.msra.mxu0 0.0
        %5972 = vmatprep.subr.mxu0 0.0
        %5973 = vmatpush1.xpose.msra.mxu0 0.0
        %5974 = vmatprep.subr.mxu0 0.0
        %5975 = vmatpush1.xpose.msra.mxu0 0.0
        %5976 = vmatprep.subr.mxu0 0.0
        %5977 = vmatpush1.xpose.msra.mxu0 0.0
        %5978 = vmatprep.subr.mxu0 0.0
        %5979 = vmatpush1.xpose.msra.mxu0 0.0
        %5980 = vmatprep.mubr.f32.mxu0 %v1569
        %5981 = vmatmul.mubr.f32.gmra.mrb[0].mxu0 %v1561
        %v5982 = vpop.f32.mrb[0].mxu0
        %v5983 = vadd.f32 %v5913, %v5982
        %v5984 = vpop.f32.mrb[0].mxu0
        %5985 = vdwg.mxu0
        %5986 = vmatprep.subr.mxu0 %v879
        %5987 = vmatpush1.xpose.msra.mxu0 %v878
        %5988 = vmatprep.subr.mxu0 %v1007
        %5989 = vmatpush1.xpose.msra.mxu0 %v1006
        %5990 = vmatprep.subr.mxu0 0.0
        %5991 = vmatpush1.xpose.msra.mxu0 0.0
        %5992 = vmatprep.subr.mxu0 0.0
        %5993 = vmatpush1.xpose.msra.mxu0 0.0
        %5994 = vmatprep.subr.mxu0 0.0
        %5995 = vmatpush1.xpose.msra.mxu0 0.0
        %5996 = vmatprep.subr.mxu0 0.0
        %5997 = vmatpush1.xpose.msra.mxu0 0.0
        %5998 = vmatprep.subr.mxu0 0.0
        %5999 = vmatpush1.xpose.msra.mxu0 0.0
        %6000 = vmatprep.subr.mxu0 0.0
        %6001 = vmatpush1.xpose.msra.mxu0 0.0
        %6002 = vmatprep.subr.mxu0 0.0
        %6003 = vmatpush1.xpose.msra.mxu0 0.0
        %6004 = vmatprep.subr.mxu0 0.0
        %6005 = vmatpush1.xpose.msra.mxu0 0.0
        %6006 = vmatprep.subr.mxu0 0.0
        %6007 = vmatpush1.xpose.msra.mxu0 0.0
        %6008 = vmatprep.subr.mxu0 0.0
        %6009 = vmatpush1.xpose.msra.mxu0 0.0
        %6010 = vmatprep.subr.mxu0 0.0
        %6011 = vmatpush1.xpose.msra.mxu0 0.0
        %6012 = vmatprep.subr.mxu0 0.0
        %6013 = vmatpush1.xpose.msra.mxu0 0.0
        %6014 = vmatprep.subr.mxu0 0.0
        %6015 = vmatpush1.xpose.msra.mxu0 0.0
        %6016 = vmatprep.subr.mxu0 0.0
        %6017 = vmatpush1.xpose.msra.mxu0 0.0
        %6018 = vmatprep.subr.mxu0 0.0
        %6019 = vmatpush1.xpose.msra.mxu0 0.0
        %6020 = vmatprep.subr.mxu0 0.0
        %6021 = vmatpush1.xpose.msra.mxu0 0.0
        %6022 = vmatprep.subr.mxu0 0.0
        %6023 = vmatpush1.xpose.msra.mxu0 0.0
        %6024 = vmatprep.subr.mxu0 0.0
        %6025 = vmatpush1.xpose.msra.mxu0 0.0
        %6026 = vmatprep.subr.mxu0 0.0
        %6027 = vmatpush1.xpose.msra.mxu0 0.0
        %6028 = vmatprep.subr.mxu0 0.0
        %6029 = vmatpush1.xpose.msra.mxu0 0.0
        %6030 = vmatprep.subr.mxu0 0.0
        %6031 = vmatpush1.xpose.msra.mxu0 0.0
        %6032 = vmatprep.subr.mxu0 0.0
        %6033 = vmatpush1.xpose.msra.mxu0 0.0
        %6034 = vmatprep.subr.mxu0 0.0
        %6035 = vmatpush1.xpose.msra.mxu0 0.0
        %6036 = vmatprep.subr.mxu0 0.0
        %6037 = vmatpush1.xpose.msra.mxu0 0.0
        %6038 = vmatprep.subr.mxu0 0.0
        %6039 = vmatpush1.xpose.msra.mxu0 0.0
        %6040 = vmatprep.subr.mxu0 0.0
        %6041 = vmatpush1.xpose.msra.mxu0 0.0
        %6042 = vmatprep.subr.mxu0 0.0
        %6043 = vmatpush1.xpose.msra.mxu0 0.0
        %6044 = vmatprep.subr.mxu0 0.0
        %6045 = vmatpush1.xpose.msra.mxu0 0.0
        %6046 = vmatprep.subr.mxu0 0.0
        %6047 = vmatpush1.xpose.msra.mxu0 0.0
        %6048 = vmatprep.subr.mxu0 0.0
        %6049 = vmatpush1.xpose.msra.mxu0 0.0
        %6050 = vmatprep.mubr.f32.mxu0 %v1570
        %6051 = vmatmul.mubr.f32.gmra.mrb[0].mxu0 %v1568
        %v6052 = vpop.f32.mrb[0].mxu0
        %v6053 = vadd.f32 %v5983, %v6052
        %v6054 = vpop.f32.mrb[0].mxu0
        %6055 = vdwg.mxu0
        %6056 = vmatprep.subr.mxu0 %v881
        %6057 = vmatpush1.xpose.msra.mxu0 %v880
        %6058 = vmatprep.subr.mxu0 %v1009
        %6059 = vmatpush1.xpose.msra.mxu0 %v1008
        %6060 = vmatprep.subr.mxu0 0.0
        %6061 = vmatpush1.xpose.msra.mxu0 0.0
        %6062 = vmatprep.subr.mxu0 0.0
        %6063 = vmatpush1.xpose.msra.mxu0 0.0
        %6064 = vmatprep.subr.mxu0 0.0
        %6065 = vmatpush1.xpose.msra.mxu0 0.0
        %6066 = vmatprep.subr.mxu0 0.0
        %6067 = vmatpush1.xpose.msra.mxu0 0.0
        %6068 = vmatprep.subr.mxu0 0.0
        %6069 = vmatpush1.xpose.msra.mxu0 0.0
        %6070 = vmatprep.subr.mxu0 0.0
        %6071 = vmatpush1.xpose.msra.mxu0 0.0
        %6072 = vmatprep.subr.mxu0 0.0
        %6073 = vmatpush1.xpose.msra.mxu0 0.0
        %6074 = vmatprep.subr.mxu0 0.0
        %6075 = vmatpush1.xpose.msra.mxu0 0.0
        %6076 = vmatprep.subr.mxu0 0.0
        %6077 = vmatpush1.xpose.msra.mxu0 0.0
        %6078 = vmatprep.subr.mxu0 0.0
        %6079 = vmatpush1.xpose.msra.mxu0 0.0
        %6080 = vmatprep.subr.mxu0 0.0
        %6081 = vmatpush1.xpose.msra.mxu0 0.0
        %6082 = vmatprep.subr.mxu0 0.0
        %6083 = vmatpush1.xpose.msra.mxu0 0.0
        %6084 = vmatprep.subr.mxu0 0.0
        %6085 = vmatpush1.xpose.msra.mxu0 0.0
        %6086 = vmatprep.subr.mxu0 0.0
        %6087 = vmatpush1.xpose.msra.mxu0 0.0
        %6088 = vmatprep.subr.mxu0 0.0
        %6089 = vmatpush1.xpose.msra.mxu0 0.0
        %6090 = vmatprep.subr.mxu0 0.0
        %6091 = vmatpush1.xpose.msra.mxu0 0.0
        %6092 = vmatprep.subr.mxu0 0.0
        %6093 = vmatpush1.xpose.msra.mxu0 0.0
        %6094 = vmatprep.subr.mxu0 0.0
        %6095 = vmatpush1.xpose.msra.mxu0 0.0
        %6096 = vmatprep.subr.mxu0 0.0
        %6097 = vmatpush1.xpose.msra.mxu0 0.0
        %6098 = vmatprep.subr.mxu0 0.0
        %6099 = vmatpush1.xpose.msra.mxu0 0.0
        %6100 = vmatprep.subr.mxu0 0.0
        %6101 = vmatpush1.xpose.msra.mxu0 0.0
        %6102 = vmatprep.subr.mxu0 0.0
        %6103 = vmatpush1.xpose.msra.mxu0 0.0
        %6104 = vmatprep.subr.mxu0 0.0
        %6105 = vmatpush1.xpose.msra.mxu0 0.0
        %6106 = vmatprep.subr.mxu0 0.0
        %6107 = vmatpush1.xpose.msra.mxu0 0.0
        %6108 = vmatprep.subr.mxu0 0.0
        %6109 = vmatpush1.xpose.msra.mxu0 0.0
        %6110 = vmatprep.subr.mxu0 0.0
        %6111 = vmatpush1.xpose.msra.mxu0 0.0
        %6112 = vmatprep.subr.mxu0 0.0
        %6113 = vmatpush1.xpose.msra.mxu0 0.0
        %6114 = vmatprep.subr.mxu0 0.0
        %6115 = vmatpush1.xpose.msra.mxu0 0.0
        %6116 = vmatprep.subr.mxu0 0.0
        %6117 = vmatpush1.xpose.msra.mxu0 0.0
        %6118 = vmatprep.subr.mxu0 0.0
        %6119 = vmatpush1.xpose.msra.mxu0 0.0
        %6120 = vmatprep.mubr.f32.mxu0 %v1586
        %6121 = vmatmul.mubr.f32.gmra.mrb[0].mxu0 %v1578
        %v6122 = vpop.f32.mrb[0].mxu0
        %v6123 = vadd.f32 %v6053, %v6122
        %v6124 = vpop.f32.mrb[0].mxu0
        %6125 = vdwg.mxu0
        %6126 = vmatprep.subr.mxu0 %v883
        %6127 = vmatpush1.xpose.msra.mxu0 %v882
        %6128 = vmatprep.subr.mxu0 %v1011
        %6129 = vmatpush1.xpose.msra.mxu0 %v1010
        %6130 = vmatprep.subr.mxu0 0.0
        %6131 = vmatpush1.xpose.msra.mxu0 0.0
        %6132 = vmatprep.subr.mxu0 0.0
        %6133 = vmatpush1.xpose.msra.mxu0 0.0
        %6134 = vmatprep.subr.mxu0 0.0
        %6135 = vmatpush1.xpose.msra.mxu0 0.0
        %6136 = vmatprep.subr.mxu0 0.0
        %6137 = vmatpush1.xpose.msra.mxu0 0.0
        %6138 = vmatprep.subr.mxu0 0.0
        %6139 = vmatpush1.xpose.msra.mxu0 0.0
        %6140 = vmatprep.subr.mxu0 0.0
        %6141 = vmatpush1.xpose.msra.mxu0 0.0
        %6142 = vmatprep.subr.mxu0 0.0
        %6143 = vmatpush1.xpose.msra.mxu0 0.0
        %6144 = vmatprep.subr.mxu0 0.0
        %6145 = vmatpush1.xpose.msra.mxu0 0.0
        %6146 = vmatprep.subr.mxu0 0.0
        %6147 = vmatpush1.xpose.msra.mxu0 0.0
        %6148 = vmatprep.subr.mxu0 0.0
        %6149 = vmatpush1.xpose.msra.mxu0 0.0
        %6150 = vmatprep.subr.mxu0 0.0
        %6151 = vmatpush1.xpose.msra.mxu0 0.0
        %6152 = vmatprep.subr.mxu0 0.0
        %6153 = vmatpush1.xpose.msra.mxu0 0.0
        %6154 = vmatprep.subr.mxu0 0.0
        %6155 = vmatpush1.xpose.msra.mxu0 0.0
        %6156 = vmatprep.subr.mxu0 0.0
        %6157 = vmatpush1.xpose.msra.mxu0 0.0
        %6158 = vmatprep.subr.mxu0 0.0
        %6159 = vmatpush1.xpose.msra.mxu0 0.0
        %6160 = vmatprep.subr.mxu0 0.0
        %6161 = vmatpush1.xpose.msra.mxu0 0.0
        %6162 = vmatprep.subr.mxu0 0.0
        %6163 = vmatpush1.xpose.msra.mxu0 0.0
        %6164 = vmatprep.subr.mxu0 0.0
        %6165 = vmatpush1.xpose.msra.mxu0 0.0
        %6166 = vmatprep.subr.mxu0 0.0
        %6167 = vmatpush1.xpose.msra.mxu0 0.0
        %6168 = vmatprep.subr.mxu0 0.0
        %6169 = vmatpush1.xpose.msra.mxu0 0.0
        %6170 = vmatprep.subr.mxu0 0.0
        %6171 = vmatpush1.xpose.msra.mxu0 0.0
        %6172 = vmatprep.subr.mxu0 0.0
        %6173 = vmatpush1.xpose.msra.mxu0 0.0
        %6174 = vmatprep.subr.mxu0 0.0
        %6175 = vmatpush1.xpose.msra.mxu0 0.0
        %6176 = vmatprep.subr.mxu0 0.0
        %6177 = vmatpush1.xpose.msra.mxu0 0.0
        %6178 = vmatprep.subr.mxu0 0.0
        %6179 = vmatpush1.xpose.msra.mxu0 0.0
        %6180 = vmatprep.subr.mxu0 0.0
        %6181 = vmatpush1.xpose.msra.mxu0 0.0
        %6182 = vmatprep.subr.mxu0 0.0
        %6183 = vmatpush1.xpose.msra.mxu0 0.0
        %6184 = vmatprep.subr.mxu0 0.0
        %6185 = vmatpush1.xpose.msra.mxu0 0.0
        %6186 = vmatprep.subr.mxu0 0.0
        %6187 = vmatpush1.xpose.msra.mxu0 0.0
        %6188 = vmatprep.subr.mxu0 0.0
        %6189 = vmatpush1.xpose.msra.mxu0 0.0
        %6190 = vmatprep.mubr.f32.mxu0 %v1587
        %6191 = vmatmul.mubr.f32.gmra.mrb[0].mxu0 %v1585
        %v6192 = vpop.f32.mrb[0].mxu0
        %v6193 = vadd.f32 %v6123, %v6192
        %v6194 = vpop.f32.mrb[0].mxu0
        %6195 = vdwg.mxu0
        %v6196 = vadd.f32 %v723, %v6193
        %vm6197 = vcmask 99328
        %6198 = vst.msk [vmem:[#allocation3] sm:$0x3] %vm6197, %v6196
        %p6199 = scmp.eq.s32.totalorder %s15, 3
        // Predicated region
        $region60: #{model_forward.3} parent=50 // pred_check
          %p6200 = pneg %p6199
        $region61: #{model_forward.3} parent=50 // pred_check_branch
          %6202 = sbr.rel (%p6200) target = $region63
        $region62: #{model_forward.3} parent=50 // pred_region
          %v6203 = vld [vmem:[#allocation3] sm:$0x3]
          %v6204 = vmax.f32 %v6203, 0.0
          %6205 = vst.msk [vmem:[#allocation3] sm:$0x3] %vm6197, %v6204
        $region63: #{model_forward.3} parent=50 // pred_fallthru
          _
        // Predicated region
        $region64: #{model_forward.3} parent=50 // pred_check
          %p6206 = pneg %p101
        $region65: #{model_forward.3} parent=50 // pred_check_branch
          %6208 = sbr.rel (%p6206) target = $region67
        $region66: #{model_forward.3} parent=50 // pred_region
          %s6210 = ssub.s32 32, 32
          %6211 = vsyncadd [#allocation4], %s6210
          %s6213 = sshll.u32 [#allocation3], 4
          %s6214 = int_to_ptr.vmem [resolvable:$true] %s6213
          %6216 = dma.vmem_to_hbm [thread:$0]  %s6214, 32, %s3, [#allocation4]
        $region67: #{model_forward.3} parent=50 // pred_fallthru
          _
        // Predicated region
        $region68: #{model_forward.3} parent=50 // pred_check
          %p6217 = pneg %p101
        $region69: #{model_forward.3} parent=50 // pred_check_branch
          %6219 = sbr.rel (%p6217) target = $region71
        $region70: #{model_forward.3} parent=50 // pred_region
          %6220 = dma.done [#allocation4], 32
        $region71: #{model_forward.3} parent=50 // pred_fallthru
          _
      $region51: #{model_forward.3} parent=5 // pred_fallthru
        _
      %p6221 = scmp.le.s32.totalorder 2, %s10
      // Predicated region
      $region72: #{model_forward.3} parent=5 // pred_check
        %p6222 = pneg %p6221
      $region73: #{model_forward.3} parent=5 // pred_check_branch
        %6224 = sbr.rel (%p6222) target = $region75
      $region74: #{model_forward.3} parent=5 // pred_region
        %s6225 = ssub.s32 %s10, 2
      $region75: #{model_forward.3} parent=5 // pred_fallthru
        _
    $region6: #{model_forward.3} parent=1 // loop_footer
      %s14 = sadd.s32 1, %s10
    $region7: #{model_forward.3} parent=1 // loop_footer_branch
      %9 = sbr.rel target = $region3
    $region8: #{model_forward.3} parent=1 // loop_exit
      _
    %6226 = vsyncpa [#allocation4], 1
    %s6227 = scalar_lea.sflag [#allocation4], 1
    %6228 = vsyncpa %s6227, 1

</llo_original>
